<compile_context>
chip_gen: v7x
topology: tpu7x:2x2x1
jax: 0.10.0
libtpu: 0.0.40
codegen_flags: <defaults>
</compile_context>

<pallas_src>
import math

import jax
import jax.numpy as jnp
from jax import lax
from jax.experimental import pallas as pl
from jax.experimental.pallas import tpu as pltpu

DIM = 1024            # CLIP ViT-L global feature width
REDUCT_DIM = 64       # bottleneck width
RPAD = 128            # bottleneck padded to one full 128-lane register (zero pad)
N_BIG = 7             # enc0..enc3, dec1..dec3  (1024x1024 weights)
N_SLOTS = 8           # stack padded to an even number of (D, D) weights
WEIGHTS_PER_STEP = 2
N_STEPS = N_SLOTS // WEIGHTS_PER_STEP   # 4 grid steps


# ------------------------------------------------------------------ math helpers
def _erf(x):
    # Abramowitz & Stegun 7.1.26 polynomial approximation of erf (abs err ~1.5e-7).
    # The divide goes through pl.reciprocal(approx=True) -> EUP slot (free).
    a1, a2, a3, a4, a5 = (0.254829592, -0.284496736, 1.421413741,
                          -1.453152027, 1.061405429)
    p = 0.3275911
    ax = jnp.abs(x)
    t = pl.reciprocal(1.0 + p * ax, approx=True)
    poly = ((((a5 * t + a4) * t + a3) * t + a2) * t + a1) * t
    y = 1.0 - poly * jnp.exp(-ax * ax)
    return jnp.where(x >= 0.0, y, -y)


def _gelu(x):
    # Matches torch.nn.GELU() default (erf-based GELU).
    return 0.5 * x * (1.0 + _erf(x * 0.7071067811865476))


def _l2_normalize(x):
    # F.normalize(x, p=2, dim=1, eps=1e-12) == x * rsqrt(max(sum(x^2), eps^2))
    ss = jnp.sum(x * x, axis=-1, keepdims=True)
    return x * lax.rsqrt(jnp.maximum(ss, 1e-24))


# ------------------------------------------------------------------ fused kernel
def fused_mlp_kernel(gap_ref, projw_ref, projb_ref,   # backbone stand-in (f32)
                     wbig_ref,                        # (2, D, D) int8 weight pair
                     we4_ref, wd0_ref, bneckb_ref,    # bottleneck (resident)
                     scale_ref, bias_ref,             # (8, 1, D) f32 resident stacks
                     ori_ref, rec_ref,                # outputs (B, D) f32
                     act_ref):                        # (B, D) f32 running activation
    s = pl.program_id(0)
    last = N_STEPS - 1

    # --- step-0 prologue: backbone projection + first L2 normalize (glob_ori) ---
    @pl.when(s == 0)
    def _():
        feat = jnp.dot(gap_ref[...], projw_ref[...],
                       preferred_element_type=jnp.float32) + projb_ref[...]
        g = _l2_normalize(feat)
        ori_ref[...] = g
        act_ref[...] = g

    # --- step-2 prologue: encoder bottleneck 1024->64 (padded to 128 lanes),
    #     L2 normalize, then decoder expand 128->1024 + GELU -------------------
    @pl.when(s == 2)
    def _():
        x = act_ref[...].astype(jnp.bfloat16)
        r = jnp.dot(x, we4_ref[...], preferred_element_type=jnp.float32)
        r = _l2_normalize(r + bneckb_ref[0][:, :RPAD])   # padded cols stay exactly 0
        y = jnp.dot(r.astype(jnp.bfloat16), wd0_ref[...],
                    preferred_element_type=jnp.float32) + bneckb_ref[1]
        act_ref[...] = _gelu(y)

    # --- first 1024x1024 layer of this step (enc0 / enc2 / dec1 / dec3) --------
    i0 = 2 * s
    x0 = act_ref[...].astype(jnp.bfloat16)
    w0 = wbig_ref[0].astype(jnp.bfloat16)   # int8 -> bf16 dequant (unit-scaled ints)
    y0 = (jnp.dot(x0, w0, preferred_element_type=jnp.float32) * scale_ref[i0]
          + bias_ref[i0])

    @pl.when(s != last)
    def _():
        # second 1024x1024 layer of this step (enc1 / enc3 / dec2); both GELU'd
        h = _gelu(y0)
        w1 = wbig_ref[1].astype(jnp.bfloat16)
        y1 = (jnp.dot(h.astype(jnp.bfloat16), w1,
                      preferred_element_type=jnp.float32) * scale_ref[i0 + 1]
              + bias_ref[i0 + 1])
        act_ref[...] = _gelu(y1)

    @pl.when(s == last)
    def _():
        # decoder tail (dec3): NO GELU; L2-normalize epilogue -> glob_recons.
        # (pad slot wbig_ref[1] is never dequantized / multiplied on this step)
        rec_ref[...] = _l2_normalize(y0)


def fused_forward(gap, proj_w, proj_b, w_big, w_e4, w_d0, b_bneck, scales, biases):
    B, C = gap.shape
    flops = 2 * B * (N_BIG * DIM * DIM + 2 * DIM * RPAD + C * DIM)
    bytes_accessed = (w_big.size                                   # int8 weights
                      + (w_e4.size + w_d0.size) * 2                # bf16 bottleneck
                      + (scales.size + biases.size + b_bneck.size
                         + proj_w.size + proj_b.size + gap.size + 2 * B * DIM) * 4)

    grid_spec = pltpu.PrefetchScalarGridSpec(
        num_scalar_prefetch=0,
        grid=(N_STEPS,),
        in_specs=[
            pl.BlockSpec((B, C), lambda s: (0, 0)),                   # pooled feature
            pl.BlockSpec((C, DIM), lambda s: (0, 0)),                 # backbone proj W
            pl.BlockSpec((1, DIM), lambda s: (0, 0)),                 # backbone proj b
            pl.BlockSpec((WEIGHTS_PER_STEP, DIM, DIM),
                         lambda s: (s, 0, 0)),                        # int8 weight pair
            pl.BlockSpec((DIM, RPAD), lambda s: (0, 0)),              # enc bottleneck W
            pl.BlockSpec((RPAD, DIM), lambda s: (0, 0)),              # dec expand W
            pl.BlockSpec((2, 1, DIM), lambda s: (0, 0, 0)),           # bottleneck biases
            pl.BlockSpec((N_SLOTS, 1, DIM), lambda s: (0, 0, 0)),     # per-layer scales
            pl.BlockSpec((N_SLOTS, 1, DIM), lambda s: (0, 0, 0)),     # per-layer biases
        ],
        out_specs=(pl.BlockSpec((B, DIM), lambda s: (0, 0)),
                   pl.BlockSpec((B, DIM), lambda s: (0, 0))),
        scratch_shapes=[pltpu.VMEM((B, DIM), jnp.float32)],           # running activation
    )
    return pl.pallas_call(
        fused_mlp_kernel,
        out_shape=(jax.ShapeDtypeStruct((B, DIM), jnp.float32),
                   jax.ShapeDtypeStruct((B, DIM), jnp.float32)),
        grid_spec=grid_spec,
        compiler_params=pltpu.CompilerParams(
            dimension_semantics=("arbitrary",),          # layers are sequential
            vmem_limit_bytes=32 * 1024 * 1024),          # explicit: safe on v5e/v6e/v7x
        cost_estimate=pl.CostEstimate(
            flops=int(flops),
            transcendentals=int(7 * B * DIM),
            bytes_accessed=int(bytes_accessed)),
    )(gap, proj_w, proj_b, w_big, w_e4, w_d0, b_bneck, scales, biases)


# ------------------------------------------------------------------ params
def _linear_init(key, fan_in, fan_out):
    # torch.nn.Linear default init: U(-1/sqrt(fan_in), 1/sqrt(fan_in))
    kw, kb = jax.random.split(key)
    bound = 1.0 / math.sqrt(fan_in)
    w = jax.random.uniform(kw, (fan_in, fan_out), jnp.float32, -bound, bound)
    b = jax.random.uniform(kb, (fan_out,), jnp.float32, -bound, bound)
    return w, b


def init_params(key, in_channels):
    params = {}
    keys = jax.random.split(key, 10)
    params["proj_w"], params["proj_b"] = _linear_init(keys[0], in_channels, DIM)
    enc_dims = [(DIM, DIM)] * 4 + [(DIM, REDUCT_DIM)]
    for i, (fi, fo) in enumerate(enc_dims):
        params[f"enc_w{i}"], params[f"enc_b{i}"] = _linear_init(keys[1 + i], fi, fo)
    dec_dims = [(REDUCT_DIM, DIM)] + [(DIM, DIM)] * 3
    for i, (fi, fo) in enumerate(dec_dims):
        params[f"dec_w{i}"], params[f"dec_b{i}"] = _linear_init(keys[6 + i], fi, fo)
    return params


def _quantize_int8(w):
    """Symmetric per-output-channel int8 quantization of an (in, out) weight."""
    amax = jnp.max(jnp.abs(w), axis=0, keepdims=True)          # (1, out)
    scale = jnp.maximum(amax, 1e-30) / 127.0
    q = jnp.clip(jnp.round(w / scale), -127, 127).astype(jnp.int8)
    return q, scale


def pack_params(params):
    """Pack per-layer params into the stacked / padded arrays the kernel expects."""
    big_w = ["enc_w0", "enc_w1", "enc_w2", "enc_w3", "dec_w1", "dec_w2", "dec_w3"]
    big_b = ["enc_b0", "enc_b1", "enc_b2", "enc_b3", "dec_b1", "dec_b2", "dec_b3"]
    qs, scs = zip(*[_quantize_int8(params[n]) for n in big_w])
    # 8th slot is a zero pad so the (2, D, D) block tiling divides evenly.
    w_big = jnp.concatenate([jnp.stack(list(qs)),
                             jnp.zeros((1, DIM, DIM), jnp.int8)], axis=0)   # (8,D,D) i8
    scales = jnp.concatenate([jnp.stack(list(scs)).reshape(N_BIG, 1, DIM),
                              jnp.ones((1, 1, DIM), jnp.float32)], axis=0)  # (8,1,D) f32
    biases = jnp.concatenate(
        [jnp.stack([params[n].reshape(1, DIM) for n in big_b]),
         jnp.zeros((1, 1, DIM), jnp.float32)], axis=0)                      # (8,1,D) f32
    # bottleneck weights: bf16, zero-padded to one full 128-lane register
    w_e4 = jnp.zeros((DIM, RPAD), jnp.bfloat16).at[:, :REDUCT_DIM].set(
        params["enc_w4"].astype(jnp.bfloat16))
    w_d0 = jnp.zeros((RPAD, DIM), jnp.bfloat16).at[:REDUCT_DIM, :].set(
        params["dec_w0"].astype(jnp.bfloat16))
    b_bneck = jnp.stack([
        jnp.zeros((DIM,), jnp.float32).at[:REDUCT_DIM].set(params["enc_b4"]),
        params["dec_b0"]]).reshape(2, 1, DIM)
    return dict(proj_w=params["proj_w"], proj_b=params["proj_b"].reshape(1, DIM),
                w_big=w_big, w_e4=w_e4, w_d0=w_d0, b_bneck=b_bneck,
                scales=scales, biases=biases)


# ------------------------------------------------------------------ forward
@jax.jit
def model_forward(x_img, packed):
    """Returns (glob_ori, glob_recons), matching ClipvitlModelReduction3.forward."""
    # backbone stand-in (glue): GAP over spatial dims; projection runs in-kernel.
    gap = jnp.mean(x_img, axis=(2, 3))                                 # (B, C)
    return fused_forward(gap, packed["proj_w"], packed["proj_b"],
                         packed["w_big"], packed["w_e4"], packed["w_d0"],
                         packed["b_bneck"], packed["scales"], packed["biases"])


# ------------------------------------------------------------------ reference
def reference_forward(x_img, packed):
    """Pure-JAX f32 reference on the SAME (int8-dequantized / bf16) weights."""
    def norm(x):
        n = jnp.linalg.norm(x, axis=-1, keepdims=True)
        return x / jnp.maximum(n, 1e-12)

    def gelu(x):
        return jax.nn.gelu(x, approximate=False)

    def big(i, x):
        w = packed["w_big"][i].astype(jnp.float32) * packed["scales"][i]
        return jnp.dot(x, w, precision="highest") + packed["biases"][i, 0]

    feat = jnp.mean(x_img, axis=(2, 3))
    feat = jnp.dot(feat, packed["proj_w"], precision="highest") + packed["proj_b"][0]
    glob_ori = norm(feat)
    h = glob_ori
    for i in range(4):                                   # encoder 1024x1024 stack
        h = gelu(big(i, h))
    w_e4 = packed["w_e4"][:, :REDUCT_DIM].astype(jnp.float32)
    h = jnp.dot(h, w_e4, precision="highest") + packed["b_bneck"][0, 0, :REDUCT_DIM]
    x_reduct = norm(h)
    w_d0 = packed["w_d0"][:REDUCT_DIM, :].astype(jnp.float32)
    h = gelu(jnp.dot(x_reduct, w_d0, precision="highest") + packed["b_bneck"][1, 0])
    for i in range(4, 6):                                # dec1, dec2
        h = gelu(big(i, h))
    h = big(6, h)                                        # dec3 (no GELU)
    glob_recons = norm(h)
    return glob_ori, glob_recons


# ------------------------------------------------------------------ main
if __name__ == "__main__":
    key = jax.random.PRNGKey(0)
    k_x, k_p = jax.random.split(key)

    B, C, H, W = 2, 4, 16, 16
    x_img = jax.random.normal(k_x, (B, C, H, W), dtype=jnp.float32)
    params = init_params(k_p, C)
    packed = pack_params(params)

    glob_ori, glob_recons = jax.block_until_ready(model_forward(x_img, packed))
    assert glob_ori.shape == (B, DIM) and glob_recons.shape == (B, DIM)

    # f32 reference on the same quantized weights; kernel uses bf16 activations
    # on the MXU with f32 accumulation, so allow a small tolerance.
    ref_ori, ref_rec = reference_forward(x_img, packed)
    err_ori = float(jnp.max(jnp.abs(glob_ori - ref_ori)))
    err_rec = float(jnp.max(jnp.abs(glob_recons - ref_rec)))
    assert err_ori < 5e-3, f"glob_ori mismatch: {err_ori}"
    assert err_rec < 5e-3, f"glob_recons mismatch: {err_rec}"

    print("KERNEL_OK")
</pallas_src>

<mosaic_0001>
module attributes {stable_mosaic.version = 11 : i64} {
  func.func @fused_mlp_kernel(%arg0: i32, %arg1: memref<2x4xf32, #tpu.memory_space<vmem>>, %arg2: memref<4x1024xf32, #tpu.memory_space<vmem>>, %arg3: memref<1x1024xf32, #tpu.memory_space<vmem>>, %arg4: memref<2x1024x1024xi8, #tpu.memory_space<vmem>>, %arg5: memref<1024x128xbf16, #tpu.memory_space<vmem>>, %arg6: memref<128x1024xbf16, #tpu.memory_space<vmem>>, %arg7: memref<2x1x1024xf32, #tpu.memory_space<vmem>>, %arg8: memref<8x1x1024xf32, #tpu.memory_space<vmem>>, %arg9: memref<8x1x1024xf32, #tpu.memory_space<vmem>>, %arg10: memref<2x1024xf32, #tpu.memory_space<vmem>>, %arg11: memref<2x1024xf32, #tpu.memory_space<vmem>>, %arg12: memref<2x1024xf32, #tpu.memory_space<vmem>>) attributes {dimension_semantics = [#tpu.dimension_semantics<arbitrary>], iteration_bounds = array<i64: 4>, scalar_prefetch = 0 : i64, scratch_operands = 1 : i64, tpu.core_type = #tpu.core_type<tc>, window_params = [{pipeline_mode = #tpu.pipeline_mode<synchronous>, transform_indices = @transform_0, window_bounds = array<i64: 2, 4>}, {pipeline_mode = #tpu.pipeline_mode<synchronous>, transform_indices = @transform_1, window_bounds = array<i64: 4, 1024>}, {pipeline_mode = #tpu.pipeline_mode<synchronous>, transform_indices = @transform_2, window_bounds = array<i64: 1, 1024>}, {transform_indices = @transform_3, window_bounds = array<i64: 2, 1024, 1024>}, {pipeline_mode = #tpu.pipeline_mode<synchronous>, transform_indices = @transform_4, window_bounds = array<i64: 1024, 128>}, {pipeline_mode = #tpu.pipeline_mode<synchronous>, transform_indices = @transform_5, window_bounds = array<i64: 128, 1024>}, {pipeline_mode = #tpu.pipeline_mode<synchronous>, transform_indices = @transform_6, window_bounds = array<i64: 2, 1, 1024>}, {pipeline_mode = #tpu.pipeline_mode<synchronous>, transform_indices = @transform_7, window_bounds = array<i64: 8, 1, 1024>}, {pipeline_mode = #tpu.pipeline_mode<synchronous>, transform_indices = @transform_8, window_bounds = array<i64: 8, 1, 1024>}, {pipeline_mode = #tpu.pipeline_mode<synchronous>, transform_indices = @transform_9, window_bounds = array<i64: 2, 1024>}, {pipeline_mode = #tpu.pipeline_mode<synchronous>, transform_indices = @transform_10, window_bounds = array<i64: 2, 1024>}]} {
    %c0_i32 = arith.constant 0 : i32
    %0 = arith.cmpi eq, %arg0, %c0_i32 : i32
    %1 = arith.extui %0 : i1 to i32
    %c0_i32_0 = arith.constant 0 : i32
    %2 = arith.cmpi ne, %1, %c0_i32_0 : i32
    scf.if %2 {
      %c0_14 = arith.constant 0 : index
      %c0_15 = arith.constant 0 : index
      %29 = vector.load %arg1[%c0_14, %c0_15] : memref<2x4xf32, #tpu.memory_space<vmem>>, vector<2x4xf32>
      %c0_16 = arith.constant 0 : index
      %c0_17 = arith.constant 0 : index
      %30 = vector.load %arg2[%c0_16, %c0_17] : memref<4x1024xf32, #tpu.memory_space<vmem>>, vector<4x1024xf32>
      %cst_18 = arith.constant dense<0.000000e+00> : vector<2x1024xf32>
      %31 = tpu.matmul %29, %30, %cst_18 {dimension_numbers = #tpu.dot_dimension_numbers<[1], [0], [0], [1], [0, 0, 1, 1], [], []>} : vector<2x4xf32>, vector<4x1024xf32>, vector<2x1024xf32> -> vector<2x1024xf32>
      %c0_19 = arith.constant 0 : index
      %c0_20 = arith.constant 0 : index
      %32 = vector.load %arg3[%c0_19, %c0_20] : memref<1x1024xf32, #tpu.memory_space<vmem>>, vector<1x1024xf32>
      %33 = vector.broadcast %32 : vector<1x1024xf32> to vector<2x1024xf32>
      %34 = arith.addf %31, %33 : vector<2x1024xf32>
      %35 = arith.mulf %34, %34 : vector<2x1024xf32>
      %cst_21 = arith.constant dense<0.000000e+00> : vector<2xf32>
      %36 = vector.multi_reduction <add>, %35, %cst_21 [1] : vector<2x1024xf32> to vector<2xf32>
      %37 = vector.shape_cast %36 : vector<2xf32> to vector<2x1xf32>
      %cst_22 = arith.constant 1.000000e-24 : f32
      %38 = vector.broadcast %cst_22 : f32 to vector<2x1xf32>
      %39 = arith.maximumf %37, %38 : vector<2x1xf32>
      %40 = math.rsqrt %39 : vector<2x1xf32>
      %41 = vector.broadcast %40 : vector<2x1xf32> to vector<2x1024xf32>
      %42 = arith.mulf %34, %41 : vector<2x1024xf32>
      %c0_23 = arith.constant 0 : index
      %c0_24 = arith.constant 0 : index
      %43 = vector.load %arg10[%c0_23, %c0_24] : memref<2x1024xf32, #tpu.memory_space<vmem>>, vector<2x1024xf32>
      tpu.vector_store %arg10[%c0_23, %c0_24], %42 {strides = array<i32>} : memref<2x1024xf32, #tpu.memory_space<vmem>>, vector<2x1024xf32>,
      %c0_25 = arith.constant 0 : index
      %c0_26 = arith.constant 0 : index
      %44 = vector.load %arg12[%c0_25, %c0_26] : memref<2x1024xf32, #tpu.memory_space<vmem>>, vector<2x1024xf32>
      tpu.vector_store %arg12[%c0_25, %c0_26], %42 {strides = array<i32>} : memref<2x1024xf32, #tpu.memory_space<vmem>>, vector<2x1024xf32>,
    } else {
    }
    %c2_i32 = arith.constant 2 : i32
    %3 = arith.cmpi eq, %arg0, %c2_i32 : i32
    %4 = arith.extui %3 : i1 to i32
    %c0_i32_1 = arith.constant 0 : i32
    %5 = arith.cmpi ne, %4, %c0_i32_1 : i32
    scf.if %5 {
      %c0_14 = arith.constant 0 : index
      %c0_15 = arith.constant 0 : index
      %29 = vector.load %arg12[%c0_14, %c0_15] : memref<2x1024xf32, #tpu.memory_space<vmem>>, vector<2x1024xf32>
      %30 = arith.truncf %29 : vector<2x1024xf32> to vector<2x1024xbf16>
      %c0_16 = arith.constant 0 : index
      %c0_17 = arith.constant 0 : index
      %31 = vector.load %arg5[%c0_16, %c0_17] : memref<1024x128xbf16, #tpu.memory_space<vmem>>, vector<1024x128xbf16>
      %cst_18 = arith.constant dense<0.000000e+00> : vector<2x128xf32>
      %32 = tpu.matmul %30, %31, %cst_18 {dimension_numbers = #tpu.dot_dimension_numbers<[1], [0], [0], [1], [0, 0, 1, 1], [], []>} : vector<2x1024xbf16>, vector<1024x128xbf16>, vector<2x128xf32> -> vector<2x128xf32>
      %c0_19 = arith.constant 0 : index
      %c0_20 = arith.constant 0 : index
      %c0_21 = arith.constant 0 : index
      %33 = vector.load %arg7[%c0_19, %c0_20, %c0_21] : memref<2x1x1024xf32, #tpu.memory_space<vmem>>, vector<1x1x1024xf32>
      %34 = vector.shape_cast %33 : vector<1x1x1024xf32> to vector<1x1024xf32>
      %35 = vector.extract_strided_slice %34 {offsets = [0, 0], sizes = [1, 128], strides = [1, 1]} : vector<1x1024xf32> to vector<1x128xf32>
      %36 = vector.broadcast %35 : vector<1x128xf32> to vector<2x128xf32>
      %37 = arith.addf %32, %36 : vector<2x128xf32>
      %38 = arith.mulf %37, %37 : vector<2x128xf32>
      %cst_22 = arith.constant dense<0.000000e+00> : vector<2xf32>
      %39 = vector.multi_reduction <add>, %38, %cst_22 [1] : vector<2x128xf32> to vector<2xf32>
      %40 = vector.shape_cast %39 : vector<2xf32> to vector<2x1xf32>
      %cst_23 = arith.constant 1.000000e-24 : f32
      %41 = vector.broadcast %cst_23 : f32 to vector<2x1xf32>
      %42 = arith.maximumf %40, %41 : vector<2x1xf32>
      %43 = math.rsqrt %42 : vector<2x1xf32>
      %44 = vector.broadcast %43 : vector<2x1xf32> to vector<2x128xf32>
      %45 = arith.mulf %37, %44 : vector<2x128xf32>
      %46 = arith.truncf %45 : vector<2x128xf32> to vector<2x128xbf16>
      %c0_24 = arith.constant 0 : index
      %c0_25 = arith.constant 0 : index
      %47 = vector.load %arg6[%c0_24, %c0_25] : memref<128x1024xbf16, #tpu.memory_space<vmem>>, vector<128x1024xbf16>
      %cst_26 = arith.constant dense<0.000000e+00> : vector<2x1024xf32>
      %48 = tpu.matmul %46, %47, %cst_26 {dimension_numbers = #tpu.dot_dimension_numbers<[1], [0], [0], [1], [0, 0, 1, 1], [], []>} : vector<2x128xbf16>, vector<128x1024xbf16>, vector<2x1024xf32> -> vector<2x1024xf32>
      %c1 = arith.constant 1 : index
      %c0_27 = arith.constant 0 : index
      %c0_28 = arith.constant 0 : index
      %49 = vector.load %arg7[%c1, %c0_27, %c0_28] : memref<2x1x1024xf32, #tpu.memory_space<vmem>>, vector<1x1x1024xf32>
      %50 = vector.shape_cast %49 : vector<1x1x1024xf32> to vector<1x1024xf32>
      %51 = vector.broadcast %50 : vector<1x1024xf32> to vector<2x1024xf32>
      %52 = arith.addf %48, %51 : vector<2x1024xf32>
      %cst_29 = arith.constant 5.000000e-01 : f32
      %53 = vector.broadcast %cst_29 : f32 to vector<2x1024xf32>
      %54 = arith.mulf %53, %52 : vector<2x1024xf32>
      %cst_30 = arith.constant 0.707106769 : f32
      %55 = vector.broadcast %cst_30 : f32 to vector<2x1024xf32>
      %56 = arith.mulf %52, %55 : vector<2x1024xf32>
      %57 = math.absf %56 : vector<2x1024xf32>
      %cst_31 = arith.constant 0.327591091 : f32
      %58 = vector.broadcast %cst_31 : f32 to vector<2x1024xf32>
      %59 = arith.mulf %58, %57 : vector<2x1024xf32>
      %cst_32 = arith.constant 1.000000e+00 : f32
      %60 = vector.broadcast %cst_32 : f32 to vector<2x1024xf32>
      %61 = arith.addf %60, %59 : vector<2x1024xf32>
      %62 = tpu.reciprocal %61 {approx = true} : vector<2x1024xf32> -> vector<2x1024xf32>
      %cst_33 = arith.constant 1.06140542 : f32
      %63 = vector.broadcast %cst_33 : f32 to vector<2x1024xf32>
      %64 = arith.mulf %63, %62 : vector<2x1024xf32>
      %cst_34 = arith.constant -1.45315206 : f32
      %65 = vector.broadcast %cst_34 : f32 to vector<2x1024xf32>
      %66 = arith.addf %64, %65 : vector<2x1024xf32>
      %67 = arith.mulf %66, %62 : vector<2x1024xf32>
      %cst_35 = arith.constant 1.42141378 : f32
      %68 = vector.broadcast %cst_35 : f32 to vector<2x1024xf32>
      %69 = arith.addf %67, %68 : vector<2x1024xf32>
      %70 = arith.mulf %69, %62 : vector<2x1024xf32>
      %cst_36 = arith.constant -0.284496725 : f32
      %71 = vector.broadcast %cst_36 : f32 to vector<2x1024xf32>
      %72 = arith.addf %70, %71 : vector<2x1024xf32>
      %73 = arith.mulf %72, %62 : vector<2x1024xf32>
      %cst_37 = arith.constant 0.254829586 : f32
      %74 = vector.broadcast %cst_37 : f32 to vector<2x1024xf32>
      %75 = arith.addf %73, %74 : vector<2x1024xf32>
      %76 = arith.mulf %75, %62 : vector<2x1024xf32>
      %cst_38 = arith.constant 0.000000e+00 : f32
      %77 = vector.broadcast %cst_38 : f32 to vector<2x1024xf32>
      %78 = arith.subf %77, %57 : vector<2x1024xf32>
      %79 = arith.mulf %78, %57 : vector<2x1024xf32>
      %80 = math.exp %79 : vector<2x1024xf32>
      %81 = arith.mulf %76, %80 : vector<2x1024xf32>
      %cst_39 = arith.constant 1.000000e+00 : f32
      %82 = vector.broadcast %cst_39 : f32 to vector<2x1024xf32>
      %83 = arith.subf %82, %81 : vector<2x1024xf32>
      %cst_40 = arith.constant 0.000000e+00 : f32
      %84 = vector.broadcast %cst_40 : f32 to vector<2x1024xf32>
      %85 = arith.cmpf oge, %56, %84 : vector<2x1024xf32>
      %cst_41 = arith.constant 0.000000e+00 : f32
      %86 = vector.broadcast %cst_41 : f32 to vector<2x1024xf32>
      %87 = arith.subf %86, %83 : vector<2x1024xf32>
      %88 = arith.select %85, %83, %87 : vector<2x1024xi1>, vector<2x1024xf32>
      %cst_42 = arith.constant 1.000000e+00 : f32
      %89 = vector.broadcast %cst_42 : f32 to vector<2x1024xf32>
      %90 = arith.addf %89, %88 : vector<2x1024xf32>
      %91 = arith.mulf %54, %90 : vector<2x1024xf32>
      %c0_43 = arith.constant 0 : index
      %c0_44 = arith.constant 0 : index
      %92 = vector.load %arg12[%c0_43, %c0_44] : memref<2x1024xf32, #tpu.memory_space<vmem>>, vector<2x1024xf32>
      tpu.vector_store %arg12[%c0_43, %c0_44], %91 {strides = array<i32>} : memref<2x1024xf32, #tpu.memory_space<vmem>>, vector<2x1024xf32>,
    } else {
    }
    %c2_i32_2 = arith.constant 2 : i32
    %6 = arith.muli %c2_i32_2, %arg0 : i32
    %c0 = arith.constant 0 : index
    %c0_3 = arith.constant 0 : index
    %7 = vector.load %arg12[%c0, %c0_3] : memref<2x1024xf32, #tpu.memory_space<vmem>>, vector<2x1024xf32>
    %8 = arith.truncf %7 : vector<2x1024xf32> to vector<2x1024xbf16>
    %c0_4 = arith.constant 0 : index
    %c0_5 = arith.constant 0 : index
    %c0_6 = arith.constant 0 : index
    %9 = vector.load %arg4[%c0_4, %c0_5, %c0_6] : memref<2x1024x1024xi8, #tpu.memory_space<vmem>>, vector<1x1024x1024xi8>
    %10 = vector.shape_cast %9 : vector<1x1024x1024xi8> to vector<1024x1024xi8>
    %11 = arith.sitofp %10 : vector<1024x1024xi8> to vector<1024x1024xbf16>
    %cst = arith.constant dense<0.000000e+00> : vector<2x1024xf32>
    %12 = tpu.matmul %8, %11, %cst {dimension_numbers = #tpu.dot_dimension_numbers<[1], [0], [0], [1], [0, 0, 1, 1], [], []>} : vector<2x1024xbf16>, vector<1024x1024xbf16>, vector<2x1024xf32> -> vector<2x1024xf32>
    %13 = arith.index_cast %6 : i32 to index
    %c0_7 = arith.constant 0 : index
    %c0_8 = arith.constant 0 : index
    %14 = vector.load %arg8[%13, %c0_7, %c0_8] : memref<8x1x1024xf32, #tpu.memory_space<vmem>>, vector<1x1x1024xf32>
    %15 = vector.shape_cast %14 : vector<1x1x1024xf32> to vector<1x1024xf32>
    %16 = vector.broadcast %15 : vector<1x1024xf32> to vector<2x1024xf32>
    %17 = arith.mulf %12, %16 : vector<2x1024xf32>
    %18 = arith.index_cast %6 : i32 to index
    %c0_9 = arith.constant 0 : index
    %c0_10 = arith.constant 0 : index
    %19 = vector.load %arg9[%18, %c0_9, %c0_10] : memref<8x1x1024xf32, #tpu.memory_space<vmem>>, vector<1x1x1024xf32>
    %20 = vector.shape_cast %19 : vector<1x1x1024xf32> to vector<1x1024xf32>
    %21 = vector.broadcast %20 : vector<1x1024xf32> to vector<2x1024xf32>
    %22 = arith.addf %17, %21 : vector<2x1024xf32>
    %c3_i32 = arith.constant 3 : i32
    %23 = arith.cmpi ne, %arg0, %c3_i32 : i32
    %24 = arith.extui %23 : i1 to i32
    %c0_i32_11 = arith.constant 0 : i32
    %25 = arith.cmpi ne, %24, %c0_i32_11 : i32
    scf.if %25 {
      %cst_14 = arith.constant 5.000000e-01 : f32
      %29 = vector.broadcast %cst_14 : f32 to vector<2x1024xf32>
      %30 = arith.mulf %29, %22 : vector<2x1024xf32>
      %cst_15 = arith.constant 0.707106769 : f32
      %31 = vector.broadcast %cst_15 : f32 to vector<2x1024xf32>
      %32 = arith.mulf %22, %31 : vector<2x1024xf32>
      %33 = math.absf %32 : vector<2x1024xf32>
      %cst_16 = arith.constant 0.327591091 : f32
      %34 = vector.broadcast %cst_16 : f32 to vector<2x1024xf32>
      %35 = arith.mulf %34, %33 : vector<2x1024xf32>
      %cst_17 = arith.constant 1.000000e+00 : f32
      %36 = vector.broadcast %cst_17 : f32 to vector<2x1024xf32>
      %37 = arith.addf %36, %35 : vector<2x1024xf32>
      %38 = tpu.reciprocal %37 {approx = true} : vector<2x1024xf32> -> vector<2x1024xf32>
      %cst_18 = arith.constant 1.06140542 : f32
      %39 = vector.broadcast %cst_18 : f32 to vector<2x1024xf32>
      %40 = arith.mulf %39, %38 : vector<2x1024xf32>
      %cst_19 = arith.constant -1.45315206 : f32
      %41 = vector.broadcast %cst_19 : f32 to vector<2x1024xf32>
      %42 = arith.addf %40, %41 : vector<2x1024xf32>
      %43 = arith.mulf %42, %38 : vector<2x1024xf32>
      %cst_20 = arith.constant 1.42141378 : f32
      %44 = vector.broadcast %cst_20 : f32 to vector<2x1024xf32>
      %45 = arith.addf %43, %44 : vector<2x1024xf32>
      %46 = arith.mulf %45, %38 : vector<2x1024xf32>
      %cst_21 = arith.constant -0.284496725 : f32
      %47 = vector.broadcast %cst_21 : f32 to vector<2x1024xf32>
      %48 = arith.addf %46, %47 : vector<2x1024xf32>
      %49 = arith.mulf %48, %38 : vector<2x1024xf32>
      %cst_22 = arith.constant 0.254829586 : f32
      %50 = vector.broadcast %cst_22 : f32 to vector<2x1024xf32>
      %51 = arith.addf %49, %50 : vector<2x1024xf32>
      %52 = arith.mulf %51, %38 : vector<2x1024xf32>
      %cst_23 = arith.constant 0.000000e+00 : f32
      %53 = vector.broadcast %cst_23 : f32 to vector<2x1024xf32>
      %54 = arith.subf %53, %33 : vector<2x1024xf32>
      %55 = arith.mulf %54, %33 : vector<2x1024xf32>
      %56 = math.exp %55 : vector<2x1024xf32>
      %57 = arith.mulf %52, %56 : vector<2x1024xf32>
      %cst_24 = arith.constant 1.000000e+00 : f32
      %58 = vector.broadcast %cst_24 : f32 to vector<2x1024xf32>
      %59 = arith.subf %58, %57 : vector<2x1024xf32>
      %cst_25 = arith.constant 0.000000e+00 : f32
      %60 = vector.broadcast %cst_25 : f32 to vector<2x1024xf32>
      %61 = arith.cmpf oge, %32, %60 : vector<2x1024xf32>
      %cst_26 = arith.constant 0.000000e+00 : f32
      %62 = vector.broadcast %cst_26 : f32 to vector<2x1024xf32>
      %63 = arith.subf %62, %59 : vector<2x1024xf32>
      %64 = arith.select %61, %59, %63 : vector<2x1024xi1>, vector<2x1024xf32>
      %cst_27 = arith.constant 1.000000e+00 : f32
      %65 = vector.broadcast %cst_27 : f32 to vector<2x1024xf32>
      %66 = arith.addf %65, %64 : vector<2x1024xf32>
      %67 = arith.mulf %30, %66 : vector<2x1024xf32>
      %c1 = arith.constant 1 : index
      %c0_28 = arith.constant 0 : index
      %c0_29 = arith.constant 0 : index
      %68 = vector.load %arg4[%c1, %c0_28, %c0_29] : memref<2x1024x1024xi8, #tpu.memory_space<vmem>>, vector<1x1024x1024xi8>
      %69 = vector.shape_cast %68 : vector<1x1024x1024xi8> to vector<1024x1024xi8>
      %70 = arith.sitofp %69 : vector<1024x1024xi8> to vector<1024x1024xbf16>
      %71 = arith.truncf %67 : vector<2x1024xf32> to vector<2x1024xbf16>
      %cst_30 = arith.constant dense<0.000000e+00> : vector<2x1024xf32>
      %72 = tpu.matmul %71, %70, %cst_30 {dimension_numbers = #tpu.dot_dimension_numbers<[1], [0], [0], [1], [0, 0, 1, 1], [], []>} : vector<2x1024xbf16>, vector<1024x1024xbf16>, vector<2x1024xf32> -> vector<2x1024xf32>
      %c1_i32 = arith.constant 1 : i32
      %73 = arith.addi %6, %c1_i32 : i32
      %74 = arith.index_cast %73 : i32 to index
      %c0_31 = arith.constant 0 : index
      %c0_32 = arith.constant 0 : index
      %75 = vector.load %arg8[%74, %c0_31, %c0_32] : memref<8x1x1024xf32, #tpu.memory_space<vmem>>, vector<1x1x1024xf32>
      %76 = vector.shape_cast %75 : vector<1x1x1024xf32> to vector<1x1024xf32>
      %77 = vector.broadcast %76 : vector<1x1024xf32> to vector<2x1024xf32>
      %78 = arith.mulf %72, %77 : vector<2x1024xf32>
      %c1_i32_33 = arith.constant 1 : i32
      %79 = arith.addi %6, %c1_i32_33 : i32
      %80 = arith.index_cast %79 : i32 to index
      %c0_34 = arith.constant 0 : index
      %c0_35 = arith.constant 0 : index
      %81 = vector.load %arg9[%80, %c0_34, %c0_35] : memref<8x1x1024xf32, #tpu.memory_space<vmem>>, vector<1x1x1024xf32>
      %82 = vector.shape_cast %81 : vector<1x1x1024xf32> to vector<1x1024xf32>
      %83 = vector.broadcast %82 : vector<1x1024xf32> to vector<2x1024xf32>
      %84 = arith.addf %78, %83 : vector<2x1024xf32>
      %cst_36 = arith.constant 5.000000e-01 : f32
      %85 = vector.broadcast %cst_36 : f32 to vector<2x1024xf32>
      %86 = arith.mulf %85, %84 : vector<2x1024xf32>
      %cst_37 = arith.constant 0.707106769 : f32
      %87 = vector.broadcast %cst_37 : f32 to vector<2x1024xf32>
      %88 = arith.mulf %84, %87 : vector<2x1024xf32>
      %89 = math.absf %88 : vector<2x1024xf32>
      %cst_38 = arith.constant 0.327591091 : f32
      %90 = vector.broadcast %cst_38 : f32 to vector<2x1024xf32>
      %91 = arith.mulf %90, %89 : vector<2x1024xf32>
      %cst_39 = arith.constant 1.000000e+00 : f32
      %92 = vector.broadcast %cst_39 : f32 to vector<2x1024xf32>
      %93 = arith.addf %92, %91 : vector<2x1024xf32>
      %94 = tpu.reciprocal %93 {approx = true} : vector<2x1024xf32> -> vector<2x1024xf32>
      %cst_40 = arith.constant 1.06140542 : f32
      %95 = vector.broadcast %cst_40 : f32 to vector<2x1024xf32>
      %96 = arith.mulf %95, %94 : vector<2x1024xf32>
      %cst_41 = arith.constant -1.45315206 : f32
      %97 = vector.broadcast %cst_41 : f32 to vector<2x1024xf32>
      %98 = arith.addf %96, %97 : vector<2x1024xf32>
      %99 = arith.mulf %98, %94 : vector<2x1024xf32>
      %cst_42 = arith.constant 1.42141378 : f32
      %100 = vector.broadcast %cst_42 : f32 to vector<2x1024xf32>
      %101 = arith.addf %99, %100 : vector<2x1024xf32>
      %102 = arith.mulf %101, %94 : vector<2x1024xf32>
      %cst_43 = arith.constant -0.284496725 : f32
      %103 = vector.broadcast %cst_43 : f32 to vector<2x1024xf32>
      %104 = arith.addf %102, %103 : vector<2x1024xf32>
      %105 = arith.mulf %104, %94 : vector<2x1024xf32>
      %cst_44 = arith.constant 0.254829586 : f32
      %106 = vector.broadcast %cst_44 : f32 to vector<2x1024xf32>
      %107 = arith.addf %105, %106 : vector<2x1024xf32>
      %108 = arith.mulf %107, %94 : vector<2x1024xf32>
      %cst_45 = arith.constant 0.000000e+00 : f32
      %109 = vector.broadcast %cst_45 : f32 to vector<2x1024xf32>
      %110 = arith.subf %109, %89 : vector<2x1024xf32>
      %111 = arith.mulf %110, %89 : vector<2x1024xf32>
      %112 = math.exp %111 : vector<2x1024xf32>
      %113 = arith.mulf %108, %112 : vector<2x1024xf32>
      %cst_46 = arith.constant 1.000000e+00 : f32
      %114 = vector.broadcast %cst_46 : f32 to vector<2x1024xf32>
      %115 = arith.subf %114, %113 : vector<2x1024xf32>
      %cst_47 = arith.constant 0.000000e+00 : f32
      %116 = vector.broadcast %cst_47 : f32 to vector<2x1024xf32>
      %117 = arith.cmpf oge, %88, %116 : vector<2x1024xf32>
      %cst_48 = arith.constant 0.000000e+00 : f32
      %118 = vector.broadcast %cst_48 : f32 to vector<2x1024xf32>
      %119 = arith.subf %118, %115 : vector<2x1024xf32>
      %120 = arith.select %117, %115, %119 : vector<2x1024xi1>, vector<2x1024xf32>
      %cst_49 = arith.constant 1.000000e+00 : f32
      %121 = vector.broadcast %cst_49 : f32 to vector<2x1024xf32>
      %122 = arith.addf %121, %120 : vector<2x1024xf32>
      %123 = arith.mulf %86, %122 : vector<2x1024xf32>
      %c0_50 = arith.constant 0 : index
      %c0_51 = arith.constant 0 : index
      %124 = vector.load %arg12[%c0_50, %c0_51] : memref<2x1024xf32, #tpu.memory_space<vmem>>, vector<2x1024xf32>
      tpu.vector_store %arg12[%c0_50, %c0_51], %123 {strides = array<i32>} : memref<2x1024xf32, #tpu.memory_space<vmem>>, vector<2x1024xf32>,
    } else {
    }
    %c3_i32_12 = arith.constant 3 : i32
    %26 = arith.cmpi eq, %arg0, %c3_i32_12 : i32
    %27 = arith.extui %26 : i1 to i32
    %c0_i32_13 = arith.constant 0 : i32
    %28 = arith.cmpi ne, %27, %c0_i32_13 : i32
    scf.if %28 {
      %29 = arith.mulf %22, %22 : vector<2x1024xf32>
      %cst_14 = arith.constant dense<0.000000e+00> : vector<2xf32>
      %30 = vector.multi_reduction <add>, %29, %cst_14 [1] : vector<2x1024xf32> to vector<2xf32>
      %31 = vector.shape_cast %30 : vector<2xf32> to vector<2x1xf32>
      %cst_15 = arith.constant 1.000000e-24 : f32
      %32 = vector.broadcast %cst_15 : f32 to vector<2x1xf32>
      %33 = arith.maximumf %31, %32 : vector<2x1xf32>
      %34 = math.rsqrt %33 : vector<2x1xf32>
      %35 = vector.broadcast %34 : vector<2x1xf32> to vector<2x1024xf32>
      %36 = arith.mulf %22, %35 : vector<2x1024xf32>
      %c0_16 = arith.constant 0 : index
      %c0_17 = arith.constant 0 : index
      %37 = vector.load %arg11[%c0_16, %c0_17] : memref<2x1024xf32, #tpu.memory_space<vmem>>, vector<2x1024xf32>
      tpu.vector_store %arg11[%c0_16, %c0_17], %36 {strides = array<i32>} : memref<2x1024xf32, #tpu.memory_space<vmem>>, vector<2x1024xf32>,
    } else {
    }
    return
  }
  func.func @transform_0(%arg0: i32) -> (i32, i32) {
    %c0_i32 = arith.constant 0 : i32
    %c0_i32_0 = arith.constant 0 : i32
    %c0_i32_1 = arith.constant 0 : i32
    return %c0_i32, %c0_i32_0 : i32, i32
  }
  func.func @transform_1(%arg0: i32) -> (i32, i32) {
    %c0_i32 = arith.constant 0 : i32
    %c0_i32_0 = arith.constant 0 : i32
    %c0_i32_1 = arith.constant 0 : i32
    return %c0_i32, %c0_i32_0 : i32, i32
  }
  func.func @transform_2(%arg0: i32) -> (i32, i32) {
    %c0_i32 = arith.constant 0 : i32
    %c0_i32_0 = arith.constant 0 : i32
    %c0_i32_1 = arith.constant 0 : i32
    return %c0_i32, %c0_i32_0 : i32, i32
  }
  func.func @transform_3(%arg0: i32) -> (i32, i32, i32) {
    %c0_i32 = arith.constant 0 : i32
    %c0_i32_0 = arith.constant 0 : i32
    %c0_i32_1 = arith.constant 0 : i32
    return %arg0, %c0_i32, %c0_i32_0 : i32, i32, i32
  }
  func.func @transform_4(%arg0: i32) -> (i32, i32) {
    %c0_i32 = arith.constant 0 : i32
    %c0_i32_0 = arith.constant 0 : i32
    %c0_i32_1 = arith.constant 0 : i32
    return %c0_i32, %c0_i32_0 : i32, i32
  }
  func.func @transform_5(%arg0: i32) -> (i32, i32) {
    %c0_i32 = arith.constant 0 : i32
    %c0_i32_0 = arith.constant 0 : i32
    %c0_i32_1 = arith.constant 0 : i32
    return %c0_i32, %c0_i32_0 : i32, i32
  }
  func.func @transform_6(%arg0: i32) -> (i32, i32, i32) {
    %c0_i32 = arith.constant 0 : i32
    %c0_i32_0 = arith.constant 0 : i32
    %c0_i32_1 = arith.constant 0 : i32
    %c0_i32_2 = arith.constant 0 : i32
    return %c0_i32, %c0_i32_0, %c0_i32_1 : i32, i32, i32
  }
  func.func @transform_7(%arg0: i32) -> (i32, i32, i32) {
    %c0_i32 = arith.constant 0 : i32
    %c0_i32_0 = arith.constant 0 : i32
    %c0_i32_1 = arith.constant 0 : i32
    %c0_i32_2 = arith.constant 0 : i32
    return %c0_i32, %c0_i32_0, %c0_i32_1 : i32, i32, i32
  }
  func.func @transform_8(%arg0: i32) -> (i32, i32, i32) {
    %c0_i32 = arith.constant 0 : i32
    %c0_i32_0 = arith.constant 0 : i32
    %c0_i32_1 = arith.constant 0 : i32
    %c0_i32_2 = arith.constant 0 : i32
    return %c0_i32, %c0_i32_0, %c0_i32_1 : i32, i32, i32
  }
  func.func @transform_9(%arg0: i32) -> (i32, i32) {
    %c0_i32 = arith.constant 0 : i32
    %c0_i32_0 = arith.constant 0 : i32
    %c0_i32_1 = arith.constant 0 : i32
    return %c0_i32, %c0_i32_0 : i32, i32
  }
  func.func @transform_10(%arg0: i32) -> (i32, i32) {
    %c0_i32 = arith.constant 0 : i32
    %c0_i32_0 = arith.constant 0 : i32
    %c0_i32_1 = arith.constant 0 : i32
    return %c0_i32, %c0_i32_0 : i32, i32
  }
}

</mosaic_0001>

<llo_original>
// kernel: model_forward.1
$region0: #{model_forward.1}
  #allocation0 [shape = 'u32[]', space=smem, size = 0x4, offset = 0x4, fixed_abs, tag = 'smem constant byte address 0x4 - core index']
  #allocation1 [shape = 'u32[144,128]{1,0:T(1,128)}', space=vmem, size = 0x12000, scoped, tag = 'internal scratch']
  #allocation2 [shape = 'f32[2,1024]{1,0:T(2,128)}', space=vmem, size = 0x2000, scoped, tag = 'scratch operand']
  %s0 = inlined_call_operand.vmem [shape: f32[2,4], index: 0, kind: input, shape index: {}]
  %s1 = inlined_call_operand.hbm [shape: f32[4,1024], index: 1, kind: input, shape index: {}]
  %s2 = inlined_call_operand.hbm [shape: f32[1,1024], index: 2, kind: input, shape index: {}]
  %s3 = inlined_call_operand.hbm [shape: s8[8,1024,1024], index: 3, kind: input, shape index: {}]
  %s4 = inlined_call_operand.hbm [shape: bf16[1024,128], index: 4, kind: input, shape index: {}]
  %s5 = inlined_call_operand.hbm [shape: bf16[128,1024], index: 5, kind: input, shape index: {}]
  %s6 = inlined_call_operand.hbm [shape: f32[2,1,1024], index: 6, kind: input, shape index: {}]
  %s7 = inlined_call_operand.hbm [shape: f32[8,1,1024], index: 7, kind: input, shape index: {}]
  %s8 = inlined_call_operand.hbm [shape: f32[8,1,1024], index: 8, kind: input, shape index: {}]
  %s9 = inlined_call_operand.hbm [shape: f32[2,1024], index: 9, kind: output, shape index: {0}]
  %s10 = inlined_call_operand.hbm [shape: f32[2,1024], index: 10, kind: output, shape index: {1}]
  %11 = xla_tuple %s9, %s10
  %s12 = sld [smem:[#allocation0]]
  $region125: #{model_forward.1} parent=0
    _
  %s14 = ssub.s32 1, %s12
  %s15 = scalar_select 0, %s14, %s12
  $region1: #{model_forward.1} parent=0
    #allocation3 [shape = 'u8[16384]{0}', space=vmem, size = 0x4000, scoped, tag = 'input window, operand 1, single buffered']
    #allocation4 [shape = 's32[2]{0}', space=sflag, size = 0x8, scoped, tag = 'scoped memory for model_forward.1']
    #allocation5 [shape = 's32[2]{0}', space=sflag, size = 0x8, scoped, tag = 'scoped memory for model_forward.1']
    #allocation6 [shape = 'u8[4096]{0}', space=vmem, size = 0x1000, scoped, tag = 'input window, operand 2, single buffered']
    #allocation7 [shape = 's32[1]{0}', space=sflag, size = 0x4, scoped, tag = 'scoped memory for model_forward.1']
    #allocation8 [shape = 'u8[4194304]{0}', space=vmem, size = 0x400000, scoped, tag = 'input window, operand 3']
    #allocation9 [shape = 'u8[262144]{0}', space=vmem, size = 0x40000, scoped, tag = 'input window, operand 4, single buffered']
    #allocation10 [shape = 'u8[262144]{0}', space=vmem, size = 0x40000, scoped, tag = 'input window, operand 5, single buffered']
    #allocation11 [shape = 's32[1]{0}', space=sflag, size = 0x4, scoped, tag = 'scoped memory for model_forward.1']
    #allocation12 [shape = 'u8[8192]{0}', space=vmem, size = 0x2000, scoped, tag = 'input window, operand 6, single buffered']
    #allocation13 [shape = 'u8[32768]{0}', space=vmem, size = 0x8000, scoped, tag = 'input window, operand 7, single buffered']
    #allocation14 [shape = 's32[1]{0}', space=sflag, size = 0x4, scoped, tag = 'scoped memory for model_forward.1']
    #allocation15 [shape = 'u8[32768]{0}', space=vmem, size = 0x8000, scoped, tag = 'input window, operand 8, single buffered']
    #allocation16 [shape = 'u8[8192]{0}', space=vmem, size = 0x2000, scoped, tag = 'output window, operand 0, single buffered']
    #allocation17 [shape = 'u8[8192]{0}', space=vmem, size = 0x2000, scoped, tag = 'output window, operand 1, single buffered']
    #allocation18 [shape = 's32[1]{0}', space=sflag, size = 0x4, scoped, tag = 'scoped memory for model_forward.1']
    %16 = vsyncpa [#allocation4], 0
    %17 = vsyncpa [#allocation7], 0
    %18 = vsyncpa [#allocation11], 0
    %19 = vsyncpa [#allocation14], 0
    %20 = vsyncpa [#allocation5], 0
    %21 = vsyncpa [#allocation18], 0
    loop: start=0, step=1, limit=6
    $region2: #{model_forward.1} parent=1 // loop_pre_header
      _
    $region3: #{model_forward.1} parent=1 // loop_header
      %s23 = sphi 0, %s27
      %p24 = scmp.ge.s32.totalorder %s23, 6
      %s31 = sphi 0, %s31
      %s33 = sphi 0, %s31
      %s34 = sphi 0, %s33
      %s48 = sphi 0, %s34
      %s52 = sphi 0, %s52
      %s54 = sphi 0, %s52
      %s55 = sphi 0, %s54
      %s69 = sphi 0, %s55
      %s73 = sphi 0, %s73
      %s75 = sphi 0, %s73
      %s76 = sphi 0, %s75
      %s90 = sphi 0, %s76
      %s96 = sphi 0, %s98
      %s99 = sphi 0, %s96
      %s100 = sphi 0, %s99
      %s116 = sphi 0, %s100
      %s120 = sphi 0, %s120
      %s122 = sphi 0, %s120
      %s123 = sphi 0, %s122
      %s137 = sphi 0, %s123
      %s141 = sphi 0, %s141
      %s143 = sphi 0, %s141
      %s144 = sphi 0, %s143
      %s158 = sphi 0, %s144
      %s162 = sphi 0, %s162
      %s164 = sphi 0, %s162
      %s165 = sphi 0, %s164
      %s179 = sphi 0, %s165
      %s183 = sphi 0, %s183
      %s185 = sphi 0, %s183
      %s186 = sphi 0, %s185
      %s200 = sphi 0, %s186
      %s204 = sphi 0, %s204
      %s206 = sphi 0, %s204
      %s207 = sphi 0, %s206
      %s221 = sphi 0, %s207
      %s225 = sphi 0, %s225
      %s227 = sphi 0, %s225
      %s228 = sphi 0, %s227
      %s242 = sphi 0, %s228
      %s246 = sphi 0, %s246
      %s248 = sphi 0, %s246
      %s249 = sphi 0, %s248
      %s263 = sphi 0, %s249
    $region4: #{model_forward.1} parent=1 // loop_header_branch
      %26 = sbr.rel (%p24) target = $region8
    $region5: #{model_forward.1} parent=1 // loop_body
      %s28 = ssub.s32 %s23, 1
      %s29 = ssub.s32 %s23, 2
      %s30 = sadd.s32 %s23, 1
      %s32 = sadd.s32 %s31, 1
      %p35 = scmp.eq.s32.totalorder %s23, 3
      %p36 = scmp.ne.s32.totalorder %s31, %s33
      %p37 = scmp.eq.s32.totalorder %s23, 0
      %p38 = por %p36, %p37
      %p39 = scmp.ne.s32.totalorder %s31, %s33
      %p40 = scmp.eq.s32.totalorder %s28, 3
      %p41 = por %p39, %p40
      %p42 = scmp.ne.s32.totalorder %s33, %s34
      %p43 = scmp.eq.s32.totalorder %s28, 0
      %p44 = por %p42, %p43
      %p45 = scmp.ne.s32.totalorder %s33, %s34
      %p46 = scmp.eq.s32.totalorder %s29, 3
      %p47 = por %p45, %p46
      %p49 = scmp.ne.s32.totalorder %s34, %s48
      %p50 = scmp.eq.s32.totalorder %s29, 0
      %p51 = por %p49, %p50
      %s53 = sadd.s32 %s52, 1
      %p56 = scmp.eq.s32.totalorder %s23, 3
      %p57 = scmp.ne.s32.totalorder %s52, %s54
      %p58 = scmp.eq.s32.totalorder %s23, 0
      %p59 = por %p57, %p58
      %p60 = scmp.ne.s32.totalorder %s52, %s54
      %p61 = scmp.eq.s32.totalorder %s28, 3
      %p62 = por %p60, %p61
      %p63 = scmp.ne.s32.totalorder %s54, %s55
      %p64 = scmp.eq.s32.totalorder %s28, 0
      %p65 = por %p63, %p64
      %p66 = scmp.ne.s32.totalorder %s54, %s55
      %p67 = scmp.eq.s32.totalorder %s29, 3
      %p68 = por %p66, %p67
      %p70 = scmp.ne.s32.totalorder %s55, %s69
      %p71 = scmp.eq.s32.totalorder %s29, 0
      %p72 = por %p70, %p71
      %s74 = sadd.s32 %s73, 1
      %p77 = scmp.eq.s32.totalorder %s23, 3
      %p78 = scmp.ne.s32.totalorder %s73, %s75
      %p79 = scmp.eq.s32.totalorder %s23, 0
      %p80 = por %p78, %p79
      %p81 = scmp.ne.s32.totalorder %s73, %s75
      %p82 = scmp.eq.s32.totalorder %s28, 3
      %p83 = por %p81, %p82
      %p84 = scmp.ne.s32.totalorder %s75, %s76
      %p85 = scmp.eq.s32.totalorder %s28, 0
      %p86 = por %p84, %p85
      %p87 = scmp.ne.s32.totalorder %s75, %s76
      %p88 = scmp.eq.s32.totalorder %s29, 3
      %p89 = por %p87, %p88
      %p91 = scmp.ne.s32.totalorder %s76, %s90
      %p92 = scmp.eq.s32.totalorder %s29, 0
      %p93 = por %p91, %p92
      %s94 = ssub.s32 %s23, %s30
      %p95 = scmp.eq.s32.totalorder %s94, 0
      %s97 = sadd.s32 %s96, 1
      %s98 = scalar_select %p95, %s96, %s97
      %p101 = pneg %p95
      %p102 = scmp.eq.s32.totalorder %s23, 3
      %p103 = por %p101, %p102
      %p104 = scmp.ne.s32.totalorder %s96, %s99
      %p105 = scmp.eq.s32.totalorder %s23, 0
      %p106 = por %p104, %p105
      %p107 = scmp.ne.s32.totalorder %s96, %s99
      %p108 = scmp.eq.s32.totalorder %s28, 3
      %p109 = por %p107, %p108
      %p110 = scmp.ne.s32.totalorder %s99, %s100
      %p111 = scmp.eq.s32.totalorder %s28, 0
      %p112 = por %p110, %p111
      %p113 = scmp.ne.s32.totalorder %s99, %s100
      %p114 = scmp.eq.s32.totalorder %s29, 3
      %p115 = por %p113, %p114
      %p117 = scmp.ne.s32.totalorder %s100, %s116
      %p118 = scmp.eq.s32.totalorder %s29, 0
      %p119 = por %p117, %p118
      %s121 = sadd.s32 %s120, 1
      %p124 = scmp.eq.s32.totalorder %s23, 3
      %p125 = scmp.ne.s32.totalorder %s120, %s122
      %p126 = scmp.eq.s32.totalorder %s23, 0
      %p127 = por %p125, %p126
      %p128 = scmp.ne.s32.totalorder %s120, %s122
      %p129 = scmp.eq.s32.totalorder %s28, 3
      %p130 = por %p128, %p129
      %p131 = scmp.ne.s32.totalorder %s122, %s123
      %p132 = scmp.eq.s32.totalorder %s28, 0
      %p133 = por %p131, %p132
      %p134 = scmp.ne.s32.totalorder %s122, %s123
      %p135 = scmp.eq.s32.totalorder %s29, 3
      %p136 = por %p134, %p135
      %p138 = scmp.ne.s32.totalorder %s123, %s137
      %p139 = scmp.eq.s32.totalorder %s29, 0
      %p140 = por %p138, %p139
      %s142 = sadd.s32 %s141, 1
      %p145 = scmp.eq.s32.totalorder %s23, 3
      %p146 = scmp.ne.s32.totalorder %s141, %s143
      %p147 = scmp.eq.s32.totalorder %s23, 0
      %p148 = por %p146, %p147
      %p149 = scmp.ne.s32.totalorder %s141, %s143
      %p150 = scmp.eq.s32.totalorder %s28, 3
      %p151 = por %p149, %p150
      %p152 = scmp.ne.s32.totalorder %s143, %s144
      %p153 = scmp.eq.s32.totalorder %s28, 0
      %p154 = por %p152, %p153
      %p155 = scmp.ne.s32.totalorder %s143, %s144
      %p156 = scmp.eq.s32.totalorder %s29, 3
      %p157 = por %p155, %p156
      %p159 = scmp.ne.s32.totalorder %s144, %s158
      %p160 = scmp.eq.s32.totalorder %s29, 0
      %p161 = por %p159, %p160
      %s163 = sadd.s32 %s162, 1
      %p166 = scmp.eq.s32.totalorder %s23, 3
      %p167 = scmp.ne.s32.totalorder %s162, %s164
      %p168 = scmp.eq.s32.totalorder %s23, 0
      %p169 = por %p167, %p168
      %p170 = scmp.ne.s32.totalorder %s162, %s164
      %p171 = scmp.eq.s32.totalorder %s28, 3
      %p172 = por %p170, %p171
      %p173 = scmp.ne.s32.totalorder %s164, %s165
      %p174 = scmp.eq.s32.totalorder %s28, 0
      %p175 = por %p173, %p174
      %p176 = scmp.ne.s32.totalorder %s164, %s165
      %p177 = scmp.eq.s32.totalorder %s29, 3
      %p178 = por %p176, %p177
      %p180 = scmp.ne.s32.totalorder %s165, %s179
      %p181 = scmp.eq.s32.totalorder %s29, 0
      %p182 = por %p180, %p181
      %s184 = sadd.s32 %s183, 1
      %p187 = scmp.eq.s32.totalorder %s23, 3
      %p188 = scmp.ne.s32.totalorder %s183, %s185
      %p189 = scmp.eq.s32.totalorder %s23, 0
      %p190 = por %p188, %p189
      %p191 = scmp.ne.s32.totalorder %s183, %s185
      %p192 = scmp.eq.s32.totalorder %s28, 3
      %p193 = por %p191, %p192
      %p194 = scmp.ne.s32.totalorder %s185, %s186
      %p195 = scmp.eq.s32.totalorder %s28, 0
      %p196 = por %p194, %p195
      %p197 = scmp.ne.s32.totalorder %s185, %s186
      %p198 = scmp.eq.s32.totalorder %s29, 3
      %p199 = por %p197, %p198
      %p201 = scmp.ne.s32.totalorder %s186, %s200
      %p202 = scmp.eq.s32.totalorder %s29, 0
      %p203 = por %p201, %p202
      %s205 = sadd.s32 %s204, 1
      %p208 = scmp.eq.s32.totalorder %s23, 3
      %p209 = scmp.ne.s32.totalorder %s204, %s206
      %p210 = scmp.eq.s32.totalorder %s23, 0
      %p211 = por %p209, %p210
      %p212 = scmp.ne.s32.totalorder %s204, %s206
      %p213 = scmp.eq.s32.totalorder %s28, 3
      %p214 = por %p212, %p213
      %p215 = scmp.ne.s32.totalorder %s206, %s207
      %p216 = scmp.eq.s32.totalorder %s28, 0
      %p217 = por %p215, %p216
      %p218 = scmp.ne.s32.totalorder %s206, %s207
      %p219 = scmp.eq.s32.totalorder %s29, 3
      %p220 = por %p218, %p219
      %p222 = scmp.ne.s32.totalorder %s207, %s221
      %p223 = scmp.eq.s32.totalorder %s29, 0
      %p224 = por %p222, %p223
      %s226 = sadd.s32 %s225, 1
      %p229 = scmp.eq.s32.totalorder %s23, 3
      %p230 = scmp.ne.s32.totalorder %s225, %s227
      %p231 = scmp.eq.s32.totalorder %s23, 0
      %p232 = por %p230, %p231
      %p233 = scmp.ne.s32.totalorder %s225, %s227
      %p234 = scmp.eq.s32.totalorder %s28, 3
      %p235 = por %p233, %p234
      %p236 = scmp.ne.s32.totalorder %s227, %s228
      %p237 = scmp.eq.s32.totalorder %s28, 0
      %p238 = por %p236, %p237
      %p239 = scmp.ne.s32.totalorder %s227, %s228
      %p240 = scmp.eq.s32.totalorder %s29, 3
      %p241 = por %p239, %p240
      %p243 = scmp.ne.s32.totalorder %s228, %s242
      %p244 = scmp.eq.s32.totalorder %s29, 0
      %p245 = por %p243, %p244
      %s247 = sadd.s32 %s246, 1
      %p250 = scmp.eq.s32.totalorder %s23, 3
      %p251 = scmp.ne.s32.totalorder %s246, %s248
      %p252 = scmp.eq.s32.totalorder %s23, 0
      %p253 = por %p251, %p252
      %p254 = scmp.ne.s32.totalorder %s246, %s248
      %p255 = scmp.eq.s32.totalorder %s28, 3
      %p256 = por %p254, %p255
      %p257 = scmp.ne.s32.totalorder %s248, %s249
      %p258 = scmp.eq.s32.totalorder %s28, 0
      %p259 = por %p257, %p258
      %p260 = scmp.ne.s32.totalorder %s248, %s249
      %p261 = scmp.eq.s32.totalorder %s29, 3
      %p262 = por %p260, %p261
      %p264 = scmp.ne.s32.totalorder %s249, %s263
      %p265 = scmp.eq.s32.totalorder %s29, 0
      %p266 = por %p264, %p265
      %p267 = scmp.le.s32.totalorder 1, %s23
      %p268 = scmp.lt.s32.totalorder %s23, 5
      %p269 = pnand %p267, %p268
      %p270 = pneg %p269
      // Predicated region
      $region9: #{model_forward.1} parent=5 // pred_check
        _
      $region10: #{model_forward.1} parent=5 // pred_check_branch
        %272 = sbr.rel (%p269) target = $region12
      $region11: #{model_forward.1} parent=5 // pred_region
        %s273 = ssub.s32 %s23, 1
        // Predicated region
        $region13: #{model_forward.1} parent=11 // pred_check
          %p274 = pneg %p44
        $region14: #{model_forward.1} parent=11 // pred_check_branch
          %276 = sbr.rel (%p274) target = $region16
        $region15: #{model_forward.1} parent=11 // pred_region
          _
        $region16: #{model_forward.1} parent=11 // pred_fallthru
          _
        // Predicated region
        $region17: #{model_forward.1} parent=11 // pred_check
          %p277 = pneg %p65
        $region18: #{model_forward.1} parent=11 // pred_check_branch
          %279 = sbr.rel (%p277) target = $region20
        $region19: #{model_forward.1} parent=11 // pred_region
          %s281 = ssub.s32 512, 512
          %282 = vsyncadd [#allocation4], %s281
          %s284 = sshll.u32 [#allocation3], 4
          %s285 = int_to_ptr.vmem [resolvable:$true] %s284
          %287 = dma.hbm_to_vmem [thread:$0]  %s1, 512, %s285, [#allocation4]
        $region20: #{model_forward.1} parent=11 // pred_fallthru
          _
        // Predicated region
        $region21: #{model_forward.1} parent=11 // pred_check
          %p288 = pneg %p86
        $region22: #{model_forward.1} parent=11 // pred_check_branch
          %290 = sbr.rel (%p288) target = $region24
        $region23: #{model_forward.1} parent=11 // pred_region
          %s292 = ssub.s32 128, 128
          %293 = vsyncadd [#allocation7], %s292
          %s295 = sshll.u32 [#allocation6], 4
          %s296 = int_to_ptr.vmem [resolvable:$true] %s295
          %298 = dma.hbm_to_vmem [thread:$0]  %s2, 128, %s296, [#allocation7]
        $region24: #{model_forward.1} parent=11 // pred_fallthru
          _
        // Predicated region
        $region25: #{model_forward.1} parent=11 // pred_check
          %p299 = pneg %p133
        $region26: #{model_forward.1} parent=11 // pred_check_branch
          %301 = sbr.rel (%p299) target = $region28
        $region27: #{model_forward.1} parent=11 // pred_region
          %s303 = ssub.s32 8192, 8192
          %304 = vsyncadd [#allocation7], %s303
          %s305 = sshll.u32 [#allocation9], 4
          %s306 = int_to_ptr.vmem [resolvable:$true] %s305
          %311 = dma.hbm_to_vmem [thread:$0]  %s4, 8192, %s306, [#allocation7], 64, 64, 4
        $region28: #{model_forward.1} parent=11 // pred_fallthru
          _
        // Predicated region
        $region29: #{model_forward.1} parent=11 // pred_check
          %p312 = pneg %p154
        $region30: #{model_forward.1} parent=11 // pred_check_branch
          %314 = sbr.rel (%p312) target = $region32
        $region31: #{model_forward.1} parent=11 // pred_region
          %s316 = ssub.s32 8192, 8192
          %317 = vsyncadd [#allocation11], %s316
          %s318 = sshll.u32 [#allocation10], 4
          %s319 = int_to_ptr.vmem [resolvable:$true] %s318
          %324 = dma.hbm_to_vmem [thread:$0]  %s5, 8192, %s319, [#allocation11], 512, 512, 32
        $region32: #{model_forward.1} parent=11 // pred_fallthru
          _
        // Predicated region
        $region33: #{model_forward.1} parent=11 // pred_check
          %p325 = pneg %p175
        $region34: #{model_forward.1} parent=11 // pred_check_branch
          %327 = sbr.rel (%p325) target = $region36
        $region35: #{model_forward.1} parent=11 // pred_region
          %s329 = ssub.s32 256, 256
          %330 = vsyncadd [#allocation11], %s329
          %s331 = sshll.u32 [#allocation12], 4
          %s332 = int_to_ptr.vmem [resolvable:$true] %s331
          %337 = dma.hbm_to_vmem [thread:$0]  %s6, 256, %s332, [#allocation11], 128, 128, 8
        $region36: #{model_forward.1} parent=11 // pred_fallthru
          _
        // Predicated region
        $region37: #{model_forward.1} parent=11 // pred_check
          %p338 = pneg %p196
        $region38: #{model_forward.1} parent=11 // pred_check_branch
          %340 = sbr.rel (%p338) target = $region40
        $region39: #{model_forward.1} parent=11 // pred_region
          %s342 = ssub.s32 1024, 1024
          %343 = vsyncadd [#allocation14], %s342
          %s344 = sshll.u32 [#allocation13], 4
          %s345 = int_to_ptr.vmem [resolvable:$true] %s344
          %350 = dma.hbm_to_vmem [thread:$0]  %s7, 1024, %s345, [#allocation14], 128, 128, 8
        $region40: #{model_forward.1} parent=11 // pred_fallthru
          _
        // Predicated region
        $region41: #{model_forward.1} parent=11 // pred_check
          %p351 = pneg %p217
        $region42: #{model_forward.1} parent=11 // pred_check_branch
          %353 = sbr.rel (%p351) target = $region44
        $region43: #{model_forward.1} parent=11 // pred_region
          %s355 = ssub.s32 1024, 1024
          %356 = vsyncadd [#allocation14], %s355
          %s357 = sshll.u32 [#allocation15], 4
          %s358 = int_to_ptr.vmem [resolvable:$true] %s357
          %363 = dma.hbm_to_vmem [thread:$0]  %s8, 1024, %s358, [#allocation14], 128, 128, 8
        $region44: #{model_forward.1} parent=11 // pred_fallthru
          _
      $region12: #{model_forward.1} parent=5 // pred_fallthru
        _
      %p364 = scmp.lt.s32.totalorder %s23, 4
      // Predicated region
      $region45: #{model_forward.1} parent=5 // pred_check
        %p365 = pneg %p364
      $region46: #{model_forward.1} parent=5 // pred_check_branch
        %367 = sbr.rel (%p365) target = $region48
      $region47: #{model_forward.1} parent=5 // pred_region
        // Predicated region
        $region49: #{model_forward.1} parent=47 // pred_check
          %p368 = pneg %p106
        $region50: #{model_forward.1} parent=47 // pred_check_branch
          %370 = sbr.rel (%p368) target = $region52
        $region51: #{model_forward.1} parent=47 // pred_region
          %s371 = sand.u32 %s23, 1
          %s372 = scalar_lea.sflag [#allocation4], %s371
          %s373 = sand.u32 %s96, 1
          %s374 = smul.addr %s373, 4096
          %s375 = scalar_lea.vmem [#allocation8], %s374
          %s376 = smul.u32 2, %s23
          %s378 = ssub.s32 65536, 65536
          %379 = vsyncadd %s372, %s378
          %s380 = smul.addr %s376, 256
          %s381 = smul.addr %s380, 128
          %s382 = scalar_lea.hbm %s3, %s381
          %s383 = sshll.u32 %s375, 4
          %s384 = int_to_ptr.vmem [resolvable:$true] %s383
          %389 = dma.hbm_to_vmem [thread:$0]  %s382, 65536, %s384, %s372, 1024, 1024, 64
        $region52: #{model_forward.1} parent=47 // pred_fallthru
          _
      $region48: #{model_forward.1} parent=5 // pred_fallthru
        _
      %p390 = scmp.le.s32.totalorder 1, %s23
      %p391 = scmp.lt.s32.totalorder %s23, 5
      %p392 = pnand %p390, %p391
      %p393 = pneg %p392
      // Predicated region
      $region53: #{model_forward.1} parent=5 // pred_check
        _
      $region54: #{model_forward.1} parent=5 // pred_check_branch
        %395 = sbr.rel (%p392) target = $region56
      $region55: #{model_forward.1} parent=5 // pred_region
        %s396 = ssub.s32 %s23, 1
        // Predicated region
        $region57: #{model_forward.1} parent=55 // pred_check
          %p397 = pneg %p65
        $region58: #{model_forward.1} parent=55 // pred_check_branch
          %399 = sbr.rel (%p397) target = $region60
        $region59: #{model_forward.1} parent=55 // pred_region
          %400 = dma.done [#allocation4], 512
        $region60: #{model_forward.1} parent=55 // pred_fallthru
          _
        // Predicated region
        $region61: #{model_forward.1} parent=55 // pred_check
          %p401 = pneg %p86
        $region62: #{model_forward.1} parent=55 // pred_check_branch
          %403 = sbr.rel (%p401) target = $region64
        $region63: #{model_forward.1} parent=55 // pred_region
          %404 = dma.done [#allocation7], 128
        $region64: #{model_forward.1} parent=55 // pred_fallthru
          _
        %s405 = sand.u32 %s28, 1
        %s406 = scalar_lea.sflag [#allocation4], %s405
        %s407 = sand.u32 %s99, 1
        %s408 = smul.addr %s407, 4096
        %s409 = scalar_lea.vmem [#allocation8], %s408
        // Predicated region
        $region65: #{model_forward.1} parent=55 // pred_check
          %p410 = pneg %p112
        $region66: #{model_forward.1} parent=55 // pred_check_branch
          %412 = sbr.rel (%p410) target = $region68
        $region67: #{model_forward.1} parent=55 // pred_region
          %413 = dma.done %s406, 65536
        $region68: #{model_forward.1} parent=55 // pred_fallthru
          _
        // Predicated region
        $region69: #{model_forward.1} parent=55 // pred_check
          %p414 = pneg %p133
        $region70: #{model_forward.1} parent=55 // pred_check_branch
          %416 = sbr.rel (%p414) target = $region72
        $region71: #{model_forward.1} parent=55 // pred_region
          %417 = dma.done [#allocation7], 8192
        $region72: #{model_forward.1} parent=55 // pred_fallthru
          _
        // Predicated region
        $region73: #{model_forward.1} parent=55 // pred_check
          %p418 = pneg %p154
        $region74: #{model_forward.1} parent=55 // pred_check_branch
          %420 = sbr.rel (%p418) target = $region76
        $region75: #{model_forward.1} parent=55 // pred_region
          %421 = dma.done [#allocation11], 8192
        $region76: #{model_forward.1} parent=55 // pred_fallthru
          _
        // Predicated region
        $region77: #{model_forward.1} parent=55 // pred_check
          %p422 = pneg %p175
        $region78: #{model_forward.1} parent=55 // pred_check_branch
          %424 = sbr.rel (%p422) target = $region80
        $region79: #{model_forward.1} parent=55 // pred_region
          %425 = dma.done [#allocation11], 256
        $region80: #{model_forward.1} parent=55 // pred_fallthru
          _
        // Predicated region
        $region81: #{model_forward.1} parent=55 // pred_check
          %p426 = pneg %p196
        $region82: #{model_forward.1} parent=55 // pred_check_branch
          %428 = sbr.rel (%p426) target = $region84
        $region83: #{model_forward.1} parent=55 // pred_region
          %429 = dma.done [#allocation14], 1024
        $region84: #{model_forward.1} parent=55 // pred_fallthru
          _
        // Predicated region
        $region85: #{model_forward.1} parent=55 // pred_check
          %p430 = pneg %p217
        $region86: #{model_forward.1} parent=55 // pred_check_branch
          %432 = sbr.rel (%p430) target = $region88
        $region87: #{model_forward.1} parent=55 // pred_region
          %433 = dma.done [#allocation14], 1024
        $region88: #{model_forward.1} parent=55 // pred_fallthru
          _
        %p434 = pneg %p44
        %p435 = pneg %p41
        %p436 = pneg %p65
        %p437 = pneg %p62
        %p438 = pneg %p86
        %p439 = pneg %p83
        %s440 = sand.u32 %s28, 1
        %s441 = scalar_lea.sflag [#allocation4], %s440
        %s442 = sand.u32 %s99, 1
        %s443 = smul.addr %s442, 4096
        %s444 = scalar_lea.vmem [#allocation8], %s443
        %p445 = pneg %p112
        %p446 = pneg %p109
        %p447 = pneg %p133
        %p448 = pneg %p130
        %p449 = pneg %p154
        %p450 = pneg %p151
        %p451 = pneg %p175
        %p452 = pneg %p172
        %p453 = pneg %p196
        %p454 = pneg %p193
        %p455 = pneg %p217
        %p456 = pneg %p214
        %p457 = pneg %p238
        %p458 = pneg %p235
        %p459 = pneg %p259
        %p460 = pneg %p256
        %s461 = smul.u32 2, %s28
        %p463 = scmp.eq.s32.totalorder %s28, 0
        // Predicated region
        $region89: #{model_forward.1} parent=55 // pred_check
          %p464 = pneg %p463
        $region90: #{model_forward.1} parent=55 // pred_check_branch
          %466 = sbr.rel (%p464) target = $region92
        $region91: #{model_forward.1} parent=55 // pred_region
          %v467 = vld [vmem:[%s0] sm:$0x3]
          %v468 = vld [vmem:[#allocation3] sm:$0xff]
          %v469 = vld [vmem:[#allocation3 + $0x8] sm:$0xff]
          %v470 = vld [vmem:[#allocation3 + $0x10] sm:$0xff]
          %v471 = vld [vmem:[#allocation3 + $0x18] sm:$0xff]
          %v472 = vld [vmem:[#allocation6] sm:$0xff]
          %v474 = vlaneseq
          %v475 = vshrl.u32 %v474, 7
          %v476 = vsub.s32 0, %v475
          %v477 = vrot.slane %v472, %v476
          %v478 = vlaneseq
          %v479 = vshrl.u32 %v478, 7
          %v480 = vsub.s32 1, %v479
          %v481 = vrot.slane %v472, %v480
          %v482 = vlaneseq
          %v483 = vshrl.u32 %v482, 7
          %v484 = vsub.s32 2, %v483
          %v485 = vrot.slane %v472, %v484
          %v486 = vlaneseq
          %v487 = vshrl.u32 %v486, 7
          %v488 = vsub.s32 3, %v487
          %v489 = vrot.slane %v472, %v488
          %v490 = vlaneseq
          %v491 = vshrl.u32 %v490, 7
          %v492 = vsub.s32 4, %v491
          %v493 = vrot.slane %v472, %v492
          %v494 = vlaneseq
          %v495 = vshrl.u32 %v494, 7
          %v496 = vsub.s32 5, %v495
          %v497 = vrot.slane %v472, %v496
          %v498 = vlaneseq
          %v499 = vshrl.u32 %v498, 7
          %v500 = vsub.s32 6, %v499
          %v501 = vrot.slane %v472, %v500
          %v502 = vlaneseq
          %v503 = vshrl.u32 %v502, 7
          %v504 = vsub.s32 7, %v503
          %v505 = vrot.slane %v472, %v504
          %v518 = vcombine.high %v468, %v468
          %v519 = vcombine.high %v469, %v469
          %v520 = vcombine.high %v470, %v470
          %v521 = vcombine.high %v471, %v471
          %vm522 = vcmask 31744
          %v524 = vsel %vm522, %v467, 0
          %vm526 = vcmask 1043456
          %v527 = vsel %vm526, %v468, 0
          %v529 = vsel %vm526, %v518, 0
          %v531 = vsel %vm526, %v469, 0
          %v533 = vsel %vm526, %v519, 0
          %v535 = vsel %vm526, %v470, 0
          %v537 = vsel %vm526, %v520, 0
          %v539 = vsel %vm526, %v471, 0
          %v541 = vsel %vm526, %v521, 0
          %543 = vmatprep.subr.mxu0 %v529
          %544 = vmatpush1.msra.mxu0 %v527
          %545 = vmatprep.subr.mxu0 0.0
          %546 = vmatpush1.msra.mxu0 0.0
          %547 = vmatprep.subr.mxu0 0.0
          %548 = vmatpush1.msra.mxu0 0.0
          %549 = vmatprep.subr.mxu0 0.0
          %550 = vmatpush1.msra.mxu0 0.0
          %551 = vmatprep.subr.mxu0 0.0
          %552 = vmatpush1.msra.mxu0 0.0
          %553 = vmatprep.subr.mxu0 0.0
          %554 = vmatpush1.msra.mxu0 0.0
          %555 = vmatprep.subr.mxu0 0.0
          %556 = vmatpush1.msra.mxu0 0.0
          %557 = vmatprep.subr.mxu0 0.0
          %558 = vmatpush1.msra.mxu0 0.0
          %559 = vmatprep.subr.mxu0 0.0
          %560 = vmatpush1.msra.mxu0 0.0
          %561 = vmatprep.subr.mxu0 0.0
          %562 = vmatpush1.msra.mxu0 0.0
          %563 = vmatprep.subr.mxu0 0.0
          %564 = vmatpush1.msra.mxu0 0.0
          %565 = vmatprep.subr.mxu0 0.0
          %566 = vmatpush1.msra.mxu0 0.0
          %567 = vmatprep.subr.mxu0 0.0
          %568 = vmatpush1.msra.mxu0 0.0
          %569 = vmatprep.subr.mxu0 0.0
          %570 = vmatpush1.msra.mxu0 0.0
          %571 = vmatprep.subr.mxu0 0.0
          %572 = vmatpush1.msra.mxu0 0.0
          %573 = vmatprep.subr.mxu0 0.0
          %574 = vmatpush1.msra.mxu0 0.0
          %575 = vmatprep.subr.mxu0 0.0
          %576 = vmatpush1.msra.mxu0 0.0
          %577 = vmatprep.subr.mxu0 0.0
          %578 = vmatpush1.msra.mxu0 0.0
          %579 = vmatprep.subr.mxu0 0.0
          %580 = vmatpush1.msra.mxu0 0.0
          %581 = vmatprep.subr.mxu0 0.0
          %582 = vmatpush1.msra.mxu0 0.0
          %583 = vmatprep.subr.mxu0 0.0
          %584 = vmatpush1.msra.mxu0 0.0
          %585 = vmatprep.subr.mxu0 0.0
          %586 = vmatpush1.msra.mxu0 0.0
          %587 = vmatprep.subr.mxu0 0.0
          %588 = vmatpush1.msra.mxu0 0.0
          %589 = vmatprep.subr.mxu0 0.0
          %590 = vmatpush1.msra.mxu0 0.0
          %591 = vmatprep.subr.mxu0 0.0
          %592 = vmatpush1.msra.mxu0 0.0
          %593 = vmatprep.subr.mxu0 0.0
          %594 = vmatpush1.msra.mxu0 0.0
          %595 = vmatprep.subr.mxu0 0.0
          %596 = vmatpush1.msra.mxu0 0.0
          %597 = vmatprep.subr.mxu0 0.0
          %598 = vmatpush1.msra.mxu0 0.0
          %599 = vmatprep.subr.mxu0 0.0
          %600 = vmatpush1.msra.mxu0 0.0
          %601 = vmatprep.subr.mxu0 0.0
          %602 = vmatpush1.msra.mxu0 0.0
          %603 = vmatprep.subr.mxu0 0.0
          %604 = vmatpush1.msra.mxu0 0.0
          %605 = vmatprep.subr.mxu0 0.0
          %606 = vmatpush1.msra.mxu0 0.0
          %607 = vmatprep.mubr.f32.mxu0 0.0
          %608 = vmatmul.mubr.f32.gmra.mrb[0].mxu0 %v524
          %v609 = vpop.f32.mrb[0].mxu0
          %v610 = vadd.f32 %v477, %v609
          %v611 = vpop.f32.mrb[0].mxu0
          %v612 = vadd.f32 %v481, %v611
          %613 = vdwg.mxu0
          %614 = vmatprep.subr.mxu0 %v533
          %615 = vmatpush1.msra.mxu0 %v531
          %616 = vmatprep.subr.mxu0 0.0
          %617 = vmatpush1.msra.mxu0 0.0
          %618 = vmatprep.subr.mxu0 0.0
          %619 = vmatpush1.msra.mxu0 0.0
          %620 = vmatprep.subr.mxu0 0.0
          %621 = vmatpush1.msra.mxu0 0.0
          %622 = vmatprep.subr.mxu0 0.0
          %623 = vmatpush1.msra.mxu0 0.0
          %624 = vmatprep.subr.mxu0 0.0
          %625 = vmatpush1.msra.mxu0 0.0
          %626 = vmatprep.subr.mxu0 0.0
          %627 = vmatpush1.msra.mxu0 0.0
          %628 = vmatprep.subr.mxu0 0.0
          %629 = vmatpush1.msra.mxu0 0.0
          %630 = vmatprep.subr.mxu0 0.0
          %631 = vmatpush1.msra.mxu0 0.0
          %632 = vmatprep.subr.mxu0 0.0
          %633 = vmatpush1.msra.mxu0 0.0
          %634 = vmatprep.subr.mxu0 0.0
          %635 = vmatpush1.msra.mxu0 0.0
          %636 = vmatprep.subr.mxu0 0.0
          %637 = vmatpush1.msra.mxu0 0.0
          %638 = vmatprep.subr.mxu0 0.0
          %639 = vmatpush1.msra.mxu0 0.0
          %640 = vmatprep.subr.mxu0 0.0
          %641 = vmatpush1.msra.mxu0 0.0
          %642 = vmatprep.subr.mxu0 0.0
          %643 = vmatpush1.msra.mxu0 0.0
          %644 = vmatprep.subr.mxu0 0.0
          %645 = vmatpush1.msra.mxu0 0.0
          %646 = vmatprep.subr.mxu0 0.0
          %647 = vmatpush1.msra.mxu0 0.0
          %648 = vmatprep.subr.mxu0 0.0
          %649 = vmatpush1.msra.mxu0 0.0
          %650 = vmatprep.subr.mxu0 0.0
          %651 = vmatpush1.msra.mxu0 0.0
          %652 = vmatprep.subr.mxu0 0.0
          %653 = vmatpush1.msra.mxu0 0.0
          %654 = vmatprep.subr.mxu0 0.0
          %655 = vmatpush1.msra.mxu0 0.0
          %656 = vmatprep.subr.mxu0 0.0
          %657 = vmatpush1.msra.mxu0 0.0
          %658 = vmatprep.subr.mxu0 0.0
          %659 = vmatpush1.msra.mxu0 0.0
          %660 = vmatprep.subr.mxu0 0.0
          %661 = vmatpush1.msra.mxu0 0.0
          %662 = vmatprep.subr.mxu0 0.0
          %663 = vmatpush1.msra.mxu0 0.0
          %664 = vmatprep.subr.mxu0 0.0
          %665 = vmatpush1.msra.mxu0 0.0
          %666 = vmatprep.subr.mxu0 0.0
          %667 = vmatpush1.msra.mxu0 0.0
          %668 = vmatprep.subr.mxu0 0.0
          %669 = vmatpush1.msra.mxu0 0.0
          %670 = vmatprep.subr.mxu0 0.0
          %671 = vmatpush1.msra.mxu0 0.0
          %672 = vmatprep.subr.mxu0 0.0
          %673 = vmatpush1.msra.mxu0 0.0
          %674 = vmatprep.subr.mxu0 0.0
          %675 = vmatpush1.msra.mxu0 0.0
          %676 = vmatprep.subr.mxu0 0.0
          %677 = vmatpush1.msra.mxu0 0.0
          %678 = vmatprep.mubr.f32.mxu0 0.0
          %679 = vmatmul.mubr.f32.gmra.mrb[0].mxu0 %v524
          %v680 = vpop.f32.mrb[0].mxu0
          %v681 = vadd.f32 %v485, %v680
          %v682 = vpop.f32.mrb[0].mxu0
          %v683 = vadd.f32 %v489, %v682
          %684 = vdwg.mxu0
          %685 = vmatprep.subr.mxu0 %v537
          %686 = vmatpush1.msra.mxu0 %v535
          %687 = vmatprep.subr.mxu0 0.0
          %688 = vmatpush1.msra.mxu0 0.0
          %689 = vmatprep.subr.mxu0 0.0
          %690 = vmatpush1.msra.mxu0 0.0
          %691 = vmatprep.subr.mxu0 0.0
          %692 = vmatpush1.msra.mxu0 0.0
          %693 = vmatprep.subr.mxu0 0.0
          %694 = vmatpush1.msra.mxu0 0.0
          %695 = vmatprep.subr.mxu0 0.0
          %696 = vmatpush1.msra.mxu0 0.0
          %697 = vmatprep.subr.mxu0 0.0
          %698 = vmatpush1.msra.mxu0 0.0
          %699 = vmatprep.subr.mxu0 0.0
          %700 = vmatpush1.msra.mxu0 0.0
          %701 = vmatprep.subr.mxu0 0.0
          %702 = vmatpush1.msra.mxu0 0.0
          %703 = vmatprep.subr.mxu0 0.0
          %704 = vmatpush1.msra.mxu0 0.0
          %705 = vmatprep.subr.mxu0 0.0
          %706 = vmatpush1.msra.mxu0 0.0
          %707 = vmatprep.subr.mxu0 0.0
          %708 = vmatpush1.msra.mxu0 0.0
          %709 = vmatprep.subr.mxu0 0.0
          %710 = vmatpush1.msra.mxu0 0.0
          %711 = vmatprep.subr.mxu0 0.0
          %712 = vmatpush1.msra.mxu0 0.0
          %713 = vmatprep.subr.mxu0 0.0
          %714 = vmatpush1.msra.mxu0 0.0
          %715 = vmatprep.subr.mxu0 0.0
          %716 = vmatpush1.msra.mxu0 0.0
          %717 = vmatprep.subr.mxu0 0.0
          %718 = vmatpush1.msra.mxu0 0.0
          %719 = vmatprep.subr.mxu0 0.0
          %720 = vmatpush1.msra.mxu0 0.0
          %721 = vmatprep.subr.mxu0 0.0
          %722 = vmatpush1.msra.mxu0 0.0
          %723 = vmatprep.subr.mxu0 0.0
          %724 = vmatpush1.msra.mxu0 0.0
          %725 = vmatprep.subr.mxu0 0.0
          %726 = vmatpush1.msra.mxu0 0.0
          %727 = vmatprep.subr.mxu0 0.0
          %728 = vmatpush1.msra.mxu0 0.0
          %729 = vmatprep.subr.mxu0 0.0
          %730 = vmatpush1.msra.mxu0 0.0
          %731 = vmatprep.subr.mxu0 0.0
          %732 = vmatpush1.msra.mxu0 0.0
          %733 = vmatprep.subr.mxu0 0.0
          %734 = vmatpush1.msra.mxu0 0.0
          %735 = vmatprep.subr.mxu0 0.0
          %736 = vmatpush1.msra.mxu0 0.0
          %737 = vmatprep.subr.mxu0 0.0
          %738 = vmatpush1.msra.mxu0 0.0
          %739 = vmatprep.subr.mxu0 0.0
          %740 = vmatpush1.msra.mxu0 0.0
          %741 = vmatprep.subr.mxu0 0.0
          %742 = vmatpush1.msra.mxu0 0.0
          %743 = vmatprep.subr.mxu0 0.0
          %744 = vmatpush1.msra.mxu0 0.0
          %745 = vmatprep.subr.mxu0 0.0
          %746 = vmatpush1.msra.mxu0 0.0
          %747 = vmatprep.subr.mxu0 0.0
          %748 = vmatpush1.msra.mxu0 0.0
          %749 = vmatprep.mubr.f32.mxu0 0.0
          %750 = vmatmul.mubr.f32.gmra.mrb[0].mxu0 %v524
          %v751 = vpop.f32.mrb[0].mxu0
          %v752 = vadd.f32 %v493, %v751
          %v753 = vpop.f32.mrb[0].mxu0
          %v754 = vadd.f32 %v497, %v753
          %755 = vdwg.mxu0
          %756 = vmatprep.subr.mxu0 %v541
          %757 = vmatpush1.msra.mxu0 %v539
          %758 = vmatprep.subr.mxu0 0.0
          %759 = vmatpush1.msra.mxu0 0.0
          %760 = vmatprep.subr.mxu0 0.0
          %761 = vmatpush1.msra.mxu0 0.0
          %762 = vmatprep.subr.mxu0 0.0
          %763 = vmatpush1.msra.mxu0 0.0
          %764 = vmatprep.subr.mxu0 0.0
          %765 = vmatpush1.msra.mxu0 0.0
          %766 = vmatprep.subr.mxu0 0.0
          %767 = vmatpush1.msra.mxu0 0.0
          %768 = vmatprep.subr.mxu0 0.0
          %769 = vmatpush1.msra.mxu0 0.0
          %770 = vmatprep.subr.mxu0 0.0
          %771 = vmatpush1.msra.mxu0 0.0
          %772 = vmatprep.subr.mxu0 0.0
          %773 = vmatpush1.msra.mxu0 0.0
          %774 = vmatprep.subr.mxu0 0.0
          %775 = vmatpush1.msra.mxu0 0.0
          %776 = vmatprep.subr.mxu0 0.0
          %777 = vmatpush1.msra.mxu0 0.0
          %778 = vmatprep.subr.mxu0 0.0
          %779 = vmatpush1.msra.mxu0 0.0
          %780 = vmatprep.subr.mxu0 0.0
          %781 = vmatpush1.msra.mxu0 0.0
          %782 = vmatprep.subr.mxu0 0.0
          %783 = vmatpush1.msra.mxu0 0.0
          %784 = vmatprep.subr.mxu0 0.0
          %785 = vmatpush1.msra.mxu0 0.0
          %786 = vmatprep.subr.mxu0 0.0
          %787 = vmatpush1.msra.mxu0 0.0
          %788 = vmatprep.subr.mxu0 0.0
          %789 = vmatpush1.msra.mxu0 0.0
          %790 = vmatprep.subr.mxu0 0.0
          %791 = vmatpush1.msra.mxu0 0.0
          %792 = vmatprep.subr.mxu0 0.0
          %793 = vmatpush1.msra.mxu0 0.0
          %794 = vmatprep.subr.mxu0 0.0
          %795 = vmatpush1.msra.mxu0 0.0
          %796 = vmatprep.subr.mxu0 0.0
          %797 = vmatpush1.msra.mxu0 0.0
          %798 = vmatprep.subr.mxu0 0.0
          %799 = vmatpush1.msra.mxu0 0.0
          %800 = vmatprep.subr.mxu0 0.0
          %801 = vmatpush1.msra.mxu0 0.0
          %802 = vmatprep.subr.mxu0 0.0
          %803 = vmatpush1.msra.mxu0 0.0
          %804 = vmatprep.subr.mxu0 0.0
          %805 = vmatpush1.msra.mxu0 0.0
          %806 = vmatprep.subr.mxu0 0.0
          %807 = vmatpush1.msra.mxu0 0.0
          %808 = vmatprep.subr.mxu0 0.0
          %809 = vmatpush1.msra.mxu0 0.0
          %810 = vmatprep.subr.mxu0 0.0
          %811 = vmatpush1.msra.mxu0 0.0
          %812 = vmatprep.subr.mxu0 0.0
          %813 = vmatpush1.msra.mxu0 0.0
          %814 = vmatprep.subr.mxu0 0.0
          %815 = vmatpush1.msra.mxu0 0.0
          %816 = vmatprep.subr.mxu0 0.0
          %817 = vmatpush1.msra.mxu0 0.0
          %818 = vmatprep.subr.mxu0 0.0
          %819 = vmatpush1.msra.mxu0 0.0
          %820 = vmatprep.mubr.f32.mxu0 0.0
          %821 = vmatmul.mubr.f32.gmra.mrb[0].mxu0 %v524
          %v822 = vpop.f32.mrb[0].mxu0
          %v823 = vadd.f32 %v501, %v822
          %v824 = vpop.f32.mrb[0].mxu0
          %v825 = vadd.f32 %v505, %v824
          %826 = vdwg.mxu0
          %v827 = vmul.f32 %v610, %v610
          %v828 = vmul.f32 %v612, %v612
          %v829 = vmul.f32 %v681, %v681
          %v830 = vmul.f32 %v683, %v683
          %v831 = vmul.f32 %v752, %v752
          %v832 = vmul.f32 %v754, %v754
          %v833 = vmul.f32 %v823, %v823
          %v834 = vmul.f32 %v825, %v825
          %vm835 = vcmask 1041408
          %v836 = vsel %vm835, %v827, 0.0
          %v837 = vsel %vm835, %v828, 0.0
          %v838 = vadd.f32 %v836, %v837
          %v839 = vsel %vm835, %v829, 0.0
          %v840 = vadd.f32 %v838, %v839
          %v841 = vsel %vm835, %v830, 0.0
          %v842 = vadd.f32 %v840, %v841
          %v843 = vsel %vm835, %v831, 0.0
          %v844 = vadd.f32 %v842, %v843
          %v845 = vsel %vm835, %v832, 0.0
          %v846 = vadd.f32 %v844, %v845
          %v847 = vsel %vm835, %v833, 0.0
          %v848 = vadd.f32 %v846, %v847
          %v849 = vsel %vm835, %v834, 0.0
          %v850 = vadd.f32 %v848, %v849
          %851 = vadd.xlane.f32.xlu0 %v850
          %v852 = vpop.xlane.xlu0 %851
          %v853 = vmax.f32 %v852, 1e-24
          %v854 = vrsqrt.pop %v853
          %v855 = vmul.f32 %v610, %v854
          %v856 = vmul.f32 %v612, %v854
          %v857 = vmul.f32 %v681, %v854
          %v858 = vmul.f32 %v683, %v854
          %v859 = vmul.f32 %v752, %v854
          %v860 = vmul.f32 %v754, %v854
          %v861 = vmul.f32 %v823, %v854
          %v862 = vmul.f32 %v825, %v854
          %v871 = vcombine.low %v855, %v856
          %v872 = vcombine.low %v857, %v858
          %v874 = vunpack.c.l.s4 1983009808
          %v875 = vunpack.c.0.s8 %v874
          %v876 = vlaneseq
          %v877 = vshrl.u32 %v876, 7
          %v878 = vsub.s32 %v875, %v877
          %v879 = vrot.slane %v871, %v878
          %v881 = vunpack.c.l.s4 1983009808
          %v882 = vunpack.c.0.s8 %v881
          %v883 = vlaneseq
          %v884 = vshrl.u32 %v883, 7
          %v885 = vsub.s32 %v882, %v884
          %v886 = vrot.slane %v872, %v885
          %v887 = vcombine.low %v879, %v886
          %v888 = vcombine.low %v859, %v860
          %v889 = vcombine.low %v861, %v862
          %v891 = vunpack.c.l.s4 1983009808
          %v892 = vunpack.c.0.s8 %v891
          %v893 = vlaneseq
          %v894 = vshrl.u32 %v893, 7
          %v895 = vsub.s32 %v892, %v894
          %v896 = vrot.slane %v888, %v895
          %v898 = vunpack.c.l.s4 1983009808
          %v899 = vunpack.c.0.s8 %v898
          %v900 = vlaneseq
          %v901 = vshrl.u32 %v900, 7
          %v902 = vsub.s32 %v899, %v901
          %v903 = vrot.slane %v889, %v902
          %v904 = vcombine.low %v896, %v903
          %907 = vst [vmem:[#allocation16] sm:$0xff] %v887
          %908 = vst [vmem:[#allocation16 + $0x8] sm:$0xff] %v904
          %909 = vst [vmem:[#allocation2] sm:$0xff] %v887
          %910 = vst [vmem:[#allocation2 + $0x8] sm:$0xff] %v904
        $region92: #{model_forward.1} parent=55 // pred_fallthru
          _
        %p911 = scmp.eq.s32.totalorder %s28, 2
        // Predicated region
        $region93: #{model_forward.1} parent=55 // pred_check
          %p912 = pneg %p911
        $region94: #{model_forward.1} parent=55 // pred_check_branch
          %914 = sbr.rel (%p912) target = $region96
        $region95: #{model_forward.1} parent=55 // pred_region
          %v915 = vld [vmem:[#allocation2] sm:$0xff]
          %v916 = vld [vmem:[#allocation2 + $0x8] sm:$0xff]
          %v919 = vcombine.high %v915, %v915
          %v921 = vunpack.c.l.s4 1983009808
          %v922 = vunpack.c.0.s8 %v921
          %v923 = vlaneseq
          %v924 = vshrl.u32 %v923, 7
          %v925 = vsub.s32 %v922, %v924
          %v926 = vrot.slane %v915, %v925
          %v928 = vunpack.c.l.s4 1983009808
          %v929 = vunpack.c.0.s8 %v928
          %v930 = vlaneseq
          %v931 = vshrl.u32 %v930, 7
          %v932 = vsub.s32 %v929, %v931
          %v933 = vrot.slane %v919, %v932
          %v934 = vcombine.high %v926, %v926
          %v935 = vcombine.high %v933, %v933
          %v936 = vcombine.high %v916, %v916
          %v938 = vunpack.c.l.s4 1983009808
          %v939 = vunpack.c.0.s8 %v938
          %v940 = vlaneseq
          %v941 = vshrl.u32 %v940, 7
          %v942 = vsub.s32 %v939, %v941
          %v943 = vrot.slane %v916, %v942
          %v945 = vunpack.c.l.s4 1983009808
          %v946 = vunpack.c.0.s8 %v945
          %v947 = vlaneseq
          %v948 = vshrl.u32 %v947, 7
          %v949 = vsub.s32 %v946, %v948
          %v950 = vrot.slane %v936, %v949
          %v951 = vcombine.high %v943, %v943
          %v952 = vcombine.high %v950, %v950
          %v961 = vpack.c.bf16 %v926, %v926
          %v962 = vpack.c.bf16 %v934, %v934
          %v963 = vpack.c.bf16 %v933, %v933
          %v964 = vpack.c.bf16 %v935, %v935
          %v965 = vpack.c.bf16 %v943, %v943
          %v966 = vpack.c.bf16 %v951, %v951
          %v967 = vpack.c.bf16 %v950, %v950
          %v968 = vpack.c.bf16 %v952, %v952
          %v969 = vld [vmem:[#allocation9] sm:$0xf]
          %v970 = vld [vmem:[#allocation9 + $0x4] sm:$0xf]
          %v971 = vld [vmem:[#allocation9 + $0x8] sm:$0xf]
          %v972 = vld [vmem:[#allocation9 + $0xc] sm:$0xf]
          %v973 = vld [vmem:[#allocation9 + $0x10] sm:$0xf]
          %v974 = vld [vmem:[#allocation9 + $0x14] sm:$0xf]
          %v975 = vld [vmem:[#allocation9 + $0x18] sm:$0xf]
          %v976 = vld [vmem:[#allocation9 + $0x1c] sm:$0xf]
          %v977 = vld [vmem:[#allocation9 + $0x20] sm:$0xf]
          %v978 = vld [vmem:[#allocation9 + $0x24] sm:$0xf]
          %v979 = vld [vmem:[#allocation9 + $0x28] sm:$0xf]
          %v980 = vld [vmem:[#allocation9 + $0x2c] sm:$0xf]
          %v981 = vld [vmem:[#allocation9 + $0x30] sm:$0xf]
          %v982 = vld [vmem:[#allocation9 + $0x34] sm:$0xf]
          %v983 = vld [vmem:[#allocation9 + $0x38] sm:$0xf]
          %v984 = vld [vmem:[#allocation9 + $0x3c] sm:$0xf]
          %v985 = vld [vmem:[#allocation9 + $0x40] sm:$0xf]
          %v986 = vld [vmem:[#allocation9 + $0x44] sm:$0xf]
          %v987 = vld [vmem:[#allocation9 + $0x48] sm:$0xf]
          %v988 = vld [vmem:[#allocation9 + $0x4c] sm:$0xf]
          %v989 = vld [vmem:[#allocation9 + $0x50] sm:$0xf]
          %v990 = vld [vmem:[#allocation9 + $0x54] sm:$0xf]
          %v991 = vld [vmem:[#allocation9 + $0x58] sm:$0xf]
          %v992 = vld [vmem:[#allocation9 + $0x5c] sm:$0xf]
          %v993 = vld [vmem:[#allocation9 + $0x60] sm:$0xf]
          %v994 = vld [vmem:[#allocation9 + $0x64] sm:$0xf]
          %v995 = vld [vmem:[#allocation9 + $0x68] sm:$0xf]
          %v996 = vld [vmem:[#allocation9 + $0x6c] sm:$0xf]
          %v997 = vld [vmem:[#allocation9 + $0x70] sm:$0xf]
          %v998 = vld [vmem:[#allocation9 + $0x74] sm:$0xf]
          %v999 = vld [vmem:[#allocation9 + $0x78] sm:$0xf]
          %v1000 = vld [vmem:[#allocation9 + $0x7c] sm:$0xf]
          %v1001 = vld [vmem:[#allocation9 + $0x80] sm:$0xf]
          %v1002 = vld [vmem:[#allocation9 + $0x84] sm:$0xf]
          %v1003 = vld [vmem:[#allocation9 + $0x88] sm:$0xf]
          %v1004 = vld [vmem:[#allocation9 + $0x8c] sm:$0xf]
          %v1005 = vld [vmem:[#allocation9 + $0x90] sm:$0xf]
          %v1006 = vld [vmem:[#allocation9 + $0x94] sm:$0xf]
          %v1007 = vld [vmem:[#allocation9 + $0x98] sm:$0xf]
          %v1008 = vld [vmem:[#allocation9 + $0x9c] sm:$0xf]
          %v1009 = vld [vmem:[#allocation9 + $0xa0] sm:$0xf]
          %v1010 = vld [vmem:[#allocation9 + $0xa4] sm:$0xf]
          %v1011 = vld [vmem:[#allocation9 + $0xa8] sm:$0xf]
          %v1012 = vld [vmem:[#allocation9 + $0xac] sm:$0xf]
          %v1013 = vld [vmem:[#allocation9 + $0xb0] sm:$0xf]
          %v1014 = vld [vmem:[#allocation9 + $0xb4] sm:$0xf]
          %v1015 = vld [vmem:[#allocation9 + $0xb8] sm:$0xf]
          %v1016 = vld [vmem:[#allocation9 + $0xbc] sm:$0xf]
          %v1017 = vld [vmem:[#allocation9 + $0xc0] sm:$0xf]
          %v1018 = vld [vmem:[#allocation9 + $0xc4] sm:$0xf]
          %v1019 = vld [vmem:[#allocation9 + $0xc8] sm:$0xf]
          %v1020 = vld [vmem:[#allocation9 + $0xcc] sm:$0xf]
          %v1021 = vld [vmem:[#allocation9 + $0xd0] sm:$0xf]
          %v1022 = vld [vmem:[#allocation9 + $0xd4] sm:$0xf]
          %v1023 = vld [vmem:[#allocation9 + $0xd8] sm:$0xf]
          %v1024 = vld [vmem:[#allocation9 + $0xdc] sm:$0xf]
          %v1025 = vld [vmem:[#allocation9 + $0xe0] sm:$0xf]
          %v1026 = vld [vmem:[#allocation9 + $0xe4] sm:$0xf]
          %v1027 = vld [vmem:[#allocation9 + $0xe8] sm:$0xf]
          %v1028 = vld [vmem:[#allocation9 + $0xec] sm:$0xf]
          %v1029 = vld [vmem:[#allocation9 + $0xf0] sm:$0xf]
          %v1030 = vld [vmem:[#allocation9 + $0xf4] sm:$0xf]
          %v1031 = vld [vmem:[#allocation9 + $0xf8] sm:$0xf]
          %v1032 = vld [vmem:[#allocation9 + $0xfc] sm:$0xf]
          %v1033 = vld [vmem:[#allocation9 + $0x100] sm:$0xf]
          %v1034 = vld [vmem:[#allocation9 + $0x104] sm:$0xf]
          %v1035 = vld [vmem:[#allocation9 + $0x108] sm:$0xf]
          %v1036 = vld [vmem:[#allocation9 + $0x10c] sm:$0xf]
          %v1037 = vld [vmem:[#allocation9 + $0x110] sm:$0xf]
          %v1038 = vld [vmem:[#allocation9 + $0x114] sm:$0xf]
          %v1039 = vld [vmem:[#allocation9 + $0x118] sm:$0xf]
          %v1040 = vld [vmem:[#allocation9 + $0x11c] sm:$0xf]
          %v1041 = vld [vmem:[#allocation9 + $0x120] sm:$0xf]
          %v1042 = vld [vmem:[#allocation9 + $0x124] sm:$0xf]
          %v1043 = vld [vmem:[#allocation9 + $0x128] sm:$0xf]
          %v1044 = vld [vmem:[#allocation9 + $0x12c] sm:$0xf]
          %v1045 = vld [vmem:[#allocation9 + $0x130] sm:$0xf]
          %v1046 = vld [vmem:[#allocation9 + $0x134] sm:$0xf]
          %v1047 = vld [vmem:[#allocation9 + $0x138] sm:$0xf]
          %v1048 = vld [vmem:[#allocation9 + $0x13c] sm:$0xf]
          %v1049 = vld [vmem:[#allocation9 + $0x140] sm:$0xf]
          %v1050 = vld [vmem:[#allocation9 + $0x144] sm:$0xf]
          %v1051 = vld [vmem:[#allocation9 + $0x148] sm:$0xf]
          %v1052 = vld [vmem:[#allocation9 + $0x14c] sm:$0xf]
          %v1053 = vld [vmem:[#allocation9 + $0x150] sm:$0xf]
          %v1054 = vld [vmem:[#allocation9 + $0x154] sm:$0xf]
          %v1055 = vld [vmem:[#allocation9 + $0x158] sm:$0xf]
          %v1056 = vld [vmem:[#allocation9 + $0x15c] sm:$0xf]
          %v1057 = vld [vmem:[#allocation9 + $0x160] sm:$0xf]
          %v1058 = vld [vmem:[#allocation9 + $0x164] sm:$0xf]
          %v1059 = vld [vmem:[#allocation9 + $0x168] sm:$0xf]
          %v1060 = vld [vmem:[#allocation9 + $0x16c] sm:$0xf]
          %v1061 = vld [vmem:[#allocation9 + $0x170] sm:$0xf]
          %v1062 = vld [vmem:[#allocation9 + $0x174] sm:$0xf]
          %v1063 = vld [vmem:[#allocation9 + $0x178] sm:$0xf]
          %v1064 = vld [vmem:[#allocation9 + $0x17c] sm:$0xf]
          %v1065 = vld [vmem:[#allocation9 + $0x180] sm:$0xf]
          %v1066 = vld [vmem:[#allocation9 + $0x184] sm:$0xf]
          %v1067 = vld [vmem:[#allocation9 + $0x188] sm:$0xf]
          %v1068 = vld [vmem:[#allocation9 + $0x18c] sm:$0xf]
          %v1069 = vld [vmem:[#allocation9 + $0x190] sm:$0xf]
          %v1070 = vld [vmem:[#allocation9 + $0x194] sm:$0xf]
          %v1071 = vld [vmem:[#allocation9 + $0x198] sm:$0xf]
          %v1072 = vld [vmem:[#allocation9 + $0x19c] sm:$0xf]
          %v1073 = vld [vmem:[#allocation9 + $0x1a0] sm:$0xf]
          %v1074 = vld [vmem:[#allocation9 + $0x1a4] sm:$0xf]
          %v1075 = vld [vmem:[#allocation9 + $0x1a8] sm:$0xf]
          %v1076 = vld [vmem:[#allocation9 + $0x1ac] sm:$0xf]
          %v1077 = vld [vmem:[#allocation9 + $0x1b0] sm:$0xf]
          %v1078 = vld [vmem:[#allocation9 + $0x1b4] sm:$0xf]
          %v1079 = vld [vmem:[#allocation9 + $0x1b8] sm:$0xf]
          %v1080 = vld [vmem:[#allocation9 + $0x1bc] sm:$0xf]
          %v1081 = vld [vmem:[#allocation9 + $0x1c0] sm:$0xf]
          %v1082 = vld [vmem:[#allocation9 + $0x1c4] sm:$0xf]
          %v1083 = vld [vmem:[#allocation9 + $0x1c8] sm:$0xf]
          %v1084 = vld [vmem:[#allocation9 + $0x1cc] sm:$0xf]
          %v1085 = vld [vmem:[#allocation9 + $0x1d0] sm:$0xf]
          %v1086 = vld [vmem:[#allocation9 + $0x1d4] sm:$0xf]
          %v1087 = vld [vmem:[#allocation9 + $0x1d8] sm:$0xf]
          %v1088 = vld [vmem:[#allocation9 + $0x1dc] sm:$0xf]
          %v1089 = vld [vmem:[#allocation9 + $0x1e0] sm:$0xf]
          %v1090 = vld [vmem:[#allocation9 + $0x1e4] sm:$0xf]
          %v1091 = vld [vmem:[#allocation9 + $0x1e8] sm:$0xf]
          %v1092 = vld [vmem:[#allocation9 + $0x1ec] sm:$0xf]
          %v1093 = vld [vmem:[#allocation9 + $0x1f0] sm:$0xf]
          %v1094 = vld [vmem:[#allocation9 + $0x1f4] sm:$0xf]
          %v1095 = vld [vmem:[#allocation9 + $0x1f8] sm:$0xf]
          %v1096 = vld [vmem:[#allocation9 + $0x1fc] sm:$0xf]
          %v1097 = vld [vmem:[#allocation12] sm:$0xff]
          %v1099 = vlaneseq
          %v1100 = vshrl.u32 %v1099, 7
          %v1101 = vsub.s32 0, %v1100
          %v1102 = vrot.slane %v1097, %v1101
          %v1232 = vunpack.c.l.b16 %v969
          %v1233 = vunpack.c.l.b16 %v970
          %v1234 = vunpack.c.l.b16 %v971
          %v1235 = vunpack.c.l.b16 %v972
          %v1236 = vunpack.c.l.b16 %v973
          %v1237 = vunpack.c.l.b16 %v974
          %v1238 = vunpack.c.l.b16 %v975
          %v1239 = vunpack.c.l.b16 %v976
          %v1240 = vunpack.c.l.b16 %v977
          %v1241 = vunpack.c.l.b16 %v978
          %v1242 = vunpack.c.l.b16 %v979
          %v1243 = vunpack.c.l.b16 %v980
          %v1244 = vunpack.c.l.b16 %v981
          %v1245 = vunpack.c.l.b16 %v982
          %v1246 = vunpack.c.l.b16 %v983
          %v1247 = vunpack.c.l.b16 %v984
          %v1248 = vunpack.c.l.b16 %v985
          %v1249 = vunpack.c.l.b16 %v986
          %v1250 = vunpack.c.l.b16 %v987
          %v1251 = vunpack.c.l.b16 %v988
          %v1252 = vunpack.c.l.b16 %v989
          %v1253 = vunpack.c.l.b16 %v990
          %v1254 = vunpack.c.l.b16 %v991
          %v1255 = vunpack.c.l.b16 %v992
          %v1256 = vunpack.c.l.b16 %v993
          %v1257 = vunpack.c.l.b16 %v994
          %v1258 = vunpack.c.l.b16 %v995
          %v1259 = vunpack.c.l.b16 %v996
          %v1260 = vunpack.c.l.b16 %v997
          %v1261 = vunpack.c.l.b16 %v998
          %v1262 = vunpack.c.l.b16 %v999
          %v1263 = vunpack.c.l.b16 %v1000
          %v1264 = vunpack.c.l.b16 %v1001
          %v1265 = vunpack.c.l.b16 %v1002
          %v1266 = vunpack.c.l.b16 %v1003
          %v1267 = vunpack.c.l.b16 %v1004
          %v1268 = vunpack.c.l.b16 %v1005
          %v1269 = vunpack.c.l.b16 %v1006
          %v1270 = vunpack.c.l.b16 %v1007
          %v1271 = vunpack.c.l.b16 %v1008
          %v1272 = vunpack.c.l.b16 %v1009
          %v1273 = vunpack.c.l.b16 %v1010
          %v1274 = vunpack.c.l.b16 %v1011
          %v1275 = vunpack.c.l.b16 %v1012
          %v1276 = vunpack.c.l.b16 %v1013
          %v1277 = vunpack.c.l.b16 %v1014
          %v1278 = vunpack.c.l.b16 %v1015
          %v1279 = vunpack.c.l.b16 %v1016
          %v1280 = vunpack.c.l.b16 %v1017
          %v1281 = vunpack.c.l.b16 %v1018
          %v1282 = vunpack.c.l.b16 %v1019
          %v1283 = vunpack.c.l.b16 %v1020
          %v1284 = vunpack.c.l.b16 %v1021
          %v1285 = vunpack.c.l.b16 %v1022
          %v1286 = vunpack.c.l.b16 %v1023
          %v1287 = vunpack.c.l.b16 %v1024
          %v1288 = vunpack.c.l.b16 %v1025
          %v1289 = vunpack.c.l.b16 %v1026
          %v1290 = vunpack.c.l.b16 %v1027
          %v1291 = vunpack.c.l.b16 %v1028
          %v1292 = vunpack.c.l.b16 %v1029
          %v1293 = vunpack.c.l.b16 %v1030
          %v1294 = vunpack.c.l.b16 %v1031
          %v1295 = vunpack.c.l.b16 %v1032
          %v1296 = vunpack.c.l.b16 %v1033
          %v1297 = vunpack.c.l.b16 %v1034
          %v1298 = vunpack.c.l.b16 %v1035
          %v1299 = vunpack.c.l.b16 %v1036
          %v1300 = vunpack.c.l.b16 %v1037
          %v1301 = vunpack.c.l.b16 %v1038
          %v1302 = vunpack.c.l.b16 %v1039
          %v1303 = vunpack.c.l.b16 %v1040
          %v1304 = vunpack.c.l.b16 %v1041
          %v1305 = vunpack.c.l.b16 %v1042
          %v1306 = vunpack.c.l.b16 %v1043
          %v1307 = vunpack.c.l.b16 %v1044
          %v1308 = vunpack.c.l.b16 %v1045
          %v1309 = vunpack.c.l.b16 %v1046
          %v1310 = vunpack.c.l.b16 %v1047
          %v1311 = vunpack.c.l.b16 %v1048
          %v1312 = vunpack.c.l.b16 %v1049
          %v1313 = vunpack.c.l.b16 %v1050
          %v1314 = vunpack.c.l.b16 %v1051
          %v1315 = vunpack.c.l.b16 %v1052
          %v1316 = vunpack.c.l.b16 %v1053
          %v1317 = vunpack.c.l.b16 %v1054
          %v1318 = vunpack.c.l.b16 %v1055
          %v1319 = vunpack.c.l.b16 %v1056
          %v1320 = vunpack.c.l.b16 %v1057
          %v1321 = vunpack.c.l.b16 %v1058
          %v1322 = vunpack.c.l.b16 %v1059
          %v1323 = vunpack.c.l.b16 %v1060
          %v1324 = vunpack.c.l.b16 %v1061
          %v1325 = vunpack.c.l.b16 %v1062
          %v1326 = vunpack.c.l.b16 %v1063
          %v1327 = vunpack.c.l.b16 %v1064
          %v1328 = vunpack.c.l.b16 %v1065
          %v1329 = vunpack.c.l.b16 %v1066
          %v1330 = vunpack.c.l.b16 %v1067
          %v1331 = vunpack.c.l.b16 %v1068
          %v1332 = vunpack.c.l.b16 %v1069
          %v1333 = vunpack.c.l.b16 %v1070
          %v1334 = vunpack.c.l.b16 %v1071
          %v1335 = vunpack.c.l.b16 %v1072
          %v1336 = vunpack.c.l.b16 %v1073
          %v1337 = vunpack.c.l.b16 %v1074
          %v1338 = vunpack.c.l.b16 %v1075
          %v1339 = vunpack.c.l.b16 %v1076
          %v1340 = vunpack.c.l.b16 %v1077
          %v1341 = vunpack.c.l.b16 %v1078
          %v1342 = vunpack.c.l.b16 %v1079
          %v1343 = vunpack.c.l.b16 %v1080
          %v1344 = vunpack.c.l.b16 %v1081
          %v1345 = vunpack.c.l.b16 %v1082
          %v1346 = vunpack.c.l.b16 %v1083
          %v1347 = vunpack.c.l.b16 %v1084
          %v1348 = vunpack.c.l.b16 %v1085
          %v1349 = vunpack.c.l.b16 %v1086
          %v1350 = vunpack.c.l.b16 %v1087
          %v1351 = vunpack.c.l.b16 %v1088
          %v1352 = vunpack.c.l.b16 %v1089
          %v1353 = vunpack.c.l.b16 %v1090
          %v1354 = vunpack.c.l.b16 %v1091
          %v1355 = vunpack.c.l.b16 %v1092
          %v1356 = vunpack.c.l.b16 %v1093
          %v1357 = vunpack.c.l.b16 %v1094
          %v1358 = vunpack.c.l.b16 %v1095
          %v1359 = vunpack.c.l.b16 %v1096
          %v1360 = vpack.c.b16 %v1233, %v1232
          %v1361 = vpack.c.b16 %v1235, %v1234
          %v1362 = vpack.c.b16 %v1237, %v1236
          %v1363 = vpack.c.b16 %v1239, %v1238
          %v1364 = vpack.c.b16 %v1241, %v1240
          %v1365 = vpack.c.b16 %v1243, %v1242
          %v1366 = vpack.c.b16 %v1245, %v1244
          %v1367 = vpack.c.b16 %v1247, %v1246
          %v1368 = vpack.c.b16 %v1249, %v1248
          %v1369 = vpack.c.b16 %v1251, %v1250
          %v1370 = vpack.c.b16 %v1253, %v1252
          %v1371 = vpack.c.b16 %v1255, %v1254
          %v1372 = vpack.c.b16 %v1257, %v1256
          %v1373 = vpack.c.b16 %v1259, %v1258
          %v1374 = vpack.c.b16 %v1261, %v1260
          %v1375 = vpack.c.b16 %v1263, %v1262
          %v1376 = vpack.c.b16 %v1265, %v1264
          %v1377 = vpack.c.b16 %v1267, %v1266
          %v1378 = vpack.c.b16 %v1269, %v1268
          %v1379 = vpack.c.b16 %v1271, %v1270
          %v1380 = vpack.c.b16 %v1273, %v1272
          %v1381 = vpack.c.b16 %v1275, %v1274
          %v1382 = vpack.c.b16 %v1277, %v1276
          %v1383 = vpack.c.b16 %v1279, %v1278
          %v1384 = vpack.c.b16 %v1281, %v1280
          %v1385 = vpack.c.b16 %v1283, %v1282
          %v1386 = vpack.c.b16 %v1285, %v1284
          %v1387 = vpack.c.b16 %v1287, %v1286
          %v1388 = vpack.c.b16 %v1289, %v1288
          %v1389 = vpack.c.b16 %v1291, %v1290
          %v1390 = vpack.c.b16 %v1293, %v1292
          %v1391 = vpack.c.b16 %v1295, %v1294
          %v1392 = vpack.c.b16 %v1297, %v1296
          %v1393 = vpack.c.b16 %v1299, %v1298
          %v1394 = vpack.c.b16 %v1301, %v1300
          %v1395 = vpack.c.b16 %v1303, %v1302
          %v1396 = vpack.c.b16 %v1305, %v1304
          %v1397 = vpack.c.b16 %v1307, %v1306
          %v1398 = vpack.c.b16 %v1309, %v1308
          %v1399 = vpack.c.b16 %v1311, %v1310
          %v1400 = vpack.c.b16 %v1313, %v1312
          %v1401 = vpack.c.b16 %v1315, %v1314
          %v1402 = vpack.c.b16 %v1317, %v1316
          %v1403 = vpack.c.b16 %v1319, %v1318
          %v1404 = vpack.c.b16 %v1321, %v1320
          %v1405 = vpack.c.b16 %v1323, %v1322
          %v1406 = vpack.c.b16 %v1325, %v1324
          %v1407 = vpack.c.b16 %v1327, %v1326
          %v1408 = vpack.c.b16 %v1329, %v1328
          %v1409 = vpack.c.b16 %v1331, %v1330
          %v1410 = vpack.c.b16 %v1333, %v1332
          %v1411 = vpack.c.b16 %v1335, %v1334
          %v1412 = vpack.c.b16 %v1337, %v1336
          %v1413 = vpack.c.b16 %v1339, %v1338
          %v1414 = vpack.c.b16 %v1341, %v1340
          %v1415 = vpack.c.b16 %v1343, %v1342
          %v1416 = vpack.c.b16 %v1345, %v1344
          %v1417 = vpack.c.b16 %v1347, %v1346
          %v1418 = vpack.c.b16 %v1349, %v1348
          %v1419 = vpack.c.b16 %v1351, %v1350
          %v1420 = vpack.c.b16 %v1353, %v1352
          %v1421 = vpack.c.b16 %v1355, %v1354
          %v1422 = vpack.c.b16 %v1357, %v1356
          %v1423 = vpack.c.b16 %v1359, %v1358
          %1488 = vmatprep.subr.bf16.mxu0 0
          %1489 = vmatpush1.bf16.msra.mxu0 %v1360
          %1490 = vmatprep.subr.bf16.mxu0 0
          %1491 = vmatpush1.bf16.msra.mxu0 %v1361
          %1492 = vmatprep.subr.bf16.mxu0 0
          %1493 = vmatpush1.bf16.msra.mxu0 %v1362
          %1494 = vmatprep.subr.bf16.mxu0 0
          %1495 = vmatpush1.bf16.msra.mxu0 %v1363
          %1496 = vmatprep.subr.bf16.mxu0 0
          %1497 = vmatpush1.bf16.msra.mxu0 %v1364
          %1498 = vmatprep.subr.bf16.mxu0 0
          %1499 = vmatpush1.bf16.msra.mxu0 %v1365
          %1500 = vmatprep.subr.bf16.mxu0 0
          %1501 = vmatpush1.bf16.msra.mxu0 %v1366
          %1502 = vmatprep.subr.bf16.mxu0 0
          %1503 = vmatpush1.bf16.msra.mxu0 %v1367
          %1504 = vmatprep.subr.bf16.mxu0 0
          %1505 = vmatpush1.bf16.msra.mxu0 %v1368
          %1506 = vmatprep.subr.bf16.mxu0 0
          %1507 = vmatpush1.bf16.msra.mxu0 %v1369
          %1508 = vmatprep.subr.bf16.mxu0 0
          %1509 = vmatpush1.bf16.msra.mxu0 %v1370
          %1510 = vmatprep.subr.bf16.mxu0 0
          %1511 = vmatpush1.bf16.msra.mxu0 %v1371
          %1512 = vmatprep.subr.bf16.mxu0 0
          %1513 = vmatpush1.bf16.msra.mxu0 %v1372
          %1514 = vmatprep.subr.bf16.mxu0 0
          %1515 = vmatpush1.bf16.msra.mxu0 %v1373
          %1516 = vmatprep.subr.bf16.mxu0 0
          %1517 = vmatpush1.bf16.msra.mxu0 %v1374
          %1518 = vmatprep.subr.bf16.mxu0 0
          %1519 = vmatpush1.bf16.msra.mxu0 %v1375
          %1520 = vmatprep.mubr.bf16.mxu0 %v962
          %1521 = vmatmul.mubr.bf16.gmra.mrb[0].mxu0 %v961
          %v1522 = vpop.f32.mrb[0].mxu0
          %v1523 = vadd.f32 %v1102, %v1522
          %v1524 = vpop.f32.mrb[0].mxu0
          %v1525 = vpop.f32.mrb[0].mxu0
          %v1526 = vpop.f32.mrb[0].mxu0
          %1527 = vdwg.mxu0
          %1528 = vmatprep.subr.bf16.mxu0 0
          %1529 = vmatpush1.bf16.msra.mxu0 %v1376
          %1530 = vmatprep.subr.bf16.mxu0 0
          %1531 = vmatpush1.bf16.msra.mxu0 %v1377
          %1532 = vmatprep.subr.bf16.mxu0 0
          %1533 = vmatpush1.bf16.msra.mxu0 %v1378
          %1534 = vmatprep.subr.bf16.mxu0 0
          %1535 = vmatpush1.bf16.msra.mxu0 %v1379
          %1536 = vmatprep.subr.bf16.mxu0 0
          %1537 = vmatpush1.bf16.msra.mxu0 %v1380
          %1538 = vmatprep.subr.bf16.mxu0 0
          %1539 = vmatpush1.bf16.msra.mxu0 %v1381
          %1540 = vmatprep.subr.bf16.mxu0 0
          %1541 = vmatpush1.bf16.msra.mxu0 %v1382
          %1542 = vmatprep.subr.bf16.mxu0 0
          %1543 = vmatpush1.bf16.msra.mxu0 %v1383
          %1544 = vmatprep.subr.bf16.mxu0 0
          %1545 = vmatpush1.bf16.msra.mxu0 %v1384
          %1546 = vmatprep.subr.bf16.mxu0 0
          %1547 = vmatpush1.bf16.msra.mxu0 %v1385
          %1548 = vmatprep.subr.bf16.mxu0 0
          %1549 = vmatpush1.bf16.msra.mxu0 %v1386
          %1550 = vmatprep.subr.bf16.mxu0 0
          %1551 = vmatpush1.bf16.msra.mxu0 %v1387
          %1552 = vmatprep.subr.bf16.mxu0 0
          %1553 = vmatpush1.bf16.msra.mxu0 %v1388
          %1554 = vmatprep.subr.bf16.mxu0 0
          %1555 = vmatpush1.bf16.msra.mxu0 %v1389
          %1556 = vmatprep.subr.bf16.mxu0 0
          %1557 = vmatpush1.bf16.msra.mxu0 %v1390
          %1558 = vmatprep.subr.bf16.mxu0 0
          %1559 = vmatpush1.bf16.msra.mxu0 %v1391
          %1560 = vmatprep.mubr.bf16.mxu0 %v964
          %1561 = vmatmul.mubr.bf16.gmra.mrb[0].mxu0 %v963
          %v1562 = vpop.f32.mrb[0].mxu0
          %v1563 = vadd.f32 %v1523, %v1562
          %v1564 = vpop.f32.mrb[0].mxu0
          %v1565 = vpop.f32.mrb[0].mxu0
          %v1566 = vpop.f32.mrb[0].mxu0
          %1567 = vdwg.mxu0
          %1568 = vmatprep.subr.bf16.mxu0 0
          %1569 = vmatpush1.bf16.msra.mxu0 %v1392
          %1570 = vmatprep.subr.bf16.mxu0 0
          %1571 = vmatpush1.bf16.msra.mxu0 %v1393
          %1572 = vmatprep.subr.bf16.mxu0 0
          %1573 = vmatpush1.bf16.msra.mxu0 %v1394
          %1574 = vmatprep.subr.bf16.mxu0 0
          %1575 = vmatpush1.bf16.msra.mxu0 %v1395
          %1576 = vmatprep.subr.bf16.mxu0 0
          %1577 = vmatpush1.bf16.msra.mxu0 %v1396
          %1578 = vmatprep.subr.bf16.mxu0 0
          %1579 = vmatpush1.bf16.msra.mxu0 %v1397
          %1580 = vmatprep.subr.bf16.mxu0 0
          %1581 = vmatpush1.bf16.msra.mxu0 %v1398
          %1582 = vmatprep.subr.bf16.mxu0 0
          %1583 = vmatpush1.bf16.msra.mxu0 %v1399
          %1584 = vmatprep.subr.bf16.mxu0 0
          %1585 = vmatpush1.bf16.msra.mxu0 %v1400
          %1586 = vmatprep.subr.bf16.mxu0 0
          %1587 = vmatpush1.bf16.msra.mxu0 %v1401
          %1588 = vmatprep.subr.bf16.mxu0 0
          %1589 = vmatpush1.bf16.msra.mxu0 %v1402
          %1590 = vmatprep.subr.bf16.mxu0 0
          %1591 = vmatpush1.bf16.msra.mxu0 %v1403
          %1592 = vmatprep.subr.bf16.mxu0 0
          %1593 = vmatpush1.bf16.msra.mxu0 %v1404
          %1594 = vmatprep.subr.bf16.mxu0 0
          %1595 = vmatpush1.bf16.msra.mxu0 %v1405
          %1596 = vmatprep.subr.bf16.mxu0 0
          %1597 = vmatpush1.bf16.msra.mxu0 %v1406
          %1598 = vmatprep.subr.bf16.mxu0 0
          %1599 = vmatpush1.bf16.msra.mxu0 %v1407
          %1600 = vmatprep.mubr.bf16.mxu0 %v966
          %1601 = vmatmul.mubr.bf16.gmra.mrb[0].mxu0 %v965
          %v1602 = vpop.f32.mrb[0].mxu0
          %v1603 = vadd.f32 %v1563, %v1602
          %v1604 = vpop.f32.mrb[0].mxu0
          %v1605 = vpop.f32.mrb[0].mxu0
          %v1606 = vpop.f32.mrb[0].mxu0
          %1607 = vdwg.mxu0
          %1608 = vmatprep.subr.bf16.mxu0 0
          %1609 = vmatpush1.bf16.msra.mxu0 %v1408
          %1610 = vmatprep.subr.bf16.mxu0 0
          %1611 = vmatpush1.bf16.msra.mxu0 %v1409
          %1612 = vmatprep.subr.bf16.mxu0 0
          %1613 = vmatpush1.bf16.msra.mxu0 %v1410
          %1614 = vmatprep.subr.bf16.mxu0 0
          %1615 = vmatpush1.bf16.msra.mxu0 %v1411
          %1616 = vmatprep.subr.bf16.mxu0 0
          %1617 = vmatpush1.bf16.msra.mxu0 %v1412
          %1618 = vmatprep.subr.bf16.mxu0 0
          %1619 = vmatpush1.bf16.msra.mxu0 %v1413
          %1620 = vmatprep.subr.bf16.mxu0 0
          %1621 = vmatpush1.bf16.msra.mxu0 %v1414
          %1622 = vmatprep.subr.bf16.mxu0 0
          %1623 = vmatpush1.bf16.msra.mxu0 %v1415
          %1624 = vmatprep.subr.bf16.mxu0 0
          %1625 = vmatpush1.bf16.msra.mxu0 %v1416
          %1626 = vmatprep.subr.bf16.mxu0 0
          %1627 = vmatpush1.bf16.msra.mxu0 %v1417
          %1628 = vmatprep.subr.bf16.mxu0 0
          %1629 = vmatpush1.bf16.msra.mxu0 %v1418
          %1630 = vmatprep.subr.bf16.mxu0 0
          %1631 = vmatpush1.bf16.msra.mxu0 %v1419
          %1632 = vmatprep.subr.bf16.mxu0 0
          %1633 = vmatpush1.bf16.msra.mxu0 %v1420
          %1634 = vmatprep.subr.bf16.mxu0 0
          %1635 = vmatpush1.bf16.msra.mxu0 %v1421
          %1636 = vmatprep.subr.bf16.mxu0 0
          %1637 = vmatpush1.bf16.msra.mxu0 %v1422
          %1638 = vmatprep.subr.bf16.mxu0 0
          %1639 = vmatpush1.bf16.msra.mxu0 %v1423
          %1640 = vmatprep.mubr.bf16.mxu0 %v968
          %1641 = vmatmul.mubr.bf16.gmra.mrb[0].mxu0 %v967
          %v1642 = vpop.f32.mrb[0].mxu0
          %v1643 = vadd.f32 %v1603, %v1642
          %v1644 = vpop.f32.mrb[0].mxu0
          %v1645 = vpop.f32.mrb[0].mxu0
          %v1646 = vpop.f32.mrb[0].mxu0
          %1647 = vdwg.mxu0
          %v1648 = vmul.f32 %v1643, %v1643
          %vm1649 = vcmask 1041408
          %v1650 = vsel %vm1649, %v1648, 0.0
          %1651 = vadd.xlane.f32.xlu0 %v1650
          %v1652 = vpop.xlane.xlu0 %1651
          %v1653 = vmax.f32 %v1652, 1e-24
          %v1654 = vrsqrt.pop %v1653
          %v1655 = vmul.f32 %v1643, %v1654
          %v1656 = vpack.c.bf16 %v1655, %v1655
          %v1657 = vld [vmem:[#allocation10] sm:$0xff]
          %v1658 = vld [vmem:[#allocation10 + $0x8] sm:$0xff]
          %v1659 = vld [vmem:[#allocation10 + $0x10] sm:$0xff]
          %v1660 = vld [vmem:[#allocation10 + $0x18] sm:$0xff]
          %v1661 = vld [vmem:[#allocation10 + $0x20] sm:$0xff]
          %v1662 = vld [vmem:[#allocation10 + $0x28] sm:$0xff]
          %v1663 = vld [vmem:[#allocation10 + $0x30] sm:$0xff]
          %v1664 = vld [vmem:[#allocation10 + $0x38] sm:$0xff]
          %v1665 = vld [vmem:[#allocation10 + $0x40] sm:$0xff]
          %v1666 = vld [vmem:[#allocation10 + $0x48] sm:$0xff]
          %v1667 = vld [vmem:[#allocation10 + $0x50] sm:$0xff]
          %v1668 = vld [vmem:[#allocation10 + $0x58] sm:$0xff]
          %v1669 = vld [vmem:[#allocation10 + $0x60] sm:$0xff]
          %v1670 = vld [vmem:[#allocation10 + $0x68] sm:$0xff]
          %v1671 = vld [vmem:[#allocation10 + $0x70] sm:$0xff]
          %v1672 = vld [vmem:[#allocation10 + $0x78] sm:$0xff]
          %v1673 = vld [vmem:[#allocation10 + $0x80] sm:$0xff]
          %v1674 = vld [vmem:[#allocation10 + $0x88] sm:$0xff]
          %v1675 = vld [vmem:[#allocation10 + $0x90] sm:$0xff]
          %v1676 = vld [vmem:[#allocation10 + $0x98] sm:$0xff]
          %v1677 = vld [vmem:[#allocation10 + $0xa0] sm:$0xff]
          %v1678 = vld [vmem:[#allocation10 + $0xa8] sm:$0xff]
          %v1679 = vld [vmem:[#allocation10 + $0xb0] sm:$0xff]
          %v1680 = vld [vmem:[#allocation10 + $0xb8] sm:$0xff]
          %v1681 = vld [vmem:[#allocation10 + $0xc0] sm:$0xff]
          %v1682 = vld [vmem:[#allocation10 + $0xc8] sm:$0xff]
          %v1683 = vld [vmem:[#allocation10 + $0xd0] sm:$0xff]
          %v1684 = vld [vmem:[#allocation10 + $0xd8] sm:$0xff]
          %v1685 = vld [vmem:[#allocation10 + $0xe0] sm:$0xff]
          %v1686 = vld [vmem:[#allocation10 + $0xe8] sm:$0xff]
          %v1687 = vld [vmem:[#allocation10 + $0xf0] sm:$0xff]
          %v1688 = vld [vmem:[#allocation10 + $0xf8] sm:$0xff]
          %v1689 = vld [vmem:[#allocation10 + $0x100] sm:$0xff]
          %v1690 = vld [vmem:[#allocation10 + $0x108] sm:$0xff]
          %v1691 = vld [vmem:[#allocation10 + $0x110] sm:$0xff]
          %v1692 = vld [vmem:[#allocation10 + $0x118] sm:$0xff]
          %v1693 = vld [vmem:[#allocation10 + $0x120] sm:$0xff]
          %v1694 = vld [vmem:[#allocation10 + $0x128] sm:$0xff]
          %v1695 = vld [vmem:[#allocation10 + $0x130] sm:$0xff]
          %v1696 = vld [vmem:[#allocation10 + $0x138] sm:$0xff]
          %v1697 = vld [vmem:[#allocation10 + $0x140] sm:$0xff]
          %v1698 = vld [vmem:[#allocation10 + $0x148] sm:$0xff]
          %v1699 = vld [vmem:[#allocation10 + $0x150] sm:$0xff]
          %v1700 = vld [vmem:[#allocation10 + $0x158] sm:$0xff]
          %v1701 = vld [vmem:[#allocation10 + $0x160] sm:$0xff]
          %v1702 = vld [vmem:[#allocation10 + $0x168] sm:$0xff]
          %v1703 = vld [vmem:[#allocation10 + $0x170] sm:$0xff]
          %v1704 = vld [vmem:[#allocation10 + $0x178] sm:$0xff]
          %v1705 = vld [vmem:[#allocation10 + $0x180] sm:$0xff]
          %v1706 = vld [vmem:[#allocation10 + $0x188] sm:$0xff]
          %v1707 = vld [vmem:[#allocation10 + $0x190] sm:$0xff]
          %v1708 = vld [vmem:[#allocation10 + $0x198] sm:$0xff]
          %v1709 = vld [vmem:[#allocation10 + $0x1a0] sm:$0xff]
          %v1710 = vld [vmem:[#allocation10 + $0x1a8] sm:$0xff]
          %v1711 = vld [vmem:[#allocation10 + $0x1b0] sm:$0xff]
          %v1712 = vld [vmem:[#allocation10 + $0x1b8] sm:$0xff]
          %v1713 = vld [vmem:[#allocation10 + $0x1c0] sm:$0xff]
          %v1714 = vld [vmem:[#allocation10 + $0x1c8] sm:$0xff]
          %v1715 = vld [vmem:[#allocation10 + $0x1d0] sm:$0xff]
          %v1716 = vld [vmem:[#allocation10 + $0x1d8] sm:$0xff]
          %v1717 = vld [vmem:[#allocation10 + $0x1e0] sm:$0xff]
          %v1718 = vld [vmem:[#allocation10 + $0x1e8] sm:$0xff]
          %v1719 = vld [vmem:[#allocation10 + $0x1f0] sm:$0xff]
          %v1720 = vld [vmem:[#allocation10 + $0x1f8] sm:$0xff]
          %s1721 = scalar_lea.vmem [#allocation12], 8
          %v1722 = vld [vmem:[%s1721] sm:$0xff]
          %v1724 = vlaneseq
          %v1725 = vshrl.u32 %v1724, 7
          %v1726 = vsub.s32 0, %v1725
          %v1727 = vrot.slane %v1722, %v1726
          %v1728 = vlaneseq
          %v1729 = vshrl.u32 %v1728, 7
          %v1730 = vsub.s32 1, %v1729
          %v1731 = vrot.slane %v1722, %v1730
          %v1732 = vlaneseq
          %v1733 = vshrl.u32 %v1732, 7
          %v1734 = vsub.s32 2, %v1733
          %v1735 = vrot.slane %v1722, %v1734
          %v1736 = vlaneseq
          %v1737 = vshrl.u32 %v1736, 7
          %v1738 = vsub.s32 3, %v1737
          %v1739 = vrot.slane %v1722, %v1738
          %v1740 = vlaneseq
          %v1741 = vshrl.u32 %v1740, 7
          %v1742 = vsub.s32 4, %v1741
          %v1743 = vrot.slane %v1722, %v1742
          %v1744 = vlaneseq
          %v1745 = vshrl.u32 %v1744, 7
          %v1746 = vsub.s32 5, %v1745
          %v1747 = vrot.slane %v1722, %v1746
          %v1748 = vlaneseq
          %v1749 = vshrl.u32 %v1748, 7
          %v1750 = vsub.s32 6, %v1749
          %v1751 = vrot.slane %v1722, %v1750
          %v1752 = vlaneseq
          %v1753 = vshrl.u32 %v1752, 7
          %v1754 = vsub.s32 7, %v1753
          %v1755 = vrot.slane %v1722, %v1754
          %v1828 = vunpack.c.l.b16 %v1657
          %v1829 = vunpack.c.h.b16 %v1657
          %v1830 = vunpack.c.l.b16 %v1658
          %v1831 = vunpack.c.h.b16 %v1658
          %v1832 = vunpack.c.l.b16 %v1659
          %v1833 = vunpack.c.h.b16 %v1659
          %v1834 = vunpack.c.l.b16 %v1660
          %v1835 = vunpack.c.h.b16 %v1660
          %v1836 = vunpack.c.l.b16 %v1661
          %v1837 = vunpack.c.h.b16 %v1661
          %v1838 = vunpack.c.l.b16 %v1662
          %v1839 = vunpack.c.h.b16 %v1662
          %v1840 = vunpack.c.l.b16 %v1663
          %v1841 = vunpack.c.h.b16 %v1663
          %v1842 = vunpack.c.l.b16 %v1664
          %v1843 = vunpack.c.h.b16 %v1664
          %v1844 = vunpack.c.l.b16 %v1665
          %v1845 = vunpack.c.h.b16 %v1665
          %v1846 = vunpack.c.l.b16 %v1666
          %v1847 = vunpack.c.h.b16 %v1666
          %v1848 = vunpack.c.l.b16 %v1667
          %v1849 = vunpack.c.h.b16 %v1667
          %v1850 = vunpack.c.l.b16 %v1668
          %v1851 = vunpack.c.h.b16 %v1668
          %v1852 = vunpack.c.l.b16 %v1669
          %v1853 = vunpack.c.h.b16 %v1669
          %v1854 = vunpack.c.l.b16 %v1670
          %v1855 = vunpack.c.h.b16 %v1670
          %v1856 = vunpack.c.l.b16 %v1671
          %v1857 = vunpack.c.h.b16 %v1671
          %v1858 = vunpack.c.l.b16 %v1672
          %v1859 = vunpack.c.h.b16 %v1672
          %v1860 = vunpack.c.l.b16 %v1673
          %v1861 = vunpack.c.h.b16 %v1673
          %v1862 = vunpack.c.l.b16 %v1674
          %v1863 = vunpack.c.h.b16 %v1674
          %v1864 = vunpack.c.l.b16 %v1675
          %v1865 = vunpack.c.h.b16 %v1675
          %v1866 = vunpack.c.l.b16 %v1676
          %v1867 = vunpack.c.h.b16 %v1676
          %v1868 = vunpack.c.l.b16 %v1677
          %v1869 = vunpack.c.h.b16 %v1677
          %v1870 = vunpack.c.l.b16 %v1678
          %v1871 = vunpack.c.h.b16 %v1678
          %v1872 = vunpack.c.l.b16 %v1679
          %v1873 = vunpack.c.h.b16 %v1679
          %v1874 = vunpack.c.l.b16 %v1680
          %v1875 = vunpack.c.h.b16 %v1680
          %v1876 = vunpack.c.l.b16 %v1681
          %v1877 = vunpack.c.h.b16 %v1681
          %v1878 = vunpack.c.l.b16 %v1682
          %v1879 = vunpack.c.h.b16 %v1682
          %v1880 = vunpack.c.l.b16 %v1683
          %v1881 = vunpack.c.h.b16 %v1683
          %v1882 = vunpack.c.l.b16 %v1684
          %v1883 = vunpack.c.h.b16 %v1684
          %v1884 = vunpack.c.l.b16 %v1685
          %v1885 = vunpack.c.h.b16 %v1685
          %v1886 = vunpack.c.l.b16 %v1686
          %v1887 = vunpack.c.h.b16 %v1686
          %v1888 = vunpack.c.l.b16 %v1687
          %v1889 = vunpack.c.h.b16 %v1687
          %v1890 = vunpack.c.l.b16 %v1688
          %v1891 = vunpack.c.h.b16 %v1688
          %v1892 = vunpack.c.l.b16 %v1689
          %v1893 = vunpack.c.h.b16 %v1689
          %v1894 = vunpack.c.l.b16 %v1690
          %v1895 = vunpack.c.h.b16 %v1690
          %v1896 = vunpack.c.l.b16 %v1691
          %v1897 = vunpack.c.h.b16 %v1691
          %v1898 = vunpack.c.l.b16 %v1692
          %v1899 = vunpack.c.h.b16 %v1692
          %v1900 = vunpack.c.l.b16 %v1693
          %v1901 = vunpack.c.h.b16 %v1693
          %v1902 = vunpack.c.l.b16 %v1694
          %v1903 = vunpack.c.h.b16 %v1694
          %v1904 = vunpack.c.l.b16 %v1695
          %v1905 = vunpack.c.h.b16 %v1695
          %v1906 = vunpack.c.l.b16 %v1696
          %v1907 = vunpack.c.h.b16 %v1696
          %v1908 = vunpack.c.l.b16 %v1697
          %v1909 = vunpack.c.h.b16 %v1697
          %v1910 = vunpack.c.l.b16 %v1698
          %v1911 = vunpack.c.h.b16 %v1698
          %v1912 = vunpack.c.l.b16 %v1699
          %v1913 = vunpack.c.h.b16 %v1699
          %v1914 = vunpack.c.l.b16 %v1700
          %v1915 = vunpack.c.h.b16 %v1700
          %v1916 = vunpack.c.l.b16 %v1701
          %v1917 = vunpack.c.h.b16 %v1701
          %v1918 = vunpack.c.l.b16 %v1702
          %v1919 = vunpack.c.h.b16 %v1702
          %v1920 = vunpack.c.l.b16 %v1703
          %v1921 = vunpack.c.h.b16 %v1703
          %v1922 = vunpack.c.l.b16 %v1704
          %v1923 = vunpack.c.h.b16 %v1704
          %v1924 = vunpack.c.l.b16 %v1705
          %v1925 = vunpack.c.h.b16 %v1705
          %v1926 = vunpack.c.l.b16 %v1706
          %v1927 = vunpack.c.h.b16 %v1706
          %v1928 = vunpack.c.l.b16 %v1707
          %v1929 = vunpack.c.h.b16 %v1707
          %v1930 = vunpack.c.l.b16 %v1708
          %v1931 = vunpack.c.h.b16 %v1708
          %v1932 = vunpack.c.l.b16 %v1709
          %v1933 = vunpack.c.h.b16 %v1709
          %v1934 = vunpack.c.l.b16 %v1710
          %v1935 = vunpack.c.h.b16 %v1710
          %v1936 = vunpack.c.l.b16 %v1711
          %v1937 = vunpack.c.h.b16 %v1711
          %v1938 = vunpack.c.l.b16 %v1712
          %v1939 = vunpack.c.h.b16 %v1712
          %v1940 = vunpack.c.l.b16 %v1713
          %v1941 = vunpack.c.h.b16 %v1713
          %v1942 = vunpack.c.l.b16 %v1714
          %v1943 = vunpack.c.h.b16 %v1714
          %v1944 = vunpack.c.l.b16 %v1715
          %v1945 = vunpack.c.h.b16 %v1715
          %v1946 = vunpack.c.l.b16 %v1716
          %v1947 = vunpack.c.h.b16 %v1716
          %v1948 = vunpack.c.l.b16 %v1717
          %v1949 = vunpack.c.h.b16 %v1717
          %v1950 = vunpack.c.l.b16 %v1718
          %v1951 = vunpack.c.h.b16 %v1718
          %v1952 = vunpack.c.l.b16 %v1719
          %v1953 = vunpack.c.h.b16 %v1719
          %v1954 = vunpack.c.l.b16 %v1720
          %v1955 = vunpack.c.h.b16 %v1720
          %v1956 = vpack.c.b16 %v1836, %v1828
          %v1957 = vpack.c.b16 %v1837, %v1829
          %v1958 = vpack.c.b16 %v1838, %v1830
          %v1959 = vpack.c.b16 %v1839, %v1831
          %v1960 = vpack.c.b16 %v1840, %v1832
          %v1961 = vpack.c.b16 %v1841, %v1833
          %v1962 = vpack.c.b16 %v1842, %v1834
          %v1963 = vpack.c.b16 %v1843, %v1835
          %v1964 = vpack.c.b16 %v1852, %v1844
          %v1965 = vpack.c.b16 %v1853, %v1845
          %v1966 = vpack.c.b16 %v1854, %v1846
          %v1967 = vpack.c.b16 %v1855, %v1847
          %v1968 = vpack.c.b16 %v1856, %v1848
          %v1969 = vpack.c.b16 %v1857, %v1849
          %v1970 = vpack.c.b16 %v1858, %v1850
          %v1971 = vpack.c.b16 %v1859, %v1851
          %v1972 = vpack.c.b16 %v1868, %v1860
          %v1973 = vpack.c.b16 %v1869, %v1861
          %v1974 = vpack.c.b16 %v1870, %v1862
          %v1975 = vpack.c.b16 %v1871, %v1863
          %v1976 = vpack.c.b16 %v1872, %v1864
          %v1977 = vpack.c.b16 %v1873, %v1865
          %v1978 = vpack.c.b16 %v1874, %v1866
          %v1979 = vpack.c.b16 %v1875, %v1867
          %v1980 = vpack.c.b16 %v1884, %v1876
          %v1981 = vpack.c.b16 %v1885, %v1877
          %v1982 = vpack.c.b16 %v1886, %v1878
          %v1983 = vpack.c.b16 %v1887, %v1879
          %v1984 = vpack.c.b16 %v1888, %v1880
          %v1985 = vpack.c.b16 %v1889, %v1881
          %v1986 = vpack.c.b16 %v1890, %v1882
          %v1987 = vpack.c.b16 %v1891, %v1883
          %v1988 = vpack.c.b16 %v1900, %v1892
          %v1989 = vpack.c.b16 %v1901, %v1893
          %v1990 = vpack.c.b16 %v1902, %v1894
          %v1991 = vpack.c.b16 %v1903, %v1895
          %v1992 = vpack.c.b16 %v1904, %v1896
          %v1993 = vpack.c.b16 %v1905, %v1897
          %v1994 = vpack.c.b16 %v1906, %v1898
          %v1995 = vpack.c.b16 %v1907, %v1899
          %v1996 = vpack.c.b16 %v1916, %v1908
          %v1997 = vpack.c.b16 %v1917, %v1909
          %v1998 = vpack.c.b16 %v1918, %v1910
          %v1999 = vpack.c.b16 %v1919, %v1911
          %v2000 = vpack.c.b16 %v1920, %v1912
          %v2001 = vpack.c.b16 %v1921, %v1913
          %v2002 = vpack.c.b16 %v1922, %v1914
          %v2003 = vpack.c.b16 %v1923, %v1915
          %v2004 = vpack.c.b16 %v1932, %v1924
          %v2005 = vpack.c.b16 %v1933, %v1925
          %v2006 = vpack.c.b16 %v1934, %v1926
          %v2007 = vpack.c.b16 %v1935, %v1927
          %v2008 = vpack.c.b16 %v1936, %v1928
          %v2009 = vpack.c.b16 %v1937, %v1929
          %v2010 = vpack.c.b16 %v1938, %v1930
          %v2011 = vpack.c.b16 %v1939, %v1931
          %v2012 = vpack.c.b16 %v1948, %v1940
          %v2013 = vpack.c.b16 %v1949, %v1941
          %v2014 = vpack.c.b16 %v1950, %v1942
          %v2015 = vpack.c.b16 %v1951, %v1943
          %v2016 = vpack.c.b16 %v1952, %v1944
          %v2017 = vpack.c.b16 %v1953, %v1945
          %v2018 = vpack.c.b16 %v1954, %v1946
          %v2019 = vpack.c.b16 %v1955, %v1947
          %2084 = vmatprep.subr.bf16.mxu0 %v1957
          %2085 = vmatpush1.bf16.msra.mxu0 %v1956
          %2086 = vmatprep.subr.bf16.mxu0 %v1965
          %2087 = vmatpush1.bf16.msra.mxu0 %v1964
          %2088 = vmatprep.subr.bf16.mxu0 %v1973
          %2089 = vmatpush1.bf16.msra.mxu0 %v1972
          %2090 = vmatprep.subr.bf16.mxu0 %v1981
          %2091 = vmatpush1.bf16.msra.mxu0 %v1980
          %2092 = vmatprep.subr.bf16.mxu0 %v1989
          %2093 = vmatpush1.bf16.msra.mxu0 %v1988
          %2094 = vmatprep.subr.bf16.mxu0 %v1997
          %2095 = vmatpush1.bf16.msra.mxu0 %v1996
          %2096 = vmatprep.subr.bf16.mxu0 %v2005
          %2097 = vmatpush1.bf16.msra.mxu0 %v2004
          %2098 = vmatprep.subr.bf16.mxu0 %v2013
          %2099 = vmatpush1.bf16.msra.mxu0 %v2012
          %2100 = vmatprep.subr.bf16.mxu0 0
          %2101 = vmatpush1.bf16.msra.mxu0 0
          %2102 = vmatprep.subr.bf16.mxu0 0
          %2103 = vmatpush1.bf16.msra.mxu0 0
          %2104 = vmatprep.subr.bf16.mxu0 0
          %2105 = vmatpush1.bf16.msra.mxu0 0
          %2106 = vmatprep.subr.bf16.mxu0 0
          %2107 = vmatpush1.bf16.msra.mxu0 0
          %2108 = vmatprep.subr.bf16.mxu0 0
          %2109 = vmatpush1.bf16.msra.mxu0 0
          %2110 = vmatprep.subr.bf16.mxu0 0
          %2111 = vmatpush1.bf16.msra.mxu0 0
          %2112 = vmatprep.subr.bf16.mxu0 0
          %2113 = vmatpush1.bf16.msra.mxu0 0
          %2114 = vmatprep.subr.bf16.mxu0 0
          %2115 = vmatpush1.bf16.msra.mxu0 0
          %2116 = vmatprep.mubr.bf16.mxu0 0
          %2117 = vmatmul.mubr.bf16.gmra.mrb[0].mxu0 %v1656
          %v2118 = vpop.f32.mrb[0].mxu0
          %v2119 = vadd.f32 %v1727, %v2118
          %v2120 = vpop.f32.mrb[0].mxu0
          %v2121 = vadd.f32 %v1731, %v2120
          %v2122 = vpop.f32.mrb[0].mxu0
          %v2123 = vpop.f32.mrb[0].mxu0
          %2124 = vdwg.mxu0
          %2125 = vmatprep.subr.bf16.mxu0 %v1959
          %2126 = vmatpush1.bf16.msra.mxu0 %v1958
          %2127 = vmatprep.subr.bf16.mxu0 %v1967
          %2128 = vmatpush1.bf16.msra.mxu0 %v1966
          %2129 = vmatprep.subr.bf16.mxu0 %v1975
          %2130 = vmatpush1.bf16.msra.mxu0 %v1974
          %2131 = vmatprep.subr.bf16.mxu0 %v1983
          %2132 = vmatpush1.bf16.msra.mxu0 %v1982
          %2133 = vmatprep.subr.bf16.mxu0 %v1991
          %2134 = vmatpush1.bf16.msra.mxu0 %v1990
          %2135 = vmatprep.subr.bf16.mxu0 %v1999
          %2136 = vmatpush1.bf16.msra.mxu0 %v1998
          %2137 = vmatprep.subr.bf16.mxu0 %v2007
          %2138 = vmatpush1.bf16.msra.mxu0 %v2006
          %2139 = vmatprep.subr.bf16.mxu0 %v2015
          %2140 = vmatpush1.bf16.msra.mxu0 %v2014
          %2141 = vmatprep.subr.bf16.mxu0 0
          %2142 = vmatpush1.bf16.msra.mxu0 0
          %2143 = vmatprep.subr.bf16.mxu0 0
          %2144 = vmatpush1.bf16.msra.mxu0 0
          %2145 = vmatprep.subr.bf16.mxu0 0
          %2146 = vmatpush1.bf16.msra.mxu0 0
          %2147 = vmatprep.subr.bf16.mxu0 0
          %2148 = vmatpush1.bf16.msra.mxu0 0
          %2149 = vmatprep.subr.bf16.mxu0 0
          %2150 = vmatpush1.bf16.msra.mxu0 0
          %2151 = vmatprep.subr.bf16.mxu0 0
          %2152 = vmatpush1.bf16.msra.mxu0 0
          %2153 = vmatprep.subr.bf16.mxu0 0
          %2154 = vmatpush1.bf16.msra.mxu0 0
          %2155 = vmatprep.subr.bf16.mxu0 0
          %2156 = vmatpush1.bf16.msra.mxu0 0
          %2157 = vmatprep.mubr.bf16.mxu0 0
          %2158 = vmatmul.mubr.bf16.gmra.mrb[0].mxu0 %v1656
          %v2159 = vpop.f32.mrb[0].mxu0
          %v2160 = vadd.f32 %v1735, %v2159
          %v2161 = vpop.f32.mrb[0].mxu0
          %v2162 = vadd.f32 %v1739, %v2161
          %v2163 = vpop.f32.mrb[0].mxu0
          %v2164 = vpop.f32.mrb[0].mxu0
          %2165 = vdwg.mxu0
          %2166 = vmatprep.subr.bf16.mxu0 %v1961
          %2167 = vmatpush1.bf16.msra.mxu0 %v1960
          %2168 = vmatprep.subr.bf16.mxu0 %v1969
          %2169 = vmatpush1.bf16.msra.mxu0 %v1968
          %2170 = vmatprep.subr.bf16.mxu0 %v1977
          %2171 = vmatpush1.bf16.msra.mxu0 %v1976
          %2172 = vmatprep.subr.bf16.mxu0 %v1985
          %2173 = vmatpush1.bf16.msra.mxu0 %v1984
          %2174 = vmatprep.subr.bf16.mxu0 %v1993
          %2175 = vmatpush1.bf16.msra.mxu0 %v1992
          %2176 = vmatprep.subr.bf16.mxu0 %v2001
          %2177 = vmatpush1.bf16.msra.mxu0 %v2000
          %2178 = vmatprep.subr.bf16.mxu0 %v2009
          %2179 = vmatpush1.bf16.msra.mxu0 %v2008
          %2180 = vmatprep.subr.bf16.mxu0 %v2017
          %2181 = vmatpush1.bf16.msra.mxu0 %v2016
          %2182 = vmatprep.subr.bf16.mxu0 0
          %2183 = vmatpush1.bf16.msra.mxu0 0
          %2184 = vmatprep.subr.bf16.mxu0 0
          %2185 = vmatpush1.bf16.msra.mxu0 0
          %2186 = vmatprep.subr.bf16.mxu0 0
          %2187 = vmatpush1.bf16.msra.mxu0 0
          %2188 = vmatprep.subr.bf16.mxu0 0
          %2189 = vmatpush1.bf16.msra.mxu0 0
          %2190 = vmatprep.subr.bf16.mxu0 0
          %2191 = vmatpush1.bf16.msra.mxu0 0
          %2192 = vmatprep.subr.bf16.mxu0 0
          %2193 = vmatpush1.bf16.msra.mxu0 0
          %2194 = vmatprep.subr.bf16.mxu0 0
          %2195 = vmatpush1.bf16.msra.mxu0 0
          %2196 = vmatprep.subr.bf16.mxu0 0
          %2197 = vmatpush1.bf16.msra.mxu0 0
          %2198 = vmatprep.mubr.bf16.mxu0 0
          %2199 = vmatmul.mubr.bf16.gmra.mrb[0].mxu0 %v1656
          %v2200 = vpop.f32.mrb[0].mxu0
          %v2201 = vadd.f32 %v1743, %v2200
          %v2202 = vpop.f32.mrb[0].mxu0
          %v2203 = vadd.f32 %v1747, %v2202
          %v2204 = vpop.f32.mrb[0].mxu0
          %v2205 = vpop.f32.mrb[0].mxu0
          %2206 = vdwg.mxu0
          %2207 = vmatprep.subr.bf16.mxu0 %v1963
          %2208 = vmatpush1.bf16.msra.mxu0 %v1962
          %2209 = vmatprep.subr.bf16.mxu0 %v1971
          %2210 = vmatpush1.bf16.msra.mxu0 %v1970
          %2211 = vmatprep.subr.bf16.mxu0 %v1979
          %2212 = vmatpush1.bf16.msra.mxu0 %v1978
          %2213 = vmatprep.subr.bf16.mxu0 %v1987
          %2214 = vmatpush1.bf16.msra.mxu0 %v1986
          %2215 = vmatprep.subr.bf16.mxu0 %v1995
          %2216 = vmatpush1.bf16.msra.mxu0 %v1994
          %2217 = vmatprep.subr.bf16.mxu0 %v2003
          %2218 = vmatpush1.bf16.msra.mxu0 %v2002
          %2219 = vmatprep.subr.bf16.mxu0 %v2011
          %2220 = vmatpush1.bf16.msra.mxu0 %v2010
          %2221 = vmatprep.subr.bf16.mxu0 %v2019
          %2222 = vmatpush1.bf16.msra.mxu0 %v2018
          %2223 = vmatprep.subr.bf16.mxu0 0
          %2224 = vmatpush1.bf16.msra.mxu0 0
          %2225 = vmatprep.subr.bf16.mxu0 0
          %2226 = vmatpush1.bf16.msra.mxu0 0
          %2227 = vmatprep.subr.bf16.mxu0 0
          %2228 = vmatpush1.bf16.msra.mxu0 0
          %2229 = vmatprep.subr.bf16.mxu0 0
          %2230 = vmatpush1.bf16.msra.mxu0 0
          %2231 = vmatprep.subr.bf16.mxu0 0
          %2232 = vmatpush1.bf16.msra.mxu0 0
          %2233 = vmatprep.subr.bf16.mxu0 0
          %2234 = vmatpush1.bf16.msra.mxu0 0
          %2235 = vmatprep.subr.bf16.mxu0 0
          %2236 = vmatpush1.bf16.msra.mxu0 0
          %2237 = vmatprep.subr.bf16.mxu0 0
          %2238 = vmatpush1.bf16.msra.mxu0 0
          %2239 = vmatprep.mubr.bf16.mxu0 0
          %2240 = vmatmul.mubr.bf16.gmra.mrb[0].mxu0 %v1656
          %v2241 = vpop.f32.mrb[0].mxu0
          %v2242 = vadd.f32 %v1751, %v2241
          %v2243 = vpop.f32.mrb[0].mxu0
          %v2244 = vadd.f32 %v1755, %v2243
          %v2245 = vpop.f32.mrb[0].mxu0
          %v2246 = vpop.f32.mrb[0].mxu0
          %2247 = vdwg.mxu0
          %v2248 = vmul.f32 %v2119, 0.5
          %v2249 = vmul.f32 %v2121, 0.5
          %v2250 = vmul.f32 %v2160, 0.5
          %v2251 = vmul.f32 %v2162, 0.5
          %v2252 = vmul.f32 %v2201, 0.5
          %v2253 = vmul.f32 %v2203, 0.5
          %v2254 = vmul.f32 %v2242, 0.5
          %v2255 = vmul.f32 %v2244, 0.5
          %v2256 = vmul.f32 %v2119, 0.70710677
          %v2257 = vmul.f32 %v2121, 0.70710677
          %v2258 = vmul.f32 %v2160, 0.70710677
          %v2259 = vmul.f32 %v2162, 0.70710677
          %v2260 = vmul.f32 %v2201, 0.70710677
          %v2261 = vmul.f32 %v2203, 0.70710677
          %v2262 = vmul.f32 %v2242, 0.70710677
          %v2263 = vmul.f32 %v2244, 0.70710677
          %v2264 = vand.u32 2147483647, %v2256
          %v2265 = vand.u32 2147483647, %v2257
          %v2266 = vand.u32 2147483647, %v2258
          %v2267 = vand.u32 2147483647, %v2259
          %v2268 = vand.u32 2147483647, %v2260
          %v2269 = vand.u32 2147483647, %v2261
          %v2270 = vand.u32 2147483647, %v2262
          %v2271 = vand.u32 2147483647, %v2263
          %v2272 = vmul.f32 %v2264, 0.3275911
          %v2273 = vmul.f32 %v2265, 0.3275911
          %v2274 = vmul.f32 %v2266, 0.3275911
          %v2275 = vmul.f32 %v2267, 0.3275911
          %v2276 = vmul.f32 %v2268, 0.3275911
          %v2277 = vmul.f32 %v2269, 0.3275911
          %v2278 = vmul.f32 %v2270, 0.3275911
          %v2279 = vmul.f32 %v2271, 0.3275911
          %v2280 = vadd.f32 %v2272, 1.0
          %v2281 = vadd.f32 %v2273, 1.0
          %v2282 = vadd.f32 %v2274, 1.0
          %v2283 = vadd.f32 %v2275, 1.0
          %v2284 = vadd.f32 %v2276, 1.0
          %v2285 = vadd.f32 %v2277, 1.0
          %v2286 = vadd.f32 %v2278, 1.0
          %v2287 = vadd.f32 %v2279, 1.0
          %v2288 = vrcp.pop %v2280
          %v2289 = vrcp.pop %v2281
          %v2290 = vrcp.pop %v2282
          %v2291 = vrcp.pop %v2283
          %v2292 = vrcp.pop %v2284
          %v2293 = vrcp.pop %v2285
          %v2294 = vrcp.pop %v2286
          %v2295 = vrcp.pop %v2287
          %v2296 = vmul.f32 %v2288, 1.0614054
          %v2297 = vmul.f32 %v2289, 1.0614054
          %v2298 = vmul.f32 %v2290, 1.0614054
          %v2299 = vmul.f32 %v2291, 1.0614054
          %v2300 = vmul.f32 %v2292, 1.0614054
          %v2301 = vmul.f32 %v2293, 1.0614054
          %v2302 = vmul.f32 %v2294, 1.0614054
          %v2303 = vmul.f32 %v2295, 1.0614054
          %v2304 = vadd.f32 %v2296, -1.4531521
          %v2305 = vadd.f32 %v2297, -1.4531521
          %v2306 = vadd.f32 %v2298, -1.4531521
          %v2307 = vadd.f32 %v2299, -1.4531521
          %v2308 = vadd.f32 %v2300, -1.4531521
          %v2309 = vadd.f32 %v2301, -1.4531521
          %v2310 = vadd.f32 %v2302, -1.4531521
          %v2311 = vadd.f32 %v2303, -1.4531521
          %v2312 = vmul.f32 %v2304, %v2288
          %v2313 = vmul.f32 %v2305, %v2289
          %v2314 = vmul.f32 %v2306, %v2290
          %v2315 = vmul.f32 %v2307, %v2291
          %v2316 = vmul.f32 %v2308, %v2292
          %v2317 = vmul.f32 %v2309, %v2293
          %v2318 = vmul.f32 %v2310, %v2294
          %v2319 = vmul.f32 %v2311, %v2295
          %v2320 = vadd.f32 %v2312, 1.4214138
          %v2321 = vadd.f32 %v2313, 1.4214138
          %v2322 = vadd.f32 %v2314, 1.4214138
          %v2323 = vadd.f32 %v2315, 1.4214138
          %v2324 = vadd.f32 %v2316, 1.4214138
          %v2325 = vadd.f32 %v2317, 1.4214138
          %v2326 = vadd.f32 %v2318, 1.4214138
          %v2327 = vadd.f32 %v2319, 1.4214138
          %v2328 = vmul.f32 %v2320, %v2288
          %v2329 = vmul.f32 %v2321, %v2289
          %v2330 = vmul.f32 %v2322, %v2290
          %v2331 = vmul.f32 %v2323, %v2291
          %v2332 = vmul.f32 %v2324, %v2292
          %v2333 = vmul.f32 %v2325, %v2293
          %v2334 = vmul.f32 %v2326, %v2294
          %v2335 = vmul.f32 %v2327, %v2295
          %v2336 = vadd.f32 %v2328, -0.28449672
          %v2337 = vadd.f32 %v2329, -0.28449672
          %v2338 = vadd.f32 %v2330, -0.28449672
          %v2339 = vadd.f32 %v2331, -0.28449672
          %v2340 = vadd.f32 %v2332, -0.28449672
          %v2341 = vadd.f32 %v2333, -0.28449672
          %v2342 = vadd.f32 %v2334, -0.28449672
          %v2343 = vadd.f32 %v2335, -0.28449672
          %v2344 = vmul.f32 %v2336, %v2288
          %v2345 = vmul.f32 %v2337, %v2289
          %v2346 = vmul.f32 %v2338, %v2290
          %v2347 = vmul.f32 %v2339, %v2291
          %v2348 = vmul.f32 %v2340, %v2292
          %v2349 = vmul.f32 %v2341, %v2293
          %v2350 = vmul.f32 %v2342, %v2294
          %v2351 = vmul.f32 %v2343, %v2295
          %v2352 = vadd.f32 %v2344, 0.2548296
          %v2353 = vadd.f32 %v2345, 0.2548296
          %v2354 = vadd.f32 %v2346, 0.2548296
          %v2355 = vadd.f32 %v2347, 0.2548296
          %v2356 = vadd.f32 %v2348, 0.2548296
          %v2357 = vadd.f32 %v2349, 0.2548296
          %v2358 = vadd.f32 %v2350, 0.2548296
          %v2359 = vadd.f32 %v2351, 0.2548296
          %v2360 = vmul.f32 %v2352, %v2288
          %v2361 = vmul.f32 %v2353, %v2289
          %v2362 = vmul.f32 %v2354, %v2290
          %v2363 = vmul.f32 %v2355, %v2291
          %v2364 = vmul.f32 %v2356, %v2292
          %v2365 = vmul.f32 %v2357, %v2293
          %v2366 = vmul.f32 %v2358, %v2294
          %v2367 = vmul.f32 %v2359, %v2295
          %v2368 = vsub.f32 0.0, %v2264
          %v2369 = vsub.f32 0.0, %v2265
          %v2370 = vsub.f32 0.0, %v2266
          %v2371 = vsub.f32 0.0, %v2267
          %v2372 = vsub.f32 0.0, %v2268
          %v2373 = vsub.f32 0.0, %v2269
          %v2374 = vsub.f32 0.0, %v2270
          %v2375 = vsub.f32 0.0, %v2271
          %v2376 = vmul.f32 %v2368, %v2264
          %v2377 = vmul.f32 %v2369, %v2265
          %v2378 = vmul.f32 %v2370, %v2266
          %v2379 = vmul.f32 %v2371, %v2267
          %v2380 = vmul.f32 %v2372, %v2268
          %v2381 = vmul.f32 %v2373, %v2269
          %v2382 = vmul.f32 %v2374, %v2270
          %v2383 = vmul.f32 %v2375, %v2271
          %v2384 = vmul.f32 %v2376, 1.442695
          %v2385 = vpow.pop %v2384
          %v2386 = vmul.f32 %v2377, 1.442695
          %v2387 = vpow.pop %v2386
          %v2388 = vmul.f32 %v2378, 1.442695
          %v2389 = vpow.pop %v2388
          %v2390 = vmul.f32 %v2379, 1.442695
          %v2391 = vpow.pop %v2390
          %v2392 = vmul.f32 %v2380, 1.442695
          %v2393 = vpow.pop %v2392
          %v2394 = vmul.f32 %v2381, 1.442695
          %v2395 = vpow.pop %v2394
          %v2396 = vmul.f32 %v2382, 1.442695
          %v2397 = vpow.pop %v2396
          %v2398 = vmul.f32 %v2383, 1.442695
          %v2399 = vpow.pop %v2398
          %v2400 = vmul.f32 %v2360, %v2385
          %v2401 = vmul.f32 %v2361, %v2387
          %v2402 = vmul.f32 %v2362, %v2389
          %v2403 = vmul.f32 %v2363, %v2391
          %v2404 = vmul.f32 %v2364, %v2393
          %v2405 = vmul.f32 %v2365, %v2395
          %v2406 = vmul.f32 %v2366, %v2397
          %v2407 = vmul.f32 %v2367, %v2399
          %v2408 = vsub.f32 1.0, %v2400
          %v2409 = vsub.f32 1.0, %v2401
          %v2410 = vsub.f32 1.0, %v2402
          %v2411 = vsub.f32 1.0, %v2403
          %v2412 = vsub.f32 1.0, %v2404
          %v2413 = vsub.f32 1.0, %v2405
          %v2414 = vsub.f32 1.0, %v2406
          %v2415 = vsub.f32 1.0, %v2407
          %vm2416 = vcmp.ge.f32.partialorder %v2256, 0.0
          %vm2417 = vcmp.ge.f32.partialorder %v2257, 0.0
          %vm2418 = vcmp.ge.f32.partialorder %v2258, 0.0
          %vm2419 = vcmp.ge.f32.partialorder %v2259, 0.0
          %vm2420 = vcmp.ge.f32.partialorder %v2260, 0.0
          %vm2421 = vcmp.ge.f32.partialorder %v2261, 0.0
          %vm2422 = vcmp.ge.f32.partialorder %v2262, 0.0
          %vm2423 = vcmp.ge.f32.partialorder %v2263, 0.0
          %v2424 = vsub.f32 0.0, %v2408
          %v2425 = vsub.f32 0.0, %v2409
          %v2426 = vsub.f32 0.0, %v2410
          %v2427 = vsub.f32 0.0, %v2411
          %v2428 = vsub.f32 0.0, %v2412
          %v2429 = vsub.f32 0.0, %v2413
          %v2430 = vsub.f32 0.0, %v2414
          %v2431 = vsub.f32 0.0, %v2415
          %v2432 = vsel %vm2416, %v2408, %v2424
          %v2433 = vsel %vm2417, %v2409, %v2425
          %v2434 = vsel %vm2418, %v2410, %v2426
          %v2435 = vsel %vm2419, %v2411, %v2427
          %v2436 = vsel %vm2420, %v2412, %v2428
          %v2437 = vsel %vm2421, %v2413, %v2429
          %v2438 = vsel %vm2422, %v2414, %v2430
          %v2439 = vsel %vm2423, %v2415, %v2431
          %v2440 = vadd.f32 %v2432, 1.0
          %v2441 = vadd.f32 %v2433, 1.0
          %v2442 = vadd.f32 %v2434, 1.0
          %v2443 = vadd.f32 %v2435, 1.0
          %v2444 = vadd.f32 %v2436, 1.0
          %v2445 = vadd.f32 %v2437, 1.0
          %v2446 = vadd.f32 %v2438, 1.0
          %v2447 = vadd.f32 %v2439, 1.0
          %v2448 = vmul.f32 %v2248, %v2440
          %v2449 = vmul.f32 %v2249, %v2441
          %v2450 = vmul.f32 %v2250, %v2442
          %v2451 = vmul.f32 %v2251, %v2443
          %v2452 = vmul.f32 %v2252, %v2444
          %v2453 = vmul.f32 %v2253, %v2445
          %v2454 = vmul.f32 %v2254, %v2446
          %v2455 = vmul.f32 %v2255, %v2447
          %v2464 = vcombine.low %v2448, %v2449
          %v2465 = vcombine.low %v2450, %v2451
          %v2467 = vunpack.c.l.s4 1983009808
          %v2468 = vunpack.c.0.s8 %v2467
          %v2469 = vlaneseq
          %v2470 = vshrl.u32 %v2469, 7
          %v2471 = vsub.s32 %v2468, %v2470
          %v2472 = vrot.slane %v2464, %v2471
          %v2474 = vunpack.c.l.s4 1983009808
          %v2475 = vunpack.c.0.s8 %v2474
          %v2476 = vlaneseq
          %v2477 = vshrl.u32 %v2476, 7
          %v2478 = vsub.s32 %v2475, %v2477
          %v2479 = vrot.slane %v2465, %v2478
          %v2480 = vcombine.low %v2472, %v2479
          %v2481 = vcombine.low %v2452, %v2453
          %v2482 = vcombine.low %v2454, %v2455
          %v2484 = vunpack.c.l.s4 1983009808
          %v2485 = vunpack.c.0.s8 %v2484
          %v2486 = vlaneseq
          %v2487 = vshrl.u32 %v2486, 7
          %v2488 = vsub.s32 %v2485, %v2487
          %v2489 = vrot.slane %v2481, %v2488
          %v2491 = vunpack.c.l.s4 1983009808
          %v2492 = vunpack.c.0.s8 %v2491
          %v2493 = vlaneseq
          %v2494 = vshrl.u32 %v2493, 7
          %v2495 = vsub.s32 %v2492, %v2494
          %v2496 = vrot.slane %v2482, %v2495
          %v2497 = vcombine.low %v2489, %v2496
          %2500 = vst [vmem:[#allocation2] sm:$0xff] %v2480
          %2501 = vst [vmem:[#allocation2 + $0x8] sm:$0xff] %v2497
        $region96: #{model_forward.1} parent=55 // pred_fallthru
          _
        %s2502 = smul.u32 %s28, 2
        %v2503 = vld [vmem:[#allocation2] sm:$0xff]
        %v2504 = vld [vmem:[#allocation2 + $0x8] sm:$0xff]
        %v2507 = vcombine.high %v2503, %v2503
        %v2509 = vunpack.c.l.s4 1983009808
        %v2510 = vunpack.c.0.s8 %v2509
        %v2511 = vlaneseq
        %v2512 = vshrl.u32 %v2511, 7
        %v2513 = vsub.s32 %v2510, %v2512
        %v2514 = vrot.slane %v2503, %v2513
        %v2516 = vunpack.c.l.s4 1983009808
        %v2517 = vunpack.c.0.s8 %v2516
        %v2518 = vlaneseq
        %v2519 = vshrl.u32 %v2518, 7
        %v2520 = vsub.s32 %v2517, %v2519
        %v2521 = vrot.slane %v2507, %v2520
        %v2522 = vcombine.high %v2514, %v2514
        %v2523 = vcombine.high %v2521, %v2521
        %v2524 = vcombine.high %v2504, %v2504
        %v2526 = vunpack.c.l.s4 1983009808
        %v2527 = vunpack.c.0.s8 %v2526
        %v2528 = vlaneseq
        %v2529 = vshrl.u32 %v2528, 7
        %v2530 = vsub.s32 %v2527, %v2529
        %v2531 = vrot.slane %v2504, %v2530
        %v2533 = vunpack.c.l.s4 1983009808
        %v2534 = vunpack.c.0.s8 %v2533
        %v2535 = vlaneseq
        %v2536 = vshrl.u32 %v2535, 7
        %v2537 = vsub.s32 %v2534, %v2536
        %v2538 = vrot.slane %v2524, %v2537
        %v2539 = vcombine.high %v2531, %v2531
        %v2540 = vcombine.high %v2538, %v2538
        %v2549 = vpack.c.bf16 %v2514, %v2514
        %v2550 = vpack.c.bf16 %v2522, %v2522
        %v2551 = vpack.c.bf16 %v2521, %v2521
        %v2552 = vpack.c.bf16 %v2523, %v2523
        %v2553 = vpack.c.bf16 %v2531, %v2531
        %v2554 = vpack.c.bf16 %v2539, %v2539
        %v2555 = vpack.c.bf16 %v2538, %v2538
        %v2556 = vpack.c.bf16 %v2540, %v2540
        %v2557 = vld [vmem:[%s409] sm:$0xff]
        %v2558 = vld [vmem:[%s409 + $0x8] sm:$0xff]
        %v2559 = vld [vmem:[%s409 + $0x10] sm:$0xff]
        %v2560 = vld [vmem:[%s409 + $0x18] sm:$0xff]
        %v2561 = vld [vmem:[%s409 + $0x20] sm:$0xff]
        %v2562 = vld [vmem:[%s409 + $0x28] sm:$0xff]
        %v2563 = vld [vmem:[%s409 + $0x30] sm:$0xff]
        %v2564 = vld [vmem:[%s409 + $0x38] sm:$0xff]
        %v2565 = vld [vmem:[%s409 + $0x40] sm:$0xff]
        %v2566 = vld [vmem:[%s409 + $0x48] sm:$0xff]
        %v2567 = vld [vmem:[%s409 + $0x50] sm:$0xff]
        %v2568 = vld [vmem:[%s409 + $0x58] sm:$0xff]
        %v2569 = vld [vmem:[%s409 + $0x60] sm:$0xff]
        %v2570 = vld [vmem:[%s409 + $0x68] sm:$0xff]
        %v2571 = vld [vmem:[%s409 + $0x70] sm:$0xff]
        %v2572 = vld [vmem:[%s409 + $0x78] sm:$0xff]
        %v2573 = vld [vmem:[%s409 + $0x80] sm:$0xff]
        %v2574 = vld [vmem:[%s409 + $0x88] sm:$0xff]
        %v2575 = vld [vmem:[%s409 + $0x90] sm:$0xff]
        %v2576 = vld [vmem:[%s409 + $0x98] sm:$0xff]
        %v2577 = vld [vmem:[%s409 + $0xa0] sm:$0xff]
        %v2578 = vld [vmem:[%s409 + $0xa8] sm:$0xff]
        %v2579 = vld [vmem:[%s409 + $0xb0] sm:$0xff]
        %v2580 = vld [vmem:[%s409 + $0xb8] sm:$0xff]
        %v2581 = vld [vmem:[%s409 + $0xc0] sm:$0xff]
        %v2582 = vld [vmem:[%s409 + $0xc8] sm:$0xff]
        %v2583 = vld [vmem:[%s409 + $0xd0] sm:$0xff]
        %v2584 = vld [vmem:[%s409 + $0xd8] sm:$0xff]
        %v2585 = vld [vmem:[%s409 + $0xe0] sm:$0xff]
        %v2586 = vld [vmem:[%s409 + $0xe8] sm:$0xff]
        %v2587 = vld [vmem:[%s409 + $0xf0] sm:$0xff]
        %v2588 = vld [vmem:[%s409 + $0xf8] sm:$0xff]
        %v2589 = vld [vmem:[%s409 + $0x100] sm:$0xff]
        %v2590 = vld [vmem:[%s409 + $0x108] sm:$0xff]
        %v2591 = vld [vmem:[%s409 + $0x110] sm:$0xff]
        %v2592 = vld [vmem:[%s409 + $0x118] sm:$0xff]
        %v2593 = vld [vmem:[%s409 + $0x120] sm:$0xff]
        %v2594 = vld [vmem:[%s409 + $0x128] sm:$0xff]
        %v2595 = vld [vmem:[%s409 + $0x130] sm:$0xff]
        %v2596 = vld [vmem:[%s409 + $0x138] sm:$0xff]
        %v2597 = vld [vmem:[%s409 + $0x140] sm:$0xff]
        %v2598 = vld [vmem:[%s409 + $0x148] sm:$0xff]
        %v2599 = vld [vmem:[%s409 + $0x150] sm:$0xff]
        %v2600 = vld [vmem:[%s409 + $0x158] sm:$0xff]
        %v2601 = vld [vmem:[%s409 + $0x160] sm:$0xff]
        %v2602 = vld [vmem:[%s409 + $0x168] sm:$0xff]
        %v2603 = vld [vmem:[%s409 + $0x170] sm:$0xff]
        %v2604 = vld [vmem:[%s409 + $0x178] sm:$0xff]
        %v2605 = vld [vmem:[%s409 + $0x180] sm:$0xff]
        %v2606 = vld [vmem:[%s409 + $0x188] sm:$0xff]
        %v2607 = vld [vmem:[%s409 + $0x190] sm:$0xff]
        %v2608 = vld [vmem:[%s409 + $0x198] sm:$0xff]
        %v2609 = vld [vmem:[%s409 + $0x1a0] sm:$0xff]
        %v2610 = vld [vmem:[%s409 + $0x1a8] sm:$0xff]
        %v2611 = vld [vmem:[%s409 + $0x1b0] sm:$0xff]
        %v2612 = vld [vmem:[%s409 + $0x1b8] sm:$0xff]
        %v2613 = vld [vmem:[%s409 + $0x1c0] sm:$0xff]
        %v2614 = vld [vmem:[%s409 + $0x1c8] sm:$0xff]
        %v2615 = vld [vmem:[%s409 + $0x1d0] sm:$0xff]
        %v2616 = vld [vmem:[%s409 + $0x1d8] sm:$0xff]
        %v2617 = vld [vmem:[%s409 + $0x1e0] sm:$0xff]
        %v2618 = vld [vmem:[%s409 + $0x1e8] sm:$0xff]
        %v2619 = vld [vmem:[%s409 + $0x1f0] sm:$0xff]
        %v2620 = vld [vmem:[%s409 + $0x1f8] sm:$0xff]
        %v2621 = vld [vmem:[%s409 + $0x200] sm:$0xff]
        %v2622 = vld [vmem:[%s409 + $0x208] sm:$0xff]
        %v2623 = vld [vmem:[%s409 + $0x210] sm:$0xff]
        %v2624 = vld [vmem:[%s409 + $0x218] sm:$0xff]
        %v2625 = vld [vmem:[%s409 + $0x220] sm:$0xff]
        %v2626 = vld [vmem:[%s409 + $0x228] sm:$0xff]
        %v2627 = vld [vmem:[%s409 + $0x230] sm:$0xff]
        %v2628 = vld [vmem:[%s409 + $0x238] sm:$0xff]
        %v2629 = vld [vmem:[%s409 + $0x240] sm:$0xff]
        %v2630 = vld [vmem:[%s409 + $0x248] sm:$0xff]
        %v2631 = vld [vmem:[%s409 + $0x250] sm:$0xff]
        %v2632 = vld [vmem:[%s409 + $0x258] sm:$0xff]
        %v2633 = vld [vmem:[%s409 + $0x260] sm:$0xff]
        %v2634 = vld [vmem:[%s409 + $0x268] sm:$0xff]
        %v2635 = vld [vmem:[%s409 + $0x270] sm:$0xff]
        %v2636 = vld [vmem:[%s409 + $0x278] sm:$0xff]
        %v2637 = vld [vmem:[%s409 + $0x280] sm:$0xff]
        %v2638 = vld [vmem:[%s409 + $0x288] sm:$0xff]
        %v2639 = vld [vmem:[%s409 + $0x290] sm:$0xff]
        %v2640 = vld [vmem:[%s409 + $0x298] sm:$0xff]
        %v2641 = vld [vmem:[%s409 + $0x2a0] sm:$0xff]
        %v2642 = vld [vmem:[%s409 + $0x2a8] sm:$0xff]
        %v2643 = vld [vmem:[%s409 + $0x2b0] sm:$0xff]
        %v2644 = vld [vmem:[%s409 + $0x2b8] sm:$0xff]
        %v2645 = vld [vmem:[%s409 + $0x2c0] sm:$0xff]
        %v2646 = vld [vmem:[%s409 + $0x2c8] sm:$0xff]
        %v2647 = vld [vmem:[%s409 + $0x2d0] sm:$0xff]
        %v2648 = vld [vmem:[%s409 + $0x2d8] sm:$0xff]
        %v2649 = vld [vmem:[%s409 + $0x2e0] sm:$0xff]
        %v2650 = vld [vmem:[%s409 + $0x2e8] sm:$0xff]
        %v2651 = vld [vmem:[%s409 + $0x2f0] sm:$0xff]
        %v2652 = vld [vmem:[%s409 + $0x2f8] sm:$0xff]
        %v2653 = vld [vmem:[%s409 + $0x300] sm:$0xff]
        %v2654 = vld [vmem:[%s409 + $0x308] sm:$0xff]
        %v2655 = vld [vmem:[%s409 + $0x310] sm:$0xff]
        %v2656 = vld [vmem:[%s409 + $0x318] sm:$0xff]
        %v2657 = vld [vmem:[%s409 + $0x320] sm:$0xff]
        %v2658 = vld [vmem:[%s409 + $0x328] sm:$0xff]
        %v2659 = vld [vmem:[%s409 + $0x330] sm:$0xff]
        %v2660 = vld [vmem:[%s409 + $0x338] sm:$0xff]
        %v2661 = vld [vmem:[%s409 + $0x340] sm:$0xff]
        %v2662 = vld [vmem:[%s409 + $0x348] sm:$0xff]
        %v2663 = vld [vmem:[%s409 + $0x350] sm:$0xff]
        %v2664 = vld [vmem:[%s409 + $0x358] sm:$0xff]
        %v2665 = vld [vmem:[%s409 + $0x360] sm:$0xff]
        %v2666 = vld [vmem:[%s409 + $0x368] sm:$0xff]
        %v2667 = vld [vmem:[%s409 + $0x370] sm:$0xff]
        %v2668 = vld [vmem:[%s409 + $0x378] sm:$0xff]
        %v2669 = vld [vmem:[%s409 + $0x380] sm:$0xff]
        %v2670 = vld [vmem:[%s409 + $0x388] sm:$0xff]
        %v2671 = vld [vmem:[%s409 + $0x390] sm:$0xff]
        %v2672 = vld [vmem:[%s409 + $0x398] sm:$0xff]
        %v2673 = vld [vmem:[%s409 + $0x3a0] sm:$0xff]
        %v2674 = vld [vmem:[%s409 + $0x3a8] sm:$0xff]
        %v2675 = vld [vmem:[%s409 + $0x3b0] sm:$0xff]
        %v2676 = vld [vmem:[%s409 + $0x3b8] sm:$0xff]
        %v2677 = vld [vmem:[%s409 + $0x3c0] sm:$0xff]
        %v2678 = vld [vmem:[%s409 + $0x3c8] sm:$0xff]
        %v2679 = vld [vmem:[%s409 + $0x3d0] sm:$0xff]
        %v2680 = vld [vmem:[%s409 + $0x3d8] sm:$0xff]
        %v2681 = vld [vmem:[%s409 + $0x3e0] sm:$0xff]
        %v2682 = vld [vmem:[%s409 + $0x3e8] sm:$0xff]
        %v2683 = vld [vmem:[%s409 + $0x3f0] sm:$0xff]
        %v2684 = vld [vmem:[%s409 + $0x3f8] sm:$0xff]
        %v2685 = vld [vmem:[%s409 + $0x400] sm:$0xff]
        %v2686 = vld [vmem:[%s409 + $0x408] sm:$0xff]
        %v2687 = vld [vmem:[%s409 + $0x410] sm:$0xff]
        %v2688 = vld [vmem:[%s409 + $0x418] sm:$0xff]
        %v2689 = vld [vmem:[%s409 + $0x420] sm:$0xff]
        %v2690 = vld [vmem:[%s409 + $0x428] sm:$0xff]
        %v2691 = vld [vmem:[%s409 + $0x430] sm:$0xff]
        %v2692 = vld [vmem:[%s409 + $0x438] sm:$0xff]
        %v2693 = vld [vmem:[%s409 + $0x440] sm:$0xff]
        %v2694 = vld [vmem:[%s409 + $0x448] sm:$0xff]
        %v2695 = vld [vmem:[%s409 + $0x450] sm:$0xff]
        %v2696 = vld [vmem:[%s409 + $0x458] sm:$0xff]
        %v2697 = vld [vmem:[%s409 + $0x460] sm:$0xff]
        %v2698 = vld [vmem:[%s409 + $0x468] sm:$0xff]
        %v2699 = vld [vmem:[%s409 + $0x470] sm:$0xff]
        %v2700 = vld [vmem:[%s409 + $0x478] sm:$0xff]
        %v2701 = vld [vmem:[%s409 + $0x480] sm:$0xff]
        %v2702 = vld [vmem:[%s409 + $0x488] sm:$0xff]
        %v2703 = vld [vmem:[%s409 + $0x490] sm:$0xff]
        %v2704 = vld [vmem:[%s409 + $0x498] sm:$0xff]
        %v2705 = vld [vmem:[%s409 + $0x4a0] sm:$0xff]
        %v2706 = vld [vmem:[%s409 + $0x4a8] sm:$0xff]
        %v2707 = vld [vmem:[%s409 + $0x4b0] sm:$0xff]
        %v2708 = vld [vmem:[%s409 + $0x4b8] sm:$0xff]
        %v2709 = vld [vmem:[%s409 + $0x4c0] sm:$0xff]
        %v2710 = vld [vmem:[%s409 + $0x4c8] sm:$0xff]
        %v2711 = vld [vmem:[%s409 + $0x4d0] sm:$0xff]
        %v2712 = vld [vmem:[%s409 + $0x4d8] sm:$0xff]
        %v2713 = vld [vmem:[%s409 + $0x4e0] sm:$0xff]
        %v2714 = vld [vmem:[%s409 + $0x4e8] sm:$0xff]
        %v2715 = vld [vmem:[%s409 + $0x4f0] sm:$0xff]
        %v2716 = vld [vmem:[%s409 + $0x4f8] sm:$0xff]
        %v2717 = vld [vmem:[%s409 + $0x500] sm:$0xff]
        %v2718 = vld [vmem:[%s409 + $0x508] sm:$0xff]
        %v2719 = vld [vmem:[%s409 + $0x510] sm:$0xff]
        %v2720 = vld [vmem:[%s409 + $0x518] sm:$0xff]
        %v2721 = vld [vmem:[%s409 + $0x520] sm:$0xff]
        %v2722 = vld [vmem:[%s409 + $0x528] sm:$0xff]
        %v2723 = vld [vmem:[%s409 + $0x530] sm:$0xff]
        %v2724 = vld [vmem:[%s409 + $0x538] sm:$0xff]
        %v2725 = vld [vmem:[%s409 + $0x540] sm:$0xff]
        %v2726 = vld [vmem:[%s409 + $0x548] sm:$0xff]
        %v2727 = vld [vmem:[%s409 + $0x550] sm:$0xff]
        %v2728 = vld [vmem:[%s409 + $0x558] sm:$0xff]
        %v2729 = vld [vmem:[%s409 + $0x560] sm:$0xff]
        %v2730 = vld [vmem:[%s409 + $0x568] sm:$0xff]
        %v2731 = vld [vmem:[%s409 + $0x570] sm:$0xff]
        %v2732 = vld [vmem:[%s409 + $0x578] sm:$0xff]
        %v2733 = vld [vmem:[%s409 + $0x580] sm:$0xff]
        %v2734 = vld [vmem:[%s409 + $0x588] sm:$0xff]
        %v2735 = vld [vmem:[%s409 + $0x590] sm:$0xff]
        %v2736 = vld [vmem:[%s409 + $0x598] sm:$0xff]
        %v2737 = vld [vmem:[%s409 + $0x5a0] sm:$0xff]
        %v2738 = vld [vmem:[%s409 + $0x5a8] sm:$0xff]
        %v2739 = vld [vmem:[%s409 + $0x5b0] sm:$0xff]
        %v2740 = vld [vmem:[%s409 + $0x5b8] sm:$0xff]
        %v2741 = vld [vmem:[%s409 + $0x5c0] sm:$0xff]
        %v2742 = vld [vmem:[%s409 + $0x5c8] sm:$0xff]
        %v2743 = vld [vmem:[%s409 + $0x5d0] sm:$0xff]
        %v2744 = vld [vmem:[%s409 + $0x5d8] sm:$0xff]
        %v2745 = vld [vmem:[%s409 + $0x5e0] sm:$0xff]
        %v2746 = vld [vmem:[%s409 + $0x5e8] sm:$0xff]
        %v2747 = vld [vmem:[%s409 + $0x5f0] sm:$0xff]
        %v2748 = vld [vmem:[%s409 + $0x5f8] sm:$0xff]
        %v2749 = vld [vmem:[%s409 + $0x600] sm:$0xff]
        %v2750 = vld [vmem:[%s409 + $0x608] sm:$0xff]
        %v2751 = vld [vmem:[%s409 + $0x610] sm:$0xff]
        %v2752 = vld [vmem:[%s409 + $0x618] sm:$0xff]
        %v2753 = vld [vmem:[%s409 + $0x620] sm:$0xff]
        %v2754 = vld [vmem:[%s409 + $0x628] sm:$0xff]
        %v2755 = vld [vmem:[%s409 + $0x630] sm:$0xff]
        %v2756 = vld [vmem:[%s409 + $0x638] sm:$0xff]
        %v2757 = vld [vmem:[%s409 + $0x640] sm:$0xff]
        %v2758 = vld [vmem:[%s409 + $0x648] sm:$0xff]
        %v2759 = vld [vmem:[%s409 + $0x650] sm:$0xff]
        %v2760 = vld [vmem:[%s409 + $0x658] sm:$0xff]
        %v2761 = vld [vmem:[%s409 + $0x660] sm:$0xff]
        %v2762 = vld [vmem:[%s409 + $0x668] sm:$0xff]
        %v2763 = vld [vmem:[%s409 + $0x670] sm:$0xff]
        %v2764 = vld [vmem:[%s409 + $0x678] sm:$0xff]
        %v2765 = vld [vmem:[%s409 + $0x680] sm:$0xff]
        %v2766 = vld [vmem:[%s409 + $0x688] sm:$0xff]
        %v2767 = vld [vmem:[%s409 + $0x690] sm:$0xff]
        %v2768 = vld [vmem:[%s409 + $0x698] sm:$0xff]
        %v2769 = vld [vmem:[%s409 + $0x6a0] sm:$0xff]
        %v2770 = vld [vmem:[%s409 + $0x6a8] sm:$0xff]
        %v2771 = vld [vmem:[%s409 + $0x6b0] sm:$0xff]
        %v2772 = vld [vmem:[%s409 + $0x6b8] sm:$0xff]
        %v2773 = vld [vmem:[%s409 + $0x6c0] sm:$0xff]
        %v2774 = vld [vmem:[%s409 + $0x6c8] sm:$0xff]
        %v2775 = vld [vmem:[%s409 + $0x6d0] sm:$0xff]
        %v2776 = vld [vmem:[%s409 + $0x6d8] sm:$0xff]
        %v2777 = vld [vmem:[%s409 + $0x6e0] sm:$0xff]
        %v2778 = vld [vmem:[%s409 + $0x6e8] sm:$0xff]
        %v2779 = vld [vmem:[%s409 + $0x6f0] sm:$0xff]
        %v2780 = vld [vmem:[%s409 + $0x6f8] sm:$0xff]
        %v2781 = vld [vmem:[%s409 + $0x700] sm:$0xff]
        %v2782 = vld [vmem:[%s409 + $0x708] sm:$0xff]
        %v2783 = vld [vmem:[%s409 + $0x710] sm:$0xff]
        %v2784 = vld [vmem:[%s409 + $0x718] sm:$0xff]
        %v2785 = vld [vmem:[%s409 + $0x720] sm:$0xff]
        %v2786 = vld [vmem:[%s409 + $0x728] sm:$0xff]
        %v2787 = vld [vmem:[%s409 + $0x730] sm:$0xff]
        %v2788 = vld [vmem:[%s409 + $0x738] sm:$0xff]
        %v2789 = vld [vmem:[%s409 + $0x740] sm:$0xff]
        %v2790 = vld [vmem:[%s409 + $0x748] sm:$0xff]
        %v2791 = vld [vmem:[%s409 + $0x750] sm:$0xff]
        %v2792 = vld [vmem:[%s409 + $0x758] sm:$0xff]
        %v2793 = vld [vmem:[%s409 + $0x760] sm:$0xff]
        %v2794 = vld [vmem:[%s409 + $0x768] sm:$0xff]
        %v2795 = vld [vmem:[%s409 + $0x770] sm:$0xff]
        %v2796 = vld [vmem:[%s409 + $0x778] sm:$0xff]
        %v2797 = vld [vmem:[%s409 + $0x780] sm:$0xff]
        %v2798 = vld [vmem:[%s409 + $0x788] sm:$0xff]
        %v2799 = vld [vmem:[%s409 + $0x790] sm:$0xff]
        %v2800 = vld [vmem:[%s409 + $0x798] sm:$0xff]
        %v2801 = vld [vmem:[%s409 + $0x7a0] sm:$0xff]
        %v2802 = vld [vmem:[%s409 + $0x7a8] sm:$0xff]
        %v2803 = vld [vmem:[%s409 + $0x7b0] sm:$0xff]
        %v2804 = vld [vmem:[%s409 + $0x7b8] sm:$0xff]
        %v2805 = vld [vmem:[%s409 + $0x7c0] sm:$0xff]
        %v2806 = vld [vmem:[%s409 + $0x7c8] sm:$0xff]
        %v2807 = vld [vmem:[%s409 + $0x7d0] sm:$0xff]
        %v2808 = vld [vmem:[%s409 + $0x7d8] sm:$0xff]
        %v2809 = vld [vmem:[%s409 + $0x7e0] sm:$0xff]
        %v2810 = vld [vmem:[%s409 + $0x7e8] sm:$0xff]
        %v2811 = vld [vmem:[%s409 + $0x7f0] sm:$0xff]
        %v2812 = vld [vmem:[%s409 + $0x7f8] sm:$0xff]
        %v2813 = vunpack.c.l.s8.bf16 %v2557
        %v2814 = vunpack.c.l.s8.bf16 %v2558
        %v2815 = vunpack.c.l.s8.bf16 %v2559
        %v2816 = vunpack.c.l.s8.bf16 %v2560
        %v2817 = vunpack.c.l.s8.bf16 %v2561
        %v2818 = vunpack.c.l.s8.bf16 %v2562
        %v2819 = vunpack.c.l.s8.bf16 %v2563
        %v2820 = vunpack.c.l.s8.bf16 %v2564
        %v2821 = vunpack.c.h.s8.bf16 %v2557
        %v2822 = vunpack.c.h.s8.bf16 %v2558
        %v2823 = vunpack.c.h.s8.bf16 %v2559
        %v2824 = vunpack.c.h.s8.bf16 %v2560
        %v2825 = vunpack.c.h.s8.bf16 %v2561
        %v2826 = vunpack.c.h.s8.bf16 %v2562
        %v2827 = vunpack.c.h.s8.bf16 %v2563
        %v2828 = vunpack.c.h.s8.bf16 %v2564
        %v2829 = vunpack.c.l.s8.bf16 %v2565
        %v2830 = vunpack.c.l.s8.bf16 %v2566
        %v2831 = vunpack.c.l.s8.bf16 %v2567
        %v2832 = vunpack.c.l.s8.bf16 %v2568
        %v2833 = vunpack.c.l.s8.bf16 %v2569
        %v2834 = vunpack.c.l.s8.bf16 %v2570
        %v2835 = vunpack.c.l.s8.bf16 %v2571
        %v2836 = vunpack.c.l.s8.bf16 %v2572
        %v2837 = vunpack.c.h.s8.bf16 %v2565
        %v2838 = vunpack.c.h.s8.bf16 %v2566
        %v2839 = vunpack.c.h.s8.bf16 %v2567
        %v2840 = vunpack.c.h.s8.bf16 %v2568
        %v2841 = vunpack.c.h.s8.bf16 %v2569
        %v2842 = vunpack.c.h.s8.bf16 %v2570
        %v2843 = vunpack.c.h.s8.bf16 %v2571
        %v2844 = vunpack.c.h.s8.bf16 %v2572
        %v2845 = vunpack.c.l.s8.bf16 %v2573
        %v2846 = vunpack.c.l.s8.bf16 %v2574
        %v2847 = vunpack.c.l.s8.bf16 %v2575
        %v2848 = vunpack.c.l.s8.bf16 %v2576
        %v2849 = vunpack.c.l.s8.bf16 %v2577
        %v2850 = vunpack.c.l.s8.bf16 %v2578
        %v2851 = vunpack.c.l.s8.bf16 %v2579
        %v2852 = vunpack.c.l.s8.bf16 %v2580
        %v2853 = vunpack.c.h.s8.bf16 %v2573
        %v2854 = vunpack.c.h.s8.bf16 %v2574
        %v2855 = vunpack.c.h.s8.bf16 %v2575
        %v2856 = vunpack.c.h.s8.bf16 %v2576
        %v2857 = vunpack.c.h.s8.bf16 %v2577
        %v2858 = vunpack.c.h.s8.bf16 %v2578
        %v2859 = vunpack.c.h.s8.bf16 %v2579
        %v2860 = vunpack.c.h.s8.bf16 %v2580
        %v2861 = vunpack.c.l.s8.bf16 %v2581
        %v2862 = vunpack.c.l.s8.bf16 %v2582
        %v2863 = vunpack.c.l.s8.bf16 %v2583
        %v2864 = vunpack.c.l.s8.bf16 %v2584
        %v2865 = vunpack.c.l.s8.bf16 %v2585
        %v2866 = vunpack.c.l.s8.bf16 %v2586
        %v2867 = vunpack.c.l.s8.bf16 %v2587
        %v2868 = vunpack.c.l.s8.bf16 %v2588
        %v2869 = vunpack.c.h.s8.bf16 %v2581
        %v2870 = vunpack.c.h.s8.bf16 %v2582
        %v2871 = vunpack.c.h.s8.bf16 %v2583
        %v2872 = vunpack.c.h.s8.bf16 %v2584
        %v2873 = vunpack.c.h.s8.bf16 %v2585
        %v2874 = vunpack.c.h.s8.bf16 %v2586
        %v2875 = vunpack.c.h.s8.bf16 %v2587
        %v2876 = vunpack.c.h.s8.bf16 %v2588
        %v2877 = vunpack.c.l.s8.bf16 %v2589
        %v2878 = vunpack.c.l.s8.bf16 %v2590
        %v2879 = vunpack.c.l.s8.bf16 %v2591
        %v2880 = vunpack.c.l.s8.bf16 %v2592
        %v2881 = vunpack.c.l.s8.bf16 %v2593
        %v2882 = vunpack.c.l.s8.bf16 %v2594
        %v2883 = vunpack.c.l.s8.bf16 %v2595
        %v2884 = vunpack.c.l.s8.bf16 %v2596
        %v2885 = vunpack.c.h.s8.bf16 %v2589
        %v2886 = vunpack.c.h.s8.bf16 %v2590
        %v2887 = vunpack.c.h.s8.bf16 %v2591
        %v2888 = vunpack.c.h.s8.bf16 %v2592
        %v2889 = vunpack.c.h.s8.bf16 %v2593
        %v2890 = vunpack.c.h.s8.bf16 %v2594
        %v2891 = vunpack.c.h.s8.bf16 %v2595
        %v2892 = vunpack.c.h.s8.bf16 %v2596
        %v2893 = vunpack.c.l.s8.bf16 %v2597
        %v2894 = vunpack.c.l.s8.bf16 %v2598
        %v2895 = vunpack.c.l.s8.bf16 %v2599
        %v2896 = vunpack.c.l.s8.bf16 %v2600
        %v2897 = vunpack.c.l.s8.bf16 %v2601
        %v2898 = vunpack.c.l.s8.bf16 %v2602
        %v2899 = vunpack.c.l.s8.bf16 %v2603
        %v2900 = vunpack.c.l.s8.bf16 %v2604
        %v2901 = vunpack.c.h.s8.bf16 %v2597
        %v2902 = vunpack.c.h.s8.bf16 %v2598
        %v2903 = vunpack.c.h.s8.bf16 %v2599
        %v2904 = vunpack.c.h.s8.bf16 %v2600
        %v2905 = vunpack.c.h.s8.bf16 %v2601
        %v2906 = vunpack.c.h.s8.bf16 %v2602
        %v2907 = vunpack.c.h.s8.bf16 %v2603
        %v2908 = vunpack.c.h.s8.bf16 %v2604
        %v2909 = vunpack.c.l.s8.bf16 %v2605
        %v2910 = vunpack.c.l.s8.bf16 %v2606
        %v2911 = vunpack.c.l.s8.bf16 %v2607
        %v2912 = vunpack.c.l.s8.bf16 %v2608
        %v2913 = vunpack.c.l.s8.bf16 %v2609
        %v2914 = vunpack.c.l.s8.bf16 %v2610
        %v2915 = vunpack.c.l.s8.bf16 %v2611
        %v2916 = vunpack.c.l.s8.bf16 %v2612
        %v2917 = vunpack.c.h.s8.bf16 %v2605
        %v2918 = vunpack.c.h.s8.bf16 %v2606
        %v2919 = vunpack.c.h.s8.bf16 %v2607
        %v2920 = vunpack.c.h.s8.bf16 %v2608
        %v2921 = vunpack.c.h.s8.bf16 %v2609
        %v2922 = vunpack.c.h.s8.bf16 %v2610
        %v2923 = vunpack.c.h.s8.bf16 %v2611
        %v2924 = vunpack.c.h.s8.bf16 %v2612
        %v2925 = vunpack.c.l.s8.bf16 %v2613
        %v2926 = vunpack.c.l.s8.bf16 %v2614
        %v2927 = vunpack.c.l.s8.bf16 %v2615
        %v2928 = vunpack.c.l.s8.bf16 %v2616
        %v2929 = vunpack.c.l.s8.bf16 %v2617
        %v2930 = vunpack.c.l.s8.bf16 %v2618
        %v2931 = vunpack.c.l.s8.bf16 %v2619
        %v2932 = vunpack.c.l.s8.bf16 %v2620
        %v2933 = vunpack.c.h.s8.bf16 %v2613
        %v2934 = vunpack.c.h.s8.bf16 %v2614
        %v2935 = vunpack.c.h.s8.bf16 %v2615
        %v2936 = vunpack.c.h.s8.bf16 %v2616
        %v2937 = vunpack.c.h.s8.bf16 %v2617
        %v2938 = vunpack.c.h.s8.bf16 %v2618
        %v2939 = vunpack.c.h.s8.bf16 %v2619
        %v2940 = vunpack.c.h.s8.bf16 %v2620
        %v2941 = vunpack.c.l.s8.bf16 %v2621
        %v2942 = vunpack.c.l.s8.bf16 %v2622
        %v2943 = vunpack.c.l.s8.bf16 %v2623
        %v2944 = vunpack.c.l.s8.bf16 %v2624
        %v2945 = vunpack.c.l.s8.bf16 %v2625
        %v2946 = vunpack.c.l.s8.bf16 %v2626
        %v2947 = vunpack.c.l.s8.bf16 %v2627
        %v2948 = vunpack.c.l.s8.bf16 %v2628
        %v2949 = vunpack.c.h.s8.bf16 %v2621
        %v2950 = vunpack.c.h.s8.bf16 %v2622
        %v2951 = vunpack.c.h.s8.bf16 %v2623
        %v2952 = vunpack.c.h.s8.bf16 %v2624
        %v2953 = vunpack.c.h.s8.bf16 %v2625
        %v2954 = vunpack.c.h.s8.bf16 %v2626
        %v2955 = vunpack.c.h.s8.bf16 %v2627
        %v2956 = vunpack.c.h.s8.bf16 %v2628
        %v2957 = vunpack.c.l.s8.bf16 %v2629
        %v2958 = vunpack.c.l.s8.bf16 %v2630
        %v2959 = vunpack.c.l.s8.bf16 %v2631
        %v2960 = vunpack.c.l.s8.bf16 %v2632
        %v2961 = vunpack.c.l.s8.bf16 %v2633
        %v2962 = vunpack.c.l.s8.bf16 %v2634
        %v2963 = vunpack.c.l.s8.bf16 %v2635
        %v2964 = vunpack.c.l.s8.bf16 %v2636
        %v2965 = vunpack.c.h.s8.bf16 %v2629
        %v2966 = vunpack.c.h.s8.bf16 %v2630
        %v2967 = vunpack.c.h.s8.bf16 %v2631
        %v2968 = vunpack.c.h.s8.bf16 %v2632
        %v2969 = vunpack.c.h.s8.bf16 %v2633
        %v2970 = vunpack.c.h.s8.bf16 %v2634
        %v2971 = vunpack.c.h.s8.bf16 %v2635
        %v2972 = vunpack.c.h.s8.bf16 %v2636
        %v2973 = vunpack.c.l.s8.bf16 %v2637
        %v2974 = vunpack.c.l.s8.bf16 %v2638
        %v2975 = vunpack.c.l.s8.bf16 %v2639
        %v2976 = vunpack.c.l.s8.bf16 %v2640
        %v2977 = vunpack.c.l.s8.bf16 %v2641
        %v2978 = vunpack.c.l.s8.bf16 %v2642
        %v2979 = vunpack.c.l.s8.bf16 %v2643
        %v2980 = vunpack.c.l.s8.bf16 %v2644
        %v2981 = vunpack.c.h.s8.bf16 %v2637
        %v2982 = vunpack.c.h.s8.bf16 %v2638
        %v2983 = vunpack.c.h.s8.bf16 %v2639
        %v2984 = vunpack.c.h.s8.bf16 %v2640
        %v2985 = vunpack.c.h.s8.bf16 %v2641
        %v2986 = vunpack.c.h.s8.bf16 %v2642
        %v2987 = vunpack.c.h.s8.bf16 %v2643
        %v2988 = vunpack.c.h.s8.bf16 %v2644
        %v2989 = vunpack.c.l.s8.bf16 %v2645
        %v2990 = vunpack.c.l.s8.bf16 %v2646
        %v2991 = vunpack.c.l.s8.bf16 %v2647
        %v2992 = vunpack.c.l.s8.bf16 %v2648
        %v2993 = vunpack.c.l.s8.bf16 %v2649
        %v2994 = vunpack.c.l.s8.bf16 %v2650
        %v2995 = vunpack.c.l.s8.bf16 %v2651
        %v2996 = vunpack.c.l.s8.bf16 %v2652
        %v2997 = vunpack.c.h.s8.bf16 %v2645
        %v2998 = vunpack.c.h.s8.bf16 %v2646
        %v2999 = vunpack.c.h.s8.bf16 %v2647
        %v3000 = vunpack.c.h.s8.bf16 %v2648
        %v3001 = vunpack.c.h.s8.bf16 %v2649
        %v3002 = vunpack.c.h.s8.bf16 %v2650
        %v3003 = vunpack.c.h.s8.bf16 %v2651
        %v3004 = vunpack.c.h.s8.bf16 %v2652
        %v3005 = vunpack.c.l.s8.bf16 %v2653
        %v3006 = vunpack.c.l.s8.bf16 %v2654
        %v3007 = vunpack.c.l.s8.bf16 %v2655
        %v3008 = vunpack.c.l.s8.bf16 %v2656
        %v3009 = vunpack.c.l.s8.bf16 %v2657
        %v3010 = vunpack.c.l.s8.bf16 %v2658
        %v3011 = vunpack.c.l.s8.bf16 %v2659
        %v3012 = vunpack.c.l.s8.bf16 %v2660
        %v3013 = vunpack.c.h.s8.bf16 %v2653
        %v3014 = vunpack.c.h.s8.bf16 %v2654
        %v3015 = vunpack.c.h.s8.bf16 %v2655
        %v3016 = vunpack.c.h.s8.bf16 %v2656
        %v3017 = vunpack.c.h.s8.bf16 %v2657
        %v3018 = vunpack.c.h.s8.bf16 %v2658
        %v3019 = vunpack.c.h.s8.bf16 %v2659
        %v3020 = vunpack.c.h.s8.bf16 %v2660
        %v3021 = vunpack.c.l.s8.bf16 %v2661
        %v3022 = vunpack.c.l.s8.bf16 %v2662
        %v3023 = vunpack.c.l.s8.bf16 %v2663
        %v3024 = vunpack.c.l.s8.bf16 %v2664
        %v3025 = vunpack.c.l.s8.bf16 %v2665
        %v3026 = vunpack.c.l.s8.bf16 %v2666
        %v3027 = vunpack.c.l.s8.bf16 %v2667
        %v3028 = vunpack.c.l.s8.bf16 %v2668
        %v3029 = vunpack.c.h.s8.bf16 %v2661
        %v3030 = vunpack.c.h.s8.bf16 %v2662
        %v3031 = vunpack.c.h.s8.bf16 %v2663
        %v3032 = vunpack.c.h.s8.bf16 %v2664
        %v3033 = vunpack.c.h.s8.bf16 %v2665
        %v3034 = vunpack.c.h.s8.bf16 %v2666
        %v3035 = vunpack.c.h.s8.bf16 %v2667
        %v3036 = vunpack.c.h.s8.bf16 %v2668
        %v3037 = vunpack.c.l.s8.bf16 %v2669
        %v3038 = vunpack.c.l.s8.bf16 %v2670
        %v3039 = vunpack.c.l.s8.bf16 %v2671
        %v3040 = vunpack.c.l.s8.bf16 %v2672
        %v3041 = vunpack.c.l.s8.bf16 %v2673
        %v3042 = vunpack.c.l.s8.bf16 %v2674
        %v3043 = vunpack.c.l.s8.bf16 %v2675
        %v3044 = vunpack.c.l.s8.bf16 %v2676
        %v3045 = vunpack.c.h.s8.bf16 %v2669
        %v3046 = vunpack.c.h.s8.bf16 %v2670
        %v3047 = vunpack.c.h.s8.bf16 %v2671
        %v3048 = vunpack.c.h.s8.bf16 %v2672
        %v3049 = vunpack.c.h.s8.bf16 %v2673
        %v3050 = vunpack.c.h.s8.bf16 %v2674
        %v3051 = vunpack.c.h.s8.bf16 %v2675
        %v3052 = vunpack.c.h.s8.bf16 %v2676
        %v3053 = vunpack.c.l.s8.bf16 %v2677
        %v3054 = vunpack.c.l.s8.bf16 %v2678
        %v3055 = vunpack.c.l.s8.bf16 %v2679
        %v3056 = vunpack.c.l.s8.bf16 %v2680
        %v3057 = vunpack.c.l.s8.bf16 %v2681
        %v3058 = vunpack.c.l.s8.bf16 %v2682
        %v3059 = vunpack.c.l.s8.bf16 %v2683
        %v3060 = vunpack.c.l.s8.bf16 %v2684
        %v3061 = vunpack.c.h.s8.bf16 %v2677
        %v3062 = vunpack.c.h.s8.bf16 %v2678
        %v3063 = vunpack.c.h.s8.bf16 %v2679
        %v3064 = vunpack.c.h.s8.bf16 %v2680
        %v3065 = vunpack.c.h.s8.bf16 %v2681
        %v3066 = vunpack.c.h.s8.bf16 %v2682
        %v3067 = vunpack.c.h.s8.bf16 %v2683
        %v3068 = vunpack.c.h.s8.bf16 %v2684
        %v3069 = vunpack.c.l.s8.bf16 %v2685
        %v3070 = vunpack.c.l.s8.bf16 %v2686
        %v3071 = vunpack.c.l.s8.bf16 %v2687
        %v3072 = vunpack.c.l.s8.bf16 %v2688
        %v3073 = vunpack.c.l.s8.bf16 %v2689
        %v3074 = vunpack.c.l.s8.bf16 %v2690
        %v3075 = vunpack.c.l.s8.bf16 %v2691
        %v3076 = vunpack.c.l.s8.bf16 %v2692
        %v3077 = vunpack.c.h.s8.bf16 %v2685
        %v3078 = vunpack.c.h.s8.bf16 %v2686
        %v3079 = vunpack.c.h.s8.bf16 %v2687
        %v3080 = vunpack.c.h.s8.bf16 %v2688
        %v3081 = vunpack.c.h.s8.bf16 %v2689
        %v3082 = vunpack.c.h.s8.bf16 %v2690
        %v3083 = vunpack.c.h.s8.bf16 %v2691
        %v3084 = vunpack.c.h.s8.bf16 %v2692
        %v3085 = vunpack.c.l.s8.bf16 %v2693
        %v3086 = vunpack.c.l.s8.bf16 %v2694
        %v3087 = vunpack.c.l.s8.bf16 %v2695
        %v3088 = vunpack.c.l.s8.bf16 %v2696
        %v3089 = vunpack.c.l.s8.bf16 %v2697
        %v3090 = vunpack.c.l.s8.bf16 %v2698
        %v3091 = vunpack.c.l.s8.bf16 %v2699
        %v3092 = vunpack.c.l.s8.bf16 %v2700
        %v3093 = vunpack.c.h.s8.bf16 %v2693
        %v3094 = vunpack.c.h.s8.bf16 %v2694
        %v3095 = vunpack.c.h.s8.bf16 %v2695
        %v3096 = vunpack.c.h.s8.bf16 %v2696
        %v3097 = vunpack.c.h.s8.bf16 %v2697
        %v3098 = vunpack.c.h.s8.bf16 %v2698
        %v3099 = vunpack.c.h.s8.bf16 %v2699
        %v3100 = vunpack.c.h.s8.bf16 %v2700
        %v3101 = vunpack.c.l.s8.bf16 %v2701
        %v3102 = vunpack.c.l.s8.bf16 %v2702
        %v3103 = vunpack.c.l.s8.bf16 %v2703
        %v3104 = vunpack.c.l.s8.bf16 %v2704
        %v3105 = vunpack.c.l.s8.bf16 %v2705
        %v3106 = vunpack.c.l.s8.bf16 %v2706
        %v3107 = vunpack.c.l.s8.bf16 %v2707
        %v3108 = vunpack.c.l.s8.bf16 %v2708
        %v3109 = vunpack.c.h.s8.bf16 %v2701
        %v3110 = vunpack.c.h.s8.bf16 %v2702
        %v3111 = vunpack.c.h.s8.bf16 %v2703
        %v3112 = vunpack.c.h.s8.bf16 %v2704
        %v3113 = vunpack.c.h.s8.bf16 %v2705
        %v3114 = vunpack.c.h.s8.bf16 %v2706
        %v3115 = vunpack.c.h.s8.bf16 %v2707
        %v3116 = vunpack.c.h.s8.bf16 %v2708
        %v3117 = vunpack.c.l.s8.bf16 %v2709
        %v3118 = vunpack.c.l.s8.bf16 %v2710
        %v3119 = vunpack.c.l.s8.bf16 %v2711
        %v3120 = vunpack.c.l.s8.bf16 %v2712
        %v3121 = vunpack.c.l.s8.bf16 %v2713
        %v3122 = vunpack.c.l.s8.bf16 %v2714
        %v3123 = vunpack.c.l.s8.bf16 %v2715
        %v3124 = vunpack.c.l.s8.bf16 %v2716
        %v3125 = vunpack.c.h.s8.bf16 %v2709
        %v3126 = vunpack.c.h.s8.bf16 %v2710
        %v3127 = vunpack.c.h.s8.bf16 %v2711
        %v3128 = vunpack.c.h.s8.bf16 %v2712
        %v3129 = vunpack.c.h.s8.bf16 %v2713
        %v3130 = vunpack.c.h.s8.bf16 %v2714
        %v3131 = vunpack.c.h.s8.bf16 %v2715
        %v3132 = vunpack.c.h.s8.bf16 %v2716
        %v3133 = vunpack.c.l.s8.bf16 %v2717
        %v3134 = vunpack.c.l.s8.bf16 %v2718
        %v3135 = vunpack.c.l.s8.bf16 %v2719
        %v3136 = vunpack.c.l.s8.bf16 %v2720
        %v3137 = vunpack.c.l.s8.bf16 %v2721
        %v3138 = vunpack.c.l.s8.bf16 %v2722
        %v3139 = vunpack.c.l.s8.bf16 %v2723
        %v3140 = vunpack.c.l.s8.bf16 %v2724
        %v3141 = vunpack.c.h.s8.bf16 %v2717
        %v3142 = vunpack.c.h.s8.bf16 %v2718
        %v3143 = vunpack.c.h.s8.bf16 %v2719
        %v3144 = vunpack.c.h.s8.bf16 %v2720
        %v3145 = vunpack.c.h.s8.bf16 %v2721
        %v3146 = vunpack.c.h.s8.bf16 %v2722
        %v3147 = vunpack.c.h.s8.bf16 %v2723
        %v3148 = vunpack.c.h.s8.bf16 %v2724
        %v3149 = vunpack.c.l.s8.bf16 %v2725
        %v3150 = vunpack.c.l.s8.bf16 %v2726
        %v3151 = vunpack.c.l.s8.bf16 %v2727
        %v3152 = vunpack.c.l.s8.bf16 %v2728
        %v3153 = vunpack.c.l.s8.bf16 %v2729
        %v3154 = vunpack.c.l.s8.bf16 %v2730
        %v3155 = vunpack.c.l.s8.bf16 %v2731
        %v3156 = vunpack.c.l.s8.bf16 %v2732
        %v3157 = vunpack.c.h.s8.bf16 %v2725
        %v3158 = vunpack.c.h.s8.bf16 %v2726
        %v3159 = vunpack.c.h.s8.bf16 %v2727
        %v3160 = vunpack.c.h.s8.bf16 %v2728
        %v3161 = vunpack.c.h.s8.bf16 %v2729
        %v3162 = vunpack.c.h.s8.bf16 %v2730
        %v3163 = vunpack.c.h.s8.bf16 %v2731
        %v3164 = vunpack.c.h.s8.bf16 %v2732
        %v3165 = vunpack.c.l.s8.bf16 %v2733
        %v3166 = vunpack.c.l.s8.bf16 %v2734
        %v3167 = vunpack.c.l.s8.bf16 %v2735
        %v3168 = vunpack.c.l.s8.bf16 %v2736
        %v3169 = vunpack.c.l.s8.bf16 %v2737
        %v3170 = vunpack.c.l.s8.bf16 %v2738
        %v3171 = vunpack.c.l.s8.bf16 %v2739
        %v3172 = vunpack.c.l.s8.bf16 %v2740
        %v3173 = vunpack.c.h.s8.bf16 %v2733
        %v3174 = vunpack.c.h.s8.bf16 %v2734
        %v3175 = vunpack.c.h.s8.bf16 %v2735
        %v3176 = vunpack.c.h.s8.bf16 %v2736
        %v3177 = vunpack.c.h.s8.bf16 %v2737
        %v3178 = vunpack.c.h.s8.bf16 %v2738
        %v3179 = vunpack.c.h.s8.bf16 %v2739
        %v3180 = vunpack.c.h.s8.bf16 %v2740
        %v3181 = vunpack.c.l.s8.bf16 %v2741
        %v3182 = vunpack.c.l.s8.bf16 %v2742
        %v3183 = vunpack.c.l.s8.bf16 %v2743
        %v3184 = vunpack.c.l.s8.bf16 %v2744
        %v3185 = vunpack.c.l.s8.bf16 %v2745
        %v3186 = vunpack.c.l.s8.bf16 %v2746
        %v3187 = vunpack.c.l.s8.bf16 %v2747
        %v3188 = vunpack.c.l.s8.bf16 %v2748
        %v3189 = vunpack.c.h.s8.bf16 %v2741
        %v3190 = vunpack.c.h.s8.bf16 %v2742
        %v3191 = vunpack.c.h.s8.bf16 %v2743
        %v3192 = vunpack.c.h.s8.bf16 %v2744
        %v3193 = vunpack.c.h.s8.bf16 %v2745
        %v3194 = vunpack.c.h.s8.bf16 %v2746
        %v3195 = vunpack.c.h.s8.bf16 %v2747
        %v3196 = vunpack.c.h.s8.bf16 %v2748
        %v3197 = vunpack.c.l.s8.bf16 %v2749
        %v3198 = vunpack.c.l.s8.bf16 %v2750
        %v3199 = vunpack.c.l.s8.bf16 %v2751
        %v3200 = vunpack.c.l.s8.bf16 %v2752
        %v3201 = vunpack.c.l.s8.bf16 %v2753
        %v3202 = vunpack.c.l.s8.bf16 %v2754
        %v3203 = vunpack.c.l.s8.bf16 %v2755
        %v3204 = vunpack.c.l.s8.bf16 %v2756
        %v3205 = vunpack.c.h.s8.bf16 %v2749
        %v3206 = vunpack.c.h.s8.bf16 %v2750
        %v3207 = vunpack.c.h.s8.bf16 %v2751
        %v3208 = vunpack.c.h.s8.bf16 %v2752
        %v3209 = vunpack.c.h.s8.bf16 %v2753
        %v3210 = vunpack.c.h.s8.bf16 %v2754
        %v3211 = vunpack.c.h.s8.bf16 %v2755
        %v3212 = vunpack.c.h.s8.bf16 %v2756
        %v3213 = vunpack.c.l.s8.bf16 %v2757
        %v3214 = vunpack.c.l.s8.bf16 %v2758
        %v3215 = vunpack.c.l.s8.bf16 %v2759
        %v3216 = vunpack.c.l.s8.bf16 %v2760
        %v3217 = vunpack.c.l.s8.bf16 %v2761
        %v3218 = vunpack.c.l.s8.bf16 %v2762
        %v3219 = vunpack.c.l.s8.bf16 %v2763
        %v3220 = vunpack.c.l.s8.bf16 %v2764
        %v3221 = vunpack.c.h.s8.bf16 %v2757
        %v3222 = vunpack.c.h.s8.bf16 %v2758
        %v3223 = vunpack.c.h.s8.bf16 %v2759
        %v3224 = vunpack.c.h.s8.bf16 %v2760
        %v3225 = vunpack.c.h.s8.bf16 %v2761
        %v3226 = vunpack.c.h.s8.bf16 %v2762
        %v3227 = vunpack.c.h.s8.bf16 %v2763
        %v3228 = vunpack.c.h.s8.bf16 %v2764
        %v3229 = vunpack.c.l.s8.bf16 %v2765
        %v3230 = vunpack.c.l.s8.bf16 %v2766
        %v3231 = vunpack.c.l.s8.bf16 %v2767
        %v3232 = vunpack.c.l.s8.bf16 %v2768
        %v3233 = vunpack.c.l.s8.bf16 %v2769
        %v3234 = vunpack.c.l.s8.bf16 %v2770
        %v3235 = vunpack.c.l.s8.bf16 %v2771
        %v3236 = vunpack.c.l.s8.bf16 %v2772
        %v3237 = vunpack.c.h.s8.bf16 %v2765
        %v3238 = vunpack.c.h.s8.bf16 %v2766
        %v3239 = vunpack.c.h.s8.bf16 %v2767
        %v3240 = vunpack.c.h.s8.bf16 %v2768
        %v3241 = vunpack.c.h.s8.bf16 %v2769
        %v3242 = vunpack.c.h.s8.bf16 %v2770
        %v3243 = vunpack.c.h.s8.bf16 %v2771
        %v3244 = vunpack.c.h.s8.bf16 %v2772
        %v3245 = vunpack.c.l.s8.bf16 %v2773
        %v3246 = vunpack.c.l.s8.bf16 %v2774
        %v3247 = vunpack.c.l.s8.bf16 %v2775
        %v3248 = vunpack.c.l.s8.bf16 %v2776
        %v3249 = vunpack.c.l.s8.bf16 %v2777
        %v3250 = vunpack.c.l.s8.bf16 %v2778
        %v3251 = vunpack.c.l.s8.bf16 %v2779
        %v3252 = vunpack.c.l.s8.bf16 %v2780
        %v3253 = vunpack.c.h.s8.bf16 %v2773
        %v3254 = vunpack.c.h.s8.bf16 %v2774
        %v3255 = vunpack.c.h.s8.bf16 %v2775
        %v3256 = vunpack.c.h.s8.bf16 %v2776
        %v3257 = vunpack.c.h.s8.bf16 %v2777
        %v3258 = vunpack.c.h.s8.bf16 %v2778
        %v3259 = vunpack.c.h.s8.bf16 %v2779
        %v3260 = vunpack.c.h.s8.bf16 %v2780
        %v3261 = vunpack.c.l.s8.bf16 %v2781
        %v3262 = vunpack.c.l.s8.bf16 %v2782
        %v3263 = vunpack.c.l.s8.bf16 %v2783
        %v3264 = vunpack.c.l.s8.bf16 %v2784
        %v3265 = vunpack.c.l.s8.bf16 %v2785
        %v3266 = vunpack.c.l.s8.bf16 %v2786
        %v3267 = vunpack.c.l.s8.bf16 %v2787
        %v3268 = vunpack.c.l.s8.bf16 %v2788
        %v3269 = vunpack.c.h.s8.bf16 %v2781
        %v3270 = vunpack.c.h.s8.bf16 %v2782
        %v3271 = vunpack.c.h.s8.bf16 %v2783
        %v3272 = vunpack.c.h.s8.bf16 %v2784
        %v3273 = vunpack.c.h.s8.bf16 %v2785
        %v3274 = vunpack.c.h.s8.bf16 %v2786
        %v3275 = vunpack.c.h.s8.bf16 %v2787
        %v3276 = vunpack.c.h.s8.bf16 %v2788
        %v3277 = vunpack.c.l.s8.bf16 %v2789
        %v3278 = vunpack.c.l.s8.bf16 %v2790
        %v3279 = vunpack.c.l.s8.bf16 %v2791
        %v3280 = vunpack.c.l.s8.bf16 %v2792
        %v3281 = vunpack.c.l.s8.bf16 %v2793
        %v3282 = vunpack.c.l.s8.bf16 %v2794
        %v3283 = vunpack.c.l.s8.bf16 %v2795
        %v3284 = vunpack.c.l.s8.bf16 %v2796
        %v3285 = vunpack.c.h.s8.bf16 %v2789
        %v3286 = vunpack.c.h.s8.bf16 %v2790
        %v3287 = vunpack.c.h.s8.bf16 %v2791
        %v3288 = vunpack.c.h.s8.bf16 %v2792
        %v3289 = vunpack.c.h.s8.bf16 %v2793
        %v3290 = vunpack.c.h.s8.bf16 %v2794
        %v3291 = vunpack.c.h.s8.bf16 %v2795
        %v3292 = vunpack.c.h.s8.bf16 %v2796
        %v3293 = vunpack.c.l.s8.bf16 %v2797
        %v3294 = vunpack.c.l.s8.bf16 %v2798
        %v3295 = vunpack.c.l.s8.bf16 %v2799
        %v3296 = vunpack.c.l.s8.bf16 %v2800
        %v3297 = vunpack.c.l.s8.bf16 %v2801
        %v3298 = vunpack.c.l.s8.bf16 %v2802
        %v3299 = vunpack.c.l.s8.bf16 %v2803
        %v3300 = vunpack.c.l.s8.bf16 %v2804
        %v3301 = vunpack.c.h.s8.bf16 %v2797
        %v3302 = vunpack.c.h.s8.bf16 %v2798
        %v3303 = vunpack.c.h.s8.bf16 %v2799
        %v3304 = vunpack.c.h.s8.bf16 %v2800
        %v3305 = vunpack.c.h.s8.bf16 %v2801
        %v3306 = vunpack.c.h.s8.bf16 %v2802
        %v3307 = vunpack.c.h.s8.bf16 %v2803
        %v3308 = vunpack.c.h.s8.bf16 %v2804
        %v3309 = vunpack.c.l.s8.bf16 %v2805
        %v3310 = vunpack.c.l.s8.bf16 %v2806
        %v3311 = vunpack.c.l.s8.bf16 %v2807
        %v3312 = vunpack.c.l.s8.bf16 %v2808
        %v3313 = vunpack.c.l.s8.bf16 %v2809
        %v3314 = vunpack.c.l.s8.bf16 %v2810
        %v3315 = vunpack.c.l.s8.bf16 %v2811
        %v3316 = vunpack.c.l.s8.bf16 %v2812
        %v3317 = vunpack.c.h.s8.bf16 %v2805
        %v3318 = vunpack.c.h.s8.bf16 %v2806
        %v3319 = vunpack.c.h.s8.bf16 %v2807
        %v3320 = vunpack.c.h.s8.bf16 %v2808
        %v3321 = vunpack.c.h.s8.bf16 %v2809
        %v3322 = vunpack.c.h.s8.bf16 %v2810
        %v3323 = vunpack.c.h.s8.bf16 %v2811
        %v3324 = vunpack.c.h.s8.bf16 %v2812
        %3325 = vmatprep.subr.bf16.mxu0 %v2814
        %3326 = vmatpush1.bf16.msra.mxu0 %v2813
        %3327 = vmatprep.subr.bf16.mxu0 %v2822
        %3328 = vmatpush1.bf16.msra.mxu0 %v2821
        %3329 = vmatprep.subr.bf16.mxu0 %v2830
        %3330 = vmatpush1.bf16.msra.mxu0 %v2829
        %3331 = vmatprep.subr.bf16.mxu0 %v2838
        %3332 = vmatpush1.bf16.msra.mxu0 %v2837
        %3333 = vmatprep.subr.bf16.mxu0 %v2846
        %3334 = vmatpush1.bf16.msra.mxu0 %v2845
        %3335 = vmatprep.subr.bf16.mxu0 %v2854
        %3336 = vmatpush1.bf16.msra.mxu0 %v2853
        %3337 = vmatprep.subr.bf16.mxu0 %v2862
        %3338 = vmatpush1.bf16.msra.mxu0 %v2861
        %3339 = vmatprep.subr.bf16.mxu0 %v2870
        %3340 = vmatpush1.bf16.msra.mxu0 %v2869
        %3341 = vmatprep.subr.bf16.mxu0 %v2878
        %3342 = vmatpush1.bf16.msra.mxu0 %v2877
        %3343 = vmatprep.subr.bf16.mxu0 %v2886
        %3344 = vmatpush1.bf16.msra.mxu0 %v2885
        %3345 = vmatprep.subr.bf16.mxu0 %v2894
        %3346 = vmatpush1.bf16.msra.mxu0 %v2893
        %3347 = vmatprep.subr.bf16.mxu0 %v2902
        %3348 = vmatpush1.bf16.msra.mxu0 %v2901
        %3349 = vmatprep.subr.bf16.mxu0 %v2910
        %3350 = vmatpush1.bf16.msra.mxu0 %v2909
        %3351 = vmatprep.subr.bf16.mxu0 %v2918
        %3352 = vmatpush1.bf16.msra.mxu0 %v2917
        %3353 = vmatprep.subr.bf16.mxu0 %v2926
        %3354 = vmatpush1.bf16.msra.mxu0 %v2925
        %3355 = vmatprep.subr.bf16.mxu0 %v2934
        %3356 = vmatpush1.bf16.msra.mxu0 %v2933
        %3357 = vmatprep.mubr.bf16.mxu0 %v2550
        %3358 = vmatmul.mubr.bf16.gmra.mrb[0].mxu0 %v2549
        %v3359 = vpop.f32.mrb[0].mxu0
        %v3360 = vadd.f32 0.0, %v3359
        %v3361 = vpop.f32.mrb[0].mxu0
        %v3362 = vadd.f32 0.0, %v3361
        %v3363 = vpop.f32.mrb[0].mxu0
        %v3364 = vpop.f32.mrb[0].mxu0
        %3365 = vdwg.mxu0
        %3366 = vmatprep.subr.bf16.mxu0 %v2942
        %3367 = vmatpush1.bf16.msra.mxu0 %v2941
        %3368 = vmatprep.subr.bf16.mxu0 %v2950
        %3369 = vmatpush1.bf16.msra.mxu0 %v2949
        %3370 = vmatprep.subr.bf16.mxu0 %v2958
        %3371 = vmatpush1.bf16.msra.mxu0 %v2957
        %3372 = vmatprep.subr.bf16.mxu0 %v2966
        %3373 = vmatpush1.bf16.msra.mxu0 %v2965
        %3374 = vmatprep.subr.bf16.mxu0 %v2974
        %3375 = vmatpush1.bf16.msra.mxu0 %v2973
        %3376 = vmatprep.subr.bf16.mxu0 %v2982
        %3377 = vmatpush1.bf16.msra.mxu0 %v2981
        %3378 = vmatprep.subr.bf16.mxu0 %v2990
        %3379 = vmatpush1.bf16.msra.mxu0 %v2989
        %3380 = vmatprep.subr.bf16.mxu0 %v2998
        %3381 = vmatpush1.bf16.msra.mxu0 %v2997
        %3382 = vmatprep.subr.bf16.mxu0 %v3006
        %3383 = vmatpush1.bf16.msra.mxu0 %v3005
        %3384 = vmatprep.subr.bf16.mxu0 %v3014
        %3385 = vmatpush1.bf16.msra.mxu0 %v3013
        %3386 = vmatprep.subr.bf16.mxu0 %v3022
        %3387 = vmatpush1.bf16.msra.mxu0 %v3021
        %3388 = vmatprep.subr.bf16.mxu0 %v3030
        %3389 = vmatpush1.bf16.msra.mxu0 %v3029
        %3390 = vmatprep.subr.bf16.mxu0 %v3038
        %3391 = vmatpush1.bf16.msra.mxu0 %v3037
        %3392 = vmatprep.subr.bf16.mxu0 %v3046
        %3393 = vmatpush1.bf16.msra.mxu0 %v3045
        %3394 = vmatprep.subr.bf16.mxu0 %v3054
        %3395 = vmatpush1.bf16.msra.mxu0 %v3053
        %3396 = vmatprep.subr.bf16.mxu0 %v3062
        %3397 = vmatpush1.bf16.msra.mxu0 %v3061
        %3398 = vmatprep.mubr.bf16.mxu0 %v2552
        %3399 = vmatmul.mubr.bf16.gmra.mrb[0].mxu0 %v2551
        %v3400 = vpop.f32.mrb[0].mxu0
        %v3401 = vadd.f32 %v3360, %v3400
        %v3402 = vpop.f32.mrb[0].mxu0
        %v3403 = vadd.f32 %v3362, %v3402
        %v3404 = vpop.f32.mrb[0].mxu0
        %v3405 = vpop.f32.mrb[0].mxu0
        %3406 = vdwg.mxu0
        %3407 = vmatprep.subr.bf16.mxu0 %v3070
        %3408 = vmatpush1.bf16.msra.mxu0 %v3069
        %3409 = vmatprep.subr.bf16.mxu0 %v3078
        %3410 = vmatpush1.bf16.msra.mxu0 %v3077
        %3411 = vmatprep.subr.bf16.mxu0 %v3086
        %3412 = vmatpush1.bf16.msra.mxu0 %v3085
        %3413 = vmatprep.subr.bf16.mxu0 %v3094
        %3414 = vmatpush1.bf16.msra.mxu0 %v3093
        %3415 = vmatprep.subr.bf16.mxu0 %v3102
        %3416 = vmatpush1.bf16.msra.mxu0 %v3101
        %3417 = vmatprep.subr.bf16.mxu0 %v3110
        %3418 = vmatpush1.bf16.msra.mxu0 %v3109
        %3419 = vmatprep.subr.bf16.mxu0 %v3118
        %3420 = vmatpush1.bf16.msra.mxu0 %v3117
        %3421 = vmatprep.subr.bf16.mxu0 %v3126
        %3422 = vmatpush1.bf16.msra.mxu0 %v3125
        %3423 = vmatprep.subr.bf16.mxu0 %v3134
        %3424 = vmatpush1.bf16.msra.mxu0 %v3133
        %3425 = vmatprep.subr.bf16.mxu0 %v3142
        %3426 = vmatpush1.bf16.msra.mxu0 %v3141
        %3427 = vmatprep.subr.bf16.mxu0 %v3150
        %3428 = vmatpush1.bf16.msra.mxu0 %v3149
        %3429 = vmatprep.subr.bf16.mxu0 %v3158
        %3430 = vmatpush1.bf16.msra.mxu0 %v3157
        %3431 = vmatprep.subr.bf16.mxu0 %v3166
        %3432 = vmatpush1.bf16.msra.mxu0 %v3165
        %3433 = vmatprep.subr.bf16.mxu0 %v3174
        %3434 = vmatpush1.bf16.msra.mxu0 %v3173
        %3435 = vmatprep.subr.bf16.mxu0 %v3182
        %3436 = vmatpush1.bf16.msra.mxu0 %v3181
        %3437 = vmatprep.subr.bf16.mxu0 %v3190
        %3438 = vmatpush1.bf16.msra.mxu0 %v3189
        %3439 = vmatprep.mubr.bf16.mxu0 %v2554
        %3440 = vmatmul.mubr.bf16.gmra.mrb[0].mxu0 %v2553
        %v3441 = vpop.f32.mrb[0].mxu0
        %v3442 = vadd.f32 %v3401, %v3441
        %v3443 = vpop.f32.mrb[0].mxu0
        %v3444 = vadd.f32 %v3403, %v3443
        %v3445 = vpop.f32.mrb[0].mxu0
        %v3446 = vpop.f32.mrb[0].mxu0
        %3447 = vdwg.mxu0
        %3448 = vmatprep.subr.bf16.mxu0 %v3198
        %3449 = vmatpush1.bf16.msra.mxu0 %v3197
        %3450 = vmatprep.subr.bf16.mxu0 %v3206
        %3451 = vmatpush1.bf16.msra.mxu0 %v3205
        %3452 = vmatprep.subr.bf16.mxu0 %v3214
        %3453 = vmatpush1.bf16.msra.mxu0 %v3213
        %3454 = vmatprep.subr.bf16.mxu0 %v3222
        %3455 = vmatpush1.bf16.msra.mxu0 %v3221
        %3456 = vmatprep.subr.bf16.mxu0 %v3230
        %3457 = vmatpush1.bf16.msra.mxu0 %v3229
        %3458 = vmatprep.subr.bf16.mxu0 %v3238
        %3459 = vmatpush1.bf16.msra.mxu0 %v3237
        %3460 = vmatprep.subr.bf16.mxu0 %v3246
        %3461 = vmatpush1.bf16.msra.mxu0 %v3245
        %3462 = vmatprep.subr.bf16.mxu0 %v3254
        %3463 = vmatpush1.bf16.msra.mxu0 %v3253
        %3464 = vmatprep.subr.bf16.mxu0 %v3262
        %3465 = vmatpush1.bf16.msra.mxu0 %v3261
        %3466 = vmatprep.subr.bf16.mxu0 %v3270
        %3467 = vmatpush1.bf16.msra.mxu0 %v3269
        %3468 = vmatprep.subr.bf16.mxu0 %v3278
        %3469 = vmatpush1.bf16.msra.mxu0 %v3277
        %3470 = vmatprep.subr.bf16.mxu0 %v3286
        %3471 = vmatpush1.bf16.msra.mxu0 %v3285
        %3472 = vmatprep.subr.bf16.mxu0 %v3294
        %3473 = vmatpush1.bf16.msra.mxu0 %v3293
        %3474 = vmatprep.subr.bf16.mxu0 %v3302
        %3475 = vmatpush1.bf16.msra.mxu0 %v3301
        %3476 = vmatprep.subr.bf16.mxu0 %v3310
        %3477 = vmatpush1.bf16.msra.mxu0 %v3309
        %3478 = vmatprep.subr.bf16.mxu0 %v3318
        %3479 = vmatpush1.bf16.msra.mxu0 %v3317
        %3480 = vmatprep.mubr.bf16.mxu0 %v2556
        %3481 = vmatmul.mubr.bf16.gmra.mrb[0].mxu0 %v2555
        %v3482 = vpop.f32.mrb[0].mxu0
        %v3483 = vadd.f32 %v3442, %v3482
        %v3484 = vpop.f32.mrb[0].mxu0
        %v3485 = vadd.f32 %v3444, %v3484
        %v3486 = vpop.f32.mrb[0].mxu0
        %v3487 = vpop.f32.mrb[0].mxu0
        %3488 = vdwg.mxu0
        %3489 = vmatprep.subr.bf16.mxu0 %v2816
        %3490 = vmatpush1.bf16.msra.mxu0 %v2815
        %3491 = vmatprep.subr.bf16.mxu0 %v2824
        %3492 = vmatpush1.bf16.msra.mxu0 %v2823
        %3493 = vmatprep.subr.bf16.mxu0 %v2832
        %3494 = vmatpush1.bf16.msra.mxu0 %v2831
        %3495 = vmatprep.subr.bf16.mxu0 %v2840
        %3496 = vmatpush1.bf16.msra.mxu0 %v2839
        %3497 = vmatprep.subr.bf16.mxu0 %v2848
        %3498 = vmatpush1.bf16.msra.mxu0 %v2847
        %3499 = vmatprep.subr.bf16.mxu0 %v2856
        %3500 = vmatpush1.bf16.msra.mxu0 %v2855
        %3501 = vmatprep.subr.bf16.mxu0 %v2864
        %3502 = vmatpush1.bf16.msra.mxu0 %v2863
        %3503 = vmatprep.subr.bf16.mxu0 %v2872
        %3504 = vmatpush1.bf16.msra.mxu0 %v2871
        %3505 = vmatprep.subr.bf16.mxu0 %v2880
        %3506 = vmatpush1.bf16.msra.mxu0 %v2879
        %3507 = vmatprep.subr.bf16.mxu0 %v2888
        %3508 = vmatpush1.bf16.msra.mxu0 %v2887
        %3509 = vmatprep.subr.bf16.mxu0 %v2896
        %3510 = vmatpush1.bf16.msra.mxu0 %v2895
        %3511 = vmatprep.subr.bf16.mxu0 %v2904
        %3512 = vmatpush1.bf16.msra.mxu0 %v2903
        %3513 = vmatprep.subr.bf16.mxu0 %v2912
        %3514 = vmatpush1.bf16.msra.mxu0 %v2911
        %3515 = vmatprep.subr.bf16.mxu0 %v2920
        %3516 = vmatpush1.bf16.msra.mxu0 %v2919
        %3517 = vmatprep.subr.bf16.mxu0 %v2928
        %3518 = vmatpush1.bf16.msra.mxu0 %v2927
        %3519 = vmatprep.subr.bf16.mxu0 %v2936
        %3520 = vmatpush1.bf16.msra.mxu0 %v2935
        %3521 = vmatprep.mubr.bf16.mxu0 %v2550
        %3522 = vmatmul.mubr.bf16.gmra.mrb[0].mxu0 %v2549
        %v3523 = vpop.f32.mrb[0].mxu0
        %v3524 = vadd.f32 0.0, %v3523
        %v3525 = vpop.f32.mrb[0].mxu0
        %v3526 = vadd.f32 0.0, %v3525
        %v3527 = vpop.f32.mrb[0].mxu0
        %v3528 = vpop.f32.mrb[0].mxu0
        %3529 = vdwg.mxu0
        %3530 = vmatprep.subr.bf16.mxu0 %v2944
        %3531 = vmatpush1.bf16.msra.mxu0 %v2943
        %3532 = vmatprep.subr.bf16.mxu0 %v2952
        %3533 = vmatpush1.bf16.msra.mxu0 %v2951
        %3534 = vmatprep.subr.bf16.mxu0 %v2960
        %3535 = vmatpush1.bf16.msra.mxu0 %v2959
        %3536 = vmatprep.subr.bf16.mxu0 %v2968
        %3537 = vmatpush1.bf16.msra.mxu0 %v2967
        %3538 = vmatprep.subr.bf16.mxu0 %v2976
        %3539 = vmatpush1.bf16.msra.mxu0 %v2975
        %3540 = vmatprep.subr.bf16.mxu0 %v2984
        %3541 = vmatpush1.bf16.msra.mxu0 %v2983
        %3542 = vmatprep.subr.bf16.mxu0 %v2992
        %3543 = vmatpush1.bf16.msra.mxu0 %v2991
        %3544 = vmatprep.subr.bf16.mxu0 %v3000
        %3545 = vmatpush1.bf16.msra.mxu0 %v2999
        %3546 = vmatprep.subr.bf16.mxu0 %v3008
        %3547 = vmatpush1.bf16.msra.mxu0 %v3007
        %3548 = vmatprep.subr.bf16.mxu0 %v3016
        %3549 = vmatpush1.bf16.msra.mxu0 %v3015
        %3550 = vmatprep.subr.bf16.mxu0 %v3024
        %3551 = vmatpush1.bf16.msra.mxu0 %v3023
        %3552 = vmatprep.subr.bf16.mxu0 %v3032
        %3553 = vmatpush1.bf16.msra.mxu0 %v3031
        %3554 = vmatprep.subr.bf16.mxu0 %v3040
        %3555 = vmatpush1.bf16.msra.mxu0 %v3039
        %3556 = vmatprep.subr.bf16.mxu0 %v3048
        %3557 = vmatpush1.bf16.msra.mxu0 %v3047
        %3558 = vmatprep.subr.bf16.mxu0 %v3056
        %3559 = vmatpush1.bf16.msra.mxu0 %v3055
        %3560 = vmatprep.subr.bf16.mxu0 %v3064
        %3561 = vmatpush1.bf16.msra.mxu0 %v3063
        %3562 = vmatprep.mubr.bf16.mxu0 %v2552
        %3563 = vmatmul.mubr.bf16.gmra.mrb[0].mxu0 %v2551
        %v3564 = vpop.f32.mrb[0].mxu0
        %v3565 = vadd.f32 %v3524, %v3564
        %v3566 = vpop.f32.mrb[0].mxu0
        %v3567 = vadd.f32 %v3526, %v3566
        %v3568 = vpop.f32.mrb[0].mxu0
        %v3569 = vpop.f32.mrb[0].mxu0
        %3570 = vdwg.mxu0
        %3571 = vmatprep.subr.bf16.mxu0 %v3072
        %3572 = vmatpush1.bf16.msra.mxu0 %v3071
        %3573 = vmatprep.subr.bf16.mxu0 %v3080
        %3574 = vmatpush1.bf16.msra.mxu0 %v3079
        %3575 = vmatprep.subr.bf16.mxu0 %v3088
        %3576 = vmatpush1.bf16.msra.mxu0 %v3087
        %3577 = vmatprep.subr.bf16.mxu0 %v3096
        %3578 = vmatpush1.bf16.msra.mxu0 %v3095
        %3579 = vmatprep.subr.bf16.mxu0 %v3104
        %3580 = vmatpush1.bf16.msra.mxu0 %v3103
        %3581 = vmatprep.subr.bf16.mxu0 %v3112
        %3582 = vmatpush1.bf16.msra.mxu0 %v3111
        %3583 = vmatprep.subr.bf16.mxu0 %v3120
        %3584 = vmatpush1.bf16.msra.mxu0 %v3119
        %3585 = vmatprep.subr.bf16.mxu0 %v3128
        %3586 = vmatpush1.bf16.msra.mxu0 %v3127
        %3587 = vmatprep.subr.bf16.mxu0 %v3136
        %3588 = vmatpush1.bf16.msra.mxu0 %v3135
        %3589 = vmatprep.subr.bf16.mxu0 %v3144
        %3590 = vmatpush1.bf16.msra.mxu0 %v3143
        %3591 = vmatprep.subr.bf16.mxu0 %v3152
        %3592 = vmatpush1.bf16.msra.mxu0 %v3151
        %3593 = vmatprep.subr.bf16.mxu0 %v3160
        %3594 = vmatpush1.bf16.msra.mxu0 %v3159
        %3595 = vmatprep.subr.bf16.mxu0 %v3168
        %3596 = vmatpush1.bf16.msra.mxu0 %v3167
        %3597 = vmatprep.subr.bf16.mxu0 %v3176
        %3598 = vmatpush1.bf16.msra.mxu0 %v3175
        %3599 = vmatprep.subr.bf16.mxu0 %v3184
        %3600 = vmatpush1.bf16.msra.mxu0 %v3183
        %3601 = vmatprep.subr.bf16.mxu0 %v3192
        %3602 = vmatpush1.bf16.msra.mxu0 %v3191
        %3603 = vmatprep.mubr.bf16.mxu0 %v2554
        %3604 = vmatmul.mubr.bf16.gmra.mrb[0].mxu0 %v2553
        %v3605 = vpop.f32.mrb[0].mxu0
        %v3606 = vadd.f32 %v3565, %v3605
        %v3607 = vpop.f32.mrb[0].mxu0
        %v3608 = vadd.f32 %v3567, %v3607
        %v3609 = vpop.f32.mrb[0].mxu0
        %v3610 = vpop.f32.mrb[0].mxu0
        %3611 = vdwg.mxu0
        %3612 = vmatprep.subr.bf16.mxu0 %v3200
        %3613 = vmatpush1.bf16.msra.mxu0 %v3199
        %3614 = vmatprep.subr.bf16.mxu0 %v3208
        %3615 = vmatpush1.bf16.msra.mxu0 %v3207
        %3616 = vmatprep.subr.bf16.mxu0 %v3216
        %3617 = vmatpush1.bf16.msra.mxu0 %v3215
        %3618 = vmatprep.subr.bf16.mxu0 %v3224
        %3619 = vmatpush1.bf16.msra.mxu0 %v3223
        %3620 = vmatprep.subr.bf16.mxu0 %v3232
        %3621 = vmatpush1.bf16.msra.mxu0 %v3231
        %3622 = vmatprep.subr.bf16.mxu0 %v3240
        %3623 = vmatpush1.bf16.msra.mxu0 %v3239
        %3624 = vmatprep.subr.bf16.mxu0 %v3248
        %3625 = vmatpush1.bf16.msra.mxu0 %v3247
        %3626 = vmatprep.subr.bf16.mxu0 %v3256
        %3627 = vmatpush1.bf16.msra.mxu0 %v3255
        %3628 = vmatprep.subr.bf16.mxu0 %v3264
        %3629 = vmatpush1.bf16.msra.mxu0 %v3263
        %3630 = vmatprep.subr.bf16.mxu0 %v3272
        %3631 = vmatpush1.bf16.msra.mxu0 %v3271
        %3632 = vmatprep.subr.bf16.mxu0 %v3280
        %3633 = vmatpush1.bf16.msra.mxu0 %v3279
        %3634 = vmatprep.subr.bf16.mxu0 %v3288
        %3635 = vmatpush1.bf16.msra.mxu0 %v3287
        %3636 = vmatprep.subr.bf16.mxu0 %v3296
        %3637 = vmatpush1.bf16.msra.mxu0 %v3295
        %3638 = vmatprep.subr.bf16.mxu0 %v3304
        %3639 = vmatpush1.bf16.msra.mxu0 %v3303
        %3640 = vmatprep.subr.bf16.mxu0 %v3312
        %3641 = vmatpush1.bf16.msra.mxu0 %v3311
        %3642 = vmatprep.subr.bf16.mxu0 %v3320
        %3643 = vmatpush1.bf16.msra.mxu0 %v3319
        %3644 = vmatprep.mubr.bf16.mxu0 %v2556
        %3645 = vmatmul.mubr.bf16.gmra.mrb[0].mxu0 %v2555
        %v3646 = vpop.f32.mrb[0].mxu0
        %v3647 = vadd.f32 %v3606, %v3646
        %v3648 = vpop.f32.mrb[0].mxu0
        %v3649 = vadd.f32 %v3608, %v3648
        %v3650 = vpop.f32.mrb[0].mxu0
        %v3651 = vpop.f32.mrb[0].mxu0
        %3652 = vdwg.mxu0
        %3653 = vmatprep.subr.bf16.mxu0 %v2818
        %3654 = vmatpush1.bf16.msra.mxu0 %v2817
        %3655 = vmatprep.subr.bf16.mxu0 %v2826
        %3656 = vmatpush1.bf16.msra.mxu0 %v2825
        %3657 = vmatprep.subr.bf16.mxu0 %v2834
        %3658 = vmatpush1.bf16.msra.mxu0 %v2833
        %3659 = vmatprep.subr.bf16.mxu0 %v2842
        %3660 = vmatpush1.bf16.msra.mxu0 %v2841
        %3661 = vmatprep.subr.bf16.mxu0 %v2850
        %3662 = vmatpush1.bf16.msra.mxu0 %v2849
        %3663 = vmatprep.subr.bf16.mxu0 %v2858
        %3664 = vmatpush1.bf16.msra.mxu0 %v2857
        %3665 = vmatprep.subr.bf16.mxu0 %v2866
        %3666 = vmatpush1.bf16.msra.mxu0 %v2865
        %3667 = vmatprep.subr.bf16.mxu0 %v2874
        %3668 = vmatpush1.bf16.msra.mxu0 %v2873
        %3669 = vmatprep.subr.bf16.mxu0 %v2882
        %3670 = vmatpush1.bf16.msra.mxu0 %v2881
        %3671 = vmatprep.subr.bf16.mxu0 %v2890
        %3672 = vmatpush1.bf16.msra.mxu0 %v2889
        %3673 = vmatprep.subr.bf16.mxu0 %v2898
        %3674 = vmatpush1.bf16.msra.mxu0 %v2897
        %3675 = vmatprep.subr.bf16.mxu0 %v2906
        %3676 = vmatpush1.bf16.msra.mxu0 %v2905
        %3677 = vmatprep.subr.bf16.mxu0 %v2914
        %3678 = vmatpush1.bf16.msra.mxu0 %v2913
        %3679 = vmatprep.subr.bf16.mxu0 %v2922
        %3680 = vmatpush1.bf16.msra.mxu0 %v2921
        %3681 = vmatprep.subr.bf16.mxu0 %v2930
        %3682 = vmatpush1.bf16.msra.mxu0 %v2929
        %3683 = vmatprep.subr.bf16.mxu0 %v2938
        %3684 = vmatpush1.bf16.msra.mxu0 %v2937
        %3685 = vmatprep.mubr.bf16.mxu0 %v2550
        %3686 = vmatmul.mubr.bf16.gmra.mrb[0].mxu0 %v2549
        %v3687 = vpop.f32.mrb[0].mxu0
        %v3688 = vadd.f32 0.0, %v3687
        %v3689 = vpop.f32.mrb[0].mxu0
        %v3690 = vadd.f32 0.0, %v3689
        %v3691 = vpop.f32.mrb[0].mxu0
        %v3692 = vpop.f32.mrb[0].mxu0
        %3693 = vdwg.mxu0
        %3694 = vmatprep.subr.bf16.mxu0 %v2946
        %3695 = vmatpush1.bf16.msra.mxu0 %v2945
        %3696 = vmatprep.subr.bf16.mxu0 %v2954
        %3697 = vmatpush1.bf16.msra.mxu0 %v2953
        %3698 = vmatprep.subr.bf16.mxu0 %v2962
        %3699 = vmatpush1.bf16.msra.mxu0 %v2961
        %3700 = vmatprep.subr.bf16.mxu0 %v2970
        %3701 = vmatpush1.bf16.msra.mxu0 %v2969
        %3702 = vmatprep.subr.bf16.mxu0 %v2978
        %3703 = vmatpush1.bf16.msra.mxu0 %v2977
        %3704 = vmatprep.subr.bf16.mxu0 %v2986
        %3705 = vmatpush1.bf16.msra.mxu0 %v2985
        %3706 = vmatprep.subr.bf16.mxu0 %v2994
        %3707 = vmatpush1.bf16.msra.mxu0 %v2993
        %3708 = vmatprep.subr.bf16.mxu0 %v3002
        %3709 = vmatpush1.bf16.msra.mxu0 %v3001
        %3710 = vmatprep.subr.bf16.mxu0 %v3010
        %3711 = vmatpush1.bf16.msra.mxu0 %v3009
        %3712 = vmatprep.subr.bf16.mxu0 %v3018
        %3713 = vmatpush1.bf16.msra.mxu0 %v3017
        %3714 = vmatprep.subr.bf16.mxu0 %v3026
        %3715 = vmatpush1.bf16.msra.mxu0 %v3025
        %3716 = vmatprep.subr.bf16.mxu0 %v3034
        %3717 = vmatpush1.bf16.msra.mxu0 %v3033
        %3718 = vmatprep.subr.bf16.mxu0 %v3042
        %3719 = vmatpush1.bf16.msra.mxu0 %v3041
        %3720 = vmatprep.subr.bf16.mxu0 %v3050
        %3721 = vmatpush1.bf16.msra.mxu0 %v3049
        %3722 = vmatprep.subr.bf16.mxu0 %v3058
        %3723 = vmatpush1.bf16.msra.mxu0 %v3057
        %3724 = vmatprep.subr.bf16.mxu0 %v3066
        %3725 = vmatpush1.bf16.msra.mxu0 %v3065
        %3726 = vmatprep.mubr.bf16.mxu0 %v2552
        %3727 = vmatmul.mubr.bf16.gmra.mrb[0].mxu0 %v2551
        %v3728 = vpop.f32.mrb[0].mxu0
        %v3729 = vadd.f32 %v3688, %v3728
        %v3730 = vpop.f32.mrb[0].mxu0
        %v3731 = vadd.f32 %v3690, %v3730
        %v3732 = vpop.f32.mrb[0].mxu0
        %v3733 = vpop.f32.mrb[0].mxu0
        %3734 = vdwg.mxu0
        %3735 = vmatprep.subr.bf16.mxu0 %v3074
        %3736 = vmatpush1.bf16.msra.mxu0 %v3073
        %3737 = vmatprep.subr.bf16.mxu0 %v3082
        %3738 = vmatpush1.bf16.msra.mxu0 %v3081
        %3739 = vmatprep.subr.bf16.mxu0 %v3090
        %3740 = vmatpush1.bf16.msra.mxu0 %v3089
        %3741 = vmatprep.subr.bf16.mxu0 %v3098
        %3742 = vmatpush1.bf16.msra.mxu0 %v3097
        %3743 = vmatprep.subr.bf16.mxu0 %v3106
        %3744 = vmatpush1.bf16.msra.mxu0 %v3105
        %3745 = vmatprep.subr.bf16.mxu0 %v3114
        %3746 = vmatpush1.bf16.msra.mxu0 %v3113
        %3747 = vmatprep.subr.bf16.mxu0 %v3122
        %3748 = vmatpush1.bf16.msra.mxu0 %v3121
        %3749 = vmatprep.subr.bf16.mxu0 %v3130
        %3750 = vmatpush1.bf16.msra.mxu0 %v3129
        %3751 = vmatprep.subr.bf16.mxu0 %v3138
        %3752 = vmatpush1.bf16.msra.mxu0 %v3137
        %3753 = vmatprep.subr.bf16.mxu0 %v3146
        %3754 = vmatpush1.bf16.msra.mxu0 %v3145
        %3755 = vmatprep.subr.bf16.mxu0 %v3154
        %3756 = vmatpush1.bf16.msra.mxu0 %v3153
        %3757 = vmatprep.subr.bf16.mxu0 %v3162
        %3758 = vmatpush1.bf16.msra.mxu0 %v3161
        %3759 = vmatprep.subr.bf16.mxu0 %v3170
        %3760 = vmatpush1.bf16.msra.mxu0 %v3169
        %3761 = vmatprep.subr.bf16.mxu0 %v3178
        %3762 = vmatpush1.bf16.msra.mxu0 %v3177
        %3763 = vmatprep.subr.bf16.mxu0 %v3186
        %3764 = vmatpush1.bf16.msra.mxu0 %v3185
        %3765 = vmatprep.subr.bf16.mxu0 %v3194
        %3766 = vmatpush1.bf16.msra.mxu0 %v3193
        %3767 = vmatprep.mubr.bf16.mxu0 %v2554
        %3768 = vmatmul.mubr.bf16.gmra.mrb[0].mxu0 %v2553
        %v3769 = vpop.f32.mrb[0].mxu0
        %v3770 = vadd.f32 %v3729, %v3769
        %v3771 = vpop.f32.mrb[0].mxu0
        %v3772 = vadd.f32 %v3731, %v3771
        %v3773 = vpop.f32.mrb[0].mxu0
        %v3774 = vpop.f32.mrb[0].mxu0
        %3775 = vdwg.mxu0
        %3776 = vmatprep.subr.bf16.mxu0 %v3202
        %3777 = vmatpush1.bf16.msra.mxu0 %v3201
        %3778 = vmatprep.subr.bf16.mxu0 %v3210
        %3779 = vmatpush1.bf16.msra.mxu0 %v3209
        %3780 = vmatprep.subr.bf16.mxu0 %v3218
        %3781 = vmatpush1.bf16.msra.mxu0 %v3217
        %3782 = vmatprep.subr.bf16.mxu0 %v3226
        %3783 = vmatpush1.bf16.msra.mxu0 %v3225
        %3784 = vmatprep.subr.bf16.mxu0 %v3234
        %3785 = vmatpush1.bf16.msra.mxu0 %v3233
        %3786 = vmatprep.subr.bf16.mxu0 %v3242
        %3787 = vmatpush1.bf16.msra.mxu0 %v3241
        %3788 = vmatprep.subr.bf16.mxu0 %v3250
        %3789 = vmatpush1.bf16.msra.mxu0 %v3249
        %3790 = vmatprep.subr.bf16.mxu0 %v3258
        %3791 = vmatpush1.bf16.msra.mxu0 %v3257
        %3792 = vmatprep.subr.bf16.mxu0 %v3266
        %3793 = vmatpush1.bf16.msra.mxu0 %v3265
        %3794 = vmatprep.subr.bf16.mxu0 %v3274
        %3795 = vmatpush1.bf16.msra.mxu0 %v3273
        %3796 = vmatprep.subr.bf16.mxu0 %v3282
        %3797 = vmatpush1.bf16.msra.mxu0 %v3281
        %3798 = vmatprep.subr.bf16.mxu0 %v3290
        %3799 = vmatpush1.bf16.msra.mxu0 %v3289
        %3800 = vmatprep.subr.bf16.mxu0 %v3298
        %3801 = vmatpush1.bf16.msra.mxu0 %v3297
        %3802 = vmatprep.subr.bf16.mxu0 %v3306
        %3803 = vmatpush1.bf16.msra.mxu0 %v3305
        %3804 = vmatprep.subr.bf16.mxu0 %v3314
        %3805 = vmatpush1.bf16.msra.mxu0 %v3313
        %3806 = vmatprep.subr.bf16.mxu0 %v3322
        %3807 = vmatpush1.bf16.msra.mxu0 %v3321
        %3808 = vmatprep.mubr.bf16.mxu0 %v2556
        %3809 = vmatmul.mubr.bf16.gmra.mrb[0].mxu0 %v2555
        %v3810 = vpop.f32.mrb[0].mxu0
        %v3811 = vadd.f32 %v3770, %v3810
        %v3812 = vpop.f32.mrb[0].mxu0
        %v3813 = vadd.f32 %v3772, %v3812
        %v3814 = vpop.f32.mrb[0].mxu0
        %v3815 = vpop.f32.mrb[0].mxu0
        %3816 = vdwg.mxu0
        %3817 = vmatprep.subr.bf16.mxu0 %v2820
        %3818 = vmatpush1.bf16.msra.mxu0 %v2819
        %3819 = vmatprep.subr.bf16.mxu0 %v2828
        %3820 = vmatpush1.bf16.msra.mxu0 %v2827
        %3821 = vmatprep.subr.bf16.mxu0 %v2836
        %3822 = vmatpush1.bf16.msra.mxu0 %v2835
        %3823 = vmatprep.subr.bf16.mxu0 %v2844
        %3824 = vmatpush1.bf16.msra.mxu0 %v2843
        %3825 = vmatprep.subr.bf16.mxu0 %v2852
        %3826 = vmatpush1.bf16.msra.mxu0 %v2851
        %3827 = vmatprep.subr.bf16.mxu0 %v2860
        %3828 = vmatpush1.bf16.msra.mxu0 %v2859
        %3829 = vmatprep.subr.bf16.mxu0 %v2868
        %3830 = vmatpush1.bf16.msra.mxu0 %v2867
        %3831 = vmatprep.subr.bf16.mxu0 %v2876
        %3832 = vmatpush1.bf16.msra.mxu0 %v2875
        %3833 = vmatprep.subr.bf16.mxu0 %v2884
        %3834 = vmatpush1.bf16.msra.mxu0 %v2883
        %3835 = vmatprep.subr.bf16.mxu0 %v2892
        %3836 = vmatpush1.bf16.msra.mxu0 %v2891
        %3837 = vmatprep.subr.bf16.mxu0 %v2900
        %3838 = vmatpush1.bf16.msra.mxu0 %v2899
        %3839 = vmatprep.subr.bf16.mxu0 %v2908
        %3840 = vmatpush1.bf16.msra.mxu0 %v2907
        %3841 = vmatprep.subr.bf16.mxu0 %v2916
        %3842 = vmatpush1.bf16.msra.mxu0 %v2915
        %3843 = vmatprep.subr.bf16.mxu0 %v2924
        %3844 = vmatpush1.bf16.msra.mxu0 %v2923
        %3845 = vmatprep.subr.bf16.mxu0 %v2932
        %3846 = vmatpush1.bf16.msra.mxu0 %v2931
        %3847 = vmatprep.subr.bf16.mxu0 %v2940
        %3848 = vmatpush1.bf16.msra.mxu0 %v2939
        %3849 = vmatprep.mubr.bf16.mxu0 %v2550
        %3850 = vmatmul.mubr.bf16.gmra.mrb[0].mxu0 %v2549
        %v3851 = vpop.f32.mrb[0].mxu0
        %v3852 = vadd.f32 0.0, %v3851
        %v3853 = vpop.f32.mrb[0].mxu0
        %v3854 = vadd.f32 0.0, %v3853
        %v3855 = vpop.f32.mrb[0].mxu0
        %v3856 = vpop.f32.mrb[0].mxu0
        %3857 = vdwg.mxu0
        %3858 = vmatprep.subr.bf16.mxu0 %v2948
        %3859 = vmatpush1.bf16.msra.mxu0 %v2947
        %3860 = vmatprep.subr.bf16.mxu0 %v2956
        %3861 = vmatpush1.bf16.msra.mxu0 %v2955
        %3862 = vmatprep.subr.bf16.mxu0 %v2964
        %3863 = vmatpush1.bf16.msra.mxu0 %v2963
        %3864 = vmatprep.subr.bf16.mxu0 %v2972
        %3865 = vmatpush1.bf16.msra.mxu0 %v2971
        %3866 = vmatprep.subr.bf16.mxu0 %v2980
        %3867 = vmatpush1.bf16.msra.mxu0 %v2979
        %3868 = vmatprep.subr.bf16.mxu0 %v2988
        %3869 = vmatpush1.bf16.msra.mxu0 %v2987
        %3870 = vmatprep.subr.bf16.mxu0 %v2996
        %3871 = vmatpush1.bf16.msra.mxu0 %v2995
        %3872 = vmatprep.subr.bf16.mxu0 %v3004
        %3873 = vmatpush1.bf16.msra.mxu0 %v3003
        %3874 = vmatprep.subr.bf16.mxu0 %v3012
        %3875 = vmatpush1.bf16.msra.mxu0 %v3011
        %3876 = vmatprep.subr.bf16.mxu0 %v3020
        %3877 = vmatpush1.bf16.msra.mxu0 %v3019
        %3878 = vmatprep.subr.bf16.mxu0 %v3028
        %3879 = vmatpush1.bf16.msra.mxu0 %v3027
        %3880 = vmatprep.subr.bf16.mxu0 %v3036
        %3881 = vmatpush1.bf16.msra.mxu0 %v3035
        %3882 = vmatprep.subr.bf16.mxu0 %v3044
        %3883 = vmatpush1.bf16.msra.mxu0 %v3043
        %3884 = vmatprep.subr.bf16.mxu0 %v3052
        %3885 = vmatpush1.bf16.msra.mxu0 %v3051
        %3886 = vmatprep.subr.bf16.mxu0 %v3060
        %3887 = vmatpush1.bf16.msra.mxu0 %v3059
        %3888 = vmatprep.subr.bf16.mxu0 %v3068
        %3889 = vmatpush1.bf16.msra.mxu0 %v3067
        %3890 = vmatprep.mubr.bf16.mxu0 %v2552
        %3891 = vmatmul.mubr.bf16.gmra.mrb[0].mxu0 %v2551
        %v3892 = vpop.f32.mrb[0].mxu0
        %v3893 = vadd.f32 %v3852, %v3892
        %v3894 = vpop.f32.mrb[0].mxu0
        %v3895 = vadd.f32 %v3854, %v3894
        %v3896 = vpop.f32.mrb[0].mxu0
        %v3897 = vpop.f32.mrb[0].mxu0
        %3898 = vdwg.mxu0
        %3899 = vmatprep.subr.bf16.mxu0 %v3076
        %3900 = vmatpush1.bf16.msra.mxu0 %v3075
        %3901 = vmatprep.subr.bf16.mxu0 %v3084
        %3902 = vmatpush1.bf16.msra.mxu0 %v3083
        %3903 = vmatprep.subr.bf16.mxu0 %v3092
        %3904 = vmatpush1.bf16.msra.mxu0 %v3091
        %3905 = vmatprep.subr.bf16.mxu0 %v3100
        %3906 = vmatpush1.bf16.msra.mxu0 %v3099
        %3907 = vmatprep.subr.bf16.mxu0 %v3108
        %3908 = vmatpush1.bf16.msra.mxu0 %v3107
        %3909 = vmatprep.subr.bf16.mxu0 %v3116
        %3910 = vmatpush1.bf16.msra.mxu0 %v3115
        %3911 = vmatprep.subr.bf16.mxu0 %v3124
        %3912 = vmatpush1.bf16.msra.mxu0 %v3123
        %3913 = vmatprep.subr.bf16.mxu0 %v3132
        %3914 = vmatpush1.bf16.msra.mxu0 %v3131
        %3915 = vmatprep.subr.bf16.mxu0 %v3140
        %3916 = vmatpush1.bf16.msra.mxu0 %v3139
        %3917 = vmatprep.subr.bf16.mxu0 %v3148
        %3918 = vmatpush1.bf16.msra.mxu0 %v3147
        %3919 = vmatprep.subr.bf16.mxu0 %v3156
        %3920 = vmatpush1.bf16.msra.mxu0 %v3155
        %3921 = vmatprep.subr.bf16.mxu0 %v3164
        %3922 = vmatpush1.bf16.msra.mxu0 %v3163
        %3923 = vmatprep.subr.bf16.mxu0 %v3172
        %3924 = vmatpush1.bf16.msra.mxu0 %v3171
        %3925 = vmatprep.subr.bf16.mxu0 %v3180
        %3926 = vmatpush1.bf16.msra.mxu0 %v3179
        %3927 = vmatprep.subr.bf16.mxu0 %v3188
        %3928 = vmatpush1.bf16.msra.mxu0 %v3187
        %3929 = vmatprep.subr.bf16.mxu0 %v3196
        %3930 = vmatpush1.bf16.msra.mxu0 %v3195
        %3931 = vmatprep.mubr.bf16.mxu0 %v2554
        %3932 = vmatmul.mubr.bf16.gmra.mrb[0].mxu0 %v2553
        %v3933 = vpop.f32.mrb[0].mxu0
        %v3934 = vadd.f32 %v3893, %v3933
        %v3935 = vpop.f32.mrb[0].mxu0
        %v3936 = vadd.f32 %v3895, %v3935
        %v3937 = vpop.f32.mrb[0].mxu0
        %v3938 = vpop.f32.mrb[0].mxu0
        %3939 = vdwg.mxu0
        %3940 = vmatprep.subr.bf16.mxu0 %v3204
        %3941 = vmatpush1.bf16.msra.mxu0 %v3203
        %3942 = vmatprep.subr.bf16.mxu0 %v3212
        %3943 = vmatpush1.bf16.msra.mxu0 %v3211
        %3944 = vmatprep.subr.bf16.mxu0 %v3220
        %3945 = vmatpush1.bf16.msra.mxu0 %v3219
        %3946 = vmatprep.subr.bf16.mxu0 %v3228
        %3947 = vmatpush1.bf16.msra.mxu0 %v3227
        %3948 = vmatprep.subr.bf16.mxu0 %v3236
        %3949 = vmatpush1.bf16.msra.mxu0 %v3235
        %3950 = vmatprep.subr.bf16.mxu0 %v3244
        %3951 = vmatpush1.bf16.msra.mxu0 %v3243
        %3952 = vmatprep.subr.bf16.mxu0 %v3252
        %3953 = vmatpush1.bf16.msra.mxu0 %v3251
        %3954 = vmatprep.subr.bf16.mxu0 %v3260
        %3955 = vmatpush1.bf16.msra.mxu0 %v3259
        %3956 = vmatprep.subr.bf16.mxu0 %v3268
        %3957 = vmatpush1.bf16.msra.mxu0 %v3267
        %3958 = vmatprep.subr.bf16.mxu0 %v3276
        %3959 = vmatpush1.bf16.msra.mxu0 %v3275
        %3960 = vmatprep.subr.bf16.mxu0 %v3284
        %3961 = vmatpush1.bf16.msra.mxu0 %v3283
        %3962 = vmatprep.subr.bf16.mxu0 %v3292
        %3963 = vmatpush1.bf16.msra.mxu0 %v3291
        %3964 = vmatprep.subr.bf16.mxu0 %v3300
        %3965 = vmatpush1.bf16.msra.mxu0 %v3299
        %3966 = vmatprep.subr.bf16.mxu0 %v3308
        %3967 = vmatpush1.bf16.msra.mxu0 %v3307
        %3968 = vmatprep.subr.bf16.mxu0 %v3316
        %3969 = vmatpush1.bf16.msra.mxu0 %v3315
        %3970 = vmatprep.subr.bf16.mxu0 %v3324
        %3971 = vmatpush1.bf16.msra.mxu0 %v3323
        %3972 = vmatprep.mubr.bf16.mxu0 %v2556
        %3973 = vmatmul.mubr.bf16.gmra.mrb[0].mxu0 %v2555
        %v3974 = vpop.f32.mrb[0].mxu0
        %v3975 = vadd.f32 %v3934, %v3974
        %v3976 = vpop.f32.mrb[0].mxu0
        %v3977 = vadd.f32 %v3936, %v3976
        %v3978 = vpop.f32.mrb[0].mxu0
        %v3979 = vpop.f32.mrb[0].mxu0
        %3980 = vdwg.mxu0
        %s3981 = smul.u32 %s2502, 8
        %s3982 = scalar_lea.vmem [#allocation13], %s3981
        %v3983 = vld [vmem:[%s3982] sm:$0xff]
        %v3985 = vlaneseq
        %v3986 = vshrl.u32 %v3985, 7
        %v3987 = vsub.s32 0, %v3986
        %v3988 = vrot.slane %v3983, %v3987
        %v3989 = vlaneseq
        %v3990 = vshrl.u32 %v3989, 7
        %v3991 = vsub.s32 1, %v3990
        %v3992 = vrot.slane %v3983, %v3991
        %v3993 = vlaneseq
        %v3994 = vshrl.u32 %v3993, 7
        %v3995 = vsub.s32 2, %v3994
        %v3996 = vrot.slane %v3983, %v3995
        %v3997 = vlaneseq
        %v3998 = vshrl.u32 %v3997, 7
        %v3999 = vsub.s32 3, %v3998
        %v4000 = vrot.slane %v3983, %v3999
        %v4001 = vlaneseq
        %v4002 = vshrl.u32 %v4001, 7
        %v4003 = vsub.s32 4, %v4002
        %v4004 = vrot.slane %v3983, %v4003
        %v4005 = vlaneseq
        %v4006 = vshrl.u32 %v4005, 7
        %v4007 = vsub.s32 5, %v4006
        %v4008 = vrot.slane %v3983, %v4007
        %v4009 = vlaneseq
        %v4010 = vshrl.u32 %v4009, 7
        %v4011 = vsub.s32 6, %v4010
        %v4012 = vrot.slane %v3983, %v4011
        %v4013 = vlaneseq
        %v4014 = vshrl.u32 %v4013, 7
        %v4015 = vsub.s32 7, %v4014
        %v4016 = vrot.slane %v3983, %v4015
        %v4025 = vmul.f32 %v3483, %v3988
        %v4026 = vmul.f32 %v3485, %v3992
        %v4027 = vmul.f32 %v3647, %v3996
        %v4028 = vmul.f32 %v3649, %v4000
        %v4029 = vmul.f32 %v3811, %v4004
        %v4030 = vmul.f32 %v3813, %v4008
        %v4031 = vmul.f32 %v3975, %v4012
        %v4032 = vmul.f32 %v3977, %v4016
        %s4033 = scalar_lea.vmem [#allocation15], %s3981
        %v4034 = vld [vmem:[%s4033] sm:$0xff]
        %v4036 = vlaneseq
        %v4037 = vshrl.u32 %v4036, 7
        %v4038 = vsub.s32 0, %v4037
        %v4039 = vrot.slane %v4034, %v4038
        %v4040 = vlaneseq
        %v4041 = vshrl.u32 %v4040, 7
        %v4042 = vsub.s32 1, %v4041
        %v4043 = vrot.slane %v4034, %v4042
        %v4044 = vlaneseq
        %v4045 = vshrl.u32 %v4044, 7
        %v4046 = vsub.s32 2, %v4045
        %v4047 = vrot.slane %v4034, %v4046
        %v4048 = vlaneseq
        %v4049 = vshrl.u32 %v4048, 7
        %v4050 = vsub.s32 3, %v4049
        %v4051 = vrot.slane %v4034, %v4050
        %v4052 = vlaneseq
        %v4053 = vshrl.u32 %v4052, 7
        %v4054 = vsub.s32 4, %v4053
        %v4055 = vrot.slane %v4034, %v4054
        %v4056 = vlaneseq
        %v4057 = vshrl.u32 %v4056, 7
        %v4058 = vsub.s32 5, %v4057
        %v4059 = vrot.slane %v4034, %v4058
        %v4060 = vlaneseq
        %v4061 = vshrl.u32 %v4060, 7
        %v4062 = vsub.s32 6, %v4061
        %v4063 = vrot.slane %v4034, %v4062
        %v4064 = vlaneseq
        %v4065 = vshrl.u32 %v4064, 7
        %v4066 = vsub.s32 7, %v4065
        %v4067 = vrot.slane %v4034, %v4066
        %v4076 = vadd.f32 %v4025, %v4039
        %v4077 = vadd.f32 %v4026, %v4043
        %v4078 = vadd.f32 %v4027, %v4047
        %v4079 = vadd.f32 %v4028, %v4051
        %v4080 = vadd.f32 %v4029, %v4055
        %v4081 = vadd.f32 %v4030, %v4059
        %v4082 = vadd.f32 %v4031, %v4063
        %v4083 = vadd.f32 %v4032, %v4067
        %p4084 = scmp.ne.s32.totalorder %s28, 3
        // Predicated region
        $region97: #{model_forward.1} parent=55 // pred_check
          %p4085 = pneg %p4084
        $region98: #{model_forward.1} parent=55 // pred_check_branch
          %4087 = sbr.rel (%p4085) target = $region100
        $region99: #{model_forward.1} parent=55 // pred_region
          %v4088 = vmul.f32 %v4076, 0.5
          %v4089 = vmul.f32 %v4077, 0.5
          %v4090 = vmul.f32 %v4078, 0.5
          %v4091 = vmul.f32 %v4079, 0.5
          %v4092 = vmul.f32 %v4080, 0.5
          %v4093 = vmul.f32 %v4081, 0.5
          %v4094 = vmul.f32 %v4082, 0.5
          %v4095 = vmul.f32 %v4083, 0.5
          %v4096 = vmul.f32 %v4076, 0.70710677
          %v4097 = vmul.f32 %v4077, 0.70710677
          %v4098 = vmul.f32 %v4078, 0.70710677
          %v4099 = vmul.f32 %v4079, 0.70710677
          %v4100 = vmul.f32 %v4080, 0.70710677
          %v4101 = vmul.f32 %v4081, 0.70710677
          %v4102 = vmul.f32 %v4082, 0.70710677
          %v4103 = vmul.f32 %v4083, 0.70710677
          %v4104 = vand.u32 2147483647, %v4096
          %v4105 = vand.u32 2147483647, %v4097
          %v4106 = vand.u32 2147483647, %v4098
          %v4107 = vand.u32 2147483647, %v4099
          %v4108 = vand.u32 2147483647, %v4100
          %v4109 = vand.u32 2147483647, %v4101
          %v4110 = vand.u32 2147483647, %v4102
          %v4111 = vand.u32 2147483647, %v4103
          %v4112 = vmul.f32 %v4104, 0.3275911
          %v4113 = vmul.f32 %v4105, 0.3275911
          %v4114 = vmul.f32 %v4106, 0.3275911
          %v4115 = vmul.f32 %v4107, 0.3275911
          %v4116 = vmul.f32 %v4108, 0.3275911
          %v4117 = vmul.f32 %v4109, 0.3275911
          %v4118 = vmul.f32 %v4110, 0.3275911
          %v4119 = vmul.f32 %v4111, 0.3275911
          %v4120 = vadd.f32 %v4112, 1.0
          %v4121 = vadd.f32 %v4113, 1.0
          %v4122 = vadd.f32 %v4114, 1.0
          %v4123 = vadd.f32 %v4115, 1.0
          %v4124 = vadd.f32 %v4116, 1.0
          %v4125 = vadd.f32 %v4117, 1.0
          %v4126 = vadd.f32 %v4118, 1.0
          %v4127 = vadd.f32 %v4119, 1.0
          %v4128 = vrcp.pop %v4120
          %v4129 = vrcp.pop %v4121
          %v4130 = vrcp.pop %v4122
          %v4131 = vrcp.pop %v4123
          %v4132 = vrcp.pop %v4124
          %v4133 = vrcp.pop %v4125
          %v4134 = vrcp.pop %v4126
          %v4135 = vrcp.pop %v4127
          %v4136 = vmul.f32 %v4128, 1.0614054
          %v4137 = vmul.f32 %v4129, 1.0614054
          %v4138 = vmul.f32 %v4130, 1.0614054
          %v4139 = vmul.f32 %v4131, 1.0614054
          %v4140 = vmul.f32 %v4132, 1.0614054
          %v4141 = vmul.f32 %v4133, 1.0614054
          %v4142 = vmul.f32 %v4134, 1.0614054
          %v4143 = vmul.f32 %v4135, 1.0614054
          %v4144 = vadd.f32 %v4136, -1.4531521
          %v4145 = vadd.f32 %v4137, -1.4531521
          %v4146 = vadd.f32 %v4138, -1.4531521
          %v4147 = vadd.f32 %v4139, -1.4531521
          %v4148 = vadd.f32 %v4140, -1.4531521
          %v4149 = vadd.f32 %v4141, -1.4531521
          %v4150 = vadd.f32 %v4142, -1.4531521
          %v4151 = vadd.f32 %v4143, -1.4531521
          %v4152 = vmul.f32 %v4144, %v4128
          %v4153 = vmul.f32 %v4145, %v4129
          %v4154 = vmul.f32 %v4146, %v4130
          %v4155 = vmul.f32 %v4147, %v4131
          %v4156 = vmul.f32 %v4148, %v4132
          %v4157 = vmul.f32 %v4149, %v4133
          %v4158 = vmul.f32 %v4150, %v4134
          %v4159 = vmul.f32 %v4151, %v4135
          %v4160 = vadd.f32 %v4152, 1.4214138
          %v4161 = vadd.f32 %v4153, 1.4214138
          %v4162 = vadd.f32 %v4154, 1.4214138
          %v4163 = vadd.f32 %v4155, 1.4214138
          %v4164 = vadd.f32 %v4156, 1.4214138
          %v4165 = vadd.f32 %v4157, 1.4214138
          %v4166 = vadd.f32 %v4158, 1.4214138
          %v4167 = vadd.f32 %v4159, 1.4214138
          %v4168 = vmul.f32 %v4160, %v4128
          %v4169 = vmul.f32 %v4161, %v4129
          %v4170 = vmul.f32 %v4162, %v4130
          %v4171 = vmul.f32 %v4163, %v4131
          %v4172 = vmul.f32 %v4164, %v4132
          %v4173 = vmul.f32 %v4165, %v4133
          %v4174 = vmul.f32 %v4166, %v4134
          %v4175 = vmul.f32 %v4167, %v4135
          %v4176 = vadd.f32 %v4168, -0.28449672
          %v4177 = vadd.f32 %v4169, -0.28449672
          %v4178 = vadd.f32 %v4170, -0.28449672
          %v4179 = vadd.f32 %v4171, -0.28449672
          %v4180 = vadd.f32 %v4172, -0.28449672
          %v4181 = vadd.f32 %v4173, -0.28449672
          %v4182 = vadd.f32 %v4174, -0.28449672
          %v4183 = vadd.f32 %v4175, -0.28449672
          %v4184 = vmul.f32 %v4176, %v4128
          %v4185 = vmul.f32 %v4177, %v4129
          %v4186 = vmul.f32 %v4178, %v4130
          %v4187 = vmul.f32 %v4179, %v4131
          %v4188 = vmul.f32 %v4180, %v4132
          %v4189 = vmul.f32 %v4181, %v4133
          %v4190 = vmul.f32 %v4182, %v4134
          %v4191 = vmul.f32 %v4183, %v4135
          %v4192 = vadd.f32 %v4184, 0.2548296
          %v4193 = vadd.f32 %v4185, 0.2548296
          %v4194 = vadd.f32 %v4186, 0.2548296
          %v4195 = vadd.f32 %v4187, 0.2548296
          %v4196 = vadd.f32 %v4188, 0.2548296
          %v4197 = vadd.f32 %v4189, 0.2548296
          %v4198 = vadd.f32 %v4190, 0.2548296
          %v4199 = vadd.f32 %v4191, 0.2548296
          %v4200 = vmul.f32 %v4192, %v4128
          %v4201 = vmul.f32 %v4193, %v4129
          %v4202 = vmul.f32 %v4194, %v4130
          %v4203 = vmul.f32 %v4195, %v4131
          %v4204 = vmul.f32 %v4196, %v4132
          %v4205 = vmul.f32 %v4197, %v4133
          %v4206 = vmul.f32 %v4198, %v4134
          %v4207 = vmul.f32 %v4199, %v4135
          %v4208 = vsub.f32 0.0, %v4104
          %v4209 = vsub.f32 0.0, %v4105
          %v4210 = vsub.f32 0.0, %v4106
          %v4211 = vsub.f32 0.0, %v4107
          %v4212 = vsub.f32 0.0, %v4108
          %v4213 = vsub.f32 0.0, %v4109
          %v4214 = vsub.f32 0.0, %v4110
          %v4215 = vsub.f32 0.0, %v4111
          %v4216 = vmul.f32 %v4208, %v4104
          %v4217 = vmul.f32 %v4209, %v4105
          %v4218 = vmul.f32 %v4210, %v4106
          %v4219 = vmul.f32 %v4211, %v4107
          %v4220 = vmul.f32 %v4212, %v4108
          %v4221 = vmul.f32 %v4213, %v4109
          %v4222 = vmul.f32 %v4214, %v4110
          %v4223 = vmul.f32 %v4215, %v4111
          %v4224 = vmul.f32 %v4216, 1.442695
          %v4225 = vpow.pop %v4224
          %v4226 = vmul.f32 %v4217, 1.442695
          %v4227 = vpow.pop %v4226
          %v4228 = vmul.f32 %v4218, 1.442695
          %v4229 = vpow.pop %v4228
          %v4230 = vmul.f32 %v4219, 1.442695
          %v4231 = vpow.pop %v4230
          %v4232 = vmul.f32 %v4220, 1.442695
          %v4233 = vpow.pop %v4232
          %v4234 = vmul.f32 %v4221, 1.442695
          %v4235 = vpow.pop %v4234
          %v4236 = vmul.f32 %v4222, 1.442695
          %v4237 = vpow.pop %v4236
          %v4238 = vmul.f32 %v4223, 1.442695
          %v4239 = vpow.pop %v4238
          %v4240 = vmul.f32 %v4200, %v4225
          %v4241 = vmul.f32 %v4201, %v4227
          %v4242 = vmul.f32 %v4202, %v4229
          %v4243 = vmul.f32 %v4203, %v4231
          %v4244 = vmul.f32 %v4204, %v4233
          %v4245 = vmul.f32 %v4205, %v4235
          %v4246 = vmul.f32 %v4206, %v4237
          %v4247 = vmul.f32 %v4207, %v4239
          %v4248 = vsub.f32 1.0, %v4240
          %v4249 = vsub.f32 1.0, %v4241
          %v4250 = vsub.f32 1.0, %v4242
          %v4251 = vsub.f32 1.0, %v4243
          %v4252 = vsub.f32 1.0, %v4244
          %v4253 = vsub.f32 1.0, %v4245
          %v4254 = vsub.f32 1.0, %v4246
          %v4255 = vsub.f32 1.0, %v4247
          %vm4256 = vcmp.ge.f32.partialorder %v4096, 0.0
          %vm4257 = vcmp.ge.f32.partialorder %v4097, 0.0
          %vm4258 = vcmp.ge.f32.partialorder %v4098, 0.0
          %vm4259 = vcmp.ge.f32.partialorder %v4099, 0.0
          %vm4260 = vcmp.ge.f32.partialorder %v4100, 0.0
          %vm4261 = vcmp.ge.f32.partialorder %v4101, 0.0
          %vm4262 = vcmp.ge.f32.partialorder %v4102, 0.0
          %vm4263 = vcmp.ge.f32.partialorder %v4103, 0.0
          %v4264 = vsub.f32 0.0, %v4248
          %v4265 = vsub.f32 0.0, %v4249
          %v4266 = vsub.f32 0.0, %v4250
          %v4267 = vsub.f32 0.0, %v4251
          %v4268 = vsub.f32 0.0, %v4252
          %v4269 = vsub.f32 0.0, %v4253
          %v4270 = vsub.f32 0.0, %v4254
          %v4271 = vsub.f32 0.0, %v4255
          %v4272 = vsel %vm4256, %v4248, %v4264
          %v4273 = vsel %vm4257, %v4249, %v4265
          %v4274 = vsel %vm4258, %v4250, %v4266
          %v4275 = vsel %vm4259, %v4251, %v4267
          %v4276 = vsel %vm4260, %v4252, %v4268
          %v4277 = vsel %vm4261, %v4253, %v4269
          %v4278 = vsel %vm4262, %v4254, %v4270
          %v4279 = vsel %vm4263, %v4255, %v4271
          %v4280 = vadd.f32 %v4272, 1.0
          %v4281 = vadd.f32 %v4273, 1.0
          %v4282 = vadd.f32 %v4274, 1.0
          %v4283 = vadd.f32 %v4275, 1.0
          %v4284 = vadd.f32 %v4276, 1.0
          %v4285 = vadd.f32 %v4277, 1.0
          %v4286 = vadd.f32 %v4278, 1.0
          %v4287 = vadd.f32 %v4279, 1.0
          %v4288 = vmul.f32 %v4088, %v4280
          %v4289 = vmul.f32 %v4089, %v4281
          %v4290 = vmul.f32 %v4090, %v4282
          %v4291 = vmul.f32 %v4091, %v4283
          %v4292 = vmul.f32 %v4092, %v4284
          %v4293 = vmul.f32 %v4093, %v4285
          %v4294 = vmul.f32 %v4094, %v4286
          %v4295 = vmul.f32 %v4095, %v4287
          %s4296 = scalar_lea.vmem %s409, 2048 [#allocation8]
          %v4297 = vld [vmem:[%s4296] sm:$0xff]
          %v4298 = vld [vmem:[%s4296 + $0x8] sm:$0xff]
          %v4299 = vld [vmem:[%s4296 + $0x10] sm:$0xff]
          %v4300 = vld [vmem:[%s4296 + $0x18] sm:$0xff]
          %v4301 = vld [vmem:[%s4296 + $0x20] sm:$0xff]
          %v4302 = vld [vmem:[%s4296 + $0x28] sm:$0xff]
          %v4303 = vld [vmem:[%s4296 + $0x30] sm:$0xff]
          %v4304 = vld [vmem:[%s4296 + $0x38] sm:$0xff]
          %v4305 = vld [vmem:[%s4296 + $0x40] sm:$0xff]
          %v4306 = vld [vmem:[%s4296 + $0x48] sm:$0xff]
          %v4307 = vld [vmem:[%s4296 + $0x50] sm:$0xff]
          %v4308 = vld [vmem:[%s4296 + $0x58] sm:$0xff]
          %v4309 = vld [vmem:[%s4296 + $0x60] sm:$0xff]
          %v4310 = vld [vmem:[%s4296 + $0x68] sm:$0xff]
          %v4311 = vld [vmem:[%s4296 + $0x70] sm:$0xff]
          %v4312 = vld [vmem:[%s4296 + $0x78] sm:$0xff]
          %v4313 = vld [vmem:[%s4296 + $0x80] sm:$0xff]
          %v4314 = vld [vmem:[%s4296 + $0x88] sm:$0xff]
          %v4315 = vld [vmem:[%s4296 + $0x90] sm:$0xff]
          %v4316 = vld [vmem:[%s4296 + $0x98] sm:$0xff]
          %v4317 = vld [vmem:[%s4296 + $0xa0] sm:$0xff]
          %v4318 = vld [vmem:[%s4296 + $0xa8] sm:$0xff]
          %v4319 = vld [vmem:[%s4296 + $0xb0] sm:$0xff]
          %v4320 = vld [vmem:[%s4296 + $0xb8] sm:$0xff]
          %v4321 = vld [vmem:[%s4296 + $0xc0] sm:$0xff]
          %v4322 = vld [vmem:[%s4296 + $0xc8] sm:$0xff]
          %v4323 = vld [vmem:[%s4296 + $0xd0] sm:$0xff]
          %v4324 = vld [vmem:[%s4296 + $0xd8] sm:$0xff]
          %v4325 = vld [vmem:[%s4296 + $0xe0] sm:$0xff]
          %v4326 = vld [vmem:[%s4296 + $0xe8] sm:$0xff]
          %v4327 = vld [vmem:[%s4296 + $0xf0] sm:$0xff]
          %v4328 = vld [vmem:[%s4296 + $0xf8] sm:$0xff]
          %v4329 = vld [vmem:[%s4296 + $0x100] sm:$0xff]
          %v4330 = vld [vmem:[%s4296 + $0x108] sm:$0xff]
          %v4331 = vld [vmem:[%s4296 + $0x110] sm:$0xff]
          %v4332 = vld [vmem:[%s4296 + $0x118] sm:$0xff]
          %v4333 = vld [vmem:[%s4296 + $0x120] sm:$0xff]
          %v4334 = vld [vmem:[%s4296 + $0x128] sm:$0xff]
          %v4335 = vld [vmem:[%s4296 + $0x130] sm:$0xff]
          %v4336 = vld [vmem:[%s4296 + $0x138] sm:$0xff]
          %v4337 = vld [vmem:[%s4296 + $0x140] sm:$0xff]
          %v4338 = vld [vmem:[%s4296 + $0x148] sm:$0xff]
          %v4339 = vld [vmem:[%s4296 + $0x150] sm:$0xff]
          %v4340 = vld [vmem:[%s4296 + $0x158] sm:$0xff]
          %v4341 = vld [vmem:[%s4296 + $0x160] sm:$0xff]
          %v4342 = vld [vmem:[%s4296 + $0x168] sm:$0xff]
          %v4343 = vld [vmem:[%s4296 + $0x170] sm:$0xff]
          %v4344 = vld [vmem:[%s4296 + $0x178] sm:$0xff]
          %v4345 = vld [vmem:[%s4296 + $0x180] sm:$0xff]
          %v4346 = vld [vmem:[%s4296 + $0x188] sm:$0xff]
          %v4347 = vld [vmem:[%s4296 + $0x190] sm:$0xff]
          %v4348 = vld [vmem:[%s4296 + $0x198] sm:$0xff]
          %v4349 = vld [vmem:[%s4296 + $0x1a0] sm:$0xff]
          %v4350 = vld [vmem:[%s4296 + $0x1a8] sm:$0xff]
          %v4351 = vld [vmem:[%s4296 + $0x1b0] sm:$0xff]
          %v4352 = vld [vmem:[%s4296 + $0x1b8] sm:$0xff]
          %v4353 = vld [vmem:[%s4296 + $0x1c0] sm:$0xff]
          %v4354 = vld [vmem:[%s4296 + $0x1c8] sm:$0xff]
          %v4355 = vld [vmem:[%s4296 + $0x1d0] sm:$0xff]
          %v4356 = vld [vmem:[%s4296 + $0x1d8] sm:$0xff]
          %v4357 = vld [vmem:[%s4296 + $0x1e0] sm:$0xff]
          %v4358 = vld [vmem:[%s4296 + $0x1e8] sm:$0xff]
          %v4359 = vld [vmem:[%s4296 + $0x1f0] sm:$0xff]
          %v4360 = vld [vmem:[%s4296 + $0x1f8] sm:$0xff]
          %v4361 = vld [vmem:[%s4296 + $0x200] sm:$0xff]
          %v4362 = vld [vmem:[%s4296 + $0x208] sm:$0xff]
          %v4363 = vld [vmem:[%s4296 + $0x210] sm:$0xff]
          %v4364 = vld [vmem:[%s4296 + $0x218] sm:$0xff]
          %v4365 = vld [vmem:[%s4296 + $0x220] sm:$0xff]
          %v4366 = vld [vmem:[%s4296 + $0x228] sm:$0xff]
          %v4367 = vld [vmem:[%s4296 + $0x230] sm:$0xff]
          %v4368 = vld [vmem:[%s4296 + $0x238] sm:$0xff]
          %v4369 = vld [vmem:[%s4296 + $0x240] sm:$0xff]
          %v4370 = vld [vmem:[%s4296 + $0x248] sm:$0xff]
          %v4371 = vld [vmem:[%s4296 + $0x250] sm:$0xff]
          %v4372 = vld [vmem:[%s4296 + $0x258] sm:$0xff]
          %v4373 = vld [vmem:[%s4296 + $0x260] sm:$0xff]
          %v4374 = vld [vmem:[%s4296 + $0x268] sm:$0xff]
          %v4375 = vld [vmem:[%s4296 + $0x270] sm:$0xff]
          %v4376 = vld [vmem:[%s4296 + $0x278] sm:$0xff]
          %v4377 = vld [vmem:[%s4296 + $0x280] sm:$0xff]
          %v4378 = vld [vmem:[%s4296 + $0x288] sm:$0xff]
          %v4379 = vld [vmem:[%s4296 + $0x290] sm:$0xff]
          %v4380 = vld [vmem:[%s4296 + $0x298] sm:$0xff]
          %v4381 = vld [vmem:[%s4296 + $0x2a0] sm:$0xff]
          %v4382 = vld [vmem:[%s4296 + $0x2a8] sm:$0xff]
          %v4383 = vld [vmem:[%s4296 + $0x2b0] sm:$0xff]
          %v4384 = vld [vmem:[%s4296 + $0x2b8] sm:$0xff]
          %v4385 = vld [vmem:[%s4296 + $0x2c0] sm:$0xff]
          %v4386 = vld [vmem:[%s4296 + $0x2c8] sm:$0xff]
          %v4387 = vld [vmem:[%s4296 + $0x2d0] sm:$0xff]
          %v4388 = vld [vmem:[%s4296 + $0x2d8] sm:$0xff]
          %v4389 = vld [vmem:[%s4296 + $0x2e0] sm:$0xff]
          %v4390 = vld [vmem:[%s4296 + $0x2e8] sm:$0xff]
          %v4391 = vld [vmem:[%s4296 + $0x2f0] sm:$0xff]
          %v4392 = vld [vmem:[%s4296 + $0x2f8] sm:$0xff]
          %v4393 = vld [vmem:[%s4296 + $0x300] sm:$0xff]
          %v4394 = vld [vmem:[%s4296 + $0x308] sm:$0xff]
          %v4395 = vld [vmem:[%s4296 + $0x310] sm:$0xff]
          %v4396 = vld [vmem:[%s4296 + $0x318] sm:$0xff]
          %v4397 = vld [vmem:[%s4296 + $0x320] sm:$0xff]
          %v4398 = vld [vmem:[%s4296 + $0x328] sm:$0xff]
          %v4399 = vld [vmem:[%s4296 + $0x330] sm:$0xff]
          %v4400 = vld [vmem:[%s4296 + $0x338] sm:$0xff]
          %v4401 = vld [vmem:[%s4296 + $0x340] sm:$0xff]
          %v4402 = vld [vmem:[%s4296 + $0x348] sm:$0xff]
          %v4403 = vld [vmem:[%s4296 + $0x350] sm:$0xff]
          %v4404 = vld [vmem:[%s4296 + $0x358] sm:$0xff]
          %v4405 = vld [vmem:[%s4296 + $0x360] sm:$0xff]
          %v4406 = vld [vmem:[%s4296 + $0x368] sm:$0xff]
          %v4407 = vld [vmem:[%s4296 + $0x370] sm:$0xff]
          %v4408 = vld [vmem:[%s4296 + $0x378] sm:$0xff]
          %v4409 = vld [vmem:[%s4296 + $0x380] sm:$0xff]
          %v4410 = vld [vmem:[%s4296 + $0x388] sm:$0xff]
          %v4411 = vld [vmem:[%s4296 + $0x390] sm:$0xff]
          %v4412 = vld [vmem:[%s4296 + $0x398] sm:$0xff]
          %v4413 = vld [vmem:[%s4296 + $0x3a0] sm:$0xff]
          %v4414 = vld [vmem:[%s4296 + $0x3a8] sm:$0xff]
          %v4415 = vld [vmem:[%s4296 + $0x3b0] sm:$0xff]
          %v4416 = vld [vmem:[%s4296 + $0x3b8] sm:$0xff]
          %v4417 = vld [vmem:[%s4296 + $0x3c0] sm:$0xff]
          %v4418 = vld [vmem:[%s4296 + $0x3c8] sm:$0xff]
          %v4419 = vld [vmem:[%s4296 + $0x3d0] sm:$0xff]
          %v4420 = vld [vmem:[%s4296 + $0x3d8] sm:$0xff]
          %v4421 = vld [vmem:[%s4296 + $0x3e0] sm:$0xff]
          %v4422 = vld [vmem:[%s4296 + $0x3e8] sm:$0xff]
          %v4423 = vld [vmem:[%s4296 + $0x3f0] sm:$0xff]
          %v4424 = vld [vmem:[%s4296 + $0x3f8] sm:$0xff]
          %v4425 = vld [vmem:[%s4296 + $0x400] sm:$0xff]
          %v4426 = vld [vmem:[%s4296 + $0x408] sm:$0xff]
          %v4427 = vld [vmem:[%s4296 + $0x410] sm:$0xff]
          %v4428 = vld [vmem:[%s4296 + $0x418] sm:$0xff]
          %v4429 = vld [vmem:[%s4296 + $0x420] sm:$0xff]
          %v4430 = vld [vmem:[%s4296 + $0x428] sm:$0xff]
          %v4431 = vld [vmem:[%s4296 + $0x430] sm:$0xff]
          %v4432 = vld [vmem:[%s4296 + $0x438] sm:$0xff]
          %v4433 = vld [vmem:[%s4296 + $0x440] sm:$0xff]
          %v4434 = vld [vmem:[%s4296 + $0x448] sm:$0xff]
          %v4435 = vld [vmem:[%s4296 + $0x450] sm:$0xff]
          %v4436 = vld [vmem:[%s4296 + $0x458] sm:$0xff]
          %v4437 = vld [vmem:[%s4296 + $0x460] sm:$0xff]
          %v4438 = vld [vmem:[%s4296 + $0x468] sm:$0xff]
          %v4439 = vld [vmem:[%s4296 + $0x470] sm:$0xff]
          %v4440 = vld [vmem:[%s4296 + $0x478] sm:$0xff]
          %v4441 = vld [vmem:[%s4296 + $0x480] sm:$0xff]
          %v4442 = vld [vmem:[%s4296 + $0x488] sm:$0xff]
          %v4443 = vld [vmem:[%s4296 + $0x490] sm:$0xff]
          %v4444 = vld [vmem:[%s4296 + $0x498] sm:$0xff]
          %v4445 = vld [vmem:[%s4296 + $0x4a0] sm:$0xff]
          %v4446 = vld [vmem:[%s4296 + $0x4a8] sm:$0xff]
          %v4447 = vld [vmem:[%s4296 + $0x4b0] sm:$0xff]
          %v4448 = vld [vmem:[%s4296 + $0x4b8] sm:$0xff]
          %v4449 = vld [vmem:[%s4296 + $0x4c0] sm:$0xff]
          %v4450 = vld [vmem:[%s4296 + $0x4c8] sm:$0xff]
          %v4451 = vld [vmem:[%s4296 + $0x4d0] sm:$0xff]
          %v4452 = vld [vmem:[%s4296 + $0x4d8] sm:$0xff]
          %v4453 = vld [vmem:[%s4296 + $0x4e0] sm:$0xff]
          %v4454 = vld [vmem:[%s4296 + $0x4e8] sm:$0xff]
          %v4455 = vld [vmem:[%s4296 + $0x4f0] sm:$0xff]
          %v4456 = vld [vmem:[%s4296 + $0x4f8] sm:$0xff]
          %v4457 = vld [vmem:[%s4296 + $0x500] sm:$0xff]
          %v4458 = vld [vmem:[%s4296 + $0x508] sm:$0xff]
          %v4459 = vld [vmem:[%s4296 + $0x510] sm:$0xff]
          %v4460 = vld [vmem:[%s4296 + $0x518] sm:$0xff]
          %v4461 = vld [vmem:[%s4296 + $0x520] sm:$0xff]
          %v4462 = vld [vmem:[%s4296 + $0x528] sm:$0xff]
          %v4463 = vld [vmem:[%s4296 + $0x530] sm:$0xff]
          %v4464 = vld [vmem:[%s4296 + $0x538] sm:$0xff]
          %v4465 = vld [vmem:[%s4296 + $0x540] sm:$0xff]
          %v4466 = vld [vmem:[%s4296 + $0x548] sm:$0xff]
          %v4467 = vld [vmem:[%s4296 + $0x550] sm:$0xff]
          %v4468 = vld [vmem:[%s4296 + $0x558] sm:$0xff]
          %v4469 = vld [vmem:[%s4296 + $0x560] sm:$0xff]
          %v4470 = vld [vmem:[%s4296 + $0x568] sm:$0xff]
          %v4471 = vld [vmem:[%s4296 + $0x570] sm:$0xff]
          %v4472 = vld [vmem:[%s4296 + $0x578] sm:$0xff]
          %v4473 = vld [vmem:[%s4296 + $0x580] sm:$0xff]
          %v4474 = vld [vmem:[%s4296 + $0x588] sm:$0xff]
          %v4475 = vld [vmem:[%s4296 + $0x590] sm:$0xff]
          %v4476 = vld [vmem:[%s4296 + $0x598] sm:$0xff]
          %v4477 = vld [vmem:[%s4296 + $0x5a0] sm:$0xff]
          %v4478 = vld [vmem:[%s4296 + $0x5a8] sm:$0xff]
          %v4479 = vld [vmem:[%s4296 + $0x5b0] sm:$0xff]
          %v4480 = vld [vmem:[%s4296 + $0x5b8] sm:$0xff]
          %v4481 = vld [vmem:[%s4296 + $0x5c0] sm:$0xff]
          %v4482 = vld [vmem:[%s4296 + $0x5c8] sm:$0xff]
          %v4483 = vld [vmem:[%s4296 + $0x5d0] sm:$0xff]
          %v4484 = vld [vmem:[%s4296 + $0x5d8] sm:$0xff]
          %v4485 = vld [vmem:[%s4296 + $0x5e0] sm:$0xff]
          %v4486 = vld [vmem:[%s4296 + $0x5e8] sm:$0xff]
          %v4487 = vld [vmem:[%s4296 + $0x5f0] sm:$0xff]
          %v4488 = vld [vmem:[%s4296 + $0x5f8] sm:$0xff]
          %v4489 = vld [vmem:[%s4296 + $0x600] sm:$0xff]
          %v4490 = vld [vmem:[%s4296 + $0x608] sm:$0xff]
          %v4491 = vld [vmem:[%s4296 + $0x610] sm:$0xff]
          %v4492 = vld [vmem:[%s4296 + $0x618] sm:$0xff]
          %v4493 = vld [vmem:[%s4296 + $0x620] sm:$0xff]
          %v4494 = vld [vmem:[%s4296 + $0x628] sm:$0xff]
          %v4495 = vld [vmem:[%s4296 + $0x630] sm:$0xff]
          %v4496 = vld [vmem:[%s4296 + $0x638] sm:$0xff]
          %v4497 = vld [vmem:[%s4296 + $0x640] sm:$0xff]
          %v4498 = vld [vmem:[%s4296 + $0x648] sm:$0xff]
          %v4499 = vld [vmem:[%s4296 + $0x650] sm:$0xff]
          %v4500 = vld [vmem:[%s4296 + $0x658] sm:$0xff]
          %v4501 = vld [vmem:[%s4296 + $0x660] sm:$0xff]
          %v4502 = vld [vmem:[%s4296 + $0x668] sm:$0xff]
          %v4503 = vld [vmem:[%s4296 + $0x670] sm:$0xff]
          %v4504 = vld [vmem:[%s4296 + $0x678] sm:$0xff]
          %v4505 = vld [vmem:[%s4296 + $0x680] sm:$0xff]
          %v4506 = vld [vmem:[%s4296 + $0x688] sm:$0xff]
          %v4507 = vld [vmem:[%s4296 + $0x690] sm:$0xff]
          %v4508 = vld [vmem:[%s4296 + $0x698] sm:$0xff]
          %v4509 = vld [vmem:[%s4296 + $0x6a0] sm:$0xff]
          %v4510 = vld [vmem:[%s4296 + $0x6a8] sm:$0xff]
          %v4511 = vld [vmem:[%s4296 + $0x6b0] sm:$0xff]
          %v4512 = vld [vmem:[%s4296 + $0x6b8] sm:$0xff]
          %v4513 = vld [vmem:[%s4296 + $0x6c0] sm:$0xff]
          %v4514 = vld [vmem:[%s4296 + $0x6c8] sm:$0xff]
          %v4515 = vld [vmem:[%s4296 + $0x6d0] sm:$0xff]
          %v4516 = vld [vmem:[%s4296 + $0x6d8] sm:$0xff]
          %v4517 = vld [vmem:[%s4296 + $0x6e0] sm:$0xff]
          %v4518 = vld [vmem:[%s4296 + $0x6e8] sm:$0xff]
          %v4519 = vld [vmem:[%s4296 + $0x6f0] sm:$0xff]
          %v4520 = vld [vmem:[%s4296 + $0x6f8] sm:$0xff]
          %v4521 = vld [vmem:[%s4296 + $0x700] sm:$0xff]
          %v4522 = vld [vmem:[%s4296 + $0x708] sm:$0xff]
          %v4523 = vld [vmem:[%s4296 + $0x710] sm:$0xff]
          %v4524 = vld [vmem:[%s4296 + $0x718] sm:$0xff]
          %v4525 = vld [vmem:[%s4296 + $0x720] sm:$0xff]
          %v4526 = vld [vmem:[%s4296 + $0x728] sm:$0xff]
          %v4527 = vld [vmem:[%s4296 + $0x730] sm:$0xff]
          %v4528 = vld [vmem:[%s4296 + $0x738] sm:$0xff]
          %v4529 = vld [vmem:[%s4296 + $0x740] sm:$0xff]
          %v4530 = vld [vmem:[%s4296 + $0x748] sm:$0xff]
          %v4531 = vld [vmem:[%s4296 + $0x750] sm:$0xff]
          %v4532 = vld [vmem:[%s4296 + $0x758] sm:$0xff]
          %v4533 = vld [vmem:[%s4296 + $0x760] sm:$0xff]
          %v4534 = vld [vmem:[%s4296 + $0x768] sm:$0xff]
          %v4535 = vld [vmem:[%s4296 + $0x770] sm:$0xff]
          %v4536 = vld [vmem:[%s4296 + $0x778] sm:$0xff]
          %v4537 = vld [vmem:[%s4296 + $0x780] sm:$0xff]
          %v4538 = vld [vmem:[%s4296 + $0x788] sm:$0xff]
          %v4539 = vld [vmem:[%s4296 + $0x790] sm:$0xff]
          %v4540 = vld [vmem:[%s4296 + $0x798] sm:$0xff]
          %v4541 = vld [vmem:[%s4296 + $0x7a0] sm:$0xff]
          %v4542 = vld [vmem:[%s4296 + $0x7a8] sm:$0xff]
          %v4543 = vld [vmem:[%s4296 + $0x7b0] sm:$0xff]
          %v4544 = vld [vmem:[%s4296 + $0x7b8] sm:$0xff]
          %v4545 = vld [vmem:[%s4296 + $0x7c0] sm:$0xff]
          %v4546 = vld [vmem:[%s4296 + $0x7c8] sm:$0xff]
          %v4547 = vld [vmem:[%s4296 + $0x7d0] sm:$0xff]
          %v4548 = vld [vmem:[%s4296 + $0x7d8] sm:$0xff]
          %v4549 = vld [vmem:[%s4296 + $0x7e0] sm:$0xff]
          %v4550 = vld [vmem:[%s4296 + $0x7e8] sm:$0xff]
          %v4551 = vld [vmem:[%s4296 + $0x7f0] sm:$0xff]
          %v4552 = vld [vmem:[%s4296 + $0x7f8] sm:$0xff]
          %v4553 = vunpack.c.l.s8.bf16 %v4297
          %v4554 = vunpack.c.l.s8.bf16 %v4298
          %v4555 = vunpack.c.l.s8.bf16 %v4299
          %v4556 = vunpack.c.l.s8.bf16 %v4300
          %v4557 = vunpack.c.l.s8.bf16 %v4301
          %v4558 = vunpack.c.l.s8.bf16 %v4302
          %v4559 = vunpack.c.l.s8.bf16 %v4303
          %v4560 = vunpack.c.l.s8.bf16 %v4304
          %v4561 = vunpack.c.h.s8.bf16 %v4297
          %v4562 = vunpack.c.h.s8.bf16 %v4298
          %v4563 = vunpack.c.h.s8.bf16 %v4299
          %v4564 = vunpack.c.h.s8.bf16 %v4300
          %v4565 = vunpack.c.h.s8.bf16 %v4301
          %v4566 = vunpack.c.h.s8.bf16 %v4302
          %v4567 = vunpack.c.h.s8.bf16 %v4303
          %v4568 = vunpack.c.h.s8.bf16 %v4304
          %v4569 = vunpack.c.l.s8.bf16 %v4305
          %v4570 = vunpack.c.l.s8.bf16 %v4306
          %v4571 = vunpack.c.l.s8.bf16 %v4307
          %v4572 = vunpack.c.l.s8.bf16 %v4308
          %v4573 = vunpack.c.l.s8.bf16 %v4309
          %v4574 = vunpack.c.l.s8.bf16 %v4310
          %v4575 = vunpack.c.l.s8.bf16 %v4311
          %v4576 = vunpack.c.l.s8.bf16 %v4312
          %v4577 = vunpack.c.h.s8.bf16 %v4305
          %v4578 = vunpack.c.h.s8.bf16 %v4306
          %v4579 = vunpack.c.h.s8.bf16 %v4307
          %v4580 = vunpack.c.h.s8.bf16 %v4308
          %v4581 = vunpack.c.h.s8.bf16 %v4309
          %v4582 = vunpack.c.h.s8.bf16 %v4310
          %v4583 = vunpack.c.h.s8.bf16 %v4311
          %v4584 = vunpack.c.h.s8.bf16 %v4312
          %v4585 = vunpack.c.l.s8.bf16 %v4313
          %v4586 = vunpack.c.l.s8.bf16 %v4314
          %v4587 = vunpack.c.l.s8.bf16 %v4315
          %v4588 = vunpack.c.l.s8.bf16 %v4316
          %v4589 = vunpack.c.l.s8.bf16 %v4317
          %v4590 = vunpack.c.l.s8.bf16 %v4318
          %v4591 = vunpack.c.l.s8.bf16 %v4319
          %v4592 = vunpack.c.l.s8.bf16 %v4320
          %v4593 = vunpack.c.h.s8.bf16 %v4313
          %v4594 = vunpack.c.h.s8.bf16 %v4314
          %v4595 = vunpack.c.h.s8.bf16 %v4315
          %v4596 = vunpack.c.h.s8.bf16 %v4316
          %v4597 = vunpack.c.h.s8.bf16 %v4317
          %v4598 = vunpack.c.h.s8.bf16 %v4318
          %v4599 = vunpack.c.h.s8.bf16 %v4319
          %v4600 = vunpack.c.h.s8.bf16 %v4320
          %v4601 = vunpack.c.l.s8.bf16 %v4321
          %v4602 = vunpack.c.l.s8.bf16 %v4322
          %v4603 = vunpack.c.l.s8.bf16 %v4323
          %v4604 = vunpack.c.l.s8.bf16 %v4324
          %v4605 = vunpack.c.l.s8.bf16 %v4325
          %v4606 = vunpack.c.l.s8.bf16 %v4326
          %v4607 = vunpack.c.l.s8.bf16 %v4327
          %v4608 = vunpack.c.l.s8.bf16 %v4328
          %v4609 = vunpack.c.h.s8.bf16 %v4321
          %v4610 = vunpack.c.h.s8.bf16 %v4322
          %v4611 = vunpack.c.h.s8.bf16 %v4323
          %v4612 = vunpack.c.h.s8.bf16 %v4324
          %v4613 = vunpack.c.h.s8.bf16 %v4325
          %v4614 = vunpack.c.h.s8.bf16 %v4326
          %v4615 = vunpack.c.h.s8.bf16 %v4327
          %v4616 = vunpack.c.h.s8.bf16 %v4328
          %v4617 = vunpack.c.l.s8.bf16 %v4329
          %v4618 = vunpack.c.l.s8.bf16 %v4330
          %v4619 = vunpack.c.l.s8.bf16 %v4331
          %v4620 = vunpack.c.l.s8.bf16 %v4332
          %v4621 = vunpack.c.l.s8.bf16 %v4333
          %v4622 = vunpack.c.l.s8.bf16 %v4334
          %v4623 = vunpack.c.l.s8.bf16 %v4335
          %v4624 = vunpack.c.l.s8.bf16 %v4336
          %v4625 = vunpack.c.h.s8.bf16 %v4329
          %v4626 = vunpack.c.h.s8.bf16 %v4330
          %v4627 = vunpack.c.h.s8.bf16 %v4331
          %v4628 = vunpack.c.h.s8.bf16 %v4332
          %v4629 = vunpack.c.h.s8.bf16 %v4333
          %v4630 = vunpack.c.h.s8.bf16 %v4334
          %v4631 = vunpack.c.h.s8.bf16 %v4335
          %v4632 = vunpack.c.h.s8.bf16 %v4336
          %v4633 = vunpack.c.l.s8.bf16 %v4337
          %v4634 = vunpack.c.l.s8.bf16 %v4338
          %v4635 = vunpack.c.l.s8.bf16 %v4339
          %v4636 = vunpack.c.l.s8.bf16 %v4340
          %v4637 = vunpack.c.l.s8.bf16 %v4341
          %v4638 = vunpack.c.l.s8.bf16 %v4342
          %v4639 = vunpack.c.l.s8.bf16 %v4343
          %v4640 = vunpack.c.l.s8.bf16 %v4344
          %v4641 = vunpack.c.h.s8.bf16 %v4337
          %v4642 = vunpack.c.h.s8.bf16 %v4338
          %v4643 = vunpack.c.h.s8.bf16 %v4339
          %v4644 = vunpack.c.h.s8.bf16 %v4340
          %v4645 = vunpack.c.h.s8.bf16 %v4341
          %v4646 = vunpack.c.h.s8.bf16 %v4342
          %v4647 = vunpack.c.h.s8.bf16 %v4343
          %v4648 = vunpack.c.h.s8.bf16 %v4344
          %v4649 = vunpack.c.l.s8.bf16 %v4345
          %v4650 = vunpack.c.l.s8.bf16 %v4346
          %v4651 = vunpack.c.l.s8.bf16 %v4347
          %v4652 = vunpack.c.l.s8.bf16 %v4348
          %v4653 = vunpack.c.l.s8.bf16 %v4349
          %v4654 = vunpack.c.l.s8.bf16 %v4350
          %v4655 = vunpack.c.l.s8.bf16 %v4351
          %v4656 = vunpack.c.l.s8.bf16 %v4352
          %v4657 = vunpack.c.h.s8.bf16 %v4345
          %v4658 = vunpack.c.h.s8.bf16 %v4346
          %v4659 = vunpack.c.h.s8.bf16 %v4347
          %v4660 = vunpack.c.h.s8.bf16 %v4348
          %v4661 = vunpack.c.h.s8.bf16 %v4349
          %v4662 = vunpack.c.h.s8.bf16 %v4350
          %v4663 = vunpack.c.h.s8.bf16 %v4351
          %v4664 = vunpack.c.h.s8.bf16 %v4352
          %v4665 = vunpack.c.l.s8.bf16 %v4353
          %v4666 = vunpack.c.l.s8.bf16 %v4354
          %v4667 = vunpack.c.l.s8.bf16 %v4355
          %v4668 = vunpack.c.l.s8.bf16 %v4356
          %v4669 = vunpack.c.l.s8.bf16 %v4357
          %v4670 = vunpack.c.l.s8.bf16 %v4358
          %v4671 = vunpack.c.l.s8.bf16 %v4359
          %v4672 = vunpack.c.l.s8.bf16 %v4360
          %v4673 = vunpack.c.h.s8.bf16 %v4353
          %v4674 = vunpack.c.h.s8.bf16 %v4354
          %v4675 = vunpack.c.h.s8.bf16 %v4355
          %v4676 = vunpack.c.h.s8.bf16 %v4356
          %v4677 = vunpack.c.h.s8.bf16 %v4357
          %v4678 = vunpack.c.h.s8.bf16 %v4358
          %v4679 = vunpack.c.h.s8.bf16 %v4359
          %v4680 = vunpack.c.h.s8.bf16 %v4360
          %v4681 = vunpack.c.l.s8.bf16 %v4361
          %v4682 = vunpack.c.l.s8.bf16 %v4362
          %v4683 = vunpack.c.l.s8.bf16 %v4363
          %v4684 = vunpack.c.l.s8.bf16 %v4364
          %v4685 = vunpack.c.l.s8.bf16 %v4365
          %v4686 = vunpack.c.l.s8.bf16 %v4366
          %v4687 = vunpack.c.l.s8.bf16 %v4367
          %v4688 = vunpack.c.l.s8.bf16 %v4368
          %v4689 = vunpack.c.h.s8.bf16 %v4361
          %v4690 = vunpack.c.h.s8.bf16 %v4362
          %v4691 = vunpack.c.h.s8.bf16 %v4363
          %v4692 = vunpack.c.h.s8.bf16 %v4364
          %v4693 = vunpack.c.h.s8.bf16 %v4365
          %v4694 = vunpack.c.h.s8.bf16 %v4366
          %v4695 = vunpack.c.h.s8.bf16 %v4367
          %v4696 = vunpack.c.h.s8.bf16 %v4368
          %v4697 = vunpack.c.l.s8.bf16 %v4369
          %v4698 = vunpack.c.l.s8.bf16 %v4370
          %v4699 = vunpack.c.l.s8.bf16 %v4371
          %v4700 = vunpack.c.l.s8.bf16 %v4372
          %v4701 = vunpack.c.l.s8.bf16 %v4373
          %v4702 = vunpack.c.l.s8.bf16 %v4374
          %v4703 = vunpack.c.l.s8.bf16 %v4375
          %v4704 = vunpack.c.l.s8.bf16 %v4376
          %v4705 = vunpack.c.h.s8.bf16 %v4369
          %v4706 = vunpack.c.h.s8.bf16 %v4370
          %v4707 = vunpack.c.h.s8.bf16 %v4371
          %v4708 = vunpack.c.h.s8.bf16 %v4372
          %v4709 = vunpack.c.h.s8.bf16 %v4373
          %v4710 = vunpack.c.h.s8.bf16 %v4374
          %v4711 = vunpack.c.h.s8.bf16 %v4375
          %v4712 = vunpack.c.h.s8.bf16 %v4376
          %v4713 = vunpack.c.l.s8.bf16 %v4377
          %v4714 = vunpack.c.l.s8.bf16 %v4378
          %v4715 = vunpack.c.l.s8.bf16 %v4379
          %v4716 = vunpack.c.l.s8.bf16 %v4380
          %v4717 = vunpack.c.l.s8.bf16 %v4381
          %v4718 = vunpack.c.l.s8.bf16 %v4382
          %v4719 = vunpack.c.l.s8.bf16 %v4383
          %v4720 = vunpack.c.l.s8.bf16 %v4384
          %v4721 = vunpack.c.h.s8.bf16 %v4377
          %v4722 = vunpack.c.h.s8.bf16 %v4378
          %v4723 = vunpack.c.h.s8.bf16 %v4379
          %v4724 = vunpack.c.h.s8.bf16 %v4380
          %v4725 = vunpack.c.h.s8.bf16 %v4381
          %v4726 = vunpack.c.h.s8.bf16 %v4382
          %v4727 = vunpack.c.h.s8.bf16 %v4383
          %v4728 = vunpack.c.h.s8.bf16 %v4384
          %v4729 = vunpack.c.l.s8.bf16 %v4385
          %v4730 = vunpack.c.l.s8.bf16 %v4386
          %v4731 = vunpack.c.l.s8.bf16 %v4387
          %v4732 = vunpack.c.l.s8.bf16 %v4388
          %v4733 = vunpack.c.l.s8.bf16 %v4389
          %v4734 = vunpack.c.l.s8.bf16 %v4390
          %v4735 = vunpack.c.l.s8.bf16 %v4391
          %v4736 = vunpack.c.l.s8.bf16 %v4392
          %v4737 = vunpack.c.h.s8.bf16 %v4385
          %v4738 = vunpack.c.h.s8.bf16 %v4386
          %v4739 = vunpack.c.h.s8.bf16 %v4387
          %v4740 = vunpack.c.h.s8.bf16 %v4388
          %v4741 = vunpack.c.h.s8.bf16 %v4389
          %v4742 = vunpack.c.h.s8.bf16 %v4390
          %v4743 = vunpack.c.h.s8.bf16 %v4391
          %v4744 = vunpack.c.h.s8.bf16 %v4392
          %v4745 = vunpack.c.l.s8.bf16 %v4393
          %v4746 = vunpack.c.l.s8.bf16 %v4394
          %v4747 = vunpack.c.l.s8.bf16 %v4395
          %v4748 = vunpack.c.l.s8.bf16 %v4396
          %v4749 = vunpack.c.l.s8.bf16 %v4397
          %v4750 = vunpack.c.l.s8.bf16 %v4398
          %v4751 = vunpack.c.l.s8.bf16 %v4399
          %v4752 = vunpack.c.l.s8.bf16 %v4400
          %v4753 = vunpack.c.h.s8.bf16 %v4393
          %v4754 = vunpack.c.h.s8.bf16 %v4394
          %v4755 = vunpack.c.h.s8.bf16 %v4395
          %v4756 = vunpack.c.h.s8.bf16 %v4396
          %v4757 = vunpack.c.h.s8.bf16 %v4397
          %v4758 = vunpack.c.h.s8.bf16 %v4398
          %v4759 = vunpack.c.h.s8.bf16 %v4399
          %v4760 = vunpack.c.h.s8.bf16 %v4400
          %v4761 = vunpack.c.l.s8.bf16 %v4401
          %v4762 = vunpack.c.l.s8.bf16 %v4402
          %v4763 = vunpack.c.l.s8.bf16 %v4403
          %v4764 = vunpack.c.l.s8.bf16 %v4404
          %v4765 = vunpack.c.l.s8.bf16 %v4405
          %v4766 = vunpack.c.l.s8.bf16 %v4406
          %v4767 = vunpack.c.l.s8.bf16 %v4407
          %v4768 = vunpack.c.l.s8.bf16 %v4408
          %v4769 = vunpack.c.h.s8.bf16 %v4401
          %v4770 = vunpack.c.h.s8.bf16 %v4402
          %v4771 = vunpack.c.h.s8.bf16 %v4403
          %v4772 = vunpack.c.h.s8.bf16 %v4404
          %v4773 = vunpack.c.h.s8.bf16 %v4405
          %v4774 = vunpack.c.h.s8.bf16 %v4406
          %v4775 = vunpack.c.h.s8.bf16 %v4407
          %v4776 = vunpack.c.h.s8.bf16 %v4408
          %v4777 = vunpack.c.l.s8.bf16 %v4409
          %v4778 = vunpack.c.l.s8.bf16 %v4410
          %v4779 = vunpack.c.l.s8.bf16 %v4411
          %v4780 = vunpack.c.l.s8.bf16 %v4412
          %v4781 = vunpack.c.l.s8.bf16 %v4413
          %v4782 = vunpack.c.l.s8.bf16 %v4414
          %v4783 = vunpack.c.l.s8.bf16 %v4415
          %v4784 = vunpack.c.l.s8.bf16 %v4416
          %v4785 = vunpack.c.h.s8.bf16 %v4409
          %v4786 = vunpack.c.h.s8.bf16 %v4410
          %v4787 = vunpack.c.h.s8.bf16 %v4411
          %v4788 = vunpack.c.h.s8.bf16 %v4412
          %v4789 = vunpack.c.h.s8.bf16 %v4413
          %v4790 = vunpack.c.h.s8.bf16 %v4414
          %v4791 = vunpack.c.h.s8.bf16 %v4415
          %v4792 = vunpack.c.h.s8.bf16 %v4416
          %v4793 = vunpack.c.l.s8.bf16 %v4417
          %v4794 = vunpack.c.l.s8.bf16 %v4418
          %v4795 = vunpack.c.l.s8.bf16 %v4419
          %v4796 = vunpack.c.l.s8.bf16 %v4420
          %v4797 = vunpack.c.l.s8.bf16 %v4421
          %v4798 = vunpack.c.l.s8.bf16 %v4422
          %v4799 = vunpack.c.l.s8.bf16 %v4423
          %v4800 = vunpack.c.l.s8.bf16 %v4424
          %v4801 = vunpack.c.h.s8.bf16 %v4417
          %v4802 = vunpack.c.h.s8.bf16 %v4418
          %v4803 = vunpack.c.h.s8.bf16 %v4419
          %v4804 = vunpack.c.h.s8.bf16 %v4420
          %v4805 = vunpack.c.h.s8.bf16 %v4421
          %v4806 = vunpack.c.h.s8.bf16 %v4422
          %v4807 = vunpack.c.h.s8.bf16 %v4423
          %v4808 = vunpack.c.h.s8.bf16 %v4424
          %v4809 = vunpack.c.l.s8.bf16 %v4425
          %v4810 = vunpack.c.l.s8.bf16 %v4426
          %v4811 = vunpack.c.l.s8.bf16 %v4427
          %v4812 = vunpack.c.l.s8.bf16 %v4428
          %v4813 = vunpack.c.l.s8.bf16 %v4429
          %v4814 = vunpack.c.l.s8.bf16 %v4430
          %v4815 = vunpack.c.l.s8.bf16 %v4431
          %v4816 = vunpack.c.l.s8.bf16 %v4432
          %v4817 = vunpack.c.h.s8.bf16 %v4425
          %v4818 = vunpack.c.h.s8.bf16 %v4426
          %v4819 = vunpack.c.h.s8.bf16 %v4427
          %v4820 = vunpack.c.h.s8.bf16 %v4428
          %v4821 = vunpack.c.h.s8.bf16 %v4429
          %v4822 = vunpack.c.h.s8.bf16 %v4430
          %v4823 = vunpack.c.h.s8.bf16 %v4431
          %v4824 = vunpack.c.h.s8.bf16 %v4432
          %v4825 = vunpack.c.l.s8.bf16 %v4433
          %v4826 = vunpack.c.l.s8.bf16 %v4434
          %v4827 = vunpack.c.l.s8.bf16 %v4435
          %v4828 = vunpack.c.l.s8.bf16 %v4436
          %v4829 = vunpack.c.l.s8.bf16 %v4437
          %v4830 = vunpack.c.l.s8.bf16 %v4438
          %v4831 = vunpack.c.l.s8.bf16 %v4439
          %v4832 = vunpack.c.l.s8.bf16 %v4440
          %v4833 = vunpack.c.h.s8.bf16 %v4433
          %v4834 = vunpack.c.h.s8.bf16 %v4434
          %v4835 = vunpack.c.h.s8.bf16 %v4435
          %v4836 = vunpack.c.h.s8.bf16 %v4436
          %v4837 = vunpack.c.h.s8.bf16 %v4437
          %v4838 = vunpack.c.h.s8.bf16 %v4438
          %v4839 = vunpack.c.h.s8.bf16 %v4439
          %v4840 = vunpack.c.h.s8.bf16 %v4440
          %v4841 = vunpack.c.l.s8.bf16 %v4441
          %v4842 = vunpack.c.l.s8.bf16 %v4442
          %v4843 = vunpack.c.l.s8.bf16 %v4443
          %v4844 = vunpack.c.l.s8.bf16 %v4444
          %v4845 = vunpack.c.l.s8.bf16 %v4445
          %v4846 = vunpack.c.l.s8.bf16 %v4446
          %v4847 = vunpack.c.l.s8.bf16 %v4447
          %v4848 = vunpack.c.l.s8.bf16 %v4448
          %v4849 = vunpack.c.h.s8.bf16 %v4441
          %v4850 = vunpack.c.h.s8.bf16 %v4442
          %v4851 = vunpack.c.h.s8.bf16 %v4443
          %v4852 = vunpack.c.h.s8.bf16 %v4444
          %v4853 = vunpack.c.h.s8.bf16 %v4445
          %v4854 = vunpack.c.h.s8.bf16 %v4446
          %v4855 = vunpack.c.h.s8.bf16 %v4447
          %v4856 = vunpack.c.h.s8.bf16 %v4448
          %v4857 = vunpack.c.l.s8.bf16 %v4449
          %v4858 = vunpack.c.l.s8.bf16 %v4450
          %v4859 = vunpack.c.l.s8.bf16 %v4451
          %v4860 = vunpack.c.l.s8.bf16 %v4452
          %v4861 = vunpack.c.l.s8.bf16 %v4453
          %v4862 = vunpack.c.l.s8.bf16 %v4454
          %v4863 = vunpack.c.l.s8.bf16 %v4455
          %v4864 = vunpack.c.l.s8.bf16 %v4456
          %v4865 = vunpack.c.h.s8.bf16 %v4449
          %v4866 = vunpack.c.h.s8.bf16 %v4450
          %v4867 = vunpack.c.h.s8.bf16 %v4451
          %v4868 = vunpack.c.h.s8.bf16 %v4452
          %v4869 = vunpack.c.h.s8.bf16 %v4453
          %v4870 = vunpack.c.h.s8.bf16 %v4454
          %v4871 = vunpack.c.h.s8.bf16 %v4455
          %v4872 = vunpack.c.h.s8.bf16 %v4456
          %v4873 = vunpack.c.l.s8.bf16 %v4457
          %v4874 = vunpack.c.l.s8.bf16 %v4458
          %v4875 = vunpack.c.l.s8.bf16 %v4459
          %v4876 = vunpack.c.l.s8.bf16 %v4460
          %v4877 = vunpack.c.l.s8.bf16 %v4461
          %v4878 = vunpack.c.l.s8.bf16 %v4462
          %v4879 = vunpack.c.l.s8.bf16 %v4463
          %v4880 = vunpack.c.l.s8.bf16 %v4464
          %v4881 = vunpack.c.h.s8.bf16 %v4457
          %v4882 = vunpack.c.h.s8.bf16 %v4458
          %v4883 = vunpack.c.h.s8.bf16 %v4459
          %v4884 = vunpack.c.h.s8.bf16 %v4460
          %v4885 = vunpack.c.h.s8.bf16 %v4461
          %v4886 = vunpack.c.h.s8.bf16 %v4462
          %v4887 = vunpack.c.h.s8.bf16 %v4463
          %v4888 = vunpack.c.h.s8.bf16 %v4464
          %v4889 = vunpack.c.l.s8.bf16 %v4465
          %v4890 = vunpack.c.l.s8.bf16 %v4466
          %v4891 = vunpack.c.l.s8.bf16 %v4467
          %v4892 = vunpack.c.l.s8.bf16 %v4468
          %v4893 = vunpack.c.l.s8.bf16 %v4469
          %v4894 = vunpack.c.l.s8.bf16 %v4470
          %v4895 = vunpack.c.l.s8.bf16 %v4471
          %v4896 = vunpack.c.l.s8.bf16 %v4472
          %v4897 = vunpack.c.h.s8.bf16 %v4465
          %v4898 = vunpack.c.h.s8.bf16 %v4466
          %v4899 = vunpack.c.h.s8.bf16 %v4467
          %v4900 = vunpack.c.h.s8.bf16 %v4468
          %v4901 = vunpack.c.h.s8.bf16 %v4469
          %v4902 = vunpack.c.h.s8.bf16 %v4470
          %v4903 = vunpack.c.h.s8.bf16 %v4471
          %v4904 = vunpack.c.h.s8.bf16 %v4472
          %v4905 = vunpack.c.l.s8.bf16 %v4473
          %v4906 = vunpack.c.l.s8.bf16 %v4474
          %v4907 = vunpack.c.l.s8.bf16 %v4475
          %v4908 = vunpack.c.l.s8.bf16 %v4476
          %v4909 = vunpack.c.l.s8.bf16 %v4477
          %v4910 = vunpack.c.l.s8.bf16 %v4478
          %v4911 = vunpack.c.l.s8.bf16 %v4479
          %v4912 = vunpack.c.l.s8.bf16 %v4480
          %v4913 = vunpack.c.h.s8.bf16 %v4473
          %v4914 = vunpack.c.h.s8.bf16 %v4474
          %v4915 = vunpack.c.h.s8.bf16 %v4475
          %v4916 = vunpack.c.h.s8.bf16 %v4476
          %v4917 = vunpack.c.h.s8.bf16 %v4477
          %v4918 = vunpack.c.h.s8.bf16 %v4478
          %v4919 = vunpack.c.h.s8.bf16 %v4479
          %v4920 = vunpack.c.h.s8.bf16 %v4480
          %v4921 = vunpack.c.l.s8.bf16 %v4481
          %v4922 = vunpack.c.l.s8.bf16 %v4482
          %v4923 = vunpack.c.l.s8.bf16 %v4483
          %v4924 = vunpack.c.l.s8.bf16 %v4484
          %v4925 = vunpack.c.l.s8.bf16 %v4485
          %v4926 = vunpack.c.l.s8.bf16 %v4486
          %v4927 = vunpack.c.l.s8.bf16 %v4487
          %v4928 = vunpack.c.l.s8.bf16 %v4488
          %v4929 = vunpack.c.h.s8.bf16 %v4481
          %v4930 = vunpack.c.h.s8.bf16 %v4482
          %v4931 = vunpack.c.h.s8.bf16 %v4483
          %v4932 = vunpack.c.h.s8.bf16 %v4484
          %v4933 = vunpack.c.h.s8.bf16 %v4485
          %v4934 = vunpack.c.h.s8.bf16 %v4486
          %v4935 = vunpack.c.h.s8.bf16 %v4487
          %v4936 = vunpack.c.h.s8.bf16 %v4488
          %v4937 = vunpack.c.l.s8.bf16 %v4489
          %v4938 = vunpack.c.l.s8.bf16 %v4490
          %v4939 = vunpack.c.l.s8.bf16 %v4491
          %v4940 = vunpack.c.l.s8.bf16 %v4492
          %v4941 = vunpack.c.l.s8.bf16 %v4493
          %v4942 = vunpack.c.l.s8.bf16 %v4494
          %v4943 = vunpack.c.l.s8.bf16 %v4495
          %v4944 = vunpack.c.l.s8.bf16 %v4496
          %v4945 = vunpack.c.h.s8.bf16 %v4489
          %v4946 = vunpack.c.h.s8.bf16 %v4490
          %v4947 = vunpack.c.h.s8.bf16 %v4491
          %v4948 = vunpack.c.h.s8.bf16 %v4492
          %v4949 = vunpack.c.h.s8.bf16 %v4493
          %v4950 = vunpack.c.h.s8.bf16 %v4494
          %v4951 = vunpack.c.h.s8.bf16 %v4495
          %v4952 = vunpack.c.h.s8.bf16 %v4496
          %v4953 = vunpack.c.l.s8.bf16 %v4497
          %v4954 = vunpack.c.l.s8.bf16 %v4498
          %v4955 = vunpack.c.l.s8.bf16 %v4499
          %v4956 = vunpack.c.l.s8.bf16 %v4500
          %v4957 = vunpack.c.l.s8.bf16 %v4501
          %v4958 = vunpack.c.l.s8.bf16 %v4502
          %v4959 = vunpack.c.l.s8.bf16 %v4503
          %v4960 = vunpack.c.l.s8.bf16 %v4504
          %v4961 = vunpack.c.h.s8.bf16 %v4497
          %v4962 = vunpack.c.h.s8.bf16 %v4498
          %v4963 = vunpack.c.h.s8.bf16 %v4499
          %v4964 = vunpack.c.h.s8.bf16 %v4500
          %v4965 = vunpack.c.h.s8.bf16 %v4501
          %v4966 = vunpack.c.h.s8.bf16 %v4502
          %v4967 = vunpack.c.h.s8.bf16 %v4503
          %v4968 = vunpack.c.h.s8.bf16 %v4504
          %v4969 = vunpack.c.l.s8.bf16 %v4505
          %v4970 = vunpack.c.l.s8.bf16 %v4506
          %v4971 = vunpack.c.l.s8.bf16 %v4507
          %v4972 = vunpack.c.l.s8.bf16 %v4508
          %v4973 = vunpack.c.l.s8.bf16 %v4509
          %v4974 = vunpack.c.l.s8.bf16 %v4510
          %v4975 = vunpack.c.l.s8.bf16 %v4511
          %v4976 = vunpack.c.l.s8.bf16 %v4512
          %v4977 = vunpack.c.h.s8.bf16 %v4505
          %v4978 = vunpack.c.h.s8.bf16 %v4506
          %v4979 = vunpack.c.h.s8.bf16 %v4507
          %v4980 = vunpack.c.h.s8.bf16 %v4508
          %v4981 = vunpack.c.h.s8.bf16 %v4509
          %v4982 = vunpack.c.h.s8.bf16 %v4510
          %v4983 = vunpack.c.h.s8.bf16 %v4511
          %v4984 = vunpack.c.h.s8.bf16 %v4512
          %v4985 = vunpack.c.l.s8.bf16 %v4513
          %v4986 = vunpack.c.l.s8.bf16 %v4514
          %v4987 = vunpack.c.l.s8.bf16 %v4515
          %v4988 = vunpack.c.l.s8.bf16 %v4516
          %v4989 = vunpack.c.l.s8.bf16 %v4517
          %v4990 = vunpack.c.l.s8.bf16 %v4518
          %v4991 = vunpack.c.l.s8.bf16 %v4519
          %v4992 = vunpack.c.l.s8.bf16 %v4520
          %v4993 = vunpack.c.h.s8.bf16 %v4513
          %v4994 = vunpack.c.h.s8.bf16 %v4514
          %v4995 = vunpack.c.h.s8.bf16 %v4515
          %v4996 = vunpack.c.h.s8.bf16 %v4516
          %v4997 = vunpack.c.h.s8.bf16 %v4517
          %v4998 = vunpack.c.h.s8.bf16 %v4518
          %v4999 = vunpack.c.h.s8.bf16 %v4519
          %v5000 = vunpack.c.h.s8.bf16 %v4520
          %v5001 = vunpack.c.l.s8.bf16 %v4521
          %v5002 = vunpack.c.l.s8.bf16 %v4522
          %v5003 = vunpack.c.l.s8.bf16 %v4523
          %v5004 = vunpack.c.l.s8.bf16 %v4524
          %v5005 = vunpack.c.l.s8.bf16 %v4525
          %v5006 = vunpack.c.l.s8.bf16 %v4526
          %v5007 = vunpack.c.l.s8.bf16 %v4527
          %v5008 = vunpack.c.l.s8.bf16 %v4528
          %v5009 = vunpack.c.h.s8.bf16 %v4521
          %v5010 = vunpack.c.h.s8.bf16 %v4522
          %v5011 = vunpack.c.h.s8.bf16 %v4523
          %v5012 = vunpack.c.h.s8.bf16 %v4524
          %v5013 = vunpack.c.h.s8.bf16 %v4525
          %v5014 = vunpack.c.h.s8.bf16 %v4526
          %v5015 = vunpack.c.h.s8.bf16 %v4527
          %v5016 = vunpack.c.h.s8.bf16 %v4528
          %v5017 = vunpack.c.l.s8.bf16 %v4529
          %v5018 = vunpack.c.l.s8.bf16 %v4530
          %v5019 = vunpack.c.l.s8.bf16 %v4531
          %v5020 = vunpack.c.l.s8.bf16 %v4532
          %v5021 = vunpack.c.l.s8.bf16 %v4533
          %v5022 = vunpack.c.l.s8.bf16 %v4534
          %v5023 = vunpack.c.l.s8.bf16 %v4535
          %v5024 = vunpack.c.l.s8.bf16 %v4536
          %v5025 = vunpack.c.h.s8.bf16 %v4529
          %v5026 = vunpack.c.h.s8.bf16 %v4530
          %v5027 = vunpack.c.h.s8.bf16 %v4531
          %v5028 = vunpack.c.h.s8.bf16 %v4532
          %v5029 = vunpack.c.h.s8.bf16 %v4533
          %v5030 = vunpack.c.h.s8.bf16 %v4534
          %v5031 = vunpack.c.h.s8.bf16 %v4535
          %v5032 = vunpack.c.h.s8.bf16 %v4536
          %v5033 = vunpack.c.l.s8.bf16 %v4537
          %v5034 = vunpack.c.l.s8.bf16 %v4538
          %v5035 = vunpack.c.l.s8.bf16 %v4539
          %v5036 = vunpack.c.l.s8.bf16 %v4540
          %v5037 = vunpack.c.l.s8.bf16 %v4541
          %v5038 = vunpack.c.l.s8.bf16 %v4542
          %v5039 = vunpack.c.l.s8.bf16 %v4543
          %v5040 = vunpack.c.l.s8.bf16 %v4544
          %v5041 = vunpack.c.h.s8.bf16 %v4537
          %v5042 = vunpack.c.h.s8.bf16 %v4538
          %v5043 = vunpack.c.h.s8.bf16 %v4539
          %v5044 = vunpack.c.h.s8.bf16 %v4540
          %v5045 = vunpack.c.h.s8.bf16 %v4541
          %v5046 = vunpack.c.h.s8.bf16 %v4542
          %v5047 = vunpack.c.h.s8.bf16 %v4543
          %v5048 = vunpack.c.h.s8.bf16 %v4544
          %v5049 = vunpack.c.l.s8.bf16 %v4545
          %v5050 = vunpack.c.l.s8.bf16 %v4546
          %v5051 = vunpack.c.l.s8.bf16 %v4547
          %v5052 = vunpack.c.l.s8.bf16 %v4548
          %v5053 = vunpack.c.l.s8.bf16 %v4549
          %v5054 = vunpack.c.l.s8.bf16 %v4550
          %v5055 = vunpack.c.l.s8.bf16 %v4551
          %v5056 = vunpack.c.l.s8.bf16 %v4552
          %v5057 = vunpack.c.h.s8.bf16 %v4545
          %v5058 = vunpack.c.h.s8.bf16 %v4546
          %v5059 = vunpack.c.h.s8.bf16 %v4547
          %v5060 = vunpack.c.h.s8.bf16 %v4548
          %v5061 = vunpack.c.h.s8.bf16 %v4549
          %v5062 = vunpack.c.h.s8.bf16 %v4550
          %v5063 = vunpack.c.h.s8.bf16 %v4551
          %v5064 = vunpack.c.h.s8.bf16 %v4552
          %v5065 = vpack.c.bf16 %v4288, %v4288
          %v5066 = vpack.c.bf16 %v4289, %v4289
          %v5067 = vpack.c.bf16 %v4290, %v4290
          %v5068 = vpack.c.bf16 %v4291, %v4291
          %v5069 = vpack.c.bf16 %v4292, %v4292
          %v5070 = vpack.c.bf16 %v4293, %v4293
          %v5071 = vpack.c.bf16 %v4294, %v4294
          %v5072 = vpack.c.bf16 %v4295, %v4295
          %5073 = vmatprep.subr.bf16.mxu0 %v4554
          %5074 = vmatpush1.bf16.msra.mxu0 %v4553
          %5075 = vmatprep.subr.bf16.mxu0 %v4562
          %5076 = vmatpush1.bf16.msra.mxu0 %v4561
          %5077 = vmatprep.subr.bf16.mxu0 %v4570
          %5078 = vmatpush1.bf16.msra.mxu0 %v4569
          %5079 = vmatprep.subr.bf16.mxu0 %v4578
          %5080 = vmatpush1.bf16.msra.mxu0 %v4577
          %5081 = vmatprep.subr.bf16.mxu0 %v4586
          %5082 = vmatpush1.bf16.msra.mxu0 %v4585
          %5083 = vmatprep.subr.bf16.mxu0 %v4594
          %5084 = vmatpush1.bf16.msra.mxu0 %v4593
          %5085 = vmatprep.subr.bf16.mxu0 %v4602
          %5086 = vmatpush1.bf16.msra.mxu0 %v4601
          %5087 = vmatprep.subr.bf16.mxu0 %v4610
          %5088 = vmatpush1.bf16.msra.mxu0 %v4609
          %5089 = vmatprep.subr.bf16.mxu0 %v4618
          %5090 = vmatpush1.bf16.msra.mxu0 %v4617
          %5091 = vmatprep.subr.bf16.mxu0 %v4626
          %5092 = vmatpush1.bf16.msra.mxu0 %v4625
          %5093 = vmatprep.subr.bf16.mxu0 %v4634
          %5094 = vmatpush1.bf16.msra.mxu0 %v4633
          %5095 = vmatprep.subr.bf16.mxu0 %v4642
          %5096 = vmatpush1.bf16.msra.mxu0 %v4641
          %5097 = vmatprep.subr.bf16.mxu0 %v4650
          %5098 = vmatpush1.bf16.msra.mxu0 %v4649
          %5099 = vmatprep.subr.bf16.mxu0 %v4658
          %5100 = vmatpush1.bf16.msra.mxu0 %v4657
          %5101 = vmatprep.subr.bf16.mxu0 %v4666
          %5102 = vmatpush1.bf16.msra.mxu0 %v4665
          %5103 = vmatprep.subr.bf16.mxu0 %v4674
          %5104 = vmatpush1.bf16.msra.mxu0 %v4673
          %5105 = vmatprep.mubr.bf16.mxu0 %v5066
          %5106 = vmatmul.mubr.bf16.gmra.mrb[0].mxu0 %v5065
          %v5107 = vpop.f32.mrb[0].mxu0
          %v5108 = vadd.f32 0.0, %v5107
          %v5109 = vpop.f32.mrb[0].mxu0
          %v5110 = vadd.f32 0.0, %v5109
          %v5111 = vpop.f32.mrb[0].mxu0
          %v5112 = vpop.f32.mrb[0].mxu0
          %5113 = vdwg.mxu0
          %5114 = vmatprep.subr.bf16.mxu0 %v4682
          %5115 = vmatpush1.bf16.msra.mxu0 %v4681
          %5116 = vmatprep.subr.bf16.mxu0 %v4690
          %5117 = vmatpush1.bf16.msra.mxu0 %v4689
          %5118 = vmatprep.subr.bf16.mxu0 %v4698
          %5119 = vmatpush1.bf16.msra.mxu0 %v4697
          %5120 = vmatprep.subr.bf16.mxu0 %v4706
          %5121 = vmatpush1.bf16.msra.mxu0 %v4705
          %5122 = vmatprep.subr.bf16.mxu0 %v4714
          %5123 = vmatpush1.bf16.msra.mxu0 %v4713
          %5124 = vmatprep.subr.bf16.mxu0 %v4722
          %5125 = vmatpush1.bf16.msra.mxu0 %v4721
          %5126 = vmatprep.subr.bf16.mxu0 %v4730
          %5127 = vmatpush1.bf16.msra.mxu0 %v4729
          %5128 = vmatprep.subr.bf16.mxu0 %v4738
          %5129 = vmatpush1.bf16.msra.mxu0 %v4737
          %5130 = vmatprep.subr.bf16.mxu0 %v4746
          %5131 = vmatpush1.bf16.msra.mxu0 %v4745
          %5132 = vmatprep.subr.bf16.mxu0 %v4754
          %5133 = vmatpush1.bf16.msra.mxu0 %v4753
          %5134 = vmatprep.subr.bf16.mxu0 %v4762
          %5135 = vmatpush1.bf16.msra.mxu0 %v4761
          %5136 = vmatprep.subr.bf16.mxu0 %v4770
          %5137 = vmatpush1.bf16.msra.mxu0 %v4769
          %5138 = vmatprep.subr.bf16.mxu0 %v4778
          %5139 = vmatpush1.bf16.msra.mxu0 %v4777
          %5140 = vmatprep.subr.bf16.mxu0 %v4786
          %5141 = vmatpush1.bf16.msra.mxu0 %v4785
          %5142 = vmatprep.subr.bf16.mxu0 %v4794
          %5143 = vmatpush1.bf16.msra.mxu0 %v4793
          %5144 = vmatprep.subr.bf16.mxu0 %v4802
          %5145 = vmatpush1.bf16.msra.mxu0 %v4801
          %5146 = vmatprep.mubr.bf16.mxu0 %v5068
          %5147 = vmatmul.mubr.bf16.gmra.mrb[0].mxu0 %v5067
          %v5148 = vpop.f32.mrb[0].mxu0
          %v5149 = vadd.f32 %v5108, %v5148
          %v5150 = vpop.f32.mrb[0].mxu0
          %v5151 = vadd.f32 %v5110, %v5150
          %v5152 = vpop.f32.mrb[0].mxu0
          %v5153 = vpop.f32.mrb[0].mxu0
          %5154 = vdwg.mxu0
          %5155 = vmatprep.subr.bf16.mxu0 %v4810
          %5156 = vmatpush1.bf16.msra.mxu0 %v4809
          %5157 = vmatprep.subr.bf16.mxu0 %v4818
          %5158 = vmatpush1.bf16.msra.mxu0 %v4817
          %5159 = vmatprep.subr.bf16.mxu0 %v4826
          %5160 = vmatpush1.bf16.msra.mxu0 %v4825
          %5161 = vmatprep.subr.bf16.mxu0 %v4834
          %5162 = vmatpush1.bf16.msra.mxu0 %v4833
          %5163 = vmatprep.subr.bf16.mxu0 %v4842
          %5164 = vmatpush1.bf16.msra.mxu0 %v4841
          %5165 = vmatprep.subr.bf16.mxu0 %v4850
          %5166 = vmatpush1.bf16.msra.mxu0 %v4849
          %5167 = vmatprep.subr.bf16.mxu0 %v4858
          %5168 = vmatpush1.bf16.msra.mxu0 %v4857
          %5169 = vmatprep.subr.bf16.mxu0 %v4866
          %5170 = vmatpush1.bf16.msra.mxu0 %v4865
          %5171 = vmatprep.subr.bf16.mxu0 %v4874
          %5172 = vmatpush1.bf16.msra.mxu0 %v4873
          %5173 = vmatprep.subr.bf16.mxu0 %v4882
          %5174 = vmatpush1.bf16.msra.mxu0 %v4881
          %5175 = vmatprep.subr.bf16.mxu0 %v4890
          %5176 = vmatpush1.bf16.msra.mxu0 %v4889
          %5177 = vmatprep.subr.bf16.mxu0 %v4898
          %5178 = vmatpush1.bf16.msra.mxu0 %v4897
          %5179 = vmatprep.subr.bf16.mxu0 %v4906
          %5180 = vmatpush1.bf16.msra.mxu0 %v4905
          %5181 = vmatprep.subr.bf16.mxu0 %v4914
          %5182 = vmatpush1.bf16.msra.mxu0 %v4913
          %5183 = vmatprep.subr.bf16.mxu0 %v4922
          %5184 = vmatpush1.bf16.msra.mxu0 %v4921
          %5185 = vmatprep.subr.bf16.mxu0 %v4930
          %5186 = vmatpush1.bf16.msra.mxu0 %v4929
          %5187 = vmatprep.mubr.bf16.mxu0 %v5070
          %5188 = vmatmul.mubr.bf16.gmra.mrb[0].mxu0 %v5069
          %v5189 = vpop.f32.mrb[0].mxu0
          %v5190 = vadd.f32 %v5149, %v5189
          %v5191 = vpop.f32.mrb[0].mxu0
          %v5192 = vadd.f32 %v5151, %v5191
          %v5193 = vpop.f32.mrb[0].mxu0
          %v5194 = vpop.f32.mrb[0].mxu0
          %5195 = vdwg.mxu0
          %5196 = vmatprep.subr.bf16.mxu0 %v4938
          %5197 = vmatpush1.bf16.msra.mxu0 %v4937
          %5198 = vmatprep.subr.bf16.mxu0 %v4946
          %5199 = vmatpush1.bf16.msra.mxu0 %v4945
          %5200 = vmatprep.subr.bf16.mxu0 %v4954
          %5201 = vmatpush1.bf16.msra.mxu0 %v4953
          %5202 = vmatprep.subr.bf16.mxu0 %v4962
          %5203 = vmatpush1.bf16.msra.mxu0 %v4961
          %5204 = vmatprep.subr.bf16.mxu0 %v4970
          %5205 = vmatpush1.bf16.msra.mxu0 %v4969
          %5206 = vmatprep.subr.bf16.mxu0 %v4978
          %5207 = vmatpush1.bf16.msra.mxu0 %v4977
          %5208 = vmatprep.subr.bf16.mxu0 %v4986
          %5209 = vmatpush1.bf16.msra.mxu0 %v4985
          %5210 = vmatprep.subr.bf16.mxu0 %v4994
          %5211 = vmatpush1.bf16.msra.mxu0 %v4993
          %5212 = vmatprep.subr.bf16.mxu0 %v5002
          %5213 = vmatpush1.bf16.msra.mxu0 %v5001
          %5214 = vmatprep.subr.bf16.mxu0 %v5010
          %5215 = vmatpush1.bf16.msra.mxu0 %v5009
          %5216 = vmatprep.subr.bf16.mxu0 %v5018
          %5217 = vmatpush1.bf16.msra.mxu0 %v5017
          %5218 = vmatprep.subr.bf16.mxu0 %v5026
          %5219 = vmatpush1.bf16.msra.mxu0 %v5025
          %5220 = vmatprep.subr.bf16.mxu0 %v5034
          %5221 = vmatpush1.bf16.msra.mxu0 %v5033
          %5222 = vmatprep.subr.bf16.mxu0 %v5042
          %5223 = vmatpush1.bf16.msra.mxu0 %v5041
          %5224 = vmatprep.subr.bf16.mxu0 %v5050
          %5225 = vmatpush1.bf16.msra.mxu0 %v5049
          %5226 = vmatprep.subr.bf16.mxu0 %v5058
          %5227 = vmatpush1.bf16.msra.mxu0 %v5057
          %5228 = vmatprep.mubr.bf16.mxu0 %v5072
          %5229 = vmatmul.mubr.bf16.gmra.mrb[0].mxu0 %v5071
          %v5230 = vpop.f32.mrb[0].mxu0
          %v5231 = vadd.f32 %v5190, %v5230
          %v5232 = vpop.f32.mrb[0].mxu0
          %v5233 = vadd.f32 %v5192, %v5232
          %v5234 = vpop.f32.mrb[0].mxu0
          %v5235 = vpop.f32.mrb[0].mxu0
          %5236 = vdwg.mxu0
          %5237 = vmatprep.subr.bf16.mxu0 %v4556
          %5238 = vmatpush1.bf16.msra.mxu0 %v4555
          %5239 = vmatprep.subr.bf16.mxu0 %v4564
          %5240 = vmatpush1.bf16.msra.mxu0 %v4563
          %5241 = vmatprep.subr.bf16.mxu0 %v4572
          %5242 = vmatpush1.bf16.msra.mxu0 %v4571
          %5243 = vmatprep.subr.bf16.mxu0 %v4580
          %5244 = vmatpush1.bf16.msra.mxu0 %v4579
          %5245 = vmatprep.subr.bf16.mxu0 %v4588
          %5246 = vmatpush1.bf16.msra.mxu0 %v4587
          %5247 = vmatprep.subr.bf16.mxu0 %v4596
          %5248 = vmatpush1.bf16.msra.mxu0 %v4595
          %5249 = vmatprep.subr.bf16.mxu0 %v4604
          %5250 = vmatpush1.bf16.msra.mxu0 %v4603
          %5251 = vmatprep.subr.bf16.mxu0 %v4612
          %5252 = vmatpush1.bf16.msra.mxu0 %v4611
          %5253 = vmatprep.subr.bf16.mxu0 %v4620
          %5254 = vmatpush1.bf16.msra.mxu0 %v4619
          %5255 = vmatprep.subr.bf16.mxu0 %v4628
          %5256 = vmatpush1.bf16.msra.mxu0 %v4627
          %5257 = vmatprep.subr.bf16.mxu0 %v4636
          %5258 = vmatpush1.bf16.msra.mxu0 %v4635
          %5259 = vmatprep.subr.bf16.mxu0 %v4644
          %5260 = vmatpush1.bf16.msra.mxu0 %v4643
          %5261 = vmatprep.subr.bf16.mxu0 %v4652
          %5262 = vmatpush1.bf16.msra.mxu0 %v4651
          %5263 = vmatprep.subr.bf16.mxu0 %v4660
          %5264 = vmatpush1.bf16.msra.mxu0 %v4659
          %5265 = vmatprep.subr.bf16.mxu0 %v4668
          %5266 = vmatpush1.bf16.msra.mxu0 %v4667
          %5267 = vmatprep.subr.bf16.mxu0 %v4676
          %5268 = vmatpush1.bf16.msra.mxu0 %v4675
          %5269 = vmatprep.mubr.bf16.mxu0 %v5066
          %5270 = vmatmul.mubr.bf16.gmra.mrb[0].mxu0 %v5065
          %v5271 = vpop.f32.mrb[0].mxu0
          %v5272 = vadd.f32 0.0, %v5271
          %v5273 = vpop.f32.mrb[0].mxu0
          %v5274 = vadd.f32 0.0, %v5273
          %v5275 = vpop.f32.mrb[0].mxu0
          %v5276 = vpop.f32.mrb[0].mxu0
          %5277 = vdwg.mxu0
          %5278 = vmatprep.subr.bf16.mxu0 %v4684
          %5279 = vmatpush1.bf16.msra.mxu0 %v4683
          %5280 = vmatprep.subr.bf16.mxu0 %v4692
          %5281 = vmatpush1.bf16.msra.mxu0 %v4691
          %5282 = vmatprep.subr.bf16.mxu0 %v4700
          %5283 = vmatpush1.bf16.msra.mxu0 %v4699
          %5284 = vmatprep.subr.bf16.mxu0 %v4708
          %5285 = vmatpush1.bf16.msra.mxu0 %v4707
          %5286 = vmatprep.subr.bf16.mxu0 %v4716
          %5287 = vmatpush1.bf16.msra.mxu0 %v4715
          %5288 = vmatprep.subr.bf16.mxu0 %v4724
          %5289 = vmatpush1.bf16.msra.mxu0 %v4723
          %5290 = vmatprep.subr.bf16.mxu0 %v4732
          %5291 = vmatpush1.bf16.msra.mxu0 %v4731
          %5292 = vmatprep.subr.bf16.mxu0 %v4740
          %5293 = vmatpush1.bf16.msra.mxu0 %v4739
          %5294 = vmatprep.subr.bf16.mxu0 %v4748
          %5295 = vmatpush1.bf16.msra.mxu0 %v4747
          %5296 = vmatprep.subr.bf16.mxu0 %v4756
          %5297 = vmatpush1.bf16.msra.mxu0 %v4755
          %5298 = vmatprep.subr.bf16.mxu0 %v4764
          %5299 = vmatpush1.bf16.msra.mxu0 %v4763
          %5300 = vmatprep.subr.bf16.mxu0 %v4772
          %5301 = vmatpush1.bf16.msra.mxu0 %v4771
          %5302 = vmatprep.subr.bf16.mxu0 %v4780
          %5303 = vmatpush1.bf16.msra.mxu0 %v4779
          %5304 = vmatprep.subr.bf16.mxu0 %v4788
          %5305 = vmatpush1.bf16.msra.mxu0 %v4787
          %5306 = vmatprep.subr.bf16.mxu0 %v4796
          %5307 = vmatpush1.bf16.msra.mxu0 %v4795
          %5308 = vmatprep.subr.bf16.mxu0 %v4804
          %5309 = vmatpush1.bf16.msra.mxu0 %v4803
          %5310 = vmatprep.mubr.bf16.mxu0 %v5068
          %5311 = vmatmul.mubr.bf16.gmra.mrb[0].mxu0 %v5067
          %v5312 = vpop.f32.mrb[0].mxu0
          %v5313 = vadd.f32 %v5272, %v5312
          %v5314 = vpop.f32.mrb[0].mxu0
          %v5315 = vadd.f32 %v5274, %v5314
          %v5316 = vpop.f32.mrb[0].mxu0
          %v5317 = vpop.f32.mrb[0].mxu0
          %5318 = vdwg.mxu0
          %5319 = vmatprep.subr.bf16.mxu0 %v4812
          %5320 = vmatpush1.bf16.msra.mxu0 %v4811
          %5321 = vmatprep.subr.bf16.mxu0 %v4820
          %5322 = vmatpush1.bf16.msra.mxu0 %v4819
          %5323 = vmatprep.subr.bf16.mxu0 %v4828
          %5324 = vmatpush1.bf16.msra.mxu0 %v4827
          %5325 = vmatprep.subr.bf16.mxu0 %v4836
          %5326 = vmatpush1.bf16.msra.mxu0 %v4835
          %5327 = vmatprep.subr.bf16.mxu0 %v4844
          %5328 = vmatpush1.bf16.msra.mxu0 %v4843
          %5329 = vmatprep.subr.bf16.mxu0 %v4852
          %5330 = vmatpush1.bf16.msra.mxu0 %v4851
          %5331 = vmatprep.subr.bf16.mxu0 %v4860
          %5332 = vmatpush1.bf16.msra.mxu0 %v4859
          %5333 = vmatprep.subr.bf16.mxu0 %v4868
          %5334 = vmatpush1.bf16.msra.mxu0 %v4867
          %5335 = vmatprep.subr.bf16.mxu0 %v4876
          %5336 = vmatpush1.bf16.msra.mxu0 %v4875
          %5337 = vmatprep.subr.bf16.mxu0 %v4884
          %5338 = vmatpush1.bf16.msra.mxu0 %v4883
          %5339 = vmatprep.subr.bf16.mxu0 %v4892
          %5340 = vmatpush1.bf16.msra.mxu0 %v4891
          %5341 = vmatprep.subr.bf16.mxu0 %v4900
          %5342 = vmatpush1.bf16.msra.mxu0 %v4899
          %5343 = vmatprep.subr.bf16.mxu0 %v4908
          %5344 = vmatpush1.bf16.msra.mxu0 %v4907
          %5345 = vmatprep.subr.bf16.mxu0 %v4916
          %5346 = vmatpush1.bf16.msra.mxu0 %v4915
          %5347 = vmatprep.subr.bf16.mxu0 %v4924
          %5348 = vmatpush1.bf16.msra.mxu0 %v4923
          %5349 = vmatprep.subr.bf16.mxu0 %v4932
          %5350 = vmatpush1.bf16.msra.mxu0 %v4931
          %5351 = vmatprep.mubr.bf16.mxu0 %v5070
          %5352 = vmatmul.mubr.bf16.gmra.mrb[0].mxu0 %v5069
          %v5353 = vpop.f32.mrb[0].mxu0
          %v5354 = vadd.f32 %v5313, %v5353
          %v5355 = vpop.f32.mrb[0].mxu0
          %v5356 = vadd.f32 %v5315, %v5355
          %v5357 = vpop.f32.mrb[0].mxu0
          %v5358 = vpop.f32.mrb[0].mxu0
          %5359 = vdwg.mxu0
          %5360 = vmatprep.subr.bf16.mxu0 %v4940
          %5361 = vmatpush1.bf16.msra.mxu0 %v4939
          %5362 = vmatprep.subr.bf16.mxu0 %v4948
          %5363 = vmatpush1.bf16.msra.mxu0 %v4947
          %5364 = vmatprep.subr.bf16.mxu0 %v4956
          %5365 = vmatpush1.bf16.msra.mxu0 %v4955
          %5366 = vmatprep.subr.bf16.mxu0 %v4964
          %5367 = vmatpush1.bf16.msra.mxu0 %v4963
          %5368 = vmatprep.subr.bf16.mxu0 %v4972
          %5369 = vmatpush1.bf16.msra.mxu0 %v4971
          %5370 = vmatprep.subr.bf16.mxu0 %v4980
          %5371 = vmatpush1.bf16.msra.mxu0 %v4979
          %5372 = vmatprep.subr.bf16.mxu0 %v4988
          %5373 = vmatpush1.bf16.msra.mxu0 %v4987
          %5374 = vmatprep.subr.bf16.mxu0 %v4996
          %5375 = vmatpush1.bf16.msra.mxu0 %v4995
          %5376 = vmatprep.subr.bf16.mxu0 %v5004
          %5377 = vmatpush1.bf16.msra.mxu0 %v5003
          %5378 = vmatprep.subr.bf16.mxu0 %v5012
          %5379 = vmatpush1.bf16.msra.mxu0 %v5011
          %5380 = vmatprep.subr.bf16.mxu0 %v5020
          %5381 = vmatpush1.bf16.msra.mxu0 %v5019
          %5382 = vmatprep.subr.bf16.mxu0 %v5028
          %5383 = vmatpush1.bf16.msra.mxu0 %v5027
          %5384 = vmatprep.subr.bf16.mxu0 %v5036
          %5385 = vmatpush1.bf16.msra.mxu0 %v5035
          %5386 = vmatprep.subr.bf16.mxu0 %v5044
          %5387 = vmatpush1.bf16.msra.mxu0 %v5043
          %5388 = vmatprep.subr.bf16.mxu0 %v5052
          %5389 = vmatpush1.bf16.msra.mxu0 %v5051
          %5390 = vmatprep.subr.bf16.mxu0 %v5060
          %5391 = vmatpush1.bf16.msra.mxu0 %v5059
          %5392 = vmatprep.mubr.bf16.mxu0 %v5072
          %5393 = vmatmul.mubr.bf16.gmra.mrb[0].mxu0 %v5071
          %v5394 = vpop.f32.mrb[0].mxu0
          %v5395 = vadd.f32 %v5354, %v5394
          %v5396 = vpop.f32.mrb[0].mxu0
          %v5397 = vadd.f32 %v5356, %v5396
          %v5398 = vpop.f32.mrb[0].mxu0
          %v5399 = vpop.f32.mrb[0].mxu0
          %5400 = vdwg.mxu0
          %5401 = vmatprep.subr.bf16.mxu0 %v4558
          %5402 = vmatpush1.bf16.msra.mxu0 %v4557
          %5403 = vmatprep.subr.bf16.mxu0 %v4566
          %5404 = vmatpush1.bf16.msra.mxu0 %v4565
          %5405 = vmatprep.subr.bf16.mxu0 %v4574
          %5406 = vmatpush1.bf16.msra.mxu0 %v4573
          %5407 = vmatprep.subr.bf16.mxu0 %v4582
          %5408 = vmatpush1.bf16.msra.mxu0 %v4581
          %5409 = vmatprep.subr.bf16.mxu0 %v4590
          %5410 = vmatpush1.bf16.msra.mxu0 %v4589
          %5411 = vmatprep.subr.bf16.mxu0 %v4598
          %5412 = vmatpush1.bf16.msra.mxu0 %v4597
          %5413 = vmatprep.subr.bf16.mxu0 %v4606
          %5414 = vmatpush1.bf16.msra.mxu0 %v4605
          %5415 = vmatprep.subr.bf16.mxu0 %v4614
          %5416 = vmatpush1.bf16.msra.mxu0 %v4613
          %5417 = vmatprep.subr.bf16.mxu0 %v4622
          %5418 = vmatpush1.bf16.msra.mxu0 %v4621
          %5419 = vmatprep.subr.bf16.mxu0 %v4630
          %5420 = vmatpush1.bf16.msra.mxu0 %v4629
          %5421 = vmatprep.subr.bf16.mxu0 %v4638
          %5422 = vmatpush1.bf16.msra.mxu0 %v4637
          %5423 = vmatprep.subr.bf16.mxu0 %v4646
          %5424 = vmatpush1.bf16.msra.mxu0 %v4645
          %5425 = vmatprep.subr.bf16.mxu0 %v4654
          %5426 = vmatpush1.bf16.msra.mxu0 %v4653
          %5427 = vmatprep.subr.bf16.mxu0 %v4662
          %5428 = vmatpush1.bf16.msra.mxu0 %v4661
          %5429 = vmatprep.subr.bf16.mxu0 %v4670
          %5430 = vmatpush1.bf16.msra.mxu0 %v4669
          %5431 = vmatprep.subr.bf16.mxu0 %v4678
          %5432 = vmatpush1.bf16.msra.mxu0 %v4677
          %5433 = vmatprep.mubr.bf16.mxu0 %v5066
          %5434 = vmatmul.mubr.bf16.gmra.mrb[0].mxu0 %v5065
          %v5435 = vpop.f32.mrb[0].mxu0
          %v5436 = vadd.f32 0.0, %v5435
          %v5437 = vpop.f32.mrb[0].mxu0
          %v5438 = vadd.f32 0.0, %v5437
          %v5439 = vpop.f32.mrb[0].mxu0
          %v5440 = vpop.f32.mrb[0].mxu0
          %5441 = vdwg.mxu0
          %5442 = vmatprep.subr.bf16.mxu0 %v4686
          %5443 = vmatpush1.bf16.msra.mxu0 %v4685
          %5444 = vmatprep.subr.bf16.mxu0 %v4694
          %5445 = vmatpush1.bf16.msra.mxu0 %v4693
          %5446 = vmatprep.subr.bf16.mxu0 %v4702
          %5447 = vmatpush1.bf16.msra.mxu0 %v4701
          %5448 = vmatprep.subr.bf16.mxu0 %v4710
          %5449 = vmatpush1.bf16.msra.mxu0 %v4709
          %5450 = vmatprep.subr.bf16.mxu0 %v4718
          %5451 = vmatpush1.bf16.msra.mxu0 %v4717
          %5452 = vmatprep.subr.bf16.mxu0 %v4726
          %5453 = vmatpush1.bf16.msra.mxu0 %v4725
          %5454 = vmatprep.subr.bf16.mxu0 %v4734
          %5455 = vmatpush1.bf16.msra.mxu0 %v4733
          %5456 = vmatprep.subr.bf16.mxu0 %v4742
          %5457 = vmatpush1.bf16.msra.mxu0 %v4741
          %5458 = vmatprep.subr.bf16.mxu0 %v4750
          %5459 = vmatpush1.bf16.msra.mxu0 %v4749
          %5460 = vmatprep.subr.bf16.mxu0 %v4758
          %5461 = vmatpush1.bf16.msra.mxu0 %v4757
          %5462 = vmatprep.subr.bf16.mxu0 %v4766
          %5463 = vmatpush1.bf16.msra.mxu0 %v4765
          %5464 = vmatprep.subr.bf16.mxu0 %v4774
          %5465 = vmatpush1.bf16.msra.mxu0 %v4773
          %5466 = vmatprep.subr.bf16.mxu0 %v4782
          %5467 = vmatpush1.bf16.msra.mxu0 %v4781
          %5468 = vmatprep.subr.bf16.mxu0 %v4790
          %5469 = vmatpush1.bf16.msra.mxu0 %v4789
          %5470 = vmatprep.subr.bf16.mxu0 %v4798
          %5471 = vmatpush1.bf16.msra.mxu0 %v4797
          %5472 = vmatprep.subr.bf16.mxu0 %v4806
          %5473 = vmatpush1.bf16.msra.mxu0 %v4805
          %5474 = vmatprep.mubr.bf16.mxu0 %v5068
          %5475 = vmatmul.mubr.bf16.gmra.mrb[0].mxu0 %v5067
          %v5476 = vpop.f32.mrb[0].mxu0
          %v5477 = vadd.f32 %v5436, %v5476
          %v5478 = vpop.f32.mrb[0].mxu0
          %v5479 = vadd.f32 %v5438, %v5478
          %v5480 = vpop.f32.mrb[0].mxu0
          %v5481 = vpop.f32.mrb[0].mxu0
          %5482 = vdwg.mxu0
          %5483 = vmatprep.subr.bf16.mxu0 %v4814
          %5484 = vmatpush1.bf16.msra.mxu0 %v4813
          %5485 = vmatprep.subr.bf16.mxu0 %v4822
          %5486 = vmatpush1.bf16.msra.mxu0 %v4821
          %5487 = vmatprep.subr.bf16.mxu0 %v4830
          %5488 = vmatpush1.bf16.msra.mxu0 %v4829
          %5489 = vmatprep.subr.bf16.mxu0 %v4838
          %5490 = vmatpush1.bf16.msra.mxu0 %v4837
          %5491 = vmatprep.subr.bf16.mxu0 %v4846
          %5492 = vmatpush1.bf16.msra.mxu0 %v4845
          %5493 = vmatprep.subr.bf16.mxu0 %v4854
          %5494 = vmatpush1.bf16.msra.mxu0 %v4853
          %5495 = vmatprep.subr.bf16.mxu0 %v4862
          %5496 = vmatpush1.bf16.msra.mxu0 %v4861
          %5497 = vmatprep.subr.bf16.mxu0 %v4870
          %5498 = vmatpush1.bf16.msra.mxu0 %v4869
          %5499 = vmatprep.subr.bf16.mxu0 %v4878
          %5500 = vmatpush1.bf16.msra.mxu0 %v4877
          %5501 = vmatprep.subr.bf16.mxu0 %v4886
          %5502 = vmatpush1.bf16.msra.mxu0 %v4885
          %5503 = vmatprep.subr.bf16.mxu0 %v4894
          %5504 = vmatpush1.bf16.msra.mxu0 %v4893
          %5505 = vmatprep.subr.bf16.mxu0 %v4902
          %5506 = vmatpush1.bf16.msra.mxu0 %v4901
          %5507 = vmatprep.subr.bf16.mxu0 %v4910
          %5508 = vmatpush1.bf16.msra.mxu0 %v4909
          %5509 = vmatprep.subr.bf16.mxu0 %v4918
          %5510 = vmatpush1.bf16.msra.mxu0 %v4917
          %5511 = vmatprep.subr.bf16.mxu0 %v4926
          %5512 = vmatpush1.bf16.msra.mxu0 %v4925
          %5513 = vmatprep.subr.bf16.mxu0 %v4934
          %5514 = vmatpush1.bf16.msra.mxu0 %v4933
          %5515 = vmatprep.mubr.bf16.mxu0 %v5070
          %5516 = vmatmul.mubr.bf16.gmra.mrb[0].mxu0 %v5069
          %v5517 = vpop.f32.mrb[0].mxu0
          %v5518 = vadd.f32 %v5477, %v5517
          %v5519 = vpop.f32.mrb[0].mxu0
          %v5520 = vadd.f32 %v5479, %v5519
          %v5521 = vpop.f32.mrb[0].mxu0
          %v5522 = vpop.f32.mrb[0].mxu0
          %5523 = vdwg.mxu0
          %5524 = vmatprep.subr.bf16.mxu0 %v4942
          %5525 = vmatpush1.bf16.msra.mxu0 %v4941
          %5526 = vmatprep.subr.bf16.mxu0 %v4950
          %5527 = vmatpush1.bf16.msra.mxu0 %v4949
          %5528 = vmatprep.subr.bf16.mxu0 %v4958
          %5529 = vmatpush1.bf16.msra.mxu0 %v4957
          %5530 = vmatprep.subr.bf16.mxu0 %v4966
          %5531 = vmatpush1.bf16.msra.mxu0 %v4965
          %5532 = vmatprep.subr.bf16.mxu0 %v4974
          %5533 = vmatpush1.bf16.msra.mxu0 %v4973
          %5534 = vmatprep.subr.bf16.mxu0 %v4982
          %5535 = vmatpush1.bf16.msra.mxu0 %v4981
          %5536 = vmatprep.subr.bf16.mxu0 %v4990
          %5537 = vmatpush1.bf16.msra.mxu0 %v4989
          %5538 = vmatprep.subr.bf16.mxu0 %v4998
          %5539 = vmatpush1.bf16.msra.mxu0 %v4997
          %5540 = vmatprep.subr.bf16.mxu0 %v5006
          %5541 = vmatpush1.bf16.msra.mxu0 %v5005
          %5542 = vmatprep.subr.bf16.mxu0 %v5014
          %5543 = vmatpush1.bf16.msra.mxu0 %v5013
          %5544 = vmatprep.subr.bf16.mxu0 %v5022
          %5545 = vmatpush1.bf16.msra.mxu0 %v5021
          %5546 = vmatprep.subr.bf16.mxu0 %v5030
          %5547 = vmatpush1.bf16.msra.mxu0 %v5029
          %5548 = vmatprep.subr.bf16.mxu0 %v5038
          %5549 = vmatpush1.bf16.msra.mxu0 %v5037
          %5550 = vmatprep.subr.bf16.mxu0 %v5046
          %5551 = vmatpush1.bf16.msra.mxu0 %v5045
          %5552 = vmatprep.subr.bf16.mxu0 %v5054
          %5553 = vmatpush1.bf16.msra.mxu0 %v5053
          %5554 = vmatprep.subr.bf16.mxu0 %v5062
          %5555 = vmatpush1.bf16.msra.mxu0 %v5061
          %5556 = vmatprep.mubr.bf16.mxu0 %v5072
          %5557 = vmatmul.mubr.bf16.gmra.mrb[0].mxu0 %v5071
          %v5558 = vpop.f32.mrb[0].mxu0
          %v5559 = vadd.f32 %v5518, %v5558
          %v5560 = vpop.f32.mrb[0].mxu0
          %v5561 = vadd.f32 %v5520, %v5560
          %v5562 = vpop.f32.mrb[0].mxu0
          %v5563 = vpop.f32.mrb[0].mxu0
          %5564 = vdwg.mxu0
          %5565 = vmatprep.subr.bf16.mxu0 %v4560
          %5566 = vmatpush1.bf16.msra.mxu0 %v4559
          %5567 = vmatprep.subr.bf16.mxu0 %v4568
          %5568 = vmatpush1.bf16.msra.mxu0 %v4567
          %5569 = vmatprep.subr.bf16.mxu0 %v4576
          %5570 = vmatpush1.bf16.msra.mxu0 %v4575
          %5571 = vmatprep.subr.bf16.mxu0 %v4584
          %5572 = vmatpush1.bf16.msra.mxu0 %v4583
          %5573 = vmatprep.subr.bf16.mxu0 %v4592
          %5574 = vmatpush1.bf16.msra.mxu0 %v4591
          %5575 = vmatprep.subr.bf16.mxu0 %v4600
          %5576 = vmatpush1.bf16.msra.mxu0 %v4599
          %5577 = vmatprep.subr.bf16.mxu0 %v4608
          %5578 = vmatpush1.bf16.msra.mxu0 %v4607
          %5579 = vmatprep.subr.bf16.mxu0 %v4616
          %5580 = vmatpush1.bf16.msra.mxu0 %v4615
          %5581 = vmatprep.subr.bf16.mxu0 %v4624
          %5582 = vmatpush1.bf16.msra.mxu0 %v4623
          %5583 = vmatprep.subr.bf16.mxu0 %v4632
          %5584 = vmatpush1.bf16.msra.mxu0 %v4631
          %5585 = vmatprep.subr.bf16.mxu0 %v4640
          %5586 = vmatpush1.bf16.msra.mxu0 %v4639
          %5587 = vmatprep.subr.bf16.mxu0 %v4648
          %5588 = vmatpush1.bf16.msra.mxu0 %v4647
          %5589 = vmatprep.subr.bf16.mxu0 %v4656
          %5590 = vmatpush1.bf16.msra.mxu0 %v4655
          %5591 = vmatprep.subr.bf16.mxu0 %v4664
          %5592 = vmatpush1.bf16.msra.mxu0 %v4663
          %5593 = vmatprep.subr.bf16.mxu0 %v4672
          %5594 = vmatpush1.bf16.msra.mxu0 %v4671
          %5595 = vmatprep.subr.bf16.mxu0 %v4680
          %5596 = vmatpush1.bf16.msra.mxu0 %v4679
          %5597 = vmatprep.mubr.bf16.mxu0 %v5066
          %5598 = vmatmul.mubr.bf16.gmra.mrb[0].mxu0 %v5065
          %v5599 = vpop.f32.mrb[0].mxu0
          %v5600 = vadd.f32 0.0, %v5599
          %v5601 = vpop.f32.mrb[0].mxu0
          %v5602 = vadd.f32 0.0, %v5601
          %v5603 = vpop.f32.mrb[0].mxu0
          %v5604 = vpop.f32.mrb[0].mxu0
          %5605 = vdwg.mxu0
          %5606 = vmatprep.subr.bf16.mxu0 %v4688
          %5607 = vmatpush1.bf16.msra.mxu0 %v4687
          %5608 = vmatprep.subr.bf16.mxu0 %v4696
          %5609 = vmatpush1.bf16.msra.mxu0 %v4695
          %5610 = vmatprep.subr.bf16.mxu0 %v4704
          %5611 = vmatpush1.bf16.msra.mxu0 %v4703
          %5612 = vmatprep.subr.bf16.mxu0 %v4712
          %5613 = vmatpush1.bf16.msra.mxu0 %v4711
          %5614 = vmatprep.subr.bf16.mxu0 %v4720
          %5615 = vmatpush1.bf16.msra.mxu0 %v4719
          %5616 = vmatprep.subr.bf16.mxu0 %v4728
          %5617 = vmatpush1.bf16.msra.mxu0 %v4727
          %5618 = vmatprep.subr.bf16.mxu0 %v4736
          %5619 = vmatpush1.bf16.msra.mxu0 %v4735
          %5620 = vmatprep.subr.bf16.mxu0 %v4744
          %5621 = vmatpush1.bf16.msra.mxu0 %v4743
          %5622 = vmatprep.subr.bf16.mxu0 %v4752
          %5623 = vmatpush1.bf16.msra.mxu0 %v4751
          %5624 = vmatprep.subr.bf16.mxu0 %v4760
          %5625 = vmatpush1.bf16.msra.mxu0 %v4759
          %5626 = vmatprep.subr.bf16.mxu0 %v4768
          %5627 = vmatpush1.bf16.msra.mxu0 %v4767
          %5628 = vmatprep.subr.bf16.mxu0 %v4776
          %5629 = vmatpush1.bf16.msra.mxu0 %v4775
          %5630 = vmatprep.subr.bf16.mxu0 %v4784
          %5631 = vmatpush1.bf16.msra.mxu0 %v4783
          %5632 = vmatprep.subr.bf16.mxu0 %v4792
          %5633 = vmatpush1.bf16.msra.mxu0 %v4791
          %5634 = vmatprep.subr.bf16.mxu0 %v4800
          %5635 = vmatpush1.bf16.msra.mxu0 %v4799
          %5636 = vmatprep.subr.bf16.mxu0 %v4808
          %5637 = vmatpush1.bf16.msra.mxu0 %v4807
          %5638 = vmatprep.mubr.bf16.mxu0 %v5068
          %5639 = vmatmul.mubr.bf16.gmra.mrb[0].mxu0 %v5067
          %v5640 = vpop.f32.mrb[0].mxu0
          %v5641 = vadd.f32 %v5600, %v5640
          %v5642 = vpop.f32.mrb[0].mxu0
          %v5643 = vadd.f32 %v5602, %v5642
          %v5644 = vpop.f32.mrb[0].mxu0
          %v5645 = vpop.f32.mrb[0].mxu0
          %5646 = vdwg.mxu0
          %5647 = vmatprep.subr.bf16.mxu0 %v4816
          %5648 = vmatpush1.bf16.msra.mxu0 %v4815
          %5649 = vmatprep.subr.bf16.mxu0 %v4824
          %5650 = vmatpush1.bf16.msra.mxu0 %v4823
          %5651 = vmatprep.subr.bf16.mxu0 %v4832
          %5652 = vmatpush1.bf16.msra.mxu0 %v4831
          %5653 = vmatprep.subr.bf16.mxu0 %v4840
          %5654 = vmatpush1.bf16.msra.mxu0 %v4839
          %5655 = vmatprep.subr.bf16.mxu0 %v4848
          %5656 = vmatpush1.bf16.msra.mxu0 %v4847
          %5657 = vmatprep.subr.bf16.mxu0 %v4856
          %5658 = vmatpush1.bf16.msra.mxu0 %v4855
          %5659 = vmatprep.subr.bf16.mxu0 %v4864
          %5660 = vmatpush1.bf16.msra.mxu0 %v4863
          %5661 = vmatprep.subr.bf16.mxu0 %v4872
          %5662 = vmatpush1.bf16.msra.mxu0 %v4871
          %5663 = vmatprep.subr.bf16.mxu0 %v4880
          %5664 = vmatpush1.bf16.msra.mxu0 %v4879
          %5665 = vmatprep.subr.bf16.mxu0 %v4888
          %5666 = vmatpush1.bf16.msra.mxu0 %v4887
          %5667 = vmatprep.subr.bf16.mxu0 %v4896
          %5668 = vmatpush1.bf16.msra.mxu0 %v4895
          %5669 = vmatprep.subr.bf16.mxu0 %v4904
          %5670 = vmatpush1.bf16.msra.mxu0 %v4903
          %5671 = vmatprep.subr.bf16.mxu0 %v4912
          %5672 = vmatpush1.bf16.msra.mxu0 %v4911
          %5673 = vmatprep.subr.bf16.mxu0 %v4920
          %5674 = vmatpush1.bf16.msra.mxu0 %v4919
          %5675 = vmatprep.subr.bf16.mxu0 %v4928
          %5676 = vmatpush1.bf16.msra.mxu0 %v4927
          %5677 = vmatprep.subr.bf16.mxu0 %v4936
          %5678 = vmatpush1.bf16.msra.mxu0 %v4935
          %5679 = vmatprep.mubr.bf16.mxu0 %v5070
          %5680 = vmatmul.mubr.bf16.gmra.mrb[0].mxu0 %v5069
          %v5681 = vpop.f32.mrb[0].mxu0
          %v5682 = vadd.f32 %v5641, %v5681
          %v5683 = vpop.f32.mrb[0].mxu0
          %v5684 = vadd.f32 %v5643, %v5683
          %v5685 = vpop.f32.mrb[0].mxu0
          %v5686 = vpop.f32.mrb[0].mxu0
          %5687 = vdwg.mxu0
          %5688 = vmatprep.subr.bf16.mxu0 %v4944
          %5689 = vmatpush1.bf16.msra.mxu0 %v4943
          %5690 = vmatprep.subr.bf16.mxu0 %v4952
          %5691 = vmatpush1.bf16.msra.mxu0 %v4951
          %5692 = vmatprep.subr.bf16.mxu0 %v4960
          %5693 = vmatpush1.bf16.msra.mxu0 %v4959
          %5694 = vmatprep.subr.bf16.mxu0 %v4968
          %5695 = vmatpush1.bf16.msra.mxu0 %v4967
          %5696 = vmatprep.subr.bf16.mxu0 %v4976
          %5697 = vmatpush1.bf16.msra.mxu0 %v4975
          %5698 = vmatprep.subr.bf16.mxu0 %v4984
          %5699 = vmatpush1.bf16.msra.mxu0 %v4983
          %5700 = vmatprep.subr.bf16.mxu0 %v4992
          %5701 = vmatpush1.bf16.msra.mxu0 %v4991
          %5702 = vmatprep.subr.bf16.mxu0 %v5000
          %5703 = vmatpush1.bf16.msra.mxu0 %v4999
          %5704 = vmatprep.subr.bf16.mxu0 %v5008
          %5705 = vmatpush1.bf16.msra.mxu0 %v5007
          %5706 = vmatprep.subr.bf16.mxu0 %v5016
          %5707 = vmatpush1.bf16.msra.mxu0 %v5015
          %5708 = vmatprep.subr.bf16.mxu0 %v5024
          %5709 = vmatpush1.bf16.msra.mxu0 %v5023
          %5710 = vmatprep.subr.bf16.mxu0 %v5032
          %5711 = vmatpush1.bf16.msra.mxu0 %v5031
          %5712 = vmatprep.subr.bf16.mxu0 %v5040
          %5713 = vmatpush1.bf16.msra.mxu0 %v5039
          %5714 = vmatprep.subr.bf16.mxu0 %v5048
          %5715 = vmatpush1.bf16.msra.mxu0 %v5047
          %5716 = vmatprep.subr.bf16.mxu0 %v5056
          %5717 = vmatpush1.bf16.msra.mxu0 %v5055
          %5718 = vmatprep.subr.bf16.mxu0 %v5064
          %5719 = vmatpush1.bf16.msra.mxu0 %v5063
          %5720 = vmatprep.mubr.bf16.mxu0 %v5072
          %5721 = vmatmul.mubr.bf16.gmra.mrb[0].mxu0 %v5071
          %v5722 = vpop.f32.mrb[0].mxu0
          %v5723 = vadd.f32 %v5682, %v5722
          %v5724 = vpop.f32.mrb[0].mxu0
          %v5725 = vadd.f32 %v5684, %v5724
          %v5726 = vpop.f32.mrb[0].mxu0
          %v5727 = vpop.f32.mrb[0].mxu0
          %5728 = vdwg.mxu0
          %s5729 = sadd.s32 %s2502, 1
          %s5730 = smul.u32 %s5729, 8
          %s5731 = scalar_lea.vmem [#allocation13], %s5730
          %v5732 = vld [vmem:[%s5731] sm:$0xff]
          %v5734 = vlaneseq
          %v5735 = vshrl.u32 %v5734, 7
          %v5736 = vsub.s32 0, %v5735
          %v5737 = vrot.slane %v5732, %v5736
          %v5738 = vlaneseq
          %v5739 = vshrl.u32 %v5738, 7
          %v5740 = vsub.s32 1, %v5739
          %v5741 = vrot.slane %v5732, %v5740
          %v5742 = vlaneseq
          %v5743 = vshrl.u32 %v5742, 7
          %v5744 = vsub.s32 2, %v5743
          %v5745 = vrot.slane %v5732, %v5744
          %v5746 = vlaneseq
          %v5747 = vshrl.u32 %v5746, 7
          %v5748 = vsub.s32 3, %v5747
          %v5749 = vrot.slane %v5732, %v5748
          %v5750 = vlaneseq
          %v5751 = vshrl.u32 %v5750, 7
          %v5752 = vsub.s32 4, %v5751
          %v5753 = vrot.slane %v5732, %v5752
          %v5754 = vlaneseq
          %v5755 = vshrl.u32 %v5754, 7
          %v5756 = vsub.s32 5, %v5755
          %v5757 = vrot.slane %v5732, %v5756
          %v5758 = vlaneseq
          %v5759 = vshrl.u32 %v5758, 7
          %v5760 = vsub.s32 6, %v5759
          %v5761 = vrot.slane %v5732, %v5760
          %v5762 = vlaneseq
          %v5763 = vshrl.u32 %v5762, 7
          %v5764 = vsub.s32 7, %v5763
          %v5765 = vrot.slane %v5732, %v5764
          %v5774 = vmul.f32 %v5231, %v5737
          %v5775 = vmul.f32 %v5233, %v5741
          %v5776 = vmul.f32 %v5395, %v5745
          %v5777 = vmul.f32 %v5397, %v5749
          %v5778 = vmul.f32 %v5559, %v5753
          %v5779 = vmul.f32 %v5561, %v5757
          %v5780 = vmul.f32 %v5723, %v5761
          %v5781 = vmul.f32 %v5725, %v5765
          %s5782 = scalar_lea.vmem [#allocation15], %s5730
          %v5783 = vld [vmem:[%s5782] sm:$0xff]
          %v5785 = vlaneseq
          %v5786 = vshrl.u32 %v5785, 7
          %v5787 = vsub.s32 0, %v5786
          %v5788 = vrot.slane %v5783, %v5787
          %v5789 = vlaneseq
          %v5790 = vshrl.u32 %v5789, 7
          %v5791 = vsub.s32 1, %v5790
          %v5792 = vrot.slane %v5783, %v5791
          %v5793 = vlaneseq
          %v5794 = vshrl.u32 %v5793, 7
          %v5795 = vsub.s32 2, %v5794
          %v5796 = vrot.slane %v5783, %v5795
          %v5797 = vlaneseq
          %v5798 = vshrl.u32 %v5797, 7
          %v5799 = vsub.s32 3, %v5798
          %v5800 = vrot.slane %v5783, %v5799
          %v5801 = vlaneseq
          %v5802 = vshrl.u32 %v5801, 7
          %v5803 = vsub.s32 4, %v5802
          %v5804 = vrot.slane %v5783, %v5803
          %v5805 = vlaneseq
          %v5806 = vshrl.u32 %v5805, 7
          %v5807 = vsub.s32 5, %v5806
          %v5808 = vrot.slane %v5783, %v5807
          %v5809 = vlaneseq
          %v5810 = vshrl.u32 %v5809, 7
          %v5811 = vsub.s32 6, %v5810
          %v5812 = vrot.slane %v5783, %v5811
          %v5813 = vlaneseq
          %v5814 = vshrl.u32 %v5813, 7
          %v5815 = vsub.s32 7, %v5814
          %v5816 = vrot.slane %v5783, %v5815
          %v5825 = vadd.f32 %v5774, %v5788
          %v5826 = vadd.f32 %v5775, %v5792
          %v5827 = vadd.f32 %v5776, %v5796
          %v5828 = vadd.f32 %v5777, %v5800
          %v5829 = vadd.f32 %v5778, %v5804
          %v5830 = vadd.f32 %v5779, %v5808
          %v5831 = vadd.f32 %v5780, %v5812
          %v5832 = vadd.f32 %v5781, %v5816
          %v5833 = vmul.f32 %v5825, 0.5
          %v5834 = vmul.f32 %v5826, 0.5
          %v5835 = vmul.f32 %v5827, 0.5
          %v5836 = vmul.f32 %v5828, 0.5
          %v5837 = vmul.f32 %v5829, 0.5
          %v5838 = vmul.f32 %v5830, 0.5
          %v5839 = vmul.f32 %v5831, 0.5
          %v5840 = vmul.f32 %v5832, 0.5
          %v5841 = vmul.f32 %v5825, 0.70710677
          %v5842 = vmul.f32 %v5826, 0.70710677
          %v5843 = vmul.f32 %v5827, 0.70710677
          %v5844 = vmul.f32 %v5828, 0.70710677
          %v5845 = vmul.f32 %v5829, 0.70710677
          %v5846 = vmul.f32 %v5830, 0.70710677
          %v5847 = vmul.f32 %v5831, 0.70710677
          %v5848 = vmul.f32 %v5832, 0.70710677
          %v5849 = vand.u32 2147483647, %v5841
          %v5850 = vand.u32 2147483647, %v5842
          %v5851 = vand.u32 2147483647, %v5843
          %v5852 = vand.u32 2147483647, %v5844
          %v5853 = vand.u32 2147483647, %v5845
          %v5854 = vand.u32 2147483647, %v5846
          %v5855 = vand.u32 2147483647, %v5847
          %v5856 = vand.u32 2147483647, %v5848
          %v5857 = vmul.f32 %v5849, 0.3275911
          %v5858 = vmul.f32 %v5850, 0.3275911
          %v5859 = vmul.f32 %v5851, 0.3275911
          %v5860 = vmul.f32 %v5852, 0.3275911
          %v5861 = vmul.f32 %v5853, 0.3275911
          %v5862 = vmul.f32 %v5854, 0.3275911
          %v5863 = vmul.f32 %v5855, 0.3275911
          %v5864 = vmul.f32 %v5856, 0.3275911
          %v5865 = vadd.f32 %v5857, 1.0
          %v5866 = vadd.f32 %v5858, 1.0
          %v5867 = vadd.f32 %v5859, 1.0
          %v5868 = vadd.f32 %v5860, 1.0
          %v5869 = vadd.f32 %v5861, 1.0
          %v5870 = vadd.f32 %v5862, 1.0
          %v5871 = vadd.f32 %v5863, 1.0
          %v5872 = vadd.f32 %v5864, 1.0
          %v5873 = vrcp.pop %v5865
          %v5874 = vrcp.pop %v5866
          %v5875 = vrcp.pop %v5867
          %v5876 = vrcp.pop %v5868
          %v5877 = vrcp.pop %v5869
          %v5878 = vrcp.pop %v5870
          %v5879 = vrcp.pop %v5871
          %v5880 = vrcp.pop %v5872
          %v5881 = vmul.f32 %v5873, 1.0614054
          %v5882 = vmul.f32 %v5874, 1.0614054
          %v5883 = vmul.f32 %v5875, 1.0614054
          %v5884 = vmul.f32 %v5876, 1.0614054
          %v5885 = vmul.f32 %v5877, 1.0614054
          %v5886 = vmul.f32 %v5878, 1.0614054
          %v5887 = vmul.f32 %v5879, 1.0614054
          %v5888 = vmul.f32 %v5880, 1.0614054
          %v5889 = vadd.f32 %v5881, -1.4531521
          %v5890 = vadd.f32 %v5882, -1.4531521
          %v5891 = vadd.f32 %v5883, -1.4531521
          %v5892 = vadd.f32 %v5884, -1.4531521
          %v5893 = vadd.f32 %v5885, -1.4531521
          %v5894 = vadd.f32 %v5886, -1.4531521
          %v5895 = vadd.f32 %v5887, -1.4531521
          %v5896 = vadd.f32 %v5888, -1.4531521
          %v5897 = vmul.f32 %v5889, %v5873
          %v5898 = vmul.f32 %v5890, %v5874
          %v5899 = vmul.f32 %v5891, %v5875
          %v5900 = vmul.f32 %v5892, %v5876
          %v5901 = vmul.f32 %v5893, %v5877
          %v5902 = vmul.f32 %v5894, %v5878
          %v5903 = vmul.f32 %v5895, %v5879
          %v5904 = vmul.f32 %v5896, %v5880
          %v5905 = vadd.f32 %v5897, 1.4214138
          %v5906 = vadd.f32 %v5898, 1.4214138
          %v5907 = vadd.f32 %v5899, 1.4214138
          %v5908 = vadd.f32 %v5900, 1.4214138
          %v5909 = vadd.f32 %v5901, 1.4214138
          %v5910 = vadd.f32 %v5902, 1.4214138
          %v5911 = vadd.f32 %v5903, 1.4214138
          %v5912 = vadd.f32 %v5904, 1.4214138
          %v5913 = vmul.f32 %v5905, %v5873
          %v5914 = vmul.f32 %v5906, %v5874
          %v5915 = vmul.f32 %v5907, %v5875
          %v5916 = vmul.f32 %v5908, %v5876
          %v5917 = vmul.f32 %v5909, %v5877
          %v5918 = vmul.f32 %v5910, %v5878
          %v5919 = vmul.f32 %v5911, %v5879
          %v5920 = vmul.f32 %v5912, %v5880
          %v5921 = vadd.f32 %v5913, -0.28449672
          %v5922 = vadd.f32 %v5914, -0.28449672
          %v5923 = vadd.f32 %v5915, -0.28449672
          %v5924 = vadd.f32 %v5916, -0.28449672
          %v5925 = vadd.f32 %v5917, -0.28449672
          %v5926 = vadd.f32 %v5918, -0.28449672
          %v5927 = vadd.f32 %v5919, -0.28449672
          %v5928 = vadd.f32 %v5920, -0.28449672
          %v5929 = vmul.f32 %v5921, %v5873
          %v5930 = vmul.f32 %v5922, %v5874
          %v5931 = vmul.f32 %v5923, %v5875
          %v5932 = vmul.f32 %v5924, %v5876
          %v5933 = vmul.f32 %v5925, %v5877
          %v5934 = vmul.f32 %v5926, %v5878
          %v5935 = vmul.f32 %v5927, %v5879
          %v5936 = vmul.f32 %v5928, %v5880
          %v5937 = vadd.f32 %v5929, 0.2548296
          %v5938 = vadd.f32 %v5930, 0.2548296
          %v5939 = vadd.f32 %v5931, 0.2548296
          %v5940 = vadd.f32 %v5932, 0.2548296
          %v5941 = vadd.f32 %v5933, 0.2548296
          %v5942 = vadd.f32 %v5934, 0.2548296
          %v5943 = vadd.f32 %v5935, 0.2548296
          %v5944 = vadd.f32 %v5936, 0.2548296
          %v5945 = vmul.f32 %v5937, %v5873
          %v5946 = vmul.f32 %v5938, %v5874
          %v5947 = vmul.f32 %v5939, %v5875
          %v5948 = vmul.f32 %v5940, %v5876
          %v5949 = vmul.f32 %v5941, %v5877
          %v5950 = vmul.f32 %v5942, %v5878
          %v5951 = vmul.f32 %v5943, %v5879
          %v5952 = vmul.f32 %v5944, %v5880
          %v5953 = vsub.f32 0.0, %v5849
          %v5954 = vsub.f32 0.0, %v5850
          %v5955 = vsub.f32 0.0, %v5851
          %v5956 = vsub.f32 0.0, %v5852
          %v5957 = vsub.f32 0.0, %v5853
          %v5958 = vsub.f32 0.0, %v5854
          %v5959 = vsub.f32 0.0, %v5855
          %v5960 = vsub.f32 0.0, %v5856
          %v5961 = vmul.f32 %v5953, %v5849
          %v5962 = vmul.f32 %v5954, %v5850
          %v5963 = vmul.f32 %v5955, %v5851
          %v5964 = vmul.f32 %v5956, %v5852
          %v5965 = vmul.f32 %v5957, %v5853
          %v5966 = vmul.f32 %v5958, %v5854
          %v5967 = vmul.f32 %v5959, %v5855
          %v5968 = vmul.f32 %v5960, %v5856
          %v5969 = vmul.f32 %v5961, 1.442695
          %v5970 = vpow.pop %v5969
          %v5971 = vmul.f32 %v5962, 1.442695
          %v5972 = vpow.pop %v5971
          %v5973 = vmul.f32 %v5963, 1.442695
          %v5974 = vpow.pop %v5973
          %v5975 = vmul.f32 %v5964, 1.442695
          %v5976 = vpow.pop %v5975
          %v5977 = vmul.f32 %v5965, 1.442695
          %v5978 = vpow.pop %v5977
          %v5979 = vmul.f32 %v5966, 1.442695
          %v5980 = vpow.pop %v5979
          %v5981 = vmul.f32 %v5967, 1.442695
          %v5982 = vpow.pop %v5981
          %v5983 = vmul.f32 %v5968, 1.442695
          %v5984 = vpow.pop %v5983
          %v5985 = vmul.f32 %v5945, %v5970
          %v5986 = vmul.f32 %v5946, %v5972
          %v5987 = vmul.f32 %v5947, %v5974
          %v5988 = vmul.f32 %v5948, %v5976
          %v5989 = vmul.f32 %v5949, %v5978
          %v5990 = vmul.f32 %v5950, %v5980
          %v5991 = vmul.f32 %v5951, %v5982
          %v5992 = vmul.f32 %v5952, %v5984
          %v5993 = vsub.f32 1.0, %v5985
          %v5994 = vsub.f32 1.0, %v5986
          %v5995 = vsub.f32 1.0, %v5987
          %v5996 = vsub.f32 1.0, %v5988
          %v5997 = vsub.f32 1.0, %v5989
          %v5998 = vsub.f32 1.0, %v5990
          %v5999 = vsub.f32 1.0, %v5991
          %v6000 = vsub.f32 1.0, %v5992
          %vm6001 = vcmp.ge.f32.partialorder %v5841, 0.0
          %vm6002 = vcmp.ge.f32.partialorder %v5842, 0.0
          %vm6003 = vcmp.ge.f32.partialorder %v5843, 0.0
          %vm6004 = vcmp.ge.f32.partialorder %v5844, 0.0
          %vm6005 = vcmp.ge.f32.partialorder %v5845, 0.0
          %vm6006 = vcmp.ge.f32.partialorder %v5846, 0.0
          %vm6007 = vcmp.ge.f32.partialorder %v5847, 0.0
          %vm6008 = vcmp.ge.f32.partialorder %v5848, 0.0
          %v6009 = vsub.f32 0.0, %v5993
          %v6010 = vsub.f32 0.0, %v5994
          %v6011 = vsub.f32 0.0, %v5995
          %v6012 = vsub.f32 0.0, %v5996
          %v6013 = vsub.f32 0.0, %v5997
          %v6014 = vsub.f32 0.0, %v5998
          %v6015 = vsub.f32 0.0, %v5999
          %v6016 = vsub.f32 0.0, %v6000
          %v6017 = vsel %vm6001, %v5993, %v6009
          %v6018 = vsel %vm6002, %v5994, %v6010
          %v6019 = vsel %vm6003, %v5995, %v6011
          %v6020 = vsel %vm6004, %v5996, %v6012
          %v6021 = vsel %vm6005, %v5997, %v6013
          %v6022 = vsel %vm6006, %v5998, %v6014
          %v6023 = vsel %vm6007, %v5999, %v6015
          %v6024 = vsel %vm6008, %v6000, %v6016
          %v6025 = vadd.f32 %v6017, 1.0
          %v6026 = vadd.f32 %v6018, 1.0
          %v6027 = vadd.f32 %v6019, 1.0
          %v6028 = vadd.f32 %v6020, 1.0
          %v6029 = vadd.f32 %v6021, 1.0
          %v6030 = vadd.f32 %v6022, 1.0
          %v6031 = vadd.f32 %v6023, 1.0
          %v6032 = vadd.f32 %v6024, 1.0
          %v6033 = vmul.f32 %v5833, %v6025
          %v6034 = vmul.f32 %v5834, %v6026
          %v6035 = vmul.f32 %v5835, %v6027
          %v6036 = vmul.f32 %v5836, %v6028
          %v6037 = vmul.f32 %v5837, %v6029
          %v6038 = vmul.f32 %v5838, %v6030
          %v6039 = vmul.f32 %v5839, %v6031
          %v6040 = vmul.f32 %v5840, %v6032
          %v6049 = vcombine.low %v6033, %v6034
          %v6050 = vcombine.low %v6035, %v6036
          %v6052 = vunpack.c.l.s4 1983009808
          %v6053 = vunpack.c.0.s8 %v6052
          %v6054 = vlaneseq
          %v6055 = vshrl.u32 %v6054, 7
          %v6056 = vsub.s32 %v6053, %v6055
          %v6057 = vrot.slane %v6049, %v6056
          %v6059 = vunpack.c.l.s4 1983009808
          %v6060 = vunpack.c.0.s8 %v6059
          %v6061 = vlaneseq
          %v6062 = vshrl.u32 %v6061, 7
          %v6063 = vsub.s32 %v6060, %v6062
          %v6064 = vrot.slane %v6050, %v6063
          %v6065 = vcombine.low %v6057, %v6064
          %v6066 = vcombine.low %v6037, %v6038
          %v6067 = vcombine.low %v6039, %v6040
          %v6069 = vunpack.c.l.s4 1983009808
          %v6070 = vunpack.c.0.s8 %v6069
          %v6071 = vlaneseq
          %v6072 = vshrl.u32 %v6071, 7
          %v6073 = vsub.s32 %v6070, %v6072
          %v6074 = vrot.slane %v6066, %v6073
          %v6076 = vunpack.c.l.s4 1983009808
          %v6077 = vunpack.c.0.s8 %v6076
          %v6078 = vlaneseq
          %v6079 = vshrl.u32 %v6078, 7
          %v6080 = vsub.s32 %v6077, %v6079
          %v6081 = vrot.slane %v6067, %v6080
          %v6082 = vcombine.low %v6074, %v6081
          %6085 = vst [vmem:[#allocation2] sm:$0xff] %v6065
          %6086 = vst [vmem:[#allocation2 + $0x8] sm:$0xff] %v6082
        $region100: #{model_forward.1} parent=55 // pred_fallthru
          _
        %p6087 = scmp.eq.s32.totalorder %s28, 3
        // Predicated region
        $region101: #{model_forward.1} parent=55 // pred_check
          %p6088 = pneg %p6087
        $region102: #{model_forward.1} parent=55 // pred_check_branch
          %6090 = sbr.rel (%p6088) target = $region104
        $region103: #{model_forward.1} parent=55 // pred_region
          %v6091 = vmul.f32 %v4076, %v4076
          %v6092 = vmul.f32 %v4077, %v4077
          %v6093 = vmul.f32 %v4078, %v4078
          %v6094 = vmul.f32 %v4079, %v4079
          %v6095 = vmul.f32 %v4080, %v4080
          %v6096 = vmul.f32 %v4081, %v4081
          %v6097 = vmul.f32 %v4082, %v4082
          %v6098 = vmul.f32 %v4083, %v4083
          %vm6099 = vcmask 1041408
          %v6100 = vsel %vm6099, %v6091, 0.0
          %v6101 = vsel %vm6099, %v6092, 0.0
          %v6102 = vadd.f32 %v6100, %v6101
          %v6103 = vsel %vm6099, %v6093, 0.0
          %v6104 = vadd.f32 %v6102, %v6103
          %v6105 = vsel %vm6099, %v6094, 0.0
          %v6106 = vadd.f32 %v6104, %v6105
          %v6107 = vsel %vm6099, %v6095, 0.0
          %v6108 = vadd.f32 %v6106, %v6107
          %v6109 = vsel %vm6099, %v6096, 0.0
          %v6110 = vadd.f32 %v6108, %v6109
          %v6111 = vsel %vm6099, %v6097, 0.0
          %v6112 = vadd.f32 %v6110, %v6111
          %v6113 = vsel %vm6099, %v6098, 0.0
          %v6114 = vadd.f32 %v6112, %v6113
          %6115 = vadd.xlane.f32.xlu0 %v6114
          %v6116 = vpop.xlane.xlu0 %6115
          %v6117 = vmax.f32 %v6116, 1e-24
          %v6118 = vrsqrt.pop %v6117
          %v6119 = vmul.f32 %v4076, %v6118
          %v6120 = vmul.f32 %v4077, %v6118
          %v6121 = vmul.f32 %v4078, %v6118
          %v6122 = vmul.f32 %v4079, %v6118
          %v6123 = vmul.f32 %v4080, %v6118
          %v6124 = vmul.f32 %v4081, %v6118
          %v6125 = vmul.f32 %v4082, %v6118
          %v6126 = vmul.f32 %v4083, %v6118
          %v6135 = vcombine.low %v6119, %v6120
          %v6136 = vcombine.low %v6121, %v6122
          %v6138 = vunpack.c.l.s4 1983009808
          %v6139 = vunpack.c.0.s8 %v6138
          %v6140 = vlaneseq
          %v6141 = vshrl.u32 %v6140, 7
          %v6142 = vsub.s32 %v6139, %v6141
          %v6143 = vrot.slane %v6135, %v6142
          %v6145 = vunpack.c.l.s4 1983009808
          %v6146 = vunpack.c.0.s8 %v6145
          %v6147 = vlaneseq
          %v6148 = vshrl.u32 %v6147, 7
          %v6149 = vsub.s32 %v6146, %v6148
          %v6150 = vrot.slane %v6136, %v6149
          %v6151 = vcombine.low %v6143, %v6150
          %v6152 = vcombine.low %v6123, %v6124
          %v6153 = vcombine.low %v6125, %v6126
          %v6155 = vunpack.c.l.s4 1983009808
          %v6156 = vunpack.c.0.s8 %v6155
          %v6157 = vlaneseq
          %v6158 = vshrl.u32 %v6157, 7
          %v6159 = vsub.s32 %v6156, %v6158
          %v6160 = vrot.slane %v6152, %v6159
          %v6162 = vunpack.c.l.s4 1983009808
          %v6163 = vunpack.c.0.s8 %v6162
          %v6164 = vlaneseq
          %v6165 = vshrl.u32 %v6164, 7
          %v6166 = vsub.s32 %v6163, %v6165
          %v6167 = vrot.slane %v6153, %v6166
          %v6168 = vcombine.low %v6160, %v6167
          %6171 = vst [vmem:[#allocation17] sm:$0xff] %v6151
          %6172 = vst [vmem:[#allocation17 + $0x8] sm:$0xff] %v6168
        $region104: #{model_forward.1} parent=55 // pred_fallthru
          _
        // Predicated region
        $region105: #{model_forward.1} parent=55 // pred_check
          %p6173 = pneg %p235
        $region106: #{model_forward.1} parent=55 // pred_check_branch
          %6175 = sbr.rel (%p6173) target = $region108
        $region107: #{model_forward.1} parent=55 // pred_region
          %s6177 = ssub.s32 256, 256
          %6178 = vsyncadd [#allocation5], %s6177
          %s6180 = sshll.u32 [#allocation16], 4
          %s6181 = int_to_ptr.vmem [resolvable:$true] %s6180
          %6183 = dma.vmem_to_hbm [thread:$0]  %s6181, 256, %s9, [#allocation5]
        $region108: #{model_forward.1} parent=55 // pred_fallthru
          _
        // Predicated region
        $region109: #{model_forward.1} parent=55 // pred_check
          %p6184 = pneg %p256
        $region110: #{model_forward.1} parent=55 // pred_check_branch
          %6186 = sbr.rel (%p6184) target = $region112
        $region111: #{model_forward.1} parent=55 // pred_region
          %s6188 = ssub.s32 256, 256
          %6189 = vsyncadd [#allocation18], %s6188
          %s6191 = sshll.u32 [#allocation17], 4
          %s6192 = int_to_ptr.vmem [resolvable:$true] %s6191
          %6194 = dma.vmem_to_hbm [thread:$0]  %s6192, 256, %s10, [#allocation18]
        $region112: #{model_forward.1} parent=55 // pred_fallthru
          _
        // Predicated region
        $region113: #{model_forward.1} parent=55 // pred_check
          %p6195 = pneg %p235
        $region114: #{model_forward.1} parent=55 // pred_check_branch
          %6197 = sbr.rel (%p6195) target = $region116
        $region115: #{model_forward.1} parent=55 // pred_region
          %6198 = dma.done [#allocation5], 256
        $region116: #{model_forward.1} parent=55 // pred_fallthru
          _
        // Predicated region
        $region117: #{model_forward.1} parent=55 // pred_check
          %p6199 = pneg %p256
        $region118: #{model_forward.1} parent=55 // pred_check_branch
          %6201 = sbr.rel (%p6199) target = $region120
        $region119: #{model_forward.1} parent=55 // pred_region
          %6202 = dma.done [#allocation18], 256
        $region120: #{model_forward.1} parent=55 // pred_fallthru
          _
      $region56: #{model_forward.1} parent=5 // pred_fallthru
        _
      %p6203 = scmp.le.s32.totalorder 2, %s23
      // Predicated region
      $region121: #{model_forward.1} parent=5 // pred_check
        %p6204 = pneg %p6203
      $region122: #{model_forward.1} parent=5 // pred_check_branch
        %6206 = sbr.rel (%p6204) target = $region124
      $region123: #{model_forward.1} parent=5 // pred_region
        %s6207 = ssub.s32 %s23, 2
      $region124: #{model_forward.1} parent=5 // pred_fallthru
        _
    $region6: #{model_forward.1} parent=1 // loop_footer
      %s27 = sadd.s32 1, %s23
    $region7: #{model_forward.1} parent=1 // loop_footer_branch
      %22 = sbr.rel target = $region3
    $region8: #{model_forward.1} parent=1 // loop_exit
      _
    %6208 = vsyncpa [#allocation4], 1
    %s6209 = scalar_lea.sflag [#allocation4], 1
    %6210 = vsyncpa %s6209, 1
    %6211 = vsyncpa [#allocation7], 1
    %6212 = vsyncpa [#allocation11], 1
    %6213 = vsyncpa [#allocation14], 1
    %6214 = vsyncpa [#allocation5], 1
    %s6215 = scalar_lea.sflag [#allocation5], 1
    %6216 = vsyncpa %s6215, 1
    %6217 = vsyncpa [#allocation18], 1

</llo_original>
